<compile_context>
chip_gen: v7x
topology: tpu7x:2x2x1
jax: 0.10.0
libtpu: 0.0.40
codegen_flags: <defaults>
</compile_context>

<pallas_src>
import functools
import math

import jax
import jax.numpy as jnp
from jax import lax
from jax.experimental import pallas as pl
from jax.experimental.pallas import tpu as pltpu


# ----------------------------------------------------------------------------
# Generic linear (M-tiled)
# ----------------------------------------------------------------------------

def _linear_kernel(x_ref, w_ref, b_ref, o_ref, *, activation):
    y = jnp.dot(x_ref[...], w_ref[...], preferred_element_type=jnp.float32)
    y = y + b_ref[...]
    if activation == "relu":
        y = jnp.maximum(y, 0.0)
    o_ref[...] = y.astype(o_ref.dtype)


def linear(x2d, w, b=None, activation=None, use_bf16=False, block_m=512):
    """y = act(x @ w + b).  x2d: [M, K], w: [K, N], b: [N] or None.

    M is tiled (parallel grid axis) so real batch sizes pipeline/double-buffer
    and stay within scoped VMEM; bf16 optionally used on wide memory-bound paths.
    """
    M, K = x2d.shape
    K2, N = w.shape
    assert K == K2
    if b is None:
        b = jnp.zeros((N,), jnp.float32)
    if use_bf16:
        x2d = x2d.astype(jnp.bfloat16)
        w = w.astype(jnp.bfloat16)
    tm = min(M, block_m)
    grid_m = pl.cdiv(M, tm)
    return pl.pallas_call(
        functools.partial(_linear_kernel, activation=activation),
        out_shape=jax.ShapeDtypeStruct((M, N), jnp.float32),
        grid=(grid_m,),
        in_specs=[
            pl.BlockSpec((tm, K), lambda i: (i, 0)),
            pl.BlockSpec((K, N), lambda i: (0, 0)),
            pl.BlockSpec((1, N), lambda i: (0, 0)),
        ],
        out_specs=pl.BlockSpec((tm, N), lambda i: (i, 0)),
        compiler_params=pltpu.CompilerParams(dimension_semantics=("parallel",)),
    )(x2d, w, b.reshape(1, N))


# ----------------------------------------------------------------------------
# Bidirectional LSTM recurrence — both directions in ONE pallas_call
# ----------------------------------------------------------------------------

def _bilstm_kernel(xg_ref, whh_ref, mask_ref, out_ref, h_scr, c_scr):
    """One LSTM direction per grid step (d=0 forward, d=1 backward).

    xg_ref  : [T, B, 4H]  precomputed x @ W_ih + b (PyTorch gate order i,f,g,o)
    whh_ref : [H, 4H]
    mask_ref: [T, B, 1]   mask-gated state update emulates pack_padded_sequence
    out_ref : [T, B, H]   written in ORIGINAL time order for both directions
    """
    T = xg_ref.shape[0]
    H = out_ref.shape[2]
    d = pl.program_id(0)
    rev = d == 1
    h_scr[...] = jnp.zeros_like(h_scr)
    c_scr[...] = jnp.zeros_like(c_scr)

    def step(s, carry):
        tt = jnp.where(rev, T - 1 - s, s)                 # in-kernel time reversal
        gates = xg_ref[tt] + jnp.dot(h_scr[...], whh_ref[...],
                                     preferred_element_type=jnp.float32)
        i = jax.nn.sigmoid(gates[:, 0 * H:1 * H])
        f = jax.nn.sigmoid(gates[:, 1 * H:2 * H])
        g = jnp.tanh(gates[:, 2 * H:3 * H])
        o = jax.nn.sigmoid(gates[:, 3 * H:4 * H])
        c_new = f * c_scr[...] + i * g
        h_new = o * jnp.tanh(c_new)
        m = mask_ref[tt]                                  # [B, 1]
        one_minus_m = 1.0 - m
        h_scr[...] = m * h_new + one_minus_m * h_scr[...]
        c_scr[...] = m * c_new + one_minus_m * c_scr[...]
        out_ref[tt] = m * h_scr[...]                      # zero at padded steps
        return carry

    # T is small and static: unroll so the LLO scheduler sees the whole recurrence.
    lax.fori_loop(0, T, step, 0, unroll=True)


def bilstm(xg_stack, whh_stack, mask_tb1):
    """xg_stack: [2, T, B, 4H], whh_stack: [2, H, 4H], mask: [T, B, 1] -> [2, T, B, H]."""
    _, T, B, G = xg_stack.shape
    H = G // 4
    return pl.pallas_call(
        _bilstm_kernel,
        out_shape=jax.ShapeDtypeStruct((2, T, B, H), jnp.float32),
        grid=(2,),
        in_specs=[
            pl.BlockSpec((None, T, B, G), lambda d: (d, 0, 0, 0)),
            pl.BlockSpec((None, H, G), lambda d: (d, 0, 0)),
            pl.BlockSpec((T, B, 1), lambda d: (0, 0, 0)),
        ],
        out_specs=pl.BlockSpec((None, T, B, H), lambda d: (d, 0, 0, 0)),
        scratch_shapes=[pltpu.VMEM((B, H), jnp.float32),
                        pltpu.VMEM((B, H), jnp.float32)],
        compiler_params=pltpu.CompilerParams(dimension_semantics=("parallel",)),
    )(xg_stack, whh_stack, mask_tb1)


# ----------------------------------------------------------------------------
# Fused dense co-attention layer (projections + attention + residual FFs)
# ----------------------------------------------------------------------------

def _dcn_layer_kernel(v1_ref, v2_ref, m1_ref, m2_ref, wq1_ref, wq2_ref,
                      ff1a_ref, ff1b_w_ref, ff1bias_ref,
                      ff2a_ref, ff2b_w_ref, ff2bias_ref,
                      img_o_ref, ques_o_ref, *, num_heads, dk, scale):
    """One NormalSubLayer for one batch element, entirely in VMEM.

    v1: [1,N1,DI] (real img rows first, learned "none" slots appended)
    v2: [1,N2,DQ]  m1: [1,1,N1]  m2: [1,1,N2]
    outputs: img [1,R,DI], ques [1,T,DQ] (residual-updated)
    """
    v1 = v1_ref[0]                        # [N1, DI]
    v2 = v2_ref[0]                        # [N2, DQ]
    N1 = v1.shape[0]
    N2 = v2.shape[0]
    R = img_o_ref.shape[1]
    T = ques_o_ref.shape[1]
    neg = jnp.float32(-1e30)

    # mask additive biases, hoisted out of the head loop (computed once)
    bias2 = jnp.where(m2_ref[0] > 0, 0.0, neg)           # [1, N2]
    bias1 = jnp.where(m1_ref[0] > 0, 0.0, neg)           # [1, N1]

    # fused symmetric (bias-free) multi-head projections
    q1 = jnp.dot(v1, wq1_ref[...], preferred_element_type=jnp.float32)   # [N1, h*dk]
    q2 = jnp.dot(v2, wq2_ref[...], preferred_element_type=jnp.float32)   # [N2, h*dk]

    # heads share the value matrices, so average the attention maps FIRST and do a
    # single A@V per direction (exact algebraic identity: mean_h(A_h V) = (mean_h A_h) V)
    a12_sum = jnp.zeros((N1, N2), jnp.float32)
    a21_sum = jnp.zeros((N2, N1), jnp.float32)
    for hh in range(num_heads):                           # static unroll over heads
        q1h = q1[:, hh * dk:(hh + 1) * dk]
        q2h = q2[:, hh * dk:(hh + 1) * dk]
        s12 = lax.dot_general(q1h, q2h, (((1,), (1,)), ((), ())),
                              preferred_element_type=jnp.float32) * scale   # [N1,N2]
        a12_sum = a12_sum + jax.nn.softmax(s12 + bias2, axis=-1)
        s21 = lax.dot_general(q2h, q1h, (((1,), (1,)), ((), ())),
                              preferred_element_type=jnp.float32) * scale   # [N2,N1]
        a21_sum = a21_sum + jax.nn.softmax(s21 + bias1, axis=-1)

    inv_h = jnp.float32(1.0 / num_heads)
    att1 = jnp.dot(a12_sum, v2, preferred_element_type=jnp.float32) * inv_h  # [N1, DQ]
    att2 = jnp.dot(a21_sum, v1, preferred_element_type=jnp.float32) * inv_h  # [N2, DI]

    img = v1[:R, :]                       # real rows (nones are appended, so offset 0)
    ques = v2[:T, :]
    att_img = att1[:R, :]                 # [R, DQ]
    att_q = att2[:T, :]                   # [T, DI]

    # concat([x, att]) @ W  ==  x @ W[:Dx] + att @ W[Dx:]  (weights pre-split outside)
    upd1 = (jnp.dot(img, ff1a_ref[...], preferred_element_type=jnp.float32)
            + jnp.dot(att_img, ff1b_w_ref[...], preferred_element_type=jnp.float32)
            + ff1bias_ref[...])
    img_o_ref[0] = img + jnp.maximum(upd1, 0.0)

    upd2 = (jnp.dot(ques, ff2a_ref[...], preferred_element_type=jnp.float32)
            + jnp.dot(att_q, ff2b_w_ref[...], preferred_element_type=jnp.float32)
            + ff2bias_ref[...])
    ques_o_ref[0] = ques + jnp.maximum(upd2, 0.0)
    # TODO(synk): dropout inside the FF branch is identity (inference mode).


def dense_coattn_layer(img, ques, img_mask, ques_mask, lp, num_heads):
    B, R, DI = img.shape
    _, T, DQ = ques.shape
    nn_ = lp["nones1"].shape[0]
    adim = lp["wq1"].shape[1]
    dk = adim // num_heads
    N1, N2 = R + nn_, T + nn_
    scale = 1.0 / math.sqrt(dk)

    # learned "none" slots APPENDED (softmax over keys is permutation invariant, so
    # this is equivalent to the original prepend and keeps real rows lane/sublane
    # aligned at offset 0 for the in-kernel slices)
    v1 = jnp.concatenate([img, jnp.broadcast_to(lp["nones1"][None], (B, nn_, DI))], axis=1)
    v2 = jnp.concatenate([ques, jnp.broadcast_to(lp["nones2"][None], (B, nn_, DQ))], axis=1)
    m1 = jnp.concatenate([img_mask, jnp.ones((B, nn_), jnp.float32)], axis=1)[:, None, :]
    m2 = jnp.concatenate([ques_mask, jnp.ones((B, nn_), jnp.float32)], axis=1)[:, None, :]

    ff1a, ff1b = lp["ff1_w"][:DI], lp["ff1_w"][DI:]
    ff2a, ff2b = lp["ff2_w"][:DQ], lp["ff2_w"][DQ:]

    img_new, ques_new = pl.pallas_call(
        functools.partial(_dcn_layer_kernel, num_heads=num_heads, dk=dk, scale=scale),
        out_shape=(jax.ShapeDtypeStruct((B, R, DI), jnp.float32),
                   jax.ShapeDtypeStruct((B, T, DQ), jnp.float32)),
        grid=(B,),
        in_specs=[
            pl.BlockSpec((1, N1, DI), lambda b: (b, 0, 0)),
            pl.BlockSpec((1, N2, DQ), lambda b: (b, 0, 0)),
            pl.BlockSpec((1, 1, N1), lambda b: (b, 0, 0)),
            pl.BlockSpec((1, 1, N2), lambda b: (b, 0, 0)),
            pl.BlockSpec((DI, adim), lambda b: (0, 0)),
            pl.BlockSpec((DQ, adim), lambda b: (0, 0)),
            pl.BlockSpec((DI, DI), lambda b: (0, 0)),
            pl.BlockSpec((DQ, DI), lambda b: (0, 0)),
            pl.BlockSpec((1, DI), lambda b: (0, 0)),
            pl.BlockSpec((DQ, DQ), lambda b: (0, 0)),
            pl.BlockSpec((DI, DQ), lambda b: (0, 0)),
            pl.BlockSpec((1, DQ), lambda b: (0, 0)),
        ],
        out_specs=(pl.BlockSpec((1, R, DI), lambda b: (b, 0, 0)),
                   pl.BlockSpec((1, T, DQ), lambda b: (b, 0, 0))),
        compiler_params=pltpu.CompilerParams(dimension_semantics=("parallel",)),
    )(v1, v2, m1, m2, lp["wq1"], lp["wq2"],
      ff1a, ff1b, lp["ff1_b"].reshape(1, DI),
      ff2a, ff2b, lp["ff2_b"].reshape(1, DQ))
    return img_new, ques_new


# ----------------------------------------------------------------------------
# Fused predict layer (summary MLPs + masked summary attention + final MLP)
# ----------------------------------------------------------------------------

def _predict_kernel(img_ref, ques_ref, mi_ref, mq_ref,
                    iw1_ref, ib1_ref, iw2_ref, ib2_ref,
                    qw1_ref, qb1_ref, qw2_ref, qb2_ref,
                    mw1i_ref, mw1q_ref, mb1_ref, mw2_ref, mb2_ref,
                    o_ref):
    """Whole PredictLayer for one batch element.  o: [1, 1, num_ans]."""
    neg = jnp.float32(-1e30)

    def summarize(v, m, w1, b1, w2, b2):
        # two-layer summary MLP -> per-head logits
        hdn = jnp.maximum(jnp.dot(v, w1, preferred_element_type=jnp.float32) + b1, 0.0)
        s = jnp.dot(hdn, w2, preferred_element_type=jnp.float32) + b2       # [N, h]
        s = s + jnp.where(m > 0, 0.0, neg)                                   # m: [N, 1]
        a = jax.nn.softmax(s, axis=0)                                        # per head over N
        # mean over heads of per-head weighted sums == (head-averaged weights) @ v
        a_mean = jnp.mean(a, axis=-1, keepdims=True)                         # [N, 1]
        return jnp.sum(a_mean * v, axis=0, keepdims=True)                    # [1, D]

    w_img = summarize(img_ref[0], mi_ref[0], iw1_ref[...], ib1_ref[...],
                      iw2_ref[...], ib2_ref[...])                            # [1, DI]
    w_q = summarize(ques_ref[0], mq_ref[0], qw1_ref[...], qb1_ref[...],
                    qw2_ref[...], qb2_ref[...])                              # [1, DQ]

    # concat([w_img, w_q]) @ mlp_w1 == w_img @ W[:DI] + w_q @ W[DI:]
    hid = (jnp.dot(w_img, mw1i_ref[...], preferred_element_type=jnp.float32)
           + jnp.dot(w_q, mw1q_ref[...], preferred_element_type=jnp.float32)
           + mb1_ref[...])
    hid = jnp.maximum(hid, 0.0)
    o_ref[0] = jnp.dot(hid, mw2_ref[...], preferred_element_type=jnp.float32) + mb2_ref[...]


def predict_layer(img, ques, img_mask, ques_mask, pp):
    B, R, DI = img.shape
    _, T, DQ = ques.shape
    na = pp["sum_img_w2"].shape[1]
    hmid = pp["mlp_w1"].shape[1]
    num_ans = pp["mlp_w2"].shape[1]

    mw1_img = pp["mlp_w1"][:DI]
    mw1_q = pp["mlp_w1"][DI:]

    score = pl.pallas_call(
        _predict_kernel,
        out_shape=jax.ShapeDtypeStruct((B, 1, num_ans), jnp.float32),
        grid=(B,),
        in_specs=[
            pl.BlockSpec((1, R, DI), lambda b: (b, 0, 0)),
            pl.BlockSpec((1, T, DQ), lambda b: (b, 0, 0)),
            pl.BlockSpec((1, R, 1), lambda b: (b, 0, 0)),
            pl.BlockSpec((1, T, 1), lambda b: (b, 0, 0)),
            pl.BlockSpec((DI, DI), lambda b: (0, 0)),
            pl.BlockSpec((1, DI), lambda b: (0, 0)),
            pl.BlockSpec((DI, na), lambda b: (0, 0)),
            pl.BlockSpec((1, na), lambda b: (0, 0)),
            pl.BlockSpec((DQ, DQ), lambda b: (0, 0)),
            pl.BlockSpec((1, DQ), lambda b: (0, 0)),
            pl.BlockSpec((DQ, na), lambda b: (0, 0)),
            pl.BlockSpec((1, na), lambda b: (0, 0)),
            pl.BlockSpec((DI, hmid), lambda b: (0, 0)),
            pl.BlockSpec((DQ, hmid), lambda b: (0, 0)),
            pl.BlockSpec((1, hmid), lambda b: (0, 0)),
            pl.BlockSpec((hmid, num_ans), lambda b: (0, 0)),
            pl.BlockSpec((1, num_ans), lambda b: (0, 0)),
        ],
        out_specs=pl.BlockSpec((1, 1, num_ans), lambda b: (b, 0, 0)),
        compiler_params=pltpu.CompilerParams(dimension_semantics=("parallel",)),
    )(img, ques, img_mask[:, :, None], ques_mask[:, :, None],
      pp["sum_img_w1"], pp["sum_img_b1"].reshape(1, DI),
      pp["sum_img_w2"], pp["sum_img_b2"].reshape(1, na),
      pp["sum_q_w1"], pp["sum_q_b1"].reshape(1, DQ),
      pp["sum_q_w2"], pp["sum_q_b2"].reshape(1, na),
      mw1_img, mw1_q, pp["mlp_b1"].reshape(1, hmid),
      pp["mlp_w2"], pp["mlp_b2"].reshape(1, num_ans))
    return score.reshape(B, num_ans)


# ----------------------------------------------------------------------------
# Module forward passes (glue in plain JAX, compute in Pallas)
# ----------------------------------------------------------------------------

def lang_extract(ques_emb, ques_mask, lstm_params):
    """LSTM(300, ques_size, num_layers, droprnn, residual_embeddings=True).

    Bidirectional LSTM; residual_embeddings concatenates the word embeddings
    with the final layer outputs.  Output dim = 300 + 2*H.
    """
    B, T, _ = ques_emb.shape
    mask_tb1 = jnp.transpose(ques_mask, (1, 0))[:, :, None]        # [T, B, 1]
    layer_in = ques_emb
    for lp in lstm_params["layers"]:
        H = lp["w_hh_f"].shape[0]
        in_dim = layer_in.shape[-1]
        x2d = layer_in.reshape(B * T, in_dim)
        # single fused input projection for both directions: [B*T, 8H]
        w_ih = jnp.concatenate([lp["w_ih_f"], lp["w_ih_b"]], axis=1)
        b_ih = jnp.concatenate([lp["b_f"], lp["b_b"]], axis=0)
        xg = linear(x2d, w_ih, b_ih).reshape(B, T, 8 * H)
        xg = jnp.transpose(xg, (1, 0, 2))                          # [T, B, 8H]
        xg_stack = jnp.stack([xg[:, :, :4 * H], xg[:, :, 4 * H:]], axis=0)   # [2,T,B,4H]
        whh_stack = jnp.stack([lp["w_hh_f"], lp["w_hh_b"]], axis=0)          # [2,H,4H]
        # TODO(synk): pack_padded_sequence is emulated via mask-gated updates
        # (assumes right-padded sequences), which matches pad_packed semantics.
        out = bilstm(xg_stack, whh_stack, mask_tb1)                # [2, T, B, H]
        layer_in = jnp.transpose(jnp.concatenate([out[0], out[1]], -1), (1, 0, 2))
    ques_feat = jnp.concatenate([ques_emb, layer_in], axis=-1)     # residual_embeddings
    return ques_feat, ques_mask


def img_extract(img, p):
    """BottomUpExtract: weight-normed Linear(2048 -> img_size), bf16 on the wide path.
    TODO(synk): weight_norm reparameterization folded into a plain weight matrix."""
    B, R, F = img.shape
    return linear(img.reshape(B * R, F), p["w"], p["b"],
                  use_bf16=True).reshape(B, R, -1)


def dcn_with_rcnn_forward(params, img, ques, img_mask, ques_mask, cfg):
    ques_feat, ques_mask = lang_extract(ques, ques_mask, params["lstm"])
    img_feat = img_extract(img, params["img_extract"])
    for lp in params["dcn_layers"]:
        img_feat, ques_feat = dense_coattn_layer(
            img_feat, ques_feat, img_mask, ques_mask, lp, cfg["num_dense_attn"])
    return predict_layer(img_feat, ques_feat, img_mask, ques_mask, params["predict"])


# ----------------------------------------------------------------------------
# Deterministic parameter init (Initializer.xavier_normal analogue)
# ----------------------------------------------------------------------------

def _xavier(key, shape):
    fan_in, fan_out = shape[0], shape[-1]
    std = math.sqrt(2.0 / (fan_in + fan_out))
    return (std * jax.random.normal(key, shape)).astype(jnp.float32)


def init_params(key, cfg):
    E, H, DI = cfg["emb_size"], cfg["ques_hidden"], cfg["img_size"]
    DQ = E + 2 * H
    adim = min(DI, DQ)
    keys = iter(jax.random.split(key, 256))
    nk = lambda: next(keys)

    lstm_layers = []
    in_dim = E
    for _ in range(cfg["num_layers"]):
        lstm_layers.append(dict(
            w_ih_f=_xavier(nk(), (in_dim, 4 * H)),
            w_hh_f=_xavier(nk(), (H, 4 * H)),
            b_f=jnp.zeros((4 * H,), jnp.float32),
            w_ih_b=_xavier(nk(), (in_dim, 4 * H)),
            w_hh_b=_xavier(nk(), (H, 4 * H)),
            b_b=jnp.zeros((4 * H,), jnp.float32),
        ))
        in_dim = 2 * H

    dcn_layers = []
    for _ in range(cfg["num_seq"]):
        dcn_layers.append(dict(
            nones1=_xavier(nk(), (cfg["num_none"], DI)),
            nones2=_xavier(nk(), (cfg["num_none"], DQ)),
            wq1=_xavier(nk(), (DI, adim)),
            wq2=_xavier(nk(), (DQ, adim)),
            ff1_w=_xavier(nk(), (DI + DQ, DI)),
            ff1_b=jnp.zeros((DI,), jnp.float32),
            ff2_w=_xavier(nk(), (DQ + DI, DQ)),
            ff2_b=jnp.zeros((DQ,), jnp.float32),
        ))

    hmid = (DI + DQ) // 2
    na = cfg["num_predict_attn"]
    predict = dict(
        sum_img_w1=_xavier(nk(), (DI, DI)), sum_img_b1=jnp.zeros((DI,), jnp.float32),
        sum_img_w2=_xavier(nk(), (DI, na)), sum_img_b2=jnp.zeros((na,), jnp.float32),
        sum_q_w1=_xavier(nk(), (DQ, DQ)), sum_q_b1=jnp.zeros((DQ,), jnp.float32),
        sum_q_w2=_xavier(nk(), (DQ, na)), sum_q_b2=jnp.zeros((na,), jnp.float32),
        mlp_w1=_xavier(nk(), (DI + DQ, hmid)), mlp_b1=jnp.zeros((hmid,), jnp.float32),
        mlp_w2=_xavier(nk(), (hmid, cfg["num_ans"])),
        mlp_b2=jnp.zeros((cfg["num_ans"],), jnp.float32),
    )

    return dict(
        lstm=dict(layers=lstm_layers),
        img_extract=dict(w=_xavier(nk(), (cfg["img_feat"], DI)),
                         b=jnp.zeros((DI,), jnp.float32)),
        dcn_layers=dcn_layers,
        predict=predict,
    )


# ----------------------------------------------------------------------------
# Main
# ----------------------------------------------------------------------------

if __name__ == "__main__":
    cfg = dict(
        img_feat=2048,        # bottom-up RCNN feature dim (hardcoded 2048 in repo)
        img_size=64,          # opt.img_size
        emb_size=300,         # LSTM input size (module hardcodes 300)
        ques_hidden=16,       # per-direction LSTM hidden; ques dim = 300 + 2*16
        num_layers=1,         # opt.num_layers
        num_dense_attn=4,     # opt.num_dense_attn (heads)
        num_none=3,           # opt.num_none
        num_seq=2,            # opt.num_seq (stacked co-attention layers)
        num_predict_attn=4,   # opt.num_predict_attn
        num_ans=10,           # num_ans
    )
    B, R, T = 2, 16, 8

    key = jax.random.PRNGKey(0)
    k_img, k_q, k_p = jax.random.split(key, 3)
    img = jax.random.normal(k_img, (B, R, cfg["img_feat"]), jnp.float32)
    ques = jax.random.normal(k_q, (B, T, cfg["emb_size"]), jnp.float32)
    img_lens = jnp.array([16, 12])
    ques_lens = jnp.array([8, 5])
    img_mask = (jnp.arange(R)[None, :] < img_lens[:, None]).astype(jnp.float32)
    ques_mask = (jnp.arange(T)[None, :] < ques_lens[:, None]).astype(jnp.float32)

    params = init_params(k_p, cfg)

    fwd = jax.jit(functools.partial(dcn_with_rcnn_forward, cfg=cfg))
    score = fwd(params, img, ques, img_mask, ques_mask)
    score = jax.block_until_ready(score)

    assert score.shape == (B, cfg["num_ans"]), score.shape
    assert bool(jnp.all(jnp.isfinite(score)))
    print("KERNEL_OK")
</pallas_src>

<mosaic_0001>
module attributes {stable_mosaic.version = 11 : i64} {
  func.func @_linear_kernel(%arg0: i32, %arg1: memref<16x300xf32, #tpu.memory_space<vmem>>, %arg2: memref<300x128xf32, #tpu.memory_space<vmem>>, %arg3: memref<1x128xf32, #tpu.memory_space<vmem>>, %arg4: memref<16x128xf32, #tpu.memory_space<vmem>>) attributes {dimension_semantics = [#tpu.dimension_semantics<parallel>], iteration_bounds = array<i64: 1>, scalar_prefetch = 0 : i64, scratch_operands = 0 : i64, tpu.core_type = #tpu.core_type<tc>, window_params = [{transform_indices = @transform_0, window_bounds = array<i64: 16, 300>}, {pipeline_mode = #tpu.pipeline_mode<synchronous>, transform_indices = @transform_1, window_bounds = array<i64: 300, 128>}, {pipeline_mode = #tpu.pipeline_mode<synchronous>, transform_indices = @transform_2, window_bounds = array<i64: 1, 128>}, {transform_indices = @transform_3, window_bounds = array<i64: 16, 128>}]} {
    %c0 = arith.constant 0 : index
    %c0_0 = arith.constant 0 : index
    %0 = vector.load %arg1[%c0, %c0_0] : memref<16x300xf32, #tpu.memory_space<vmem>>, vector<16x300xf32>
    %c0_1 = arith.constant 0 : index
    %c0_2 = arith.constant 0 : index
    %1 = vector.load %arg2[%c0_1, %c0_2] : memref<300x128xf32, #tpu.memory_space<vmem>>, vector<300x128xf32>
    %cst = arith.constant dense<0.000000e+00> : vector<16x128xf32>
    %2 = tpu.matmul %0, %1, %cst {dimension_numbers = #tpu.dot_dimension_numbers<[1], [0], [0], [1], [0, 0, 1, 1], [], []>} : vector<16x300xf32>, vector<300x128xf32>, vector<16x128xf32> -> vector<16x128xf32>
    %c0_3 = arith.constant 0 : index
    %c0_4 = arith.constant 0 : index
    %3 = vector.load %arg3[%c0_3, %c0_4] : memref<1x128xf32, #tpu.memory_space<vmem>>, vector<1x128xf32>
    %4 = vector.broadcast %3 : vector<1x128xf32> to vector<16x128xf32>
    %5 = arith.addf %2, %4 : vector<16x128xf32>
    %c0_5 = arith.constant 0 : index
    %c0_6 = arith.constant 0 : index
    %6 = vector.load %arg4[%c0_5, %c0_6] : memref<16x128xf32, #tpu.memory_space<vmem>>, vector<16x128xf32>
    tpu.vector_store %arg4[%c0_5, %c0_6], %5 {strides = array<i32>} : memref<16x128xf32, #tpu.memory_space<vmem>>, vector<16x128xf32>,
    return
  }
  func.func @transform_0(%arg0: i32) -> (i32, i32) {
    %c0_i32 = arith.constant 0 : i32
    %c0_i32_0 = arith.constant 0 : i32
    return %arg0, %c0_i32 : i32, i32
  }
  func.func @transform_1(%arg0: i32) -> (i32, i32) {
    %c0_i32 = arith.constant 0 : i32
    %c0_i32_0 = arith.constant 0 : i32
    %c0_i32_1 = arith.constant 0 : i32
    return %c0_i32, %c0_i32_0 : i32, i32
  }
  func.func @transform_2(%arg0: i32) -> (i32, i32) {
    %c0_i32 = arith.constant 0 : i32
    %c0_i32_0 = arith.constant 0 : i32
    %c0_i32_1 = arith.constant 0 : i32
    return %c0_i32, %c0_i32_0 : i32, i32
  }
  func.func @transform_3(%arg0: i32) -> (i32, i32) {
    %c0_i32 = arith.constant 0 : i32
    %c0_i32_0 = arith.constant 0 : i32
    return %arg0, %c0_i32 : i32, i32
  }
}

module attributes {stable_mosaic.version = 11 : i64} {
  func.func @_bilstm_kernel(%arg0: i32, %arg1: memref<1x8x2x64xf32, #tpu.memory_space<vmem>>, %arg2: memref<1x16x64xf32, #tpu.memory_space<vmem>>, %arg3: memref<8x2x1xf32, #tpu.memory_space<vmem>>, %arg4: memref<1x8x2x16xf32, #tpu.memory_space<vmem>>, %arg5: memref<2x16xf32, #tpu.memory_space<vmem>>, %arg6: memref<2x16xf32, #tpu.memory_space<vmem>>) attributes {dimension_semantics = [#tpu.dimension_semantics<parallel>], iteration_bounds = array<i64: 2>, scalar_prefetch = 0 : i64, scratch_operands = 2 : i64, tpu.core_type = #tpu.core_type<tc>, window_params = [{transform_indices = @transform_0, window_bounds = array<i64: 1, 8, 2, 64>}, {transform_indices = @transform_1, window_bounds = array<i64: 1, 16, 64>}, {pipeline_mode = #tpu.pipeline_mode<synchronous>, transform_indices = @transform_2, window_bounds = array<i64: 8, 2, 1>}, {transform_indices = @transform_3, window_bounds = array<i64: 1, 8, 2, 16>}]} {
    %c1_i32 = arith.constant 1 : i32
    %0 = arith.cmpi eq, %arg0, %c1_i32 : i32
    %cst = arith.constant 0.000000e+00 : f32
    %1 = vector.broadcast %cst : f32 to vector<2x16xf32>
    %c0 = arith.constant 0 : index
    %c0_0 = arith.constant 0 : index
    %2 = vector.load %arg5[%c0, %c0_0] : memref<2x16xf32, #tpu.memory_space<vmem>>, vector<2x16xf32>
    tpu.vector_store %arg5[%c0, %c0_0], %1 {strides = array<i32>} : memref<2x16xf32, #tpu.memory_space<vmem>>, vector<2x16xf32>,
    %cst_1 = arith.constant 0.000000e+00 : f32
    %3 = vector.broadcast %cst_1 : f32 to vector<2x16xf32>
    %c0_2 = arith.constant 0 : index
    %c0_3 = arith.constant 0 : index
    %4 = vector.load %arg6[%c0_2, %c0_3] : memref<2x16xf32, #tpu.memory_space<vmem>>, vector<2x16xf32>
    tpu.vector_store %arg6[%c0_2, %c0_3], %3 {strides = array<i32>} : memref<2x16xf32, #tpu.memory_space<vmem>>, vector<2x16xf32>,
    %c0_i32 = arith.constant 0 : i32
    %c7_i32 = arith.constant 7 : i32
    %5 = arith.subi %c7_i32, %c0_i32 : i32
    %6 = arith.select %0, %5, %c0_i32 : i32
    %c0_4 = arith.constant 0 : index
    %7 = arith.index_cast %6 : i32 to index
    %c0_5 = arith.constant 0 : index
    %c0_6 = arith.constant 0 : index
    %8 = vector.load %arg1[%c0_4, %7, %c0_5, %c0_6] : memref<1x8x2x64xf32, #tpu.memory_space<vmem>>, vector<1x1x2x64xf32>
    %9 = vector.shape_cast %8 : vector<1x1x2x64xf32> to vector<2x64xf32>
    %c0_7 = arith.constant 0 : index
    %c0_8 = arith.constant 0 : index
    %10 = vector.load %arg5[%c0_7, %c0_8] : memref<2x16xf32, #tpu.memory_space<vmem>>, vector<2x16xf32>
    %c0_9 = arith.constant 0 : index
    %c0_10 = arith.constant 0 : index
    %c0_11 = arith.constant 0 : index
    %11 = vector.load %arg2[%c0_9, %c0_10, %c0_11] : memref<1x16x64xf32, #tpu.memory_space<vmem>>, vector<1x16x64xf32>
    %12 = vector.shape_cast %11 : vector<1x16x64xf32> to vector<16x64xf32>
    %cst_12 = arith.constant dense<0.000000e+00> : vector<2x64xf32>
    %13 = tpu.matmul %10, %12, %cst_12 {dimension_numbers = #tpu.dot_dimension_numbers<[1], [0], [0], [1], [0, 0, 1, 1], [], []>} : vector<2x16xf32>, vector<16x64xf32>, vector<2x64xf32> -> vector<2x64xf32>
    %14 = arith.addf %9, %13 : vector<2x64xf32>
    %15 = vector.extract_strided_slice %14 {offsets = [0, 0], sizes = [2, 16], strides = [1, 1]} : vector<2x64xf32> to vector<2x16xf32>
    %16 = arith.negf %15 : vector<2x16xf32>
    %17 = math.exp %16 : vector<2x16xf32>
    %cst_13 = arith.constant 1.000000e+00 : f32
    %18 = vector.broadcast %cst_13 : f32 to vector<2x16xf32>
    %19 = arith.addf %18, %17 : vector<2x16xf32>
    %20 = arith.divf %18, %19 : vector<2x16xf32>
    %21 = vector.extract_strided_slice %14 {offsets = [0, 16], sizes = [2, 16], strides = [1, 1]} : vector<2x64xf32> to vector<2x16xf32>
    %22 = arith.negf %21 : vector<2x16xf32>
    %23 = math.exp %22 : vector<2x16xf32>
    %cst_14 = arith.constant 1.000000e+00 : f32
    %24 = vector.broadcast %cst_14 : f32 to vector<2x16xf32>
    %25 = arith.addf %24, %23 : vector<2x16xf32>
    %26 = arith.divf %24, %25 : vector<2x16xf32>
    %27 = vector.extract_strided_slice %14 {offsets = [0, 32], sizes = [2, 16], strides = [1, 1]} : vector<2x64xf32> to vector<2x16xf32>
    %28 = math.tanh %27 : vector<2x16xf32>
    %29 = vector.extract_strided_slice %14 {offsets = [0, 48], sizes = [2, 16], strides = [1, 1]} : vector<2x64xf32> to vector<2x16xf32>
    %30 = arith.negf %29 : vector<2x16xf32>
    %31 = math.exp %30 : vector<2x16xf32>
    %cst_15 = arith.constant 1.000000e+00 : f32
    %32 = vector.broadcast %cst_15 : f32 to vector<2x16xf32>
    %33 = arith.addf %32, %31 : vector<2x16xf32>
    %34 = arith.divf %32, %33 : vector<2x16xf32>
    %c0_16 = arith.constant 0 : index
    %c0_17 = arith.constant 0 : index
    %35 = vector.load %arg6[%c0_16, %c0_17] : memref<2x16xf32, #tpu.memory_space<vmem>>, vector<2x16xf32>
    %36 = arith.mulf %26, %35 : vector<2x16xf32>
    %37 = arith.mulf %20, %28 : vector<2x16xf32>
    %38 = arith.addf %36, %37 : vector<2x16xf32>
    %39 = math.tanh %38 : vector<2x16xf32>
    %40 = arith.mulf %34, %39 : vector<2x16xf32>
    %41 = arith.index_cast %6 : i32 to index
    %c0_18 = arith.constant 0 : index
    %c0_19 = arith.constant 0 : index
    %42 = vector.load %arg3[%41, %c0_18, %c0_19] : memref<8x2x1xf32, #tpu.memory_space<vmem>>, vector<1x2x1xf32>
    %43 = vector.shape_cast %42 : vector<1x2x1xf32> to vector<2x1xf32>
    %cst_20 = arith.constant 1.000000e+00 : f32
    %44 = vector.broadcast %cst_20 : f32 to vector<2x1xf32>
    %45 = arith.subf %44, %43 : vector<2x1xf32>
    %46 = vector.broadcast %43 : vector<2x1xf32> to vector<2x16xf32>
    %47 = arith.mulf %46, %40 : vector<2x16xf32>
    %c0_21 = arith.constant 0 : index
    %c0_22 = arith.constant 0 : index
    %48 = vector.load %arg5[%c0_21, %c0_22] : memref<2x16xf32, #tpu.memory_space<vmem>>, vector<2x16xf32>
    %49 = vector.broadcast %45 : vector<2x1xf32> to vector<2x16xf32>
    %50 = arith.mulf %49, %48 : vector<2x16xf32>
    %51 = arith.addf %47, %50 : vector<2x16xf32>
    %c0_23 = arith.constant 0 : index
    %c0_24 = arith.constant 0 : index
    %52 = vector.load %arg5[%c0_23, %c0_24] : memref<2x16xf32, #tpu.memory_space<vmem>>, vector<2x16xf32>
    tpu.vector_store %arg5[%c0_23, %c0_24], %51 {strides = array<i32>} : memref<2x16xf32, #tpu.memory_space<vmem>>, vector<2x16xf32>,
    %53 = vector.broadcast %43 : vector<2x1xf32> to vector<2x16xf32>
    %54 = arith.mulf %53, %38 : vector<2x16xf32>
    %c0_25 = arith.constant 0 : index
    %c0_26 = arith.constant 0 : index
    %55 = vector.load %arg6[%c0_25, %c0_26] : memref<2x16xf32, #tpu.memory_space<vmem>>, vector<2x16xf32>
    %56 = vector.broadcast %45 : vector<2x1xf32> to vector<2x16xf32>
    %57 = arith.mulf %56, %55 : vector<2x16xf32>
    %58 = arith.addf %54, %57 : vector<2x16xf32>
    %c0_27 = arith.constant 0 : index
    %c0_28 = arith.constant 0 : index
    %59 = vector.load %arg6[%c0_27, %c0_28] : memref<2x16xf32, #tpu.memory_space<vmem>>, vector<2x16xf32>
    tpu.vector_store %arg6[%c0_27, %c0_28], %58 {strides = array<i32>} : memref<2x16xf32, #tpu.memory_space<vmem>>, vector<2x16xf32>,
    %c0_29 = arith.constant 0 : index
    %c0_30 = arith.constant 0 : index
    %60 = vector.load %arg5[%c0_29, %c0_30] : memref<2x16xf32, #tpu.memory_space<vmem>>, vector<2x16xf32>
    %61 = vector.broadcast %43 : vector<2x1xf32> to vector<2x16xf32>
    %62 = arith.mulf %61, %60 : vector<2x16xf32>
    %c0_31 = arith.constant 0 : index
    %63 = arith.index_cast %6 : i32 to index
    %c0_32 = arith.constant 0 : index
    %c0_33 = arith.constant 0 : index
    %64 = vector.load %arg4[%c0_31, %63, %c0_32, %c0_33] : memref<1x8x2x16xf32, #tpu.memory_space<vmem>>, vector<1x1x2x16xf32>
    %65 = vector.shape_cast %64 : vector<1x1x2x16xf32> to vector<2x16xf32>
    %66 = vector.shape_cast %62 : vector<2x16xf32> to vector<1x1x2x16xf32>
    tpu.vector_store %arg4[%c0_31, %63, %c0_32, %c0_33], %66 {strides = array<i32>} : memref<1x8x2x16xf32, #tpu.memory_space<vmem>>, vector<1x1x2x16xf32>,
    %c1_i32_34 = arith.constant 1 : i32
    %c7_i32_35 = arith.constant 7 : i32
    %67 = arith.subi %c7_i32_35, %c1_i32_34 : i32
    %68 = arith.select %0, %67, %c1_i32_34 : i32
    %c0_36 = arith.constant 0 : index
    %69 = arith.index_cast %68 : i32 to index
    %c0_37 = arith.constant 0 : index
    %c0_38 = arith.constant 0 : index
    %70 = vector.load %arg1[%c0_36, %69, %c0_37, %c0_38] : memref<1x8x2x64xf32, #tpu.memory_space<vmem>>, vector<1x1x2x64xf32>
    %71 = vector.shape_cast %70 : vector<1x1x2x64xf32> to vector<2x64xf32>
    %c0_39 = arith.constant 0 : index
    %c0_40 = arith.constant 0 : index
    %72 = vector.load %arg5[%c0_39, %c0_40] : memref<2x16xf32, #tpu.memory_space<vmem>>, vector<2x16xf32>
    %c0_41 = arith.constant 0 : index
    %c0_42 = arith.constant 0 : index
    %c0_43 = arith.constant 0 : index
    %73 = vector.load %arg2[%c0_41, %c0_42, %c0_43] : memref<1x16x64xf32, #tpu.memory_space<vmem>>, vector<1x16x64xf32>
    %74 = vector.shape_cast %73 : vector<1x16x64xf32> to vector<16x64xf32>
    %cst_44 = arith.constant dense<0.000000e+00> : vector<2x64xf32>
    %75 = tpu.matmul %72, %74, %cst_44 {dimension_numbers = #tpu.dot_dimension_numbers<[1], [0], [0], [1], [0, 0, 1, 1], [], []>} : vector<2x16xf32>, vector<16x64xf32>, vector<2x64xf32> -> vector<2x64xf32>
    %76 = arith.addf %71, %75 : vector<2x64xf32>
    %77 = vector.extract_strided_slice %76 {offsets = [0, 0], sizes = [2, 16], strides = [1, 1]} : vector<2x64xf32> to vector<2x16xf32>
    %78 = arith.negf %77 : vector<2x16xf32>
    %79 = math.exp %78 : vector<2x16xf32>
    %cst_45 = arith.constant 1.000000e+00 : f32
    %80 = vector.broadcast %cst_45 : f32 to vector<2x16xf32>
    %81 = arith.addf %80, %79 : vector<2x16xf32>
    %82 = arith.divf %80, %81 : vector<2x16xf32>
    %83 = vector.extract_strided_slice %76 {offsets = [0, 16], sizes = [2, 16], strides = [1, 1]} : vector<2x64xf32> to vector<2x16xf32>
    %84 = arith.negf %83 : vector<2x16xf32>
    %85 = math.exp %84 : vector<2x16xf32>
    %cst_46 = arith.constant 1.000000e+00 : f32
    %86 = vector.broadcast %cst_46 : f32 to vector<2x16xf32>
    %87 = arith.addf %86, %85 : vector<2x16xf32>
    %88 = arith.divf %86, %87 : vector<2x16xf32>
    %89 = vector.extract_strided_slice %76 {offsets = [0, 32], sizes = [2, 16], strides = [1, 1]} : vector<2x64xf32> to vector<2x16xf32>
    %90 = math.tanh %89 : vector<2x16xf32>
    %91 = vector.extract_strided_slice %76 {offsets = [0, 48], sizes = [2, 16], strides = [1, 1]} : vector<2x64xf32> to vector<2x16xf32>
    %92 = arith.negf %91 : vector<2x16xf32>
    %93 = math.exp %92 : vector<2x16xf32>
    %cst_47 = arith.constant 1.000000e+00 : f32
    %94 = vector.broadcast %cst_47 : f32 to vector<2x16xf32>
    %95 = arith.addf %94, %93 : vector<2x16xf32>
    %96 = arith.divf %94, %95 : vector<2x16xf32>
    %c0_48 = arith.constant 0 : index
    %c0_49 = arith.constant 0 : index
    %97 = vector.load %arg6[%c0_48, %c0_49] : memref<2x16xf32, #tpu.memory_space<vmem>>, vector<2x16xf32>
    %98 = arith.mulf %88, %97 : vector<2x16xf32>
    %99 = arith.mulf %82, %90 : vector<2x16xf32>
    %100 = arith.addf %98, %99 : vector<2x16xf32>
    %101 = math.tanh %100 : vector<2x16xf32>
    %102 = arith.mulf %96, %101 : vector<2x16xf32>
    %103 = arith.index_cast %68 : i32 to index
    %c0_50 = arith.constant 0 : index
    %c0_51 = arith.constant 0 : index
    %104 = vector.load %arg3[%103, %c0_50, %c0_51] : memref<8x2x1xf32, #tpu.memory_space<vmem>>, vector<1x2x1xf32>
    %105 = vector.shape_cast %104 : vector<1x2x1xf32> to vector<2x1xf32>
    %cst_52 = arith.constant 1.000000e+00 : f32
    %106 = vector.broadcast %cst_52 : f32 to vector<2x1xf32>
    %107 = arith.subf %106, %105 : vector<2x1xf32>
    %108 = vector.broadcast %105 : vector<2x1xf32> to vector<2x16xf32>
    %109 = arith.mulf %108, %102 : vector<2x16xf32>
    %c0_53 = arith.constant 0 : index
    %c0_54 = arith.constant 0 : index
    %110 = vector.load %arg5[%c0_53, %c0_54] : memref<2x16xf32, #tpu.memory_space<vmem>>, vector<2x16xf32>
    %111 = vector.broadcast %107 : vector<2x1xf32> to vector<2x16xf32>
    %112 = arith.mulf %111, %110 : vector<2x16xf32>
    %113 = arith.addf %109, %112 : vector<2x16xf32>
    %c0_55 = arith.constant 0 : index
    %c0_56 = arith.constant 0 : index
    %114 = vector.load %arg5[%c0_55, %c0_56] : memref<2x16xf32, #tpu.memory_space<vmem>>, vector<2x16xf32>
    tpu.vector_store %arg5[%c0_55, %c0_56], %113 {strides = array<i32>} : memref<2x16xf32, #tpu.memory_space<vmem>>, vector<2x16xf32>,
    %115 = vector.broadcast %105 : vector<2x1xf32> to vector<2x16xf32>
    %116 = arith.mulf %115, %100 : vector<2x16xf32>
    %c0_57 = arith.constant 0 : index
    %c0_58 = arith.constant 0 : index
    %117 = vector.load %arg6[%c0_57, %c0_58] : memref<2x16xf32, #tpu.memory_space<vmem>>, vector<2x16xf32>
    %118 = vector.broadcast %107 : vector<2x1xf32> to vector<2x16xf32>
    %119 = arith.mulf %118, %117 : vector<2x16xf32>
    %120 = arith.addf %116, %119 : vector<2x16xf32>
    %c0_59 = arith.constant 0 : index
    %c0_60 = arith.constant 0 : index
    %121 = vector.load %arg6[%c0_59, %c0_60] : memref<2x16xf32, #tpu.memory_space<vmem>>, vector<2x16xf32>
    tpu.vector_store %arg6[%c0_59, %c0_60], %120 {strides = array<i32>} : memref<2x16xf32, #tpu.memory_space<vmem>>, vector<2x16xf32>,
    %c0_61 = arith.constant 0 : index
    %c0_62 = arith.constant 0 : index
    %122 = vector.load %arg5[%c0_61, %c0_62] : memref<2x16xf32, #tpu.memory_space<vmem>>, vector<2x16xf32>
    %123 = vector.broadcast %105 : vector<2x1xf32> to vector<2x16xf32>
    %124 = arith.mulf %123, %122 : vector<2x16xf32>
    %c0_63 = arith.constant 0 : index
    %125 = arith.index_cast %68 : i32 to index
    %c0_64 = arith.constant 0 : index
    %c0_65 = arith.constant 0 : index
    %126 = vector.load %arg4[%c0_63, %125, %c0_64, %c0_65] : memref<1x8x2x16xf32, #tpu.memory_space<vmem>>, vector<1x1x2x16xf32>
    %127 = vector.shape_cast %126 : vector<1x1x2x16xf32> to vector<2x16xf32>
    %128 = vector.shape_cast %124 : vector<2x16xf32> to vector<1x1x2x16xf32>
    tpu.vector_store %arg4[%c0_63, %125, %c0_64, %c0_65], %128 {strides = array<i32>} : memref<1x8x2x16xf32, #tpu.memory_space<vmem>>, vector<1x1x2x16xf32>,
    %c2_i32 = arith.constant 2 : i32
    %c7_i32_66 = arith.constant 7 : i32
    %129 = arith.subi %c7_i32_66, %c2_i32 : i32
    %130 = arith.select %0, %129, %c2_i32 : i32
    %c0_67 = arith.constant 0 : index
    %131 = arith.index_cast %130 : i32 to index
    %c0_68 = arith.constant 0 : index
    %c0_69 = arith.constant 0 : index
    %132 = vector.load %arg1[%c0_67, %131, %c0_68, %c0_69] : memref<1x8x2x64xf32, #tpu.memory_space<vmem>>, vector<1x1x2x64xf32>
    %133 = vector.shape_cast %132 : vector<1x1x2x64xf32> to vector<2x64xf32>
    %c0_70 = arith.constant 0 : index
    %c0_71 = arith.constant 0 : index
    %134 = vector.load %arg5[%c0_70, %c0_71] : memref<2x16xf32, #tpu.memory_space<vmem>>, vector<2x16xf32>
    %c0_72 = arith.constant 0 : index
    %c0_73 = arith.constant 0 : index
    %c0_74 = arith.constant 0 : index
    %135 = vector.load %arg2[%c0_72, %c0_73, %c0_74] : memref<1x16x64xf32, #tpu.memory_space<vmem>>, vector<1x16x64xf32>
    %136 = vector.shape_cast %135 : vector<1x16x64xf32> to vector<16x64xf32>
    %cst_75 = arith.constant dense<0.000000e+00> : vector<2x64xf32>
    %137 = tpu.matmul %134, %136, %cst_75 {dimension_numbers = #tpu.dot_dimension_numbers<[1], [0], [0], [1], [0, 0, 1, 1], [], []>} : vector<2x16xf32>, vector<16x64xf32>, vector<2x64xf32> -> vector<2x64xf32>
    %138 = arith.addf %133, %137 : vector<2x64xf32>
    %139 = vector.extract_strided_slice %138 {offsets = [0, 0], sizes = [2, 16], strides = [1, 1]} : vector<2x64xf32> to vector<2x16xf32>
    %140 = arith.negf %139 : vector<2x16xf32>
    %141 = math.exp %140 : vector<2x16xf32>
    %cst_76 = arith.constant 1.000000e+00 : f32
    %142 = vector.broadcast %cst_76 : f32 to vector<2x16xf32>
    %143 = arith.addf %142, %141 : vector<2x16xf32>
    %144 = arith.divf %142, %143 : vector<2x16xf32>
    %145 = vector.extract_strided_slice %138 {offsets = [0, 16], sizes = [2, 16], strides = [1, 1]} : vector<2x64xf32> to vector<2x16xf32>
    %146 = arith.negf %145 : vector<2x16xf32>
    %147 = math.exp %146 : vector<2x16xf32>
    %cst_77 = arith.constant 1.000000e+00 : f32
    %148 = vector.broadcast %cst_77 : f32 to vector<2x16xf32>
    %149 = arith.addf %148, %147 : vector<2x16xf32>
    %150 = arith.divf %148, %149 : vector<2x16xf32>
    %151 = vector.extract_strided_slice %138 {offsets = [0, 32], sizes = [2, 16], strides = [1, 1]} : vector<2x64xf32> to vector<2x16xf32>
    %152 = math.tanh %151 : vector<2x16xf32>
    %153 = vector.extract_strided_slice %138 {offsets = [0, 48], sizes = [2, 16], strides = [1, 1]} : vector<2x64xf32> to vector<2x16xf32>
    %154 = arith.negf %153 : vector<2x16xf32>
    %155 = math.exp %154 : vector<2x16xf32>
    %cst_78 = arith.constant 1.000000e+00 : f32
    %156 = vector.broadcast %cst_78 : f32 to vector<2x16xf32>
    %157 = arith.addf %156, %155 : vector<2x16xf32>
    %158 = arith.divf %156, %157 : vector<2x16xf32>
    %c0_79 = arith.constant 0 : index
    %c0_80 = arith.constant 0 : index
    %159 = vector.load %arg6[%c0_79, %c0_80] : memref<2x16xf32, #tpu.memory_space<vmem>>, vector<2x16xf32>
    %160 = arith.mulf %150, %159 : vector<2x16xf32>
    %161 = arith.mulf %144, %152 : vector<2x16xf32>
    %162 = arith.addf %160, %161 : vector<2x16xf32>
    %163 = math.tanh %162 : vector<2x16xf32>
    %164 = arith.mulf %158, %163 : vector<2x16xf32>
    %165 = arith.index_cast %130 : i32 to index
    %c0_81 = arith.constant 0 : index
    %c0_82 = arith.constant 0 : index
    %166 = vector.load %arg3[%165, %c0_81, %c0_82] : memref<8x2x1xf32, #tpu.memory_space<vmem>>, vector<1x2x1xf32>
    %167 = vector.shape_cast %166 : vector<1x2x1xf32> to vector<2x1xf32>
    %cst_83 = arith.constant 1.000000e+00 : f32
    %168 = vector.broadcast %cst_83 : f32 to vector<2x1xf32>
    %169 = arith.subf %168, %167 : vector<2x1xf32>
    %170 = vector.broadcast %167 : vector<2x1xf32> to vector<2x16xf32>
    %171 = arith.mulf %170, %164 : vector<2x16xf32>
    %c0_84 = arith.constant 0 : index
    %c0_85 = arith.constant 0 : index
    %172 = vector.load %arg5[%c0_84, %c0_85] : memref<2x16xf32, #tpu.memory_space<vmem>>, vector<2x16xf32>
    %173 = vector.broadcast %169 : vector<2x1xf32> to vector<2x16xf32>
    %174 = arith.mulf %173, %172 : vector<2x16xf32>
    %175 = arith.addf %171, %174 : vector<2x16xf32>
    %c0_86 = arith.constant 0 : index
    %c0_87 = arith.constant 0 : index
    %176 = vector.load %arg5[%c0_86, %c0_87] : memref<2x16xf32, #tpu.memory_space<vmem>>, vector<2x16xf32>
    tpu.vector_store %arg5[%c0_86, %c0_87], %175 {strides = array<i32>} : memref<2x16xf32, #tpu.memory_space<vmem>>, vector<2x16xf32>,
    %177 = vector.broadcast %167 : vector<2x1xf32> to vector<2x16xf32>
    %178 = arith.mulf %177, %162 : vector<2x16xf32>
    %c0_88 = arith.constant 0 : index
    %c0_89 = arith.constant 0 : index
    %179 = vector.load %arg6[%c0_88, %c0_89] : memref<2x16xf32, #tpu.memory_space<vmem>>, vector<2x16xf32>
    %180 = vector.broadcast %169 : vector<2x1xf32> to vector<2x16xf32>
    %181 = arith.mulf %180, %179 : vector<2x16xf32>
    %182 = arith.addf %178, %181 : vector<2x16xf32>
    %c0_90 = arith.constant 0 : index
    %c0_91 = arith.constant 0 : index
    %183 = vector.load %arg6[%c0_90, %c0_91] : memref<2x16xf32, #tpu.memory_space<vmem>>, vector<2x16xf32>
    tpu.vector_store %arg6[%c0_90, %c0_91], %182 {strides = array<i32>} : memref<2x16xf32, #tpu.memory_space<vmem>>, vector<2x16xf32>,
    %c0_92 = arith.constant 0 : index
    %c0_93 = arith.constant 0 : index
    %184 = vector.load %arg5[%c0_92, %c0_93] : memref<2x16xf32, #tpu.memory_space<vmem>>, vector<2x16xf32>
    %185 = vector.broadcast %167 : vector<2x1xf32> to vector<2x16xf32>
    %186 = arith.mulf %185, %184 : vector<2x16xf32>
    %c0_94 = arith.constant 0 : index
    %187 = arith.index_cast %130 : i32 to index
    %c0_95 = arith.constant 0 : index
    %c0_96 = arith.constant 0 : index
    %188 = vector.load %arg4[%c0_94, %187, %c0_95, %c0_96] : memref<1x8x2x16xf32, #tpu.memory_space<vmem>>, vector<1x1x2x16xf32>
    %189 = vector.shape_cast %188 : vector<1x1x2x16xf32> to vector<2x16xf32>
    %190 = vector.shape_cast %186 : vector<2x16xf32> to vector<1x1x2x16xf32>
    tpu.vector_store %arg4[%c0_94, %187, %c0_95, %c0_96], %190 {strides = array<i32>} : memref<1x8x2x16xf32, #tpu.memory_space<vmem>>, vector<1x1x2x16xf32>,
    %c3_i32 = arith.constant 3 : i32
    %c7_i32_97 = arith.constant 7 : i32
    %191 = arith.subi %c7_i32_97, %c3_i32 : i32
    %192 = arith.select %0, %191, %c3_i32 : i32
    %c0_98 = arith.constant 0 : index
    %193 = arith.index_cast %192 : i32 to index
    %c0_99 = arith.constant 0 : index
    %c0_100 = arith.constant 0 : index
    %194 = vector.load %arg1[%c0_98, %193, %c0_99, %c0_100] : memref<1x8x2x64xf32, #tpu.memory_space<vmem>>, vector<1x1x2x64xf32>
    %195 = vector.shape_cast %194 : vector<1x1x2x64xf32> to vector<2x64xf32>
    %c0_101 = arith.constant 0 : index
    %c0_102 = arith.constant 0 : index
    %196 = vector.load %arg5[%c0_101, %c0_102] : memref<2x16xf32, #tpu.memory_space<vmem>>, vector<2x16xf32>
    %c0_103 = arith.constant 0 : index
    %c0_104 = arith.constant 0 : index
    %c0_105 = arith.constant 0 : index
    %197 = vector.load %arg2[%c0_103, %c0_104, %c0_105] : memref<1x16x64xf32, #tpu.memory_space<vmem>>, vector<1x16x64xf32>
    %198 = vector.shape_cast %197 : vector<1x16x64xf32> to vector<16x64xf32>
    %cst_106 = arith.constant dense<0.000000e+00> : vector<2x64xf32>
    %199 = tpu.matmul %196, %198, %cst_106 {dimension_numbers = #tpu.dot_dimension_numbers<[1], [0], [0], [1], [0, 0, 1, 1], [], []>} : vector<2x16xf32>, vector<16x64xf32>, vector<2x64xf32> -> vector<2x64xf32>
    %200 = arith.addf %195, %199 : vector<2x64xf32>
    %201 = vector.extract_strided_slice %200 {offsets = [0, 0], sizes = [2, 16], strides = [1, 1]} : vector<2x64xf32> to vector<2x16xf32>
    %202 = arith.negf %201 : vector<2x16xf32>
    %203 = math.exp %202 : vector<2x16xf32>
    %cst_107 = arith.constant 1.000000e+00 : f32
    %204 = vector.broadcast %cst_107 : f32 to vector<2x16xf32>
    %205 = arith.addf %204, %203 : vector<2x16xf32>
    %206 = arith.divf %204, %205 : vector<2x16xf32>
    %207 = vector.extract_strided_slice %200 {offsets = [0, 16], sizes = [2, 16], strides = [1, 1]} : vector<2x64xf32> to vector<2x16xf32>
    %208 = arith.negf %207 : vector<2x16xf32>
    %209 = math.exp %208 : vector<2x16xf32>
    %cst_108 = arith.constant 1.000000e+00 : f32
    %210 = vector.broadcast %cst_108 : f32 to vector<2x16xf32>
    %211 = arith.addf %210, %209 : vector<2x16xf32>
    %212 = arith.divf %210, %211 : vector<2x16xf32>
    %213 = vector.extract_strided_slice %200 {offsets = [0, 32], sizes = [2, 16], strides = [1, 1]} : vector<2x64xf32> to vector<2x16xf32>
    %214 = math.tanh %213 : vector<2x16xf32>
    %215 = vector.extract_strided_slice %200 {offsets = [0, 48], sizes = [2, 16], strides = [1, 1]} : vector<2x64xf32> to vector<2x16xf32>
    %216 = arith.negf %215 : vector<2x16xf32>
    %217 = math.exp %216 : vector<2x16xf32>
    %cst_109 = arith.constant 1.000000e+00 : f32
    %218 = vector.broadcast %cst_109 : f32 to vector<2x16xf32>
    %219 = arith.addf %218, %217 : vector<2x16xf32>
    %220 = arith.divf %218, %219 : vector<2x16xf32>
    %c0_110 = arith.constant 0 : index
    %c0_111 = arith.constant 0 : index
    %221 = vector.load %arg6[%c0_110, %c0_111] : memref<2x16xf32, #tpu.memory_space<vmem>>, vector<2x16xf32>
    %222 = arith.mulf %212, %221 : vector<2x16xf32>
    %223 = arith.mulf %206, %214 : vector<2x16xf32>
    %224 = arith.addf %222, %223 : vector<2x16xf32>
    %225 = math.tanh %224 : vector<2x16xf32>
    %226 = arith.mulf %220, %225 : vector<2x16xf32>
    %227 = arith.index_cast %192 : i32 to index
    %c0_112 = arith.constant 0 : index
    %c0_113 = arith.constant 0 : index
    %228 = vector.load %arg3[%227, %c0_112, %c0_113] : memref<8x2x1xf32, #tpu.memory_space<vmem>>, vector<1x2x1xf32>
    %229 = vector.shape_cast %228 : vector<1x2x1xf32> to vector<2x1xf32>
    %cst_114 = arith.constant 1.000000e+00 : f32
    %230 = vector.broadcast %cst_114 : f32 to vector<2x1xf32>
    %231 = arith.subf %230, %229 : vector<2x1xf32>
    %232 = vector.broadcast %229 : vector<2x1xf32> to vector<2x16xf32>
    %233 = arith.mulf %232, %226 : vector<2x16xf32>
    %c0_115 = arith.constant 0 : index
    %c0_116 = arith.constant 0 : index
    %234 = vector.load %arg5[%c0_115, %c0_116] : memref<2x16xf32, #tpu.memory_space<vmem>>, vector<2x16xf32>
    %235 = vector.broadcast %231 : vector<2x1xf32> to vector<2x16xf32>
    %236 = arith.mulf %235, %234 : vector<2x16xf32>
    %237 = arith.addf %233, %236 : vector<2x16xf32>
    %c0_117 = arith.constant 0 : index
    %c0_118 = arith.constant 0 : index
    %238 = vector.load %arg5[%c0_117, %c0_118] : memref<2x16xf32, #tpu.memory_space<vmem>>, vector<2x16xf32>
    tpu.vector_store %arg5[%c0_117, %c0_118], %237 {strides = array<i32>} : memref<2x16xf32, #tpu.memory_space<vmem>>, vector<2x16xf32>,
    %239 = vector.broadcast %229 : vector<2x1xf32> to vector<2x16xf32>
    %240 = arith.mulf %239, %224 : vector<2x16xf32>
    %c0_119 = arith.constant 0 : index
    %c0_120 = arith.constant 0 : index
    %241 = vector.load %arg6[%c0_119, %c0_120] : memref<2x16xf32, #tpu.memory_space<vmem>>, vector<2x16xf32>
    %242 = vector.broadcast %231 : vector<2x1xf32> to vector<2x16xf32>
    %243 = arith.mulf %242, %241 : vector<2x16xf32>
    %244 = arith.addf %240, %243 : vector<2x16xf32>
    %c0_121 = arith.constant 0 : index
    %c0_122 = arith.constant 0 : index
    %245 = vector.load %arg6[%c0_121, %c0_122] : memref<2x16xf32, #tpu.memory_space<vmem>>, vector<2x16xf32>
    tpu.vector_store %arg6[%c0_121, %c0_122], %244 {strides = array<i32>} : memref<2x16xf32, #tpu.memory_space<vmem>>, vector<2x16xf32>,
    %c0_123 = arith.constant 0 : index
    %c0_124 = arith.constant 0 : index
    %246 = vector.load %arg5[%c0_123, %c0_124] : memref<2x16xf32, #tpu.memory_space<vmem>>, vector<2x16xf32>
    %247 = vector.broadcast %229 : vector<2x1xf32> to vector<2x16xf32>
    %248 = arith.mulf %247, %246 : vector<2x16xf32>
    %c0_125 = arith.constant 0 : index
    %249 = arith.index_cast %192 : i32 to index
    %c0_126 = arith.constant 0 : index
    %c0_127 = arith.constant 0 : index
    %250 = vector.load %arg4[%c0_125, %249, %c0_126, %c0_127] : memref<1x8x2x16xf32, #tpu.memory_space<vmem>>, vector<1x1x2x16xf32>
    %251 = vector.shape_cast %250 : vector<1x1x2x16xf32> to vector<2x16xf32>
    %252 = vector.shape_cast %248 : vector<2x16xf32> to vector<1x1x2x16xf32>
    tpu.vector_store %arg4[%c0_125, %249, %c0_126, %c0_127], %252 {strides = array<i32>} : memref<1x8x2x16xf32, #tpu.memory_space<vmem>>, vector<1x1x2x16xf32>,
    %c4_i32 = arith.constant 4 : i32
    %c7_i32_128 = arith.constant 7 : i32
    %253 = arith.subi %c7_i32_128, %c4_i32 : i32
    %254 = arith.select %0, %253, %c4_i32 : i32
    %c0_129 = arith.constant 0 : index
    %255 = arith.index_cast %254 : i32 to index
    %c0_130 = arith.constant 0 : index
    %c0_131 = arith.constant 0 : index
    %256 = vector.load %arg1[%c0_129, %255, %c0_130, %c0_131] : memref<1x8x2x64xf32, #tpu.memory_space<vmem>>, vector<1x1x2x64xf32>
    %257 = vector.shape_cast %256 : vector<1x1x2x64xf32> to vector<2x64xf32>
    %c0_132 = arith.constant 0 : index
    %c0_133 = arith.constant 0 : index
    %258 = vector.load %arg5[%c0_132, %c0_133] : memref<2x16xf32, #tpu.memory_space<vmem>>, vector<2x16xf32>
    %c0_134 = arith.constant 0 : index
    %c0_135 = arith.constant 0 : index
    %c0_136 = arith.constant 0 : index
    %259 = vector.load %arg2[%c0_134, %c0_135, %c0_136] : memref<1x16x64xf32, #tpu.memory_space<vmem>>, vector<1x16x64xf32>
    %260 = vector.shape_cast %259 : vector<1x16x64xf32> to vector<16x64xf32>
    %cst_137 = arith.constant dense<0.000000e+00> : vector<2x64xf32>
    %261 = tpu.matmul %258, %260, %cst_137 {dimension_numbers = #tpu.dot_dimension_numbers<[1], [0], [0], [1], [0, 0, 1, 1], [], []>} : vector<2x16xf32>, vector<16x64xf32>, vector<2x64xf32> -> vector<2x64xf32>
    %262 = arith.addf %257, %261 : vector<2x64xf32>
    %263 = vector.extract_strided_slice %262 {offsets = [0, 0], sizes = [2, 16], strides = [1, 1]} : vector<2x64xf32> to vector<2x16xf32>
    %264 = arith.negf %263 : vector<2x16xf32>
    %265 = math.exp %264 : vector<2x16xf32>
    %cst_138 = arith.constant 1.000000e+00 : f32
    %266 = vector.broadcast %cst_138 : f32 to vector<2x16xf32>
    %267 = arith.addf %266, %265 : vector<2x16xf32>
    %268 = arith.divf %266, %267 : vector<2x16xf32>
    %269 = vector.extract_strided_slice %262 {offsets = [0, 16], sizes = [2, 16], strides = [1, 1]} : vector<2x64xf32> to vector<2x16xf32>
    %270 = arith.negf %269 : vector<2x16xf32>
    %271 = math.exp %270 : vector<2x16xf32>
    %cst_139 = arith.constant 1.000000e+00 : f32
    %272 = vector.broadcast %cst_139 : f32 to vector<2x16xf32>
    %273 = arith.addf %272, %271 : vector<2x16xf32>
    %274 = arith.divf %272, %273 : vector<2x16xf32>
    %275 = vector.extract_strided_slice %262 {offsets = [0, 32], sizes = [2, 16], strides = [1, 1]} : vector<2x64xf32> to vector<2x16xf32>
    %276 = math.tanh %275 : vector<2x16xf32>
    %277 = vector.extract_strided_slice %262 {offsets = [0, 48], sizes = [2, 16], strides = [1, 1]} : vector<2x64xf32> to vector<2x16xf32>
    %278 = arith.negf %277 : vector<2x16xf32>
    %279 = math.exp %278 : vector<2x16xf32>
    %cst_140 = arith.constant 1.000000e+00 : f32
    %280 = vector.broadcast %cst_140 : f32 to vector<2x16xf32>
    %281 = arith.addf %280, %279 : vector<2x16xf32>
    %282 = arith.divf %280, %281 : vector<2x16xf32>
    %c0_141 = arith.constant 0 : index
    %c0_142 = arith.constant 0 : index
    %283 = vector.load %arg6[%c0_141, %c0_142] : memref<2x16xf32, #tpu.memory_space<vmem>>, vector<2x16xf32>
    %284 = arith.mulf %274, %283 : vector<2x16xf32>
    %285 = arith.mulf %268, %276 : vector<2x16xf32>
    %286 = arith.addf %284, %285 : vector<2x16xf32>
    %287 = math.tanh %286 : vector<2x16xf32>
    %288 = arith.mulf %282, %287 : vector<2x16xf32>
    %289 = arith.index_cast %254 : i32 to index
    %c0_143 = arith.constant 0 : index
    %c0_144 = arith.constant 0 : index
    %290 = vector.load %arg3[%289, %c0_143, %c0_144] : memref<8x2x1xf32, #tpu.memory_space<vmem>>, vector<1x2x1xf32>
    %291 = vector.shape_cast %290 : vector<1x2x1xf32> to vector<2x1xf32>
    %cst_145 = arith.constant 1.000000e+00 : f32
    %292 = vector.broadcast %cst_145 : f32 to vector<2x1xf32>
    %293 = arith.subf %292, %291 : vector<2x1xf32>
    %294 = vector.broadcast %291 : vector<2x1xf32> to vector<2x16xf32>
    %295 = arith.mulf %294, %288 : vector<2x16xf32>
    %c0_146 = arith.constant 0 : index
    %c0_147 = arith.constant 0 : index
    %296 = vector.load %arg5[%c0_146, %c0_147] : memref<2x16xf32, #tpu.memory_space<vmem>>, vector<2x16xf32>
    %297 = vector.broadcast %293 : vector<2x1xf32> to vector<2x16xf32>
    %298 = arith.mulf %297, %296 : vector<2x16xf32>
    %299 = arith.addf %295, %298 : vector<2x16xf32>
    %c0_148 = arith.constant 0 : index
    %c0_149 = arith.constant 0 : index
    %300 = vector.load %arg5[%c0_148, %c0_149] : memref<2x16xf32, #tpu.memory_space<vmem>>, vector<2x16xf32>
    tpu.vector_store %arg5[%c0_148, %c0_149], %299 {strides = array<i32>} : memref<2x16xf32, #tpu.memory_space<vmem>>, vector<2x16xf32>,
    %301 = vector.broadcast %291 : vector<2x1xf32> to vector<2x16xf32>
    %302 = arith.mulf %301, %286 : vector<2x16xf32>
    %c0_150 = arith.constant 0 : index
    %c0_151 = arith.constant 0 : index
    %303 = vector.load %arg6[%c0_150, %c0_151] : memref<2x16xf32, #tpu.memory_space<vmem>>, vector<2x16xf32>
    %304 = vector.broadcast %293 : vector<2x1xf32> to vector<2x16xf32>
    %305 = arith.mulf %304, %303 : vector<2x16xf32>
    %306 = arith.addf %302, %305 : vector<2x16xf32>
    %c0_152 = arith.constant 0 : index
    %c0_153 = arith.constant 0 : index
    %307 = vector.load %arg6[%c0_152, %c0_153] : memref<2x16xf32, #tpu.memory_space<vmem>>, vector<2x16xf32>
    tpu.vector_store %arg6[%c0_152, %c0_153], %306 {strides = array<i32>} : memref<2x16xf32, #tpu.memory_space<vmem>>, vector<2x16xf32>,
    %c0_154 = arith.constant 0 : index
    %c0_155 = arith.constant 0 : index
    %308 = vector.load %arg5[%c0_154, %c0_155] : memref<2x16xf32, #tpu.memory_space<vmem>>, vector<2x16xf32>
    %309 = vector.broadcast %291 : vector<2x1xf32> to vector<2x16xf32>
    %310 = arith.mulf %309, %308 : vector<2x16xf32>
    %c0_156 = arith.constant 0 : index
    %311 = arith.index_cast %254 : i32 to index
    %c0_157 = arith.constant 0 : index
    %c0_158 = arith.constant 0 : index
    %312 = vector.load %arg4[%c0_156, %311, %c0_157, %c0_158] : memref<1x8x2x16xf32, #tpu.memory_space<vmem>>, vector<1x1x2x16xf32>
    %313 = vector.shape_cast %312 : vector<1x1x2x16xf32> to vector<2x16xf32>
    %314 = vector.shape_cast %310 : vector<2x16xf32> to vector<1x1x2x16xf32>
    tpu.vector_store %arg4[%c0_156, %311, %c0_157, %c0_158], %314 {strides = array<i32>} : memref<1x8x2x16xf32, #tpu.memory_space<vmem>>, vector<1x1x2x16xf32>,
    %c5_i32 = arith.constant 5 : i32
    %c7_i32_159 = arith.constant 7 : i32
    %315 = arith.subi %c7_i32_159, %c5_i32 : i32
    %316 = arith.select %0, %315, %c5_i32 : i32
    %c0_160 = arith.constant 0 : index
    %317 = arith.index_cast %316 : i32 to index
    %c0_161 = arith.constant 0 : index
    %c0_162 = arith.constant 0 : index
    %318 = vector.load %arg1[%c0_160, %317, %c0_161, %c0_162] : memref<1x8x2x64xf32, #tpu.memory_space<vmem>>, vector<1x1x2x64xf32>
    %319 = vector.shape_cast %318 : vector<1x1x2x64xf32> to vector<2x64xf32>
    %c0_163 = arith.constant 0 : index
    %c0_164 = arith.constant 0 : index
    %320 = vector.load %arg5[%c0_163, %c0_164] : memref<2x16xf32, #tpu.memory_space<vmem>>, vector<2x16xf32>
    %c0_165 = arith.constant 0 : index
    %c0_166 = arith.constant 0 : index
    %c0_167 = arith.constant 0 : index
    %321 = vector.load %arg2[%c0_165, %c0_166, %c0_167] : memref<1x16x64xf32, #tpu.memory_space<vmem>>, vector<1x16x64xf32>
    %322 = vector.shape_cast %321 : vector<1x16x64xf32> to vector<16x64xf32>
    %cst_168 = arith.constant dense<0.000000e+00> : vector<2x64xf32>
    %323 = tpu.matmul %320, %322, %cst_168 {dimension_numbers = #tpu.dot_dimension_numbers<[1], [0], [0], [1], [0, 0, 1, 1], [], []>} : vector<2x16xf32>, vector<16x64xf32>, vector<2x64xf32> -> vector<2x64xf32>
    %324 = arith.addf %319, %323 : vector<2x64xf32>
    %325 = vector.extract_strided_slice %324 {offsets = [0, 0], sizes = [2, 16], strides = [1, 1]} : vector<2x64xf32> to vector<2x16xf32>
    %326 = arith.negf %325 : vector<2x16xf32>
    %327 = math.exp %326 : vector<2x16xf32>
    %cst_169 = arith.constant 1.000000e+00 : f32
    %328 = vector.broadcast %cst_169 : f32 to vector<2x16xf32>
    %329 = arith.addf %328, %327 : vector<2x16xf32>
    %330 = arith.divf %328, %329 : vector<2x16xf32>
    %331 = vector.extract_strided_slice %324 {offsets = [0, 16], sizes = [2, 16], strides = [1, 1]} : vector<2x64xf32> to vector<2x16xf32>
    %332 = arith.negf %331 : vector<2x16xf32>
    %333 = math.exp %332 : vector<2x16xf32>
    %cst_170 = arith.constant 1.000000e+00 : f32
    %334 = vector.broadcast %cst_170 : f32 to vector<2x16xf32>
    %335 = arith.addf %334, %333 : vector<2x16xf32>
    %336 = arith.divf %334, %335 : vector<2x16xf32>
    %337 = vector.extract_strided_slice %324 {offsets = [0, 32], sizes = [2, 16], strides = [1, 1]} : vector<2x64xf32> to vector<2x16xf32>
    %338 = math.tanh %337 : vector<2x16xf32>
    %339 = vector.extract_strided_slice %324 {offsets = [0, 48], sizes = [2, 16], strides = [1, 1]} : vector<2x64xf32> to vector<2x16xf32>
    %340 = arith.negf %339 : vector<2x16xf32>
    %341 = math.exp %340 : vector<2x16xf32>
    %cst_171 = arith.constant 1.000000e+00 : f32
    %342 = vector.broadcast %cst_171 : f32 to vector<2x16xf32>
    %343 = arith.addf %342, %341 : vector<2x16xf32>
    %344 = arith.divf %342, %343 : vector<2x16xf32>
    %c0_172 = arith.constant 0 : index
    %c0_173 = arith.constant 0 : index
    %345 = vector.load %arg6[%c0_172, %c0_173] : memref<2x16xf32, #tpu.memory_space<vmem>>, vector<2x16xf32>
    %346 = arith.mulf %336, %345 : vector<2x16xf32>
    %347 = arith.mulf %330, %338 : vector<2x16xf32>
    %348 = arith.addf %346, %347 : vector<2x16xf32>
    %349 = math.tanh %348 : vector<2x16xf32>
    %350 = arith.mulf %344, %349 : vector<2x16xf32>
    %351 = arith.index_cast %316 : i32 to index
    %c0_174 = arith.constant 0 : index
    %c0_175 = arith.constant 0 : index
    %352 = vector.load %arg3[%351, %c0_174, %c0_175] : memref<8x2x1xf32, #tpu.memory_space<vmem>>, vector<1x2x1xf32>
    %353 = vector.shape_cast %352 : vector<1x2x1xf32> to vector<2x1xf32>
    %cst_176 = arith.constant 1.000000e+00 : f32
    %354 = vector.broadcast %cst_176 : f32 to vector<2x1xf32>
    %355 = arith.subf %354, %353 : vector<2x1xf32>
    %356 = vector.broadcast %353 : vector<2x1xf32> to vector<2x16xf32>
    %357 = arith.mulf %356, %350 : vector<2x16xf32>
    %c0_177 = arith.constant 0 : index
    %c0_178 = arith.constant 0 : index
    %358 = vector.load %arg5[%c0_177, %c0_178] : memref<2x16xf32, #tpu.memory_space<vmem>>, vector<2x16xf32>
    %359 = vector.broadcast %355 : vector<2x1xf32> to vector<2x16xf32>
    %360 = arith.mulf %359, %358 : vector<2x16xf32>
    %361 = arith.addf %357, %360 : vector<2x16xf32>
    %c0_179 = arith.constant 0 : index
    %c0_180 = arith.constant 0 : index
    %362 = vector.load %arg5[%c0_179, %c0_180] : memref<2x16xf32, #tpu.memory_space<vmem>>, vector<2x16xf32>
    tpu.vector_store %arg5[%c0_179, %c0_180], %361 {strides = array<i32>} : memref<2x16xf32, #tpu.memory_space<vmem>>, vector<2x16xf32>,
    %363 = vector.broadcast %353 : vector<2x1xf32> to vector<2x16xf32>
    %364 = arith.mulf %363, %348 : vector<2x16xf32>
    %c0_181 = arith.constant 0 : index
    %c0_182 = arith.constant 0 : index
    %365 = vector.load %arg6[%c0_181, %c0_182] : memref<2x16xf32, #tpu.memory_space<vmem>>, vector<2x16xf32>
    %366 = vector.broadcast %355 : vector<2x1xf32> to vector<2x16xf32>
    %367 = arith.mulf %366, %365 : vector<2x16xf32>
    %368 = arith.addf %364, %367 : vector<2x16xf32>
    %c0_183 = arith.constant 0 : index
    %c0_184 = arith.constant 0 : index
    %369 = vector.load %arg6[%c0_183, %c0_184] : memref<2x16xf32, #tpu.memory_space<vmem>>, vector<2x16xf32>
    tpu.vector_store %arg6[%c0_183, %c0_184], %368 {strides = array<i32>} : memref<2x16xf32, #tpu.memory_space<vmem>>, vector<2x16xf32>,
    %c0_185 = arith.constant 0 : index
    %c0_186 = arith.constant 0 : index
    %370 = vector.load %arg5[%c0_185, %c0_186] : memref<2x16xf32, #tpu.memory_space<vmem>>, vector<2x16xf32>
    %371 = vector.broadcast %353 : vector<2x1xf32> to vector<2x16xf32>
    %372 = arith.mulf %371, %370 : vector<2x16xf32>
    %c0_187 = arith.constant 0 : index
    %373 = arith.index_cast %316 : i32 to index
    %c0_188 = arith.constant 0 : index
    %c0_189 = arith.constant 0 : index
    %374 = vector.load %arg4[%c0_187, %373, %c0_188, %c0_189] : memref<1x8x2x16xf32, #tpu.memory_space<vmem>>, vector<1x1x2x16xf32>
    %375 = vector.shape_cast %374 : vector<1x1x2x16xf32> to vector<2x16xf32>
    %376 = vector.shape_cast %372 : vector<2x16xf32> to vector<1x1x2x16xf32>
    tpu.vector_store %arg4[%c0_187, %373, %c0_188, %c0_189], %376 {strides = array<i32>} : memref<1x8x2x16xf32, #tpu.memory_space<vmem>>, vector<1x1x2x16xf32>,
    %c6_i32 = arith.constant 6 : i32
    %c7_i32_190 = arith.constant 7 : i32
    %377 = arith.subi %c7_i32_190, %c6_i32 : i32
    %378 = arith.select %0, %377, %c6_i32 : i32
    %c0_191 = arith.constant 0 : index
    %379 = arith.index_cast %378 : i32 to index
    %c0_192 = arith.constant 0 : index
    %c0_193 = arith.constant 0 : index
    %380 = vector.load %arg1[%c0_191, %379, %c0_192, %c0_193] : memref<1x8x2x64xf32, #tpu.memory_space<vmem>>, vector<1x1x2x64xf32>
    %381 = vector.shape_cast %380 : vector<1x1x2x64xf32> to vector<2x64xf32>
    %c0_194 = arith.constant 0 : index
    %c0_195 = arith.constant 0 : index
    %382 = vector.load %arg5[%c0_194, %c0_195] : memref<2x16xf32, #tpu.memory_space<vmem>>, vector<2x16xf32>
    %c0_196 = arith.constant 0 : index
    %c0_197 = arith.constant 0 : index
    %c0_198 = arith.constant 0 : index
    %383 = vector.load %arg2[%c0_196, %c0_197, %c0_198] : memref<1x16x64xf32, #tpu.memory_space<vmem>>, vector<1x16x64xf32>
    %384 = vector.shape_cast %383 : vector<1x16x64xf32> to vector<16x64xf32>
    %cst_199 = arith.constant dense<0.000000e+00> : vector<2x64xf32>
    %385 = tpu.matmul %382, %384, %cst_199 {dimension_numbers = #tpu.dot_dimension_numbers<[1], [0], [0], [1], [0, 0, 1, 1], [], []>} : vector<2x16xf32>, vector<16x64xf32>, vector<2x64xf32> -> vector<2x64xf32>
    %386 = arith.addf %381, %385 : vector<2x64xf32>
    %387 = vector.extract_strided_slice %386 {offsets = [0, 0], sizes = [2, 16], strides = [1, 1]} : vector<2x64xf32> to vector<2x16xf32>
    %388 = arith.negf %387 : vector<2x16xf32>
    %389 = math.exp %388 : vector<2x16xf32>
    %cst_200 = arith.constant 1.000000e+00 : f32
    %390 = vector.broadcast %cst_200 : f32 to vector<2x16xf32>
    %391 = arith.addf %390, %389 : vector<2x16xf32>
    %392 = arith.divf %390, %391 : vector<2x16xf32>
    %393 = vector.extract_strided_slice %386 {offsets = [0, 16], sizes = [2, 16], strides = [1, 1]} : vector<2x64xf32> to vector<2x16xf32>
    %394 = arith.negf %393 : vector<2x16xf32>
    %395 = math.exp %394 : vector<2x16xf32>
    %cst_201 = arith.constant 1.000000e+00 : f32
    %396 = vector.broadcast %cst_201 : f32 to vector<2x16xf32>
    %397 = arith.addf %396, %395 : vector<2x16xf32>
    %398 = arith.divf %396, %397 : vector<2x16xf32>
    %399 = vector.extract_strided_slice %386 {offsets = [0, 32], sizes = [2, 16], strides = [1, 1]} : vector<2x64xf32> to vector<2x16xf32>
    %400 = math.tanh %399 : vector<2x16xf32>
    %401 = vector.extract_strided_slice %386 {offsets = [0, 48], sizes = [2, 16], strides = [1, 1]} : vector<2x64xf32> to vector<2x16xf32>
    %402 = arith.negf %401 : vector<2x16xf32>
    %403 = math.exp %402 : vector<2x16xf32>
    %cst_202 = arith.constant 1.000000e+00 : f32
    %404 = vector.broadcast %cst_202 : f32 to vector<2x16xf32>
    %405 = arith.addf %404, %403 : vector<2x16xf32>
    %406 = arith.divf %404, %405 : vector<2x16xf32>
    %c0_203 = arith.constant 0 : index
    %c0_204 = arith.constant 0 : index
    %407 = vector.load %arg6[%c0_203, %c0_204] : memref<2x16xf32, #tpu.memory_space<vmem>>, vector<2x16xf32>
    %408 = arith.mulf %398, %407 : vector<2x16xf32>
    %409 = arith.mulf %392, %400 : vector<2x16xf32>
    %410 = arith.addf %408, %409 : vector<2x16xf32>
    %411 = math.tanh %410 : vector<2x16xf32>
    %412 = arith.mulf %406, %411 : vector<2x16xf32>
    %413 = arith.index_cast %378 : i32 to index
    %c0_205 = arith.constant 0 : index
    %c0_206 = arith.constant 0 : index
    %414 = vector.load %arg3[%413, %c0_205, %c0_206] : memref<8x2x1xf32, #tpu.memory_space<vmem>>, vector<1x2x1xf32>
    %415 = vector.shape_cast %414 : vector<1x2x1xf32> to vector<2x1xf32>
    %cst_207 = arith.constant 1.000000e+00 : f32
    %416 = vector.broadcast %cst_207 : f32 to vector<2x1xf32>
    %417 = arith.subf %416, %415 : vector<2x1xf32>
    %418 = vector.broadcast %415 : vector<2x1xf32> to vector<2x16xf32>
    %419 = arith.mulf %418, %412 : vector<2x16xf32>
    %c0_208 = arith.constant 0 : index
    %c0_209 = arith.constant 0 : index
    %420 = vector.load %arg5[%c0_208, %c0_209] : memref<2x16xf32, #tpu.memory_space<vmem>>, vector<2x16xf32>
    %421 = vector.broadcast %417 : vector<2x1xf32> to vector<2x16xf32>
    %422 = arith.mulf %421, %420 : vector<2x16xf32>
    %423 = arith.addf %419, %422 : vector<2x16xf32>
    %c0_210 = arith.constant 0 : index
    %c0_211 = arith.constant 0 : index
    %424 = vector.load %arg5[%c0_210, %c0_211] : memref<2x16xf32, #tpu.memory_space<vmem>>, vector<2x16xf32>
    tpu.vector_store %arg5[%c0_210, %c0_211], %423 {strides = array<i32>} : memref<2x16xf32, #tpu.memory_space<vmem>>, vector<2x16xf32>,
    %425 = vector.broadcast %415 : vector<2x1xf32> to vector<2x16xf32>
    %426 = arith.mulf %425, %410 : vector<2x16xf32>
    %c0_212 = arith.constant 0 : index
    %c0_213 = arith.constant 0 : index
    %427 = vector.load %arg6[%c0_212, %c0_213] : memref<2x16xf32, #tpu.memory_space<vmem>>, vector<2x16xf32>
    %428 = vector.broadcast %417 : vector<2x1xf32> to vector<2x16xf32>
    %429 = arith.mulf %428, %427 : vector<2x16xf32>
    %430 = arith.addf %426, %429 : vector<2x16xf32>
    %c0_214 = arith.constant 0 : index
    %c0_215 = arith.constant 0 : index
    %431 = vector.load %arg6[%c0_214, %c0_215] : memref<2x16xf32, #tpu.memory_space<vmem>>, vector<2x16xf32>
    tpu.vector_store %arg6[%c0_214, %c0_215], %430 {strides = array<i32>} : memref<2x16xf32, #tpu.memory_space<vmem>>, vector<2x16xf32>,
    %c0_216 = arith.constant 0 : index
    %c0_217 = arith.constant 0 : index
    %432 = vector.load %arg5[%c0_216, %c0_217] : memref<2x16xf32, #tpu.memory_space<vmem>>, vector<2x16xf32>
    %433 = vector.broadcast %415 : vector<2x1xf32> to vector<2x16xf32>
    %434 = arith.mulf %433, %432 : vector<2x16xf32>
    %c0_218 = arith.constant 0 : index
    %435 = arith.index_cast %378 : i32 to index
    %c0_219 = arith.constant 0 : index
    %c0_220 = arith.constant 0 : index
    %436 = vector.load %arg4[%c0_218, %435, %c0_219, %c0_220] : memref<1x8x2x16xf32, #tpu.memory_space<vmem>>, vector<1x1x2x16xf32>
    %437 = vector.shape_cast %436 : vector<1x1x2x16xf32> to vector<2x16xf32>
    %438 = vector.shape_cast %434 : vector<2x16xf32> to vector<1x1x2x16xf32>
    tpu.vector_store %arg4[%c0_218, %435, %c0_219, %c0_220], %438 {strides = array<i32>} : memref<1x8x2x16xf32, #tpu.memory_space<vmem>>, vector<1x1x2x16xf32>,
    %c7_i32_221 = arith.constant 7 : i32
    %c7_i32_222 = arith.constant 7 : i32
    %439 = arith.subi %c7_i32_222, %c7_i32_221 : i32
    %440 = arith.select %0, %439, %c7_i32_221 : i32
    %c0_223 = arith.constant 0 : index
    %441 = arith.index_cast %440 : i32 to index
    %c0_224 = arith.constant 0 : index
    %c0_225 = arith.constant 0 : index
    %442 = vector.load %arg1[%c0_223, %441, %c0_224, %c0_225] : memref<1x8x2x64xf32, #tpu.memory_space<vmem>>, vector<1x1x2x64xf32>
    %443 = vector.shape_cast %442 : vector<1x1x2x64xf32> to vector<2x64xf32>
    %c0_226 = arith.constant 0 : index
    %c0_227 = arith.constant 0 : index
    %444 = vector.load %arg5[%c0_226, %c0_227] : memref<2x16xf32, #tpu.memory_space<vmem>>, vector<2x16xf32>
    %c0_228 = arith.constant 0 : index
    %c0_229 = arith.constant 0 : index
    %c0_230 = arith.constant 0 : index
    %445 = vector.load %arg2[%c0_228, %c0_229, %c0_230] : memref<1x16x64xf32, #tpu.memory_space<vmem>>, vector<1x16x64xf32>
    %446 = vector.shape_cast %445 : vector<1x16x64xf32> to vector<16x64xf32>
    %cst_231 = arith.constant dense<0.000000e+00> : vector<2x64xf32>
    %447 = tpu.matmul %444, %446, %cst_231 {dimension_numbers = #tpu.dot_dimension_numbers<[1], [0], [0], [1], [0, 0, 1, 1], [], []>} : vector<2x16xf32>, vector<16x64xf32>, vector<2x64xf32> -> vector<2x64xf32>
    %448 = arith.addf %443, %447 : vector<2x64xf32>
    %449 = vector.extract_strided_slice %448 {offsets = [0, 0], sizes = [2, 16], strides = [1, 1]} : vector<2x64xf32> to vector<2x16xf32>
    %450 = arith.negf %449 : vector<2x16xf32>
    %451 = math.exp %450 : vector<2x16xf32>
    %cst_232 = arith.constant 1.000000e+00 : f32
    %452 = vector.broadcast %cst_232 : f32 to vector<2x16xf32>
    %453 = arith.addf %452, %451 : vector<2x16xf32>
    %454 = arith.divf %452, %453 : vector<2x16xf32>
    %455 = vector.extract_strided_slice %448 {offsets = [0, 16], sizes = [2, 16], strides = [1, 1]} : vector<2x64xf32> to vector<2x16xf32>
    %456 = arith.negf %455 : vector<2x16xf32>
    %457 = math.exp %456 : vector<2x16xf32>
    %cst_233 = arith.constant 1.000000e+00 : f32
    %458 = vector.broadcast %cst_233 : f32 to vector<2x16xf32>
    %459 = arith.addf %458, %457 : vector<2x16xf32>
    %460 = arith.divf %458, %459 : vector<2x16xf32>
    %461 = vector.extract_strided_slice %448 {offsets = [0, 32], sizes = [2, 16], strides = [1, 1]} : vector<2x64xf32> to vector<2x16xf32>
    %462 = math.tanh %461 : vector<2x16xf32>
    %463 = vector.extract_strided_slice %448 {offsets = [0, 48], sizes = [2, 16], strides = [1, 1]} : vector<2x64xf32> to vector<2x16xf32>
    %464 = arith.negf %463 : vector<2x16xf32>
    %465 = math.exp %464 : vector<2x16xf32>
    %cst_234 = arith.constant 1.000000e+00 : f32
    %466 = vector.broadcast %cst_234 : f32 to vector<2x16xf32>
    %467 = arith.addf %466, %465 : vector<2x16xf32>
    %468 = arith.divf %466, %467 : vector<2x16xf32>
    %c0_235 = arith.constant 0 : index
    %c0_236 = arith.constant 0 : index
    %469 = vector.load %arg6[%c0_235, %c0_236] : memref<2x16xf32, #tpu.memory_space<vmem>>, vector<2x16xf32>
    %470 = arith.mulf %460, %469 : vector<2x16xf32>
    %471 = arith.mulf %454, %462 : vector<2x16xf32>
    %472 = arith.addf %470, %471 : vector<2x16xf32>
    %473 = math.tanh %472 : vector<2x16xf32>
    %474 = arith.mulf %468, %473 : vector<2x16xf32>
    %475 = arith.index_cast %440 : i32 to index
    %c0_237 = arith.constant 0 : index
    %c0_238 = arith.constant 0 : index
    %476 = vector.load %arg3[%475, %c0_237, %c0_238] : memref<8x2x1xf32, #tpu.memory_space<vmem>>, vector<1x2x1xf32>
    %477 = vector.shape_cast %476 : vector<1x2x1xf32> to vector<2x1xf32>
    %cst_239 = arith.constant 1.000000e+00 : f32
    %478 = vector.broadcast %cst_239 : f32 to vector<2x1xf32>
    %479 = arith.subf %478, %477 : vector<2x1xf32>
    %480 = vector.broadcast %477 : vector<2x1xf32> to vector<2x16xf32>
    %481 = arith.mulf %480, %474 : vector<2x16xf32>
    %c0_240 = arith.constant 0 : index
    %c0_241 = arith.constant 0 : index
    %482 = vector.load %arg5[%c0_240, %c0_241] : memref<2x16xf32, #tpu.memory_space<vmem>>, vector<2x16xf32>
    %483 = vector.broadcast %479 : vector<2x1xf32> to vector<2x16xf32>
    %484 = arith.mulf %483, %482 : vector<2x16xf32>
    %485 = arith.addf %481, %484 : vector<2x16xf32>
    %c0_242 = arith.constant 0 : index
    %c0_243 = arith.constant 0 : index
    %486 = vector.load %arg5[%c0_242, %c0_243] : memref<2x16xf32, #tpu.memory_space<vmem>>, vector<2x16xf32>
    tpu.vector_store %arg5[%c0_242, %c0_243], %485 {strides = array<i32>} : memref<2x16xf32, #tpu.memory_space<vmem>>, vector<2x16xf32>,
    %487 = vector.broadcast %477 : vector<2x1xf32> to vector<2x16xf32>
    %488 = arith.mulf %487, %472 : vector<2x16xf32>
    %c0_244 = arith.constant 0 : index
    %c0_245 = arith.constant 0 : index
    %489 = vector.load %arg6[%c0_244, %c0_245] : memref<2x16xf32, #tpu.memory_space<vmem>>, vector<2x16xf32>
    %490 = vector.broadcast %479 : vector<2x1xf32> to vector<2x16xf32>
    %491 = arith.mulf %490, %489 : vector<2x16xf32>
    %492 = arith.addf %488, %491 : vector<2x16xf32>
    %c0_246 = arith.constant 0 : index
    %c0_247 = arith.constant 0 : index
    %493 = vector.load %arg6[%c0_246, %c0_247] : memref<2x16xf32, #tpu.memory_space<vmem>>, vector<2x16xf32>
    tpu.vector_store %arg6[%c0_246, %c0_247], %492 {strides = array<i32>} : memref<2x16xf32, #tpu.memory_space<vmem>>, vector<2x16xf32>,
    %c0_248 = arith.constant 0 : index
    %c0_249 = arith.constant 0 : index
    %494 = vector.load %arg5[%c0_248, %c0_249] : memref<2x16xf32, #tpu.memory_space<vmem>>, vector<2x16xf32>
    %495 = vector.broadcast %477 : vector<2x1xf32> to vector<2x16xf32>
    %496 = arith.mulf %495, %494 : vector<2x16xf32>
    %c0_250 = arith.constant 0 : index
    %497 = arith.index_cast %440 : i32 to index
    %c0_251 = arith.constant 0 : index
    %c0_252 = arith.constant 0 : index
    %498 = vector.load %arg4[%c0_250, %497, %c0_251, %c0_252] : memref<1x8x2x16xf32, #tpu.memory_space<vmem>>, vector<1x1x2x16xf32>
    %499 = vector.shape_cast %498 : vector<1x1x2x16xf32> to vector<2x16xf32>
    %500 = vector.shape_cast %496 : vector<2x16xf32> to vector<1x1x2x16xf32>
    tpu.vector_store %arg4[%c0_250, %497, %c0_251, %c0_252], %500 {strides = array<i32>} : memref<1x8x2x16xf32, #tpu.memory_space<vmem>>, vector<1x1x2x16xf32>,
    %c8_i32 = arith.constant 8 : i32
    return
  }
  func.func @transform_0(%arg0: i32) -> (i32, i32, i32, i32) {
    %c0_i32 = arith.constant 0 : i32
    %c0_i32_0 = arith.constant 0 : i32
    %c0_i32_1 = arith.constant 0 : i32
    %c0_i32_2 = arith.constant 0 : i32
    return %arg0, %c0_i32, %c0_i32_0, %c0_i32_1 : i32, i32, i32, i32
  }
  func.func @transform_1(%arg0: i32) -> (i32, i32, i32) {
    %c0_i32 = arith.constant 0 : i32
    %c0_i32_0 = arith.constant 0 : i32
    %c0_i32_1 = arith.constant 0 : i32
    return %arg0, %c0_i32, %c0_i32_0 : i32, i32, i32
  }
  func.func @transform_2(%arg0: i32) -> (i32, i32, i32) {
    %c0_i32 = arith.constant 0 : i32
    %c0_i32_0 = arith.constant 0 : i32
    %c0_i32_1 = arith.constant 0 : i32
    %c0_i32_2 = arith.constant 0 : i32
    return %c0_i32, %c0_i32_0, %c0_i32_1 : i32, i32, i32
  }
  func.func @transform_3(%arg0: i32) -> (i32, i32, i32, i32) {
    %c0_i32 = arith.constant 0 : i32
    %c0_i32_0 = arith.constant 0 : i32
    %c0_i32_1 = arith.constant 0 : i32
    %c0_i32_2 = arith.constant 0 : i32
    return %arg0, %c0_i32, %c0_i32_0, %c0_i32_1 : i32, i32, i32, i32
  }
}

module attributes {stable_mosaic.version = 11 : i64} {
  func.func @_linear_kernel(%arg0: i32, %arg1: memref<32x2048xbf16, #tpu.memory_space<vmem>>, %arg2: memref<2048x64xbf16, #tpu.memory_space<vmem>>, %arg3: memref<1x64xf32, #tpu.memory_space<vmem>>, %arg4: memref<32x64xf32, #tpu.memory_space<vmem>>) attributes {dimension_semantics = [#tpu.dimension_semantics<parallel>], iteration_bounds = array<i64: 1>, scalar_prefetch = 0 : i64, scratch_operands = 0 : i64, tpu.core_type = #tpu.core_type<tc>, window_params = [{transform_indices = @transform_0, window_bounds = array<i64: 32, 2048>}, {pipeline_mode = #tpu.pipeline_mode<synchronous>, transform_indices = @transform_1, window_bounds = array<i64: 2048, 64>}, {pipeline_mode = #tpu.pipeline_mode<synchronous>, transform_indices = @transform_2, window_bounds = array<i64: 1, 64>}, {transform_indices = @transform_3, window_bounds = array<i64: 32, 64>}]} {
    %c0 = arith.constant 0 : index
    %c0_0 = arith.constant 0 : index
    %0 = vector.load %arg1[%c0, %c0_0] : memref<32x2048xbf16, #tpu.memory_space<vmem>>, vector<32x2048xbf16>
    %c0_1 = arith.constant 0 : index
    %c0_2 = arith.constant 0 : index
    %1 = vector.load %arg2[%c0_1, %c0_2] : memref<2048x64xbf16, #tpu.memory_space<vmem>>, vector<2048x64xbf16>
    %cst = arith.constant dense<0.000000e+00> : vector<32x64xf32>
    %2 = tpu.matmul %0, %1, %cst {dimension_numbers = #tpu.dot_dimension_numbers<[1], [0], [0], [1], [0, 0, 1, 1], [], []>} : vector<32x2048xbf16>, vector<2048x64xbf16>, vector<32x64xf32> -> vector<32x64xf32>
    %c0_3 = arith.constant 0 : index
    %c0_4 = arith.constant 0 : index
    %3 = vector.load %arg3[%c0_3, %c0_4] : memref<1x64xf32, #tpu.memory_space<vmem>>, vector<1x64xf32>
    %4 = vector.broadcast %3 : vector<1x64xf32> to vector<32x64xf32>
    %5 = arith.addf %2, %4 : vector<32x64xf32>
    %c0_5 = arith.constant 0 : index
    %c0_6 = arith.constant 0 : index
    %6 = vector.load %arg4[%c0_5, %c0_6] : memref<32x64xf32, #tpu.memory_space<vmem>>, vector<32x64xf32>
    tpu.vector_store %arg4[%c0_5, %c0_6], %5 {strides = array<i32>} : memref<32x64xf32, #tpu.memory_space<vmem>>, vector<32x64xf32>,
    return
  }
  func.func @transform_0(%arg0: i32) -> (i32, i32) {
    %c0_i32 = arith.constant 0 : i32
    %c0_i32_0 = arith.constant 0 : i32
    return %arg0, %c0_i32 : i32, i32
  }
  func.func @transform_1(%arg0: i32) -> (i32, i32) {
    %c0_i32 = arith.constant 0 : i32
    %c0_i32_0 = arith.constant 0 : i32
    %c0_i32_1 = arith.constant 0 : i32
    return %c0_i32, %c0_i32_0 : i32, i32
  }
  func.func @transform_2(%arg0: i32) -> (i32, i32) {
    %c0_i32 = arith.constant 0 : i32
    %c0_i32_0 = arith.constant 0 : i32
    %c0_i32_1 = arith.constant 0 : i32
    return %c0_i32, %c0_i32_0 : i32, i32
  }
  func.func @transform_3(%arg0: i32) -> (i32, i32) {
    %c0_i32 = arith.constant 0 : i32
    %c0_i32_0 = arith.constant 0 : i32
    return %arg0, %c0_i32 : i32, i32
  }
}

module attributes {stable_mosaic.version = 11 : i64} {
  func.func @_dcn_layer_kernel(%arg0: i32, %arg1: memref<1x19x64xf32, #tpu.memory_space<vmem>>, %arg2: memref<1x11x332xf32, #tpu.memory_space<vmem>>, %arg3: memref<1x1x19xf32, #tpu.memory_space<vmem>>, %arg4: memref<1x1x11xf32, #tpu.memory_space<vmem>>, %arg5: memref<64x64xf32, #tpu.memory_space<vmem>>, %arg6: memref<332x64xf32, #tpu.memory_space<vmem>>, %arg7: memref<64x64xf32, #tpu.memory_space<vmem>>, %arg8: memref<332x64xf32, #tpu.memory_space<vmem>>, %arg9: memref<1x64xf32, #tpu.memory_space<vmem>>, %arg10: memref<332x332xf32, #tpu.memory_space<vmem>>, %arg11: memref<64x332xf32, #tpu.memory_space<vmem>>, %arg12: memref<1x332xf32, #tpu.memory_space<vmem>>, %arg13: memref<1x16x64xf32, #tpu.memory_space<vmem>>, %arg14: memref<1x8x332xf32, #tpu.memory_space<vmem>>) attributes {dimension_semantics = [#tpu.dimension_semantics<parallel>], iteration_bounds = array<i64: 2>, scalar_prefetch = 0 : i64, scratch_operands = 0 : i64, tpu.core_type = #tpu.core_type<tc>, window_params = [{transform_indices = @transform_0, window_bounds = array<i64: 1, 19, 64>}, {transform_indices = @transform_1, window_bounds = array<i64: 1, 11, 332>}, {transform_indices = @transform_2, window_bounds = array<i64: 1, 1, 19>}, {transform_indices = @transform_3, window_bounds = array<i64: 1, 1, 11>}, {pipeline_mode = #tpu.pipeline_mode<synchronous>, transform_indices = @transform_4, window_bounds = array<i64: 64, 64>}, {pipeline_mode = #tpu.pipeline_mode<synchronous>, transform_indices = @transform_5, window_bounds = array<i64: 332, 64>}, {pipeline_mode = #tpu.pipeline_mode<synchronous>, transform_indices = @transform_6, window_bounds = array<i64: 64, 64>}, {pipeline_mode = #tpu.pipeline_mode<synchronous>, transform_indices = @transform_7, window_bounds = array<i64: 332, 64>}, {pipeline_mode = #tpu.pipeline_mode<synchronous>, transform_indices = @transform_8, window_bounds = array<i64: 1, 64>}, {pipeline_mode = #tpu.pipeline_mode<synchronous>, transform_indices = @transform_9, window_bounds = array<i64: 332, 332>}, {pipeline_mode = #tpu.pipeline_mode<synchronous>, transform_indices = @transform_10, window_bounds = array<i64: 64, 332>}, {pipeline_mode = #tpu.pipeline_mode<synchronous>, transform_indices = @transform_11, window_bounds = array<i64: 1, 332>}, {transform_indices = @transform_12, window_bounds = array<i64: 1, 16, 64>}, {transform_indices = @transform_13, window_bounds = array<i64: 1, 8, 332>}]} {
    %c0 = arith.constant 0 : index
    %c0_0 = arith.constant 0 : index
    %c0_1 = arith.constant 0 : index
    %0 = vector.load %arg1[%c0, %c0_0, %c0_1] : memref<1x19x64xf32, #tpu.memory_space<vmem>>, vector<1x19x64xf32>
    %1 = vector.shape_cast %0 : vector<1x19x64xf32> to vector<19x64xf32>
    %c0_2 = arith.constant 0 : index
    %c0_3 = arith.constant 0 : index
    %c0_4 = arith.constant 0 : index
    %2 = vector.load %arg2[%c0_2, %c0_3, %c0_4] : memref<1x11x332xf32, #tpu.memory_space<vmem>>, vector<1x11x332xf32>
    %3 = vector.shape_cast %2 : vector<1x11x332xf32> to vector<11x332xf32>
    %c0_5 = arith.constant 0 : index
    %c0_6 = arith.constant 0 : index
    %c0_7 = arith.constant 0 : index
    %4 = vector.load %arg4[%c0_5, %c0_6, %c0_7] : memref<1x1x11xf32, #tpu.memory_space<vmem>>, vector<1x1x11xf32>
    %5 = vector.shape_cast %4 : vector<1x1x11xf32> to vector<1x11xf32>
    %cst = arith.constant 0.000000e+00 : f32
    %6 = vector.broadcast %cst : f32 to vector<1x11xf32>
    %7 = arith.cmpf ogt, %5, %6 : vector<1x11xf32>
    %cst_8 = arith.constant 0.000000e+00 : f32
    %cst_9 = arith.constant -1.000000e+30 : f32
    %8 = vector.broadcast %cst_8 : f32 to vector<1x11xf32>
    %9 = vector.broadcast %cst_9 : f32 to vector<1x11xf32>
    %10 = arith.select %7, %8, %9 : vector<1x11xi1>, vector<1x11xf32>
    %c0_10 = arith.constant 0 : index
    %c0_11 = arith.constant 0 : index
    %c0_12 = arith.constant 0 : index
    %11 = vector.load %arg3[%c0_10, %c0_11, %c0_12] : memref<1x1x19xf32, #tpu.memory_space<vmem>>, vector<1x1x19xf32>
    %12 = vector.shape_cast %11 : vector<1x1x19xf32> to vector<1x19xf32>
    %cst_13 = arith.constant 0.000000e+00 : f32
    %13 = vector.broadcast %cst_13 : f32 to vector<1x19xf32>
    %14 = arith.cmpf ogt, %12, %13 : vector<1x19xf32>
    %cst_14 = arith.constant 0.000000e+00 : f32
    %cst_15 = arith.constant -1.000000e+30 : f32
    %15 = vector.broadcast %cst_14 : f32 to vector<1x19xf32>
    %16 = vector.broadcast %cst_15 : f32 to vector<1x19xf32>
    %17 = arith.select %14, %15, %16 : vector<1x19xi1>, vector<1x19xf32>
    %c0_16 = arith.constant 0 : index
    %c0_17 = arith.constant 0 : index
    %18 = vector.load %arg5[%c0_16, %c0_17] : memref<64x64xf32, #tpu.memory_space<vmem>>, vector<64x64xf32>
    %cst_18 = arith.constant dense<0.000000e+00> : vector<19x64xf32>
    %19 = tpu.matmul %1, %18, %cst_18 {dimension_numbers = #tpu.dot_dimension_numbers<[1], [0], [0], [1], [0, 0, 1, 1], [], []>} : vector<19x64xf32>, vector<64x64xf32>, vector<19x64xf32> -> vector<19x64xf32>
    %c0_19 = arith.constant 0 : index
    %c0_20 = arith.constant 0 : index
    %20 = vector.load %arg6[%c0_19, %c0_20] : memref<332x64xf32, #tpu.memory_space<vmem>>, vector<332x64xf32>
    %cst_21 = arith.constant dense<0.000000e+00> : vector<11x64xf32>
    %21 = tpu.matmul %3, %20, %cst_21 {dimension_numbers = #tpu.dot_dimension_numbers<[1], [0], [0], [1], [0, 0, 1, 1], [], []>} : vector<11x332xf32>, vector<332x64xf32>, vector<11x64xf32> -> vector<11x64xf32>
    %cst_22 = arith.constant 0.000000e+00 : f32
    %22 = vector.broadcast %cst_22 : f32 to vector<19x11xf32>
    %cst_23 = arith.constant 0.000000e+00 : f32
    %23 = vector.broadcast %cst_23 : f32 to vector<11x19xf32>
    %24 = vector.extract_strided_slice %19 {offsets = [0, 0], sizes = [19, 16], strides = [1, 1]} : vector<19x64xf32> to vector<19x16xf32>
    %25 = vector.extract_strided_slice %21 {offsets = [0, 0], sizes = [11, 16], strides = [1, 1]} : vector<11x64xf32> to vector<11x16xf32>
    %cst_24 = arith.constant dense<0.000000e+00> : vector<19x11xf32>
    %26 = tpu.matmul %24, %25, %cst_24 {dimension_numbers = #tpu.dot_dimension_numbers<[1], [1], [0], [0], [0, 0, 1, 0], [], []>} : vector<19x16xf32>, vector<11x16xf32>, vector<19x11xf32> -> vector<19x11xf32>
    %cst_25 = arith.constant 2.500000e-01 : f32
    %27 = vector.broadcast %cst_25 : f32 to vector<19x11xf32>
    %28 = arith.mulf %26, %27 : vector<19x11xf32>
    %29 = vector.broadcast %10 : vector<1x11xf32> to vector<19x11xf32>
    %30 = arith.addf %28, %29 : vector<19x11xf32>
    %cst_26 = arith.constant dense<0xFF800000> : vector<19xf32>
    %31 = vector.multi_reduction <maximumf>, %30, %cst_26 [1] : vector<19x11xf32> to vector<19xf32>
    %cst_27 = arith.constant 0xFF800000 : f32
    %32 = vector.broadcast %cst_27 : f32 to vector<19xf32>
    %33 = arith.maximumf %32, %31 : vector<19xf32>
    %34 = vector.shape_cast %33 : vector<19xf32> to vector<19x1xf32>
    %35 = vector.broadcast %34 : vector<19x1xf32> to vector<19x11xf32>
    %36 = arith.subf %30, %35 : vector<19x11xf32>
    %37 = math.exp %36 : vector<19x11xf32>
    %cst_28 = arith.constant dense<0.000000e+00> : vector<19xf32>
    %38 = vector.multi_reduction <add>, %37, %cst_28 [1] : vector<19x11xf32> to vector<19xf32>
    %39 = vector.shape_cast %38 : vector<19xf32> to vector<19x1xf32>
    %40 = vector.broadcast %39 : vector<19x1xf32> to vector<19x11xf32>
    %41 = arith.divf %37, %40 : vector<19x11xf32>
    %42 = arith.addf %22, %41 : vector<19x11xf32>
    %cst_29 = arith.constant dense<0.000000e+00> : vector<11x19xf32>
    %43 = tpu.matmul %25, %24, %cst_29 {dimension_numbers = #tpu.dot_dimension_numbers<[1], [1], [0], [0], [0, 0, 1, 0], [], []>} : vector<11x16xf32>, vector<19x16xf32>, vector<11x19xf32> -> vector<11x19xf32>
    %cst_30 = arith.constant 2.500000e-01 : f32
    %44 = vector.broadcast %cst_30 : f32 to vector<11x19xf32>
    %45 = arith.mulf %43, %44 : vector<11x19xf32>
    %46 = vector.broadcast %17 : vector<1x19xf32> to vector<11x19xf32>
    %47 = arith.addf %45, %46 : vector<11x19xf32>
    %cst_31 = arith.constant dense<0xFF800000> : vector<11xf32>
    %48 = vector.multi_reduction <maximumf>, %47, %cst_31 [1] : vector<11x19xf32> to vector<11xf32>
    %cst_32 = arith.constant 0xFF800000 : f32
    %49 = vector.broadcast %cst_32 : f32 to vector<11xf32>
    %50 = arith.maximumf %49, %48 : vector<11xf32>
    %51 = vector.shape_cast %50 : vector<11xf32> to vector<11x1xf32>
    %52 = vector.broadcast %51 : vector<11x1xf32> to vector<11x19xf32>
    %53 = arith.subf %47, %52 : vector<11x19xf32>
    %54 = math.exp %53 : vector<11x19xf32>
    %cst_33 = arith.constant dense<0.000000e+00> : vector<11xf32>
    %55 = vector.multi_reduction <add>, %54, %cst_33 [1] : vector<11x19xf32> to vector<11xf32>
    %56 = vector.shape_cast %55 : vector<11xf32> to vector<11x1xf32>
    %57 = vector.broadcast %56 : vector<11x1xf32> to vector<11x19xf32>
    %58 = arith.divf %54, %57 : vector<11x19xf32>
    %59 = arith.addf %23, %58 : vector<11x19xf32>
    %60 = vector.extract_strided_slice %19 {offsets = [0, 16], sizes = [19, 16], strides = [1, 1]} : vector<19x64xf32> to vector<19x16xf32>
    %61 = vector.extract_strided_slice %21 {offsets = [0, 16], sizes = [11, 16], strides = [1, 1]} : vector<11x64xf32> to vector<11x16xf32>
    %cst_34 = arith.constant dense<0.000000e+00> : vector<19x11xf32>
    %62 = tpu.matmul %60, %61, %cst_34 {dimension_numbers = #tpu.dot_dimension_numbers<[1], [1], [0], [0], [0, 0, 1, 0], [], []>} : vector<19x16xf32>, vector<11x16xf32>, vector<19x11xf32> -> vector<19x11xf32>
    %cst_35 = arith.constant 2.500000e-01 : f32
    %63 = vector.broadcast %cst_35 : f32 to vector<19x11xf32>
    %64 = arith.mulf %62, %63 : vector<19x11xf32>
    %65 = vector.broadcast %10 : vector<1x11xf32> to vector<19x11xf32>
    %66 = arith.addf %64, %65 : vector<19x11xf32>
    %cst_36 = arith.constant dense<0xFF800000> : vector<19xf32>
    %67 = vector.multi_reduction <maximumf>, %66, %cst_36 [1] : vector<19x11xf32> to vector<19xf32>
    %cst_37 = arith.constant 0xFF800000 : f32
    %68 = vector.broadcast %cst_37 : f32 to vector<19xf32>
    %69 = arith.maximumf %68, %67 : vector<19xf32>
    %70 = vector.shape_cast %69 : vector<19xf32> to vector<19x1xf32>
    %71 = vector.broadcast %70 : vector<19x1xf32> to vector<19x11xf32>
    %72 = arith.subf %66, %71 : vector<19x11xf32>
    %73 = math.exp %72 : vector<19x11xf32>
    %cst_38 = arith.constant dense<0.000000e+00> : vector<19xf32>
    %74 = vector.multi_reduction <add>, %73, %cst_38 [1] : vector<19x11xf32> to vector<19xf32>
    %75 = vector.shape_cast %74 : vector<19xf32> to vector<19x1xf32>
    %76 = vector.broadcast %75 : vector<19x1xf32> to vector<19x11xf32>
    %77 = arith.divf %73, %76 : vector<19x11xf32>
    %78 = arith.addf %42, %77 : vector<19x11xf32>
    %cst_39 = arith.constant dense<0.000000e+00> : vector<11x19xf32>
    %79 = tpu.matmul %61, %60, %cst_39 {dimension_numbers = #tpu.dot_dimension_numbers<[1], [1], [0], [0], [0, 0, 1, 0], [], []>} : vector<11x16xf32>, vector<19x16xf32>, vector<11x19xf32> -> vector<11x19xf32>
    %cst_40 = arith.constant 2.500000e-01 : f32
    %80 = vector.broadcast %cst_40 : f32 to vector<11x19xf32>
    %81 = arith.mulf %79, %80 : vector<11x19xf32>
    %82 = vector.broadcast %17 : vector<1x19xf32> to vector<11x19xf32>
    %83 = arith.addf %81, %82 : vector<11x19xf32>
    %cst_41 = arith.constant dense<0xFF800000> : vector<11xf32>
    %84 = vector.multi_reduction <maximumf>, %83, %cst_41 [1] : vector<11x19xf32> to vector<11xf32>
    %cst_42 = arith.constant 0xFF800000 : f32
    %85 = vector.broadcast %cst_42 : f32 to vector<11xf32>
    %86 = arith.maximumf %85, %84 : vector<11xf32>
    %87 = vector.shape_cast %86 : vector<11xf32> to vector<11x1xf32>
    %88 = vector.broadcast %87 : vector<11x1xf32> to vector<11x19xf32>
    %89 = arith.subf %83, %88 : vector<11x19xf32>
    %90 = math.exp %89 : vector<11x19xf32>
    %cst_43 = arith.constant dense<0.000000e+00> : vector<11xf32>
    %91 = vector.multi_reduction <add>, %90, %cst_43 [1] : vector<11x19xf32> to vector<11xf32>
    %92 = vector.shape_cast %91 : vector<11xf32> to vector<11x1xf32>
    %93 = vector.broadcast %92 : vector<11x1xf32> to vector<11x19xf32>
    %94 = arith.divf %90, %93 : vector<11x19xf32>
    %95 = arith.addf %59, %94 : vector<11x19xf32>
    %96 = vector.extract_strided_slice %19 {offsets = [0, 32], sizes = [19, 16], strides = [1, 1]} : vector<19x64xf32> to vector<19x16xf32>
    %97 = vector.extract_strided_slice %21 {offsets = [0, 32], sizes = [11, 16], strides = [1, 1]} : vector<11x64xf32> to vector<11x16xf32>
    %cst_44 = arith.constant dense<0.000000e+00> : vector<19x11xf32>
    %98 = tpu.matmul %96, %97, %cst_44 {dimension_numbers = #tpu.dot_dimension_numbers<[1], [1], [0], [0], [0, 0, 1, 0], [], []>} : vector<19x16xf32>, vector<11x16xf32>, vector<19x11xf32> -> vector<19x11xf32>
    %cst_45 = arith.constant 2.500000e-01 : f32
    %99 = vector.broadcast %cst_45 : f32 to vector<19x11xf32>
    %100 = arith.mulf %98, %99 : vector<19x11xf32>
    %101 = vector.broadcast %10 : vector<1x11xf32> to vector<19x11xf32>
    %102 = arith.addf %100, %101 : vector<19x11xf32>
    %cst_46 = arith.constant dense<0xFF800000> : vector<19xf32>
    %103 = vector.multi_reduction <maximumf>, %102, %cst_46 [1] : vector<19x11xf32> to vector<19xf32>
    %cst_47 = arith.constant 0xFF800000 : f32
    %104 = vector.broadcast %cst_47 : f32 to vector<19xf32>
    %105 = arith.maximumf %104, %103 : vector<19xf32>
    %106 = vector.shape_cast %105 : vector<19xf32> to vector<19x1xf32>
    %107 = vector.broadcast %106 : vector<19x1xf32> to vector<19x11xf32>
    %108 = arith.subf %102, %107 : vector<19x11xf32>
    %109 = math.exp %108 : vector<19x11xf32>
    %cst_48 = arith.constant dense<0.000000e+00> : vector<19xf32>
    %110 = vector.multi_reduction <add>, %109, %cst_48 [1] : vector<19x11xf32> to vector<19xf32>
    %111 = vector.shape_cast %110 : vector<19xf32> to vector<19x1xf32>
    %112 = vector.broadcast %111 : vector<19x1xf32> to vector<19x11xf32>
    %113 = arith.divf %109, %112 : vector<19x11xf32>
    %114 = arith.addf %78, %113 : vector<19x11xf32>
    %cst_49 = arith.constant dense<0.000000e+00> : vector<11x19xf32>
    %115 = tpu.matmul %97, %96, %cst_49 {dimension_numbers = #tpu.dot_dimension_numbers<[1], [1], [0], [0], [0, 0, 1, 0], [], []>} : vector<11x16xf32>, vector<19x16xf32>, vector<11x19xf32> -> vector<11x19xf32>
    %cst_50 = arith.constant 2.500000e-01 : f32
    %116 = vector.broadcast %cst_50 : f32 to vector<11x19xf32>
    %117 = arith.mulf %115, %116 : vector<11x19xf32>
    %118 = vector.broadcast %17 : vector<1x19xf32> to vector<11x19xf32>
    %119 = arith.addf %117, %118 : vector<11x19xf32>
    %cst_51 = arith.constant dense<0xFF800000> : vector<11xf32>
    %120 = vector.multi_reduction <maximumf>, %119, %cst_51 [1] : vector<11x19xf32> to vector<11xf32>
    %cst_52 = arith.constant 0xFF800000 : f32
    %121 = vector.broadcast %cst_52 : f32 to vector<11xf32>
    %122 = arith.maximumf %121, %120 : vector<11xf32>
    %123 = vector.shape_cast %122 : vector<11xf32> to vector<11x1xf32>
    %124 = vector.broadcast %123 : vector<11x1xf32> to vector<11x19xf32>
    %125 = arith.subf %119, %124 : vector<11x19xf32>
    %126 = math.exp %125 : vector<11x19xf32>
    %cst_53 = arith.constant dense<0.000000e+00> : vector<11xf32>
    %127 = vector.multi_reduction <add>, %126, %cst_53 [1] : vector<11x19xf32> to vector<11xf32>
    %128 = vector.shape_cast %127 : vector<11xf32> to vector<11x1xf32>
    %129 = vector.broadcast %128 : vector<11x1xf32> to vector<11x19xf32>
    %130 = arith.divf %126, %129 : vector<11x19xf32>
    %131 = arith.addf %95, %130 : vector<11x19xf32>
    %132 = vector.extract_strided_slice %19 {offsets = [0, 48], sizes = [19, 16], strides = [1, 1]} : vector<19x64xf32> to vector<19x16xf32>
    %133 = vector.extract_strided_slice %21 {offsets = [0, 48], sizes = [11, 16], strides = [1, 1]} : vector<11x64xf32> to vector<11x16xf32>
    %cst_54 = arith.constant dense<0.000000e+00> : vector<19x11xf32>
    %134 = tpu.matmul %132, %133, %cst_54 {dimension_numbers = #tpu.dot_dimension_numbers<[1], [1], [0], [0], [0, 0, 1, 0], [], []>} : vector<19x16xf32>, vector<11x16xf32>, vector<19x11xf32> -> vector<19x11xf32>
    %cst_55 = arith.constant 2.500000e-01 : f32
    %135 = vector.broadcast %cst_55 : f32 to vector<19x11xf32>
    %136 = arith.mulf %134, %135 : vector<19x11xf32>
    %137 = vector.broadcast %10 : vector<1x11xf32> to vector<19x11xf32>
    %138 = arith.addf %136, %137 : vector<19x11xf32>
    %cst_56 = arith.constant dense<0xFF800000> : vector<19xf32>
    %139 = vector.multi_reduction <maximumf>, %138, %cst_56 [1] : vector<19x11xf32> to vector<19xf32>
    %cst_57 = arith.constant 0xFF800000 : f32
    %140 = vector.broadcast %cst_57 : f32 to vector<19xf32>
    %141 = arith.maximumf %140, %139 : vector<19xf32>
    %142 = vector.shape_cast %141 : vector<19xf32> to vector<19x1xf32>
    %143 = vector.broadcast %142 : vector<19x1xf32> to vector<19x11xf32>
    %144 = arith.subf %138, %143 : vector<19x11xf32>
    %145 = math.exp %144 : vector<19x11xf32>
    %cst_58 = arith.constant dense<0.000000e+00> : vector<19xf32>
    %146 = vector.multi_reduction <add>, %145, %cst_58 [1] : vector<19x11xf32> to vector<19xf32>
    %147 = vector.shape_cast %146 : vector<19xf32> to vector<19x1xf32>
    %148 = vector.broadcast %147 : vector<19x1xf32> to vector<19x11xf32>
    %149 = arith.divf %145, %148 : vector<19x11xf32>
    %150 = arith.addf %114, %149 : vector<19x11xf32>
    %cst_59 = arith.constant dense<0.000000e+00> : vector<11x19xf32>
    %151 = tpu.matmul %133, %132, %cst_59 {dimension_numbers = #tpu.dot_dimension_numbers<[1], [1], [0], [0], [0, 0, 1, 0], [], []>} : vector<11x16xf32>, vector<19x16xf32>, vector<11x19xf32> -> vector<11x19xf32>
    %cst_60 = arith.constant 2.500000e-01 : f32
    %152 = vector.broadcast %cst_60 : f32 to vector<11x19xf32>
    %153 = arith.mulf %151, %152 : vector<11x19xf32>
    %154 = vector.broadcast %17 : vector<1x19xf32> to vector<11x19xf32>
    %155 = arith.addf %153, %154 : vector<11x19xf32>
    %cst_61 = arith.constant dense<0xFF800000> : vector<11xf32>
    %156 = vector.multi_reduction <maximumf>, %155, %cst_61 [1] : vector<11x19xf32> to vector<11xf32>
    %cst_62 = arith.constant 0xFF800000 : f32
    %157 = vector.broadcast %cst_62 : f32 to vector<11xf32>
    %158 = arith.maximumf %157, %156 : vector<11xf32>
    %159 = vector.shape_cast %158 : vector<11xf32> to vector<11x1xf32>
    %160 = vector.broadcast %159 : vector<11x1xf32> to vector<11x19xf32>
    %161 = arith.subf %155, %160 : vector<11x19xf32>
    %162 = math.exp %161 : vector<11x19xf32>
    %cst_63 = arith.constant dense<0.000000e+00> : vector<11xf32>
    %163 = vector.multi_reduction <add>, %162, %cst_63 [1] : vector<11x19xf32> to vector<11xf32>
    %164 = vector.shape_cast %163 : vector<11xf32> to vector<11x1xf32>
    %165 = vector.broadcast %164 : vector<11x1xf32> to vector<11x19xf32>
    %166 = arith.divf %162, %165 : vector<11x19xf32>
    %167 = arith.addf %131, %166 : vector<11x19xf32>
    %cst_64 = arith.constant dense<0.000000e+00> : vector<19x332xf32>
    %168 = tpu.matmul %150, %3, %cst_64 {dimension_numbers = #tpu.dot_dimension_numbers<[1], [0], [0], [1], [0, 0, 1, 1], [], []>} : vector<19x11xf32>, vector<11x332xf32>, vector<19x332xf32> -> vector<19x332xf32>
    %cst_65 = arith.constant 2.500000e-01 : f32
    %169 = vector.broadcast %cst_65 : f32 to vector<19x332xf32>
    %170 = arith.mulf %168, %169 : vector<19x332xf32>
    %cst_66 = arith.constant dense<0.000000e+00> : vector<11x64xf32>
    %171 = tpu.matmul %167, %1, %cst_66 {dimension_numbers = #tpu.dot_dimension_numbers<[1], [0], [0], [1], [0, 0, 1, 1], [], []>} : vector<11x19xf32>, vector<19x64xf32>, vector<11x64xf32> -> vector<11x64xf32>
    %cst_67 = arith.constant 2.500000e-01 : f32
    %172 = vector.broadcast %cst_67 : f32 to vector<11x64xf32>
    %173 = arith.mulf %171, %172 : vector<11x64xf32>
    %174 = vector.extract_strided_slice %1 {offsets = [0, 0], sizes = [16, 64], strides = [1, 1]} : vector<19x64xf32> to vector<16x64xf32>
    %175 = vector.extract_strided_slice %3 {offsets = [0, 0], sizes = [8, 332], strides = [1, 1]} : vector<11x332xf32> to vector<8x332xf32>
    %176 = vector.extract_strided_slice %170 {offsets = [0, 0], sizes = [16, 332], strides = [1, 1]} : vector<19x332xf32> to vector<16x332xf32>
    %177 = vector.extract_strided_slice %173 {offsets = [0, 0], sizes = [8, 64], strides = [1, 1]} : vector<11x64xf32> to vector<8x64xf32>
    %c0_68 = arith.constant 0 : index
    %c0_69 = arith.constant 0 : index
    %178 = vector.load %arg7[%c0_68, %c0_69] : memref<64x64xf32, #tpu.memory_space<vmem>>, vector<64x64xf32>
    %cst_70 = arith.constant dense<0.000000e+00> : vector<16x64xf32>
    %179 = tpu.matmul %174, %178, %cst_70 {dimension_numbers = #tpu.dot_dimension_numbers<[1], [0], [0], [1], [0, 0, 1, 1], [], []>} : vector<16x64xf32>, vector<64x64xf32>, vector<16x64xf32> -> vector<16x64xf32>
    %c0_71 = arith.constant 0 : index
    %c0_72 = arith.constant 0 : index
    %180 = vector.load %arg8[%c0_71, %c0_72] : memref<332x64xf32, #tpu.memory_space<vmem>>, vector<332x64xf32>
    %cst_73 = arith.constant dense<0.000000e+00> : vector<16x64xf32>
    %181 = tpu.matmul %176, %180, %cst_73 {dimension_numbers = #tpu.dot_dimension_numbers<[1], [0], [0], [1], [0, 0, 1, 1], [], []>} : vector<16x332xf32>, vector<332x64xf32>, vector<16x64xf32> -> vector<16x64xf32>
    %182 = arith.addf %179, %181 : vector<16x64xf32>
    %c0_74 = arith.constant 0 : index
    %c0_75 = arith.constant 0 : index
    %183 = vector.load %arg9[%c0_74, %c0_75] : memref<1x64xf32, #tpu.memory_space<vmem>>, vector<1x64xf32>
    %184 = vector.broadcast %183 : vector<1x64xf32> to vector<16x64xf32>
    %185 = arith.addf %182, %184 : vector<16x64xf32>
    %cst_76 = arith.constant 0.000000e+00 : f32
    %186 = vector.broadcast %cst_76 : f32 to vector<16x64xf32>
    %187 = arith.maximumf %185, %186 : vector<16x64xf32>
    %188 = arith.addf %174, %187 : vector<16x64xf32>
    %c0_77 = arith.constant 0 : index
    %c0_78 = arith.constant 0 : index
    %c0_79 = arith.constant 0 : index
    %189 = vector.load %arg13[%c0_77, %c0_78, %c0_79] : memref<1x16x64xf32, #tpu.memory_space<vmem>>, vector<1x16x64xf32>
    %190 = vector.shape_cast %189 : vector<1x16x64xf32> to vector<16x64xf32>
    %191 = vector.shape_cast %188 : vector<16x64xf32> to vector<1x16x64xf32>
    tpu.vector_store %arg13[%c0_77, %c0_78, %c0_79], %191 {strides = array<i32>} : memref<1x16x64xf32, #tpu.memory_space<vmem>>, vector<1x16x64xf32>,
    %c0_80 = arith.constant 0 : index
    %c0_81 = arith.constant 0 : index
    %192 = vector.load %arg10[%c0_80, %c0_81] : memref<332x332xf32, #tpu.memory_space<vmem>>, vector<332x332xf32>
    %cst_82 = arith.constant dense<0.000000e+00> : vector<8x332xf32>
    %193 = tpu.matmul %175, %192, %cst_82 {dimension_numbers = #tpu.dot_dimension_numbers<[1], [0], [0], [1], [0, 0, 1, 1], [], []>} : vector<8x332xf32>, vector<332x332xf32>, vector<8x332xf32> -> vector<8x332xf32>
    %c0_83 = arith.constant 0 : index
    %c0_84 = arith.constant 0 : index
    %194 = vector.load %arg11[%c0_83, %c0_84] : memref<64x332xf32, #tpu.memory_space<vmem>>, vector<64x332xf32>
    %cst_85 = arith.constant dense<0.000000e+00> : vector<8x332xf32>
    %195 = tpu.matmul %177, %194, %cst_85 {dimension_numbers = #tpu.dot_dimension_numbers<[1], [0], [0], [1], [0, 0, 1, 1], [], []>} : vector<8x64xf32>, vector<64x332xf32>, vector<8x332xf32> -> vector<8x332xf32>
    %196 = arith.addf %193, %195 : vector<8x332xf32>
    %c0_86 = arith.constant 0 : index
    %c0_87 = arith.constant 0 : index
    %197 = vector.load %arg12[%c0_86, %c0_87] : memref<1x332xf32, #tpu.memory_space<vmem>>, vector<1x332xf32>
    %198 = vector.broadcast %197 : vector<1x332xf32> to vector<8x332xf32>
    %199 = arith.addf %196, %198 : vector<8x332xf32>
    %cst_88 = arith.constant 0.000000e+00 : f32
    %200 = vector.broadcast %cst_88 : f32 to vector<8x332xf32>
    %201 = arith.maximumf %199, %200 : vector<8x332xf32>
    %202 = arith.addf %175, %201 : vector<8x332xf32>
    %c0_89 = arith.constant 0 : index
    %c0_90 = arith.constant 0 : index
    %c0_91 = arith.constant 0 : index
    %203 = vector.load %arg14[%c0_89, %c0_90, %c0_91] : memref<1x8x332xf32, #tpu.memory_space<vmem>>, vector<1x8x332xf32>
    %204 = vector.shape_cast %203 : vector<1x8x332xf32> to vector<8x332xf32>
    %205 = vector.shape_cast %202 : vector<8x332xf32> to vector<1x8x332xf32>
    tpu.vector_store %arg14[%c0_89, %c0_90, %c0_91], %205 {strides = array<i32>} : memref<1x8x332xf32, #tpu.memory_space<vmem>>, vector<1x8x332xf32>,
    return
  }
  func.func @transform_0(%arg0: i32) -> (i32, i32, i32) {
    %c0_i32 = arith.constant 0 : i32
    %c0_i32_0 = arith.constant 0 : i32
    %c0_i32_1 = arith.constant 0 : i32
    return %arg0, %c0_i32, %c0_i32_0 : i32, i32, i32
  }
  func.func @transform_1(%arg0: i32) -> (i32, i32, i32) {
    %c0_i32 = arith.constant 0 : i32
    %c0_i32_0 = arith.constant 0 : i32
    %c0_i32_1 = arith.constant 0 : i32
    return %arg0, %c0_i32, %c0_i32_0 : i32, i32, i32
  }
  func.func @transform_2(%arg0: i32) -> (i32, i32, i32) {
    %c0_i32 = arith.constant 0 : i32
    %c0_i32_0 = arith.constant 0 : i32
    %c0_i32_1 = arith.constant 0 : i32
    return %arg0, %c0_i32, %c0_i32_0 : i32, i32, i32
  }
  func.func @transform_3(%arg0: i32) -> (i32, i32, i32) {
    %c0_i32 = arith.constant 0 : i32
    %c0_i32_0 = arith.constant 0 : i32
    %c0_i32_1 = arith.constant 0 : i32
    return %arg0, %c0_i32, %c0_i32_0 : i32, i32, i32
  }
  func.func @transform_4(%arg0: i32) -> (i32, i32) {
    %c0_i32 = arith.constant 0 : i32
    %c0_i32_0 = arith.constant 0 : i32
    %c0_i32_1 = arith.constant 0 : i32
    return %c0_i32, %c0_i32_0 : i32, i32
  }
  func.func @transform_5(%arg0: i32) -> (i32, i32) {
    %c0_i32 = arith.constant 0 : i32
    %c0_i32_0 = arith.constant 0 : i32
    %c0_i32_1 = arith.constant 0 : i32
    return %c0_i32, %c0_i32_0 : i32, i32
  }
  func.func @transform_6(%arg0: i32) -> (i32, i32) {
    %c0_i32 = arith.constant 0 : i32
    %c0_i32_0 = arith.constant 0 : i32
    %c0_i32_1 = arith.constant 0 : i32
    return %c0_i32, %c0_i32_0 : i32, i32
  }
  func.func @transform_7(%arg0: i32) -> (i32, i32) {
    %c0_i32 = arith.constant 0 : i32
    %c0_i32_0 = arith.constant 0 : i32
    %c0_i32_1 = arith.constant 0 : i32
    return %c0_i32, %c0_i32_0 : i32, i32
  }
  func.func @transform_8(%arg0: i32) -> (i32, i32) {
    %c0_i32 = arith.constant 0 : i32
    %c0_i32_0 = arith.constant 0 : i32
    %c0_i32_1 = arith.constant 0 : i32
    return %c0_i32, %c0_i32_0 : i32, i32
  }
  func.func @transform_9(%arg0: i32) -> (i32, i32) {
    %c0_i32 = arith.constant 0 : i32
    %c0_i32_0 = arith.constant 0 : i32
    %c0_i32_1 = arith.constant 0 : i32
    return %c0_i32, %c0_i32_0 : i32, i32
  }
  func.func @transform_10(%arg0: i32) -> (i32, i32) {
    %c0_i32 = arith.constant 0 : i32
    %c0_i32_0 = arith.constant 0 : i32
    %c0_i32_1 = arith.constant 0 : i32
    return %c0_i32, %c0_i32_0 : i32, i32
  }
  func.func @transform_11(%arg0: i32) -> (i32, i32) {
    %c0_i32 = arith.constant 0 : i32
    %c0_i32_0 = arith.constant 0 : i32
    %c0_i32_1 = arith.constant 0 : i32
    return %c0_i32, %c0_i32_0 : i32, i32
  }
  func.func @transform_12(%arg0: i32) -> (i32, i32, i32) {
    %c0_i32 = arith.constant 0 : i32
    %c0_i32_0 = arith.constant 0 : i32
    %c0_i32_1 = arith.constant 0 : i32
    return %arg0, %c0_i32, %c0_i32_0 : i32, i32, i32
  }
  func.func @transform_13(%arg0: i32) -> (i32, i32, i32) {
    %c0_i32 = arith.constant 0 : i32
    %c0_i32_0 = arith.constant 0 : i32
    %c0_i32_1 = arith.constant 0 : i32
    return %arg0, %c0_i32, %c0_i32_0 : i32, i32, i32
  }
}

module attributes {stable_mosaic.version = 11 : i64} {
  func.func @_predict_kernel(%arg0: i32, %arg1: memref<1x16x64xf32, #tpu.memory_space<vmem>>, %arg2: memref<1x8x332xf32, #tpu.memory_space<vmem>>, %arg3: memref<1x16x1xf32, #tpu.memory_space<vmem>>, %arg4: memref<1x8x1xf32, #tpu.memory_space<vmem>>, %arg5: memref<64x64xf32, #tpu.memory_space<vmem>>, %arg6: memref<1x64xf32, #tpu.memory_space<vmem>>, %arg7: memref<64x4xf32, #tpu.memory_space<vmem>>, %arg8: memref<1x4xf32, #tpu.memory_space<vmem>>, %arg9: memref<332x332xf32, #tpu.memory_space<vmem>>, %arg10: memref<1x332xf32, #tpu.memory_space<vmem>>, %arg11: memref<332x4xf32, #tpu.memory_space<vmem>>, %arg12: memref<1x4xf32, #tpu.memory_space<vmem>>, %arg13: memref<64x198xf32, #tpu.memory_space<vmem>>, %arg14: memref<332x198xf32, #tpu.memory_space<vmem>>, %arg15: memref<1x198xf32, #tpu.memory_space<vmem>>, %arg16: memref<198x10xf32, #tpu.memory_space<vmem>>, %arg17: memref<1x10xf32, #tpu.memory_space<vmem>>, %arg18: memref<1x1x10xf32, #tpu.memory_space<vmem>>) attributes {dimension_semantics = [#tpu.dimension_semantics<parallel>], iteration_bounds = array<i64: 2>, scalar_prefetch = 0 : i64, scratch_operands = 0 : i64, tpu.core_type = #tpu.core_type<tc>, window_params = [{transform_indices = @transform_0, window_bounds = array<i64: 1, 16, 64>}, {transform_indices = @transform_1, window_bounds = array<i64: 1, 8, 332>}, {transform_indices = @transform_2, window_bounds = array<i64: 1, 16, 1>}, {transform_indices = @transform_3, window_bounds = array<i64: 1, 8, 1>}, {pipeline_mode = #tpu.pipeline_mode<synchronous>, transform_indices = @transform_4, window_bounds = array<i64: 64, 64>}, {pipeline_mode = #tpu.pipeline_mode<synchronous>, transform_indices = @transform_5, window_bounds = array<i64: 1, 64>}, {pipeline_mode = #tpu.pipeline_mode<synchronous>, transform_indices = @transform_6, window_bounds = array<i64: 64, 4>}, {pipeline_mode = #tpu.pipeline_mode<synchronous>, transform_indices = @transform_7, window_bounds = array<i64: 1, 4>}, {pipeline_mode = #tpu.pipeline_mode<synchronous>, transform_indices = @transform_8, window_bounds = array<i64: 332, 332>}, {pipeline_mode = #tpu.pipeline_mode<synchronous>, transform_indices = @transform_9, window_bounds = array<i64: 1, 332>}, {pipeline_mode = #tpu.pipeline_mode<synchronous>, transform_indices = @transform_10, window_bounds = array<i64: 332, 4>}, {pipeline_mode = #tpu.pipeline_mode<synchronous>, transform_indices = @transform_11, window_bounds = array<i64: 1, 4>}, {pipeline_mode = #tpu.pipeline_mode<synchronous>, transform_indices = @transform_12, window_bounds = array<i64: 64, 198>}, {pipeline_mode = #tpu.pipeline_mode<synchronous>, transform_indices = @transform_13, window_bounds = array<i64: 332, 198>}, {pipeline_mode = #tpu.pipeline_mode<synchronous>, transform_indices = @transform_14, window_bounds = array<i64: 1, 198>}, {pipeline_mode = #tpu.pipeline_mode<synchronous>, transform_indices = @transform_15, window_bounds = array<i64: 198, 10>}, {pipeline_mode = #tpu.pipeline_mode<synchronous>, transform_indices = @transform_16, window_bounds = array<i64: 1, 10>}, {transform_indices = @transform_17, window_bounds = array<i64: 1, 1, 10>}]} {
    %c0 = arith.constant 0 : index
    %c0_0 = arith.constant 0 : index
    %c0_1 = arith.constant 0 : index
    %0 = vector.load %arg1[%c0, %c0_0, %c0_1] : memref<1x16x64xf32, #tpu.memory_space<vmem>>, vector<1x16x64xf32>
    %1 = vector.shape_cast %0 : vector<1x16x64xf32> to vector<16x64xf32>
    %c0_2 = arith.constant 0 : index
    %c0_3 = arith.constant 0 : index
    %c0_4 = arith.constant 0 : index
    %2 = vector.load %arg3[%c0_2, %c0_3, %c0_4] : memref<1x16x1xf32, #tpu.memory_space<vmem>>, vector<1x16x1xf32>
    %3 = vector.shape_cast %2 : vector<1x16x1xf32> to vector<16x1xf32>
    %c0_5 = arith.constant 0 : index
    %c0_6 = arith.constant 0 : index
    %4 = vector.load %arg5[%c0_5, %c0_6] : memref<64x64xf32, #tpu.memory_space<vmem>>, vector<64x64xf32>
    %c0_7 = arith.constant 0 : index
    %c0_8 = arith.constant 0 : index
    %5 = vector.load %arg6[%c0_7, %c0_8] : memref<1x64xf32, #tpu.memory_space<vmem>>, vector<1x64xf32>
    %c0_9 = arith.constant 0 : index
    %c0_10 = arith.constant 0 : index
    %6 = vector.load %arg7[%c0_9, %c0_10] : memref<64x4xf32, #tpu.memory_space<vmem>>, vector<64x4xf32>
    %c0_11 = arith.constant 0 : index
    %c0_12 = arith.constant 0 : index
    %7 = vector.load %arg8[%c0_11, %c0_12] : memref<1x4xf32, #tpu.memory_space<vmem>>, vector<1x4xf32>
    %cst = arith.constant dense<0.000000e+00> : vector<16x64xf32>
    %8 = tpu.matmul %1, %4, %cst {dimension_numbers = #tpu.dot_dimension_numbers<[1], [0], [0], [1], [0, 0, 1, 1], [], []>} : vector<16x64xf32>, vector<64x64xf32>, vector<16x64xf32> -> vector<16x64xf32>
    %9 = vector.broadcast %5 : vector<1x64xf32> to vector<16x64xf32>
    %10 = arith.addf %8, %9 : vector<16x64xf32>
    %cst_13 = arith.constant 0.000000e+00 : f32
    %11 = vector.broadcast %cst_13 : f32 to vector<16x64xf32>
    %12 = arith.maximumf %10, %11 : vector<16x64xf32>
    %cst_14 = arith.constant dense<0.000000e+00> : vector<16x4xf32>
    %13 = tpu.matmul %12, %6, %cst_14 {dimension_numbers = #tpu.dot_dimension_numbers<[1], [0], [0], [1], [0, 0, 1, 1], [], []>} : vector<16x64xf32>, vector<64x4xf32>, vector<16x4xf32> -> vector<16x4xf32>
    %14 = vector.broadcast %7 : vector<1x4xf32> to vector<16x4xf32>
    %15 = arith.addf %13, %14 : vector<16x4xf32>
    %cst_15 = arith.constant 0.000000e+00 : f32
    %16 = vector.broadcast %cst_15 : f32 to vector<16x1xf32>
    %17 = arith.cmpf ogt, %3, %16 : vector<16x1xf32>
    %cst_16 = arith.constant 0.000000e+00 : f32
    %cst_17 = arith.constant -1.000000e+30 : f32
    %18 = vector.broadcast %cst_16 : f32 to vector<16x1xf32>
    %19 = vector.broadcast %cst_17 : f32 to vector<16x1xf32>
    %20 = arith.select %17, %18, %19 : vector<16x1xi1>, vector<16x1xf32>
    %21 = vector.broadcast %20 : vector<16x1xf32> to vector<16x4xf32>
    %22 = arith.addf %15, %21 : vector<16x4xf32>
    %cst_18 = arith.constant dense<0xFF800000> : vector<4xf32>
    %23 = vector.multi_reduction <maximumf>, %22, %cst_18 [0] : vector<16x4xf32> to vector<4xf32>
    %cst_19 = arith.constant 0xFF800000 : f32
    %24 = vector.broadcast %cst_19 : f32 to vector<4xf32>
    %25 = arith.maximumf %24, %23 : vector<4xf32>
    %26 = vector.shape_cast %25 : vector<4xf32> to vector<1x4xf32>
    %27 = vector.broadcast %26 : vector<1x4xf32> to vector<16x4xf32>
    %28 = arith.subf %22, %27 : vector<16x4xf32>
    %29 = math.exp %28 : vector<16x4xf32>
    %cst_20 = arith.constant dense<0.000000e+00> : vector<4xf32>
    %30 = vector.multi_reduction <add>, %29, %cst_20 [0] : vector<16x4xf32> to vector<4xf32>
    %31 = vector.shape_cast %30 : vector<4xf32> to vector<1x4xf32>
    %32 = vector.broadcast %31 : vector<1x4xf32> to vector<16x4xf32>
    %33 = arith.divf %29, %32 : vector<16x4xf32>
    %cst_21 = arith.constant dense<0.000000e+00> : vector<16xf32>
    %34 = vector.multi_reduction <add>, %33, %cst_21 [1] : vector<16x4xf32> to vector<16xf32>
    %35 = vector.shape_cast %34 : vector<16xf32> to vector<16x1xf32>
    %cst_22 = arith.constant 4.000000e+00 : f32
    %36 = vector.broadcast %cst_22 : f32 to vector<16x1xf32>
    %37 = arith.divf %35, %36 : vector<16x1xf32>
    %38 = vector.broadcast %37 : vector<16x1xf32> to vector<16x64xf32>
    %39 = arith.mulf %38, %1 : vector<16x64xf32>
    %cst_23 = arith.constant dense<0.000000e+00> : vector<64xf32>
    %40 = vector.multi_reduction <add>, %39, %cst_23 [0] : vector<16x64xf32> to vector<64xf32>
    %41 = vector.shape_cast %40 : vector<64xf32> to vector<1x64xf32>
    %c0_24 = arith.constant 0 : index
    %c0_25 = arith.constant 0 : index
    %c0_26 = arith.constant 0 : index
    %42 = vector.load %arg2[%c0_24, %c0_25, %c0_26] : memref<1x8x332xf32, #tpu.memory_space<vmem>>, vector<1x8x332xf32>
    %43 = vector.shape_cast %42 : vector<1x8x332xf32> to vector<8x332xf32>
    %c0_27 = arith.constant 0 : index
    %c0_28 = arith.constant 0 : index
    %c0_29 = arith.constant 0 : index
    %44 = vector.load %arg4[%c0_27, %c0_28, %c0_29] : memref<1x8x1xf32, #tpu.memory_space<vmem>>, vector<1x8x1xf32>
    %45 = vector.shape_cast %44 : vector<1x8x1xf32> to vector<8x1xf32>
    %c0_30 = arith.constant 0 : index
    %c0_31 = arith.constant 0 : index
    %46 = vector.load %arg9[%c0_30, %c0_31] : memref<332x332xf32, #tpu.memory_space<vmem>>, vector<332x332xf32>
    %c0_32 = arith.constant 0 : index
    %c0_33 = arith.constant 0 : index
    %47 = vector.load %arg10[%c0_32, %c0_33] : memref<1x332xf32, #tpu.memory_space<vmem>>, vector<1x332xf32>
    %c0_34 = arith.constant 0 : index
    %c0_35 = arith.constant 0 : index
    %48 = vector.load %arg11[%c0_34, %c0_35] : memref<332x4xf32, #tpu.memory_space<vmem>>, vector<332x4xf32>
    %c0_36 = arith.constant 0 : index
    %c0_37 = arith.constant 0 : index
    %49 = vector.load %arg12[%c0_36, %c0_37] : memref<1x4xf32, #tpu.memory_space<vmem>>, vector<1x4xf32>
    %cst_38 = arith.constant dense<0.000000e+00> : vector<8x332xf32>
    %50 = tpu.matmul %43, %46, %cst_38 {dimension_numbers = #tpu.dot_dimension_numbers<[1], [0], [0], [1], [0, 0, 1, 1], [], []>} : vector<8x332xf32>, vector<332x332xf32>, vector<8x332xf32> -> vector<8x332xf32>
    %51 = vector.broadcast %47 : vector<1x332xf32> to vector<8x332xf32>
    %52 = arith.addf %50, %51 : vector<8x332xf32>
    %cst_39 = arith.constant 0.000000e+00 : f32
    %53 = vector.broadcast %cst_39 : f32 to vector<8x332xf32>
    %54 = arith.maximumf %52, %53 : vector<8x332xf32>
    %cst_40 = arith.constant dense<0.000000e+00> : vector<8x4xf32>
    %55 = tpu.matmul %54, %48, %cst_40 {dimension_numbers = #tpu.dot_dimension_numbers<[1], [0], [0], [1], [0, 0, 1, 1], [], []>} : vector<8x332xf32>, vector<332x4xf32>, vector<8x4xf32> -> vector<8x4xf32>
    %56 = vector.broadcast %49 : vector<1x4xf32> to vector<8x4xf32>
    %57 = arith.addf %55, %56 : vector<8x4xf32>
    %cst_41 = arith.constant 0.000000e+00 : f32
    %58 = vector.broadcast %cst_41 : f32 to vector<8x1xf32>
    %59 = arith.cmpf ogt, %45, %58 : vector<8x1xf32>
    %cst_42 = arith.constant 0.000000e+00 : f32
    %cst_43 = arith.constant -1.000000e+30 : f32
    %60 = vector.broadcast %cst_42 : f32 to vector<8x1xf32>
    %61 = vector.broadcast %cst_43 : f32 to vector<8x1xf32>
    %62 = arith.select %59, %60, %61 : vector<8x1xi1>, vector<8x1xf32>
    %63 = vector.broadcast %62 : vector<8x1xf32> to vector<8x4xf32>
    %64 = arith.addf %57, %63 : vector<8x4xf32>
    %cst_44 = arith.constant dense<0xFF800000> : vector<4xf32>
    %65 = vector.multi_reduction <maximumf>, %64, %cst_44 [0] : vector<8x4xf32> to vector<4xf32>
    %cst_45 = arith.constant 0xFF800000 : f32
    %66 = vector.broadcast %cst_45 : f32 to vector<4xf32>
    %67 = arith.maximumf %66, %65 : vector<4xf32>
    %68 = vector.shape_cast %67 : vector<4xf32> to vector<1x4xf32>
    %69 = vector.broadcast %68 : vector<1x4xf32> to vector<8x4xf32>
    %70 = arith.subf %64, %69 : vector<8x4xf32>
    %71 = math.exp %70 : vector<8x4xf32>
    %cst_46 = arith.constant dense<0.000000e+00> : vector<4xf32>
    %72 = vector.multi_reduction <add>, %71, %cst_46 [0] : vector<8x4xf32> to vector<4xf32>
    %73 = vector.shape_cast %72 : vector<4xf32> to vector<1x4xf32>
    %74 = vector.broadcast %73 : vector<1x4xf32> to vector<8x4xf32>
    %75 = arith.divf %71, %74 : vector<8x4xf32>
    %cst_47 = arith.constant dense<0.000000e+00> : vector<8xf32>
    %76 = vector.multi_reduction <add>, %75, %cst_47 [1] : vector<8x4xf32> to vector<8xf32>
    %77 = vector.shape_cast %76 : vector<8xf32> to vector<8x1xf32>
    %cst_48 = arith.constant 4.000000e+00 : f32
    %78 = vector.broadcast %cst_48 : f32 to vector<8x1xf32>
    %79 = arith.divf %77, %78 : vector<8x1xf32>
    %80 = vector.broadcast %79 : vector<8x1xf32> to vector<8x332xf32>
    %81 = arith.mulf %80, %43 : vector<8x332xf32>
    %cst_49 = arith.constant dense<0.000000e+00> : vector<332xf32>
    %82 = vector.multi_reduction <add>, %81, %cst_49 [0] : vector<8x332xf32> to vector<332xf32>
    %83 = vector.shape_cast %82 : vector<332xf32> to vector<1x332xf32>
    %c0_50 = arith.constant 0 : index
    %c0_51 = arith.constant 0 : index
    %84 = vector.load %arg13[%c0_50, %c0_51] : memref<64x198xf32, #tpu.memory_space<vmem>>, vector<64x198xf32>
    %cst_52 = arith.constant dense<0.000000e+00> : vector<1x198xf32>
    %85 = tpu.matmul %41, %84, %cst_52 {dimension_numbers = #tpu.dot_dimension_numbers<[1], [0], [0], [1], [0, 0, 1, 1], [], []>} : vector<1x64xf32>, vector<64x198xf32>, vector<1x198xf32> -> vector<1x198xf32>
    %c0_53 = arith.constant 0 : index
    %c0_54 = arith.constant 0 : index
    %86 = vector.load %arg14[%c0_53, %c0_54] : memref<332x198xf32, #tpu.memory_space<vmem>>, vector<332x198xf32>
    %cst_55 = arith.constant dense<0.000000e+00> : vector<1x198xf32>
    %87 = tpu.matmul %83, %86, %cst_55 {dimension_numbers = #tpu.dot_dimension_numbers<[1], [0], [0], [1], [0, 0, 1, 1], [], []>} : vector<1x332xf32>, vector<332x198xf32>, vector<1x198xf32> -> vector<1x198xf32>
    %88 = arith.addf %85, %87 : vector<1x198xf32>
    %c0_56 = arith.constant 0 : index
    %c0_57 = arith.constant 0 : index
    %89 = vector.load %arg15[%c0_56, %c0_57] : memref<1x198xf32, #tpu.memory_space<vmem>>, vector<1x198xf32>
    %90 = arith.addf %88, %89 : vector<1x198xf32>
    %cst_58 = arith.constant 0.000000e+00 : f32
    %91 = vector.broadcast %cst_58 : f32 to vector<1x198xf32>
    %92 = arith.maximumf %90, %91 : vector<1x198xf32>
    %c0_59 = arith.constant 0 : index
    %c0_60 = arith.constant 0 : index
    %93 = vector.load %arg16[%c0_59, %c0_60] : memref<198x10xf32, #tpu.memory_space<vmem>>, vector<198x10xf32>
    %cst_61 = arith.constant dense<0.000000e+00> : vector<1x10xf32>
    %94 = tpu.matmul %92, %93, %cst_61 {dimension_numbers = #tpu.dot_dimension_numbers<[1], [0], [0], [1], [0, 0, 1, 1], [], []>} : vector<1x198xf32>, vector<198x10xf32>, vector<1x10xf32> -> vector<1x10xf32>
    %c0_62 = arith.constant 0 : index
    %c0_63 = arith.constant 0 : index
    %95 = vector.load %arg17[%c0_62, %c0_63] : memref<1x10xf32, #tpu.memory_space<vmem>>, vector<1x10xf32>
    %96 = arith.addf %94, %95 : vector<1x10xf32>
    %c0_64 = arith.constant 0 : index
    %c0_65 = arith.constant 0 : index
    %c0_66 = arith.constant 0 : index
    %97 = vector.load %arg18[%c0_64, %c0_65, %c0_66] : memref<1x1x10xf32, #tpu.memory_space<vmem>>, vector<1x1x10xf32>
    %98 = vector.shape_cast %97 : vector<1x1x10xf32> to vector<1x10xf32>
    %99 = vector.shape_cast %96 : vector<1x10xf32> to vector<1x1x10xf32>
    tpu.vector_store %arg18[%c0_64, %c0_65, %c0_66], %99 {strides = array<i32>} : memref<1x1x10xf32, #tpu.memory_space<vmem>>, vector<1x1x10xf32>,
    return
  }
  func.func @transform_0(%arg0: i32) -> (i32, i32, i32) {
    %c0_i32 = arith.constant 0 : i32
    %c0_i32_0 = arith.constant 0 : i32
    %c0_i32_1 = arith.constant 0 : i32
    return %arg0, %c0_i32, %c0_i32_0 : i32, i32, i32
  }
  func.func @transform_1(%arg0: i32) -> (i32, i32, i32) {
    %c0_i32 = arith.constant 0 : i32
    %c0_i32_0 = arith.constant 0 : i32
    %c0_i32_1 = arith.constant 0 : i32
    return %arg0, %c0_i32, %c0_i32_0 : i32, i32, i32
  }
  func.func @transform_2(%arg0: i32) -> (i32, i32, i32) {
    %c0_i32 = arith.constant 0 : i32
    %c0_i32_0 = arith.constant 0 : i32
    %c0_i32_1 = arith.constant 0 : i32
    return %arg0, %c0_i32, %c0_i32_0 : i32, i32, i32
  }
  func.func @transform_3(%arg0: i32) -> (i32, i32, i32) {
    %c0_i32 = arith.constant 0 : i32
    %c0_i32_0 = arith.constant 0 : i32
    %c0_i32_1 = arith.constant 0 : i32
    return %arg0, %c0_i32, %c0_i32_0 : i32, i32, i32
  }
  func.func @transform_4(%arg0: i32) -> (i32, i32) {
    %c0_i32 = arith.constant 0 : i32
    %c0_i32_0 = arith.constant 0 : i32
    %c0_i32_1 = arith.constant 0 : i32
    return %c0_i32, %c0_i32_0 : i32, i32
  }
  func.func @transform_5(%arg0: i32) -> (i32, i32) {
    %c0_i32 = arith.constant 0 : i32
    %c0_i32_0 = arith.constant 0 : i32
    %c0_i32_1 = arith.constant 0 : i32
    return %c0_i32, %c0_i32_0 : i32, i32
  }
  func.func @transform_6(%arg0: i32) -> (i32, i32) {
    %c0_i32 = arith.constant 0 : i32
    %c0_i32_0 = arith.constant 0 : i32
    %c0_i32_1 = arith.constant 0 : i32
    return %c0_i32, %c0_i32_0 : i32, i32
  }
  func.func @transform_7(%arg0: i32) -> (i32, i32) {
    %c0_i32 = arith.constant 0 : i32
    %c0_i32_0 = arith.constant 0 : i32
    %c0_i32_1 = arith.constant 0 : i32
    return %c0_i32, %c0_i32_0 : i32, i32
  }
  func.func @transform_8(%arg0: i32) -> (i32, i32) {
    %c0_i32 = arith.constant 0 : i32
    %c0_i32_0 = arith.constant 0 : i32
    %c0_i32_1 = arith.constant 0 : i32
    return %c0_i32, %c0_i32_0 : i32, i32
  }
  func.func @transform_9(%arg0: i32) -> (i32, i32) {
    %c0_i32 = arith.constant 0 : i32
    %c0_i32_0 = arith.constant 0 : i32
    %c0_i32_1 = arith.constant 0 : i32
    return %c0_i32, %c0_i32_0 : i32, i32
  }
  func.func @transform_10(%arg0: i32) -> (i32, i32) {
    %c0_i32 = arith.constant 0 : i32
    %c0_i32_0 = arith.constant 0 : i32
    %c0_i32_1 = arith.constant 0 : i32
    return %c0_i32, %c0_i32_0 : i32, i32
  }
  func.func @transform_11(%arg0: i32) -> (i32, i32) {
    %c0_i32 = arith.constant 0 : i32
    %c0_i32_0 = arith.constant 0 : i32
    %c0_i32_1 = arith.constant 0 : i32
    return %c0_i32, %c0_i32_0 : i32, i32
  }
  func.func @transform_12(%arg0: i32) -> (i32, i32) {
    %c0_i32 = arith.constant 0 : i32
    %c0_i32_0 = arith.constant 0 : i32
    %c0_i32_1 = arith.constant 0 : i32
    return %c0_i32, %c0_i32_0 : i32, i32
  }
  func.func @transform_13(%arg0: i32) -> (i32, i32) {
    %c0_i32 = arith.constant 0 : i32
    %c0_i32_0 = arith.constant 0 : i32
    %c0_i32_1 = arith.constant 0 : i32
    return %c0_i32, %c0_i32_0 : i32, i32
  }
  func.func @transform_14(%arg0: i32) -> (i32, i32) {
    %c0_i32 = arith.constant 0 : i32
    %c0_i32_0 = arith.constant 0 : i32
    %c0_i32_1 = arith.constant 0 : i32
    return %c0_i32, %c0_i32_0 : i32, i32
  }
  func.func @transform_15(%arg0: i32) -> (i32, i32) {
    %c0_i32 = arith.constant 0 : i32
    %c0_i32_0 = arith.constant 0 : i32
    %c0_i32_1 = arith.constant 0 : i32
    return %c0_i32, %c0_i32_0 : i32, i32
  }
  func.func @transform_16(%arg0: i32) -> (i32, i32) {
    %c0_i32 = arith.constant 0 : i32
    %c0_i32_0 = arith.constant 0 : i32
    %c0_i32_1 = arith.constant 0 : i32
    return %c0_i32, %c0_i32_0 : i32, i32
  }
  func.func @transform_17(%arg0: i32) -> (i32, i32, i32) {
    %c0_i32 = arith.constant 0 : i32
    %c0_i32_0 = arith.constant 0 : i32
    %c0_i32_1 = arith.constant 0 : i32
    return %arg0, %c0_i32, %c0_i32_0 : i32, i32, i32
  }
}

</mosaic_0001>

<llo_original>
// kernel: dcn_with_rcnn_forward.6
$region0: #{dcn_with_rcnn_forward.6}
  #allocation0 [shape = 'u32[]', space=smem, size = 0x4, offset = 0x4, fixed_abs, tag = 'smem constant byte address 0x4 - core index']
  #allocation1 [shape = 'u32[144,128]{1,0:T(1,128)}', space=vmem, size = 0x12000, scoped, tag = 'internal scratch']
  %s0 = inlined_call_operand.vmem [shape: f32[16,300], index: 0, kind: input, shape index: {}]
  %s1 = inlined_call_operand.vmem [shape: f32[300,128], index: 1, kind: input, shape index: {}]
  %s2 = inlined_call_operand.vmem [shape: f32[1,128], index: 2, kind: input, shape index: {}]
  %s3 = inlined_call_operand.vmem [shape: f32[16,128], index: 3, kind: output, shape index: {}]
  %s4 = sld [smem:[#allocation0]]
  $region22: #{dcn_with_rcnn_forward.6} parent=0
    _
  %s6 = ssub.s32 1, %s4
  %s7 = scalar_select 0, %s6, %s4
  // Predicated region
  $region2: #{dcn_with_rcnn_forward.6} parent=0 // pred_check
    _
  $region3: #{dcn_with_rcnn_forward.6} parent=0 // pred_check_branch
    %9 = sbr.rel (0) target = $region5
  $region4: #{dcn_with_rcnn_forward.6} parent=0 // pred_region
    _
  $region5: #{dcn_with_rcnn_forward.6} parent=0 // pred_fallthru
    _
  // Predicated region
  $region6: #{dcn_with_rcnn_forward.6} parent=0 // pred_check
    _
  $region7: #{dcn_with_rcnn_forward.6} parent=0 // pred_check_branch
    %11 = sbr.rel (0) target = $region9
  $region8: #{dcn_with_rcnn_forward.6} parent=0 // pred_region
    _
  $region9: #{dcn_with_rcnn_forward.6} parent=0 // pred_fallthru
    _
  // Predicated region
  $region10: #{dcn_with_rcnn_forward.6} parent=0 // pred_check
    _
  $region11: #{dcn_with_rcnn_forward.6} parent=0 // pred_check_branch
    %13 = sbr.rel (0) target = $region13
  $region12: #{dcn_with_rcnn_forward.6} parent=0 // pred_region
    _
  $region13: #{dcn_with_rcnn_forward.6} parent=0 // pred_fallthru
    _
  %v14 = vld [vmem:[%s0] sm:$0xff]
  %v15 = vld [vmem:[%s0 + $0x8] sm:$0xff]
  %v16 = vld [vmem:[%s0 + $0x10] sm:$0xff]
  %v17 = vld [vmem:[%s0 + $0x18] sm:$0xff]
  %v18 = vld [vmem:[%s0 + $0x20] sm:$0xff]
  %v19 = vld [vmem:[%s0 + $0x28] sm:$0xff]
  %v20 = vld [vmem:[%s1] sm:$0xff]
  %v21 = vld [vmem:[%s1 + $0x8] sm:$0xff]
  %v22 = vld [vmem:[%s1 + $0x10] sm:$0xff]
  %v23 = vld [vmem:[%s1 + $0x18] sm:$0xff]
  %v24 = vld [vmem:[%s1 + $0x20] sm:$0xff]
  %v25 = vld [vmem:[%s1 + $0x28] sm:$0xff]
  %v26 = vld [vmem:[%s1 + $0x30] sm:$0xff]
  %v27 = vld [vmem:[%s1 + $0x38] sm:$0xff]
  %v28 = vld [vmem:[%s1 + $0x40] sm:$0xff]
  %v29 = vld [vmem:[%s1 + $0x48] sm:$0xff]
  %v30 = vld [vmem:[%s1 + $0x50] sm:$0xff]
  %v31 = vld [vmem:[%s1 + $0x58] sm:$0xff]
  %v32 = vld [vmem:[%s1 + $0x60] sm:$0xff]
  %v33 = vld [vmem:[%s1 + $0x68] sm:$0xff]
  %v34 = vld [vmem:[%s1 + $0x70] sm:$0xff]
  %v35 = vld [vmem:[%s1 + $0x78] sm:$0xff]
  %v36 = vld [vmem:[%s1 + $0x80] sm:$0xff]
  %v37 = vld [vmem:[%s1 + $0x88] sm:$0xff]
  %v38 = vld [vmem:[%s1 + $0x90] sm:$0xff]
  %v39 = vld [vmem:[%s1 + $0x98] sm:$0xff]
  %v40 = vld [vmem:[%s1 + $0xa0] sm:$0xff]
  %v41 = vld [vmem:[%s1 + $0xa8] sm:$0xff]
  %v42 = vld [vmem:[%s1 + $0xb0] sm:$0xff]
  %v43 = vld [vmem:[%s1 + $0xb8] sm:$0xff]
  %v44 = vld [vmem:[%s1 + $0xc0] sm:$0xff]
  %v45 = vld [vmem:[%s1 + $0xc8] sm:$0xff]
  %v46 = vld [vmem:[%s1 + $0xd0] sm:$0xff]
  %v47 = vld [vmem:[%s1 + $0xd8] sm:$0xff]
  %v48 = vld [vmem:[%s1 + $0xe0] sm:$0xff]
  %v49 = vld [vmem:[%s1 + $0xe8] sm:$0xff]
  %v50 = vld [vmem:[%s1 + $0xf0] sm:$0xff]
  %v51 = vld [vmem:[%s1 + $0xf8] sm:$0xff]
  %v52 = vld [vmem:[%s1 + $0x100] sm:$0xff]
  %v53 = vld [vmem:[%s1 + $0x108] sm:$0xff]
  %v54 = vld [vmem:[%s1 + $0x110] sm:$0xff]
  %v55 = vld [vmem:[%s1 + $0x118] sm:$0xff]
  %v56 = vld [vmem:[%s1 + $0x120] sm:$0xff]
  %v57 = vld [vmem:[%s1 + $0x128] sm:$0xf]
  %v58 = vld [vmem:[%s2] sm:$0x1]
  %v60 = vlaneseq
  %v61 = vshrl.u32 %v60, 7
  %v62 = vsub.s32 0, %v61
  %v63 = vrot.slane %v58, %v62
  %vm65 = vcmask 359424
  %v67 = vsel %vm65, %v16, 0
  %v70 = vsel %vm65, %v19, 0
  %vm72 = vcmask 1043456
  %v74 = vsel %vm72, %v57, 0
  %76 = vmatprep.subr.mxu0 0.0
  %77 = vmatpush1.msra.mxu0 %v20
  %78 = vmatprep.subr.mxu0 0.0
  %79 = vmatpush1.msra.mxu0 %v21
  %80 = vmatprep.subr.mxu0 0.0
  %81 = vmatpush1.msra.mxu0 %v22
  %82 = vmatprep.subr.mxu0 0.0
  %83 = vmatpush1.msra.mxu0 %v23
  %84 = vmatprep.subr.mxu0 0.0
  %85 = vmatpush1.msra.mxu0 %v24
  %86 = vmatprep.subr.mxu0 0.0
  %87 = vmatpush1.msra.mxu0 %v25
  %88 = vmatprep.subr.mxu0 0.0
  %89 = vmatpush1.msra.mxu0 %v26
  %90 = vmatprep.subr.mxu0 0.0
  %91 = vmatpush1.msra.mxu0 %v27
  %92 = vmatprep.subr.mxu0 0.0
  %93 = vmatpush1.msra.mxu0 %v28
  %94 = vmatprep.subr.mxu0 0.0
  %95 = vmatpush1.msra.mxu0 %v29
  %96 = vmatprep.subr.mxu0 0.0
  %97 = vmatpush1.msra.mxu0 %v30
  %98 = vmatprep.subr.mxu0 0.0
  %99 = vmatpush1.msra.mxu0 %v31
  %100 = vmatprep.subr.mxu0 0.0
  %101 = vmatpush1.msra.mxu0 %v32
  %102 = vmatprep.subr.mxu0 0.0
  %103 = vmatpush1.msra.mxu0 %v33
  %104 = vmatprep.subr.mxu0 0.0
  %105 = vmatpush1.msra.mxu0 %v34
  %106 = vmatprep.subr.mxu0 0.0
  %107 = vmatpush1.msra.mxu0 %v35
  %108 = vmatprep.subr.mxu0 0.0
  %109 = vmatpush1.msra.mxu0 %v36
  %110 = vmatprep.subr.mxu0 0.0
  %111 = vmatpush1.msra.mxu0 %v37
  %112 = vmatprep.subr.mxu0 0.0
  %113 = vmatpush1.msra.mxu0 %v38
  %114 = vmatprep.subr.mxu0 0.0
  %115 = vmatpush1.msra.mxu0 %v39
  %116 = vmatprep.subr.mxu0 0.0
  %117 = vmatpush1.msra.mxu0 %v40
  %118 = vmatprep.subr.mxu0 0.0
  %119 = vmatpush1.msra.mxu0 %v41
  %120 = vmatprep.subr.mxu0 0.0
  %121 = vmatpush1.msra.mxu0 %v42
  %122 = vmatprep.subr.mxu0 0.0
  %123 = vmatpush1.msra.mxu0 %v43
  %124 = vmatprep.subr.mxu0 0.0
  %125 = vmatpush1.msra.mxu0 %v44
  %126 = vmatprep.subr.mxu0 0.0
  %127 = vmatpush1.msra.mxu0 %v45
  %128 = vmatprep.subr.mxu0 0.0
  %129 = vmatpush1.msra.mxu0 %v46
  %130 = vmatprep.subr.mxu0 0.0
  %131 = vmatpush1.msra.mxu0 %v47
  %132 = vmatprep.subr.mxu0 0.0
  %133 = vmatpush1.msra.mxu0 %v48
  %134 = vmatprep.subr.mxu0 0.0
  %135 = vmatpush1.msra.mxu0 %v49
  %136 = vmatprep.subr.mxu0 0.0
  %137 = vmatpush1.msra.mxu0 %v50
  %138 = vmatprep.subr.mxu0 0.0
  %139 = vmatpush1.msra.mxu0 %v51
  %140 = vmatprep.mubr.f32.mxu0 %v15
  %141 = vmatmul.mubr.f32.gmra.mrb[0].mxu0 %v14
  %v142 = vpop.f32.mrb[0].mxu0
  %v143 = vadd.f32 %v63, %v142
  %v144 = vpop.f32.mrb[0].mxu0
  %145 = vmatprep.mubr.f32.mxu0 %v18
  %146 = vmatmul.mubr.f32.gmra.mrb[0].mxu0 %v17
  %v147 = vpop.f32.mrb[0].mxu0
  %v148 = vadd.f32 %v63, %v147
  %v149 = vpop.f32.mrb[0].mxu0
  %150 = vdwg.mxu0
  %151 = vmatprep.subr.mxu0 0.0
  %152 = vmatpush1.msra.mxu0 %v52
  %153 = vmatprep.subr.mxu0 0.0
  %154 = vmatpush1.msra.mxu0 %v53
  %155 = vmatprep.subr.mxu0 0.0
  %156 = vmatpush1.msra.mxu0 %v54
  %157 = vmatprep.subr.mxu0 0.0
  %158 = vmatpush1.msra.mxu0 %v55
  %159 = vmatprep.subr.mxu0 0.0
  %160 = vmatpush1.msra.mxu0 %v56
  %161 = vmatprep.subr.mxu0 0.0
  %162 = vmatpush1.msra.mxu0 %v74
  %163 = vmatprep.subr.mxu0 0.0
  %164 = vmatpush1.msra.mxu0 0.0
  %165 = vmatprep.subr.mxu0 0.0
  %166 = vmatpush1.msra.mxu0 0.0
  %167 = vmatprep.subr.mxu0 0.0
  %168 = vmatpush1.msra.mxu0 0.0
  %169 = vmatprep.subr.mxu0 0.0
  %170 = vmatpush1.msra.mxu0 0.0
  %171 = vmatprep.subr.mxu0 0.0
  %172 = vmatpush1.msra.mxu0 0.0
  %173 = vmatprep.subr.mxu0 0.0
  %174 = vmatpush1.msra.mxu0 0.0
  %175 = vmatprep.subr.mxu0 0.0
  %176 = vmatpush1.msra.mxu0 0.0
  %177 = vmatprep.subr.mxu0 0.0
  %178 = vmatpush1.msra.mxu0 0.0
  %179 = vmatprep.subr.mxu0 0.0
  %180 = vmatpush1.msra.mxu0 0.0
  %181 = vmatprep.subr.mxu0 0.0
  %182 = vmatpush1.msra.mxu0 0.0
  %183 = vmatprep.subr.mxu0 0.0
  %184 = vmatpush1.msra.mxu0 0.0
  %185 = vmatprep.subr.mxu0 0.0
  %186 = vmatpush1.msra.mxu0 0.0
  %187 = vmatprep.subr.mxu0 0.0
  %188 = vmatpush1.msra.mxu0 0.0
  %189 = vmatprep.subr.mxu0 0.0
  %190 = vmatpush1.msra.mxu0 0.0
  %191 = vmatprep.subr.mxu0 0.0
  %192 = vmatpush1.msra.mxu0 0.0
  %193 = vmatprep.subr.mxu0 0.0
  %194 = vmatpush1.msra.mxu0 0.0
  %195 = vmatprep.subr.mxu0 0.0
  %196 = vmatpush1.msra.mxu0 0.0
  %197 = vmatprep.subr.mxu0 0.0
  %198 = vmatpush1.msra.mxu0 0.0
  %199 = vmatprep.subr.mxu0 0.0
  %200 = vmatpush1.msra.mxu0 0.0
  %201 = vmatprep.subr.mxu0 0.0
  %202 = vmatpush1.msra.mxu0 0.0
  %203 = vmatprep.subr.mxu0 0.0
  %204 = vmatpush1.msra.mxu0 0.0
  %205 = vmatprep.subr.mxu0 0.0
  %206 = vmatpush1.msra.mxu0 0.0
  %207 = vmatprep.subr.mxu0 0.0
  %208 = vmatpush1.msra.mxu0 0.0
  %209 = vmatprep.subr.mxu0 0.0
  %210 = vmatpush1.msra.mxu0 0.0
  %211 = vmatprep.subr.mxu0 0.0
  %212 = vmatpush1.msra.mxu0 0.0
  %213 = vmatprep.subr.mxu0 0.0
  %214 = vmatpush1.msra.mxu0 0.0
  %215 = vmatprep.mubr.f32.mxu0 0.0
  %216 = vmatmul.mubr.f32.gmra.mrb[0].mxu0 %v67
  %v217 = vpop.f32.mrb[0].mxu0
  %v218 = vadd.f32 %v143, %v217
  %v219 = vpop.f32.mrb[0].mxu0
  %220 = vmatprep.mubr.f32.mxu0 0.0
  %221 = vmatmul.mubr.f32.gmra.mrb[0].mxu0 %v70
  %v222 = vpop.f32.mrb[0].mxu0
  %v223 = vadd.f32 %v148, %v222
  %v224 = vpop.f32.mrb[0].mxu0
  %225 = vdwg.mxu0
  %226 = vst [vmem:[%s3] sm:$0xff] %v218
  %227 = vst [vmem:[%s3 + $0x8] sm:$0xff] %v223
  // Predicated region
  $region14: #{dcn_with_rcnn_forward.6} parent=0 // pred_check
    _
  $region15: #{dcn_with_rcnn_forward.6} parent=0 // pred_check_branch
    %229 = sbr.rel (0) target = $region17
  $region16: #{dcn_with_rcnn_forward.6} parent=0 // pred_region
    _
  $region17: #{dcn_with_rcnn_forward.6} parent=0 // pred_fallthru
    _
  // Predicated region
  $region18: #{dcn_with_rcnn_forward.6} parent=0 // pred_check
    _
  $region19: #{dcn_with_rcnn_forward.6} parent=0 // pred_check_branch
    %231 = sbr.rel (0) target = $region21
  $region20: #{dcn_with_rcnn_forward.6} parent=0 // pred_region
    _
  $region21: #{dcn_with_rcnn_forward.6} parent=0 // pred_fallthru
    _

// kernel: dcn_with_rcnn_forward.7
$region0: #{dcn_with_rcnn_forward.7}
  #allocation0 [shape = 'u32[]', space=smem, size = 0x4, offset = 0x4, fixed_abs, tag = 'smem constant byte address 0x4 - core index']
  #allocation1 [shape = 'u32[144,128]{1,0:T(1,128)}', space=vmem, size = 0x12000, scoped, tag = 'internal scratch']
  #allocation2 [shape = 'f32[2,16]{1,0:T(2,128)}', space=vmem, size = 0x400, scoped, tag = 'scratch operand']
  #allocation3 [shape = 'f32[2,16]{1,0:T(2,128)}', space=vmem, size = 0x400, scoped, tag = 'scratch operand']
  %s0 = inlined_call_operand.vmem [shape: f32[2,8,2,64], index: 0, kind: input, shape index: {}]
  %s1 = inlined_call_operand.vmem [shape: f32[2,16,64], index: 1, kind: input, shape index: {}]
  %s2 = inlined_call_operand.vmem [shape: f32[8,2,1], index: 2, kind: input, shape index: {}]
  %s3 = inlined_call_operand.vmem [shape: f32[2,8,2,16], index: 3, kind: output, shape index: {}]
  %s4 = sld [smem:[#allocation0]]
  $region45: #{dcn_with_rcnn_forward.7} parent=0
    _
  %s6 = ssub.s32 1, %s4
  %s7 = scalar_select 0, %s6, %s4
  loop: start=0, step=1, limit=4
  $region2: #{dcn_with_rcnn_forward.7} parent=0 // loop_pre_header
    _
  $region3: #{dcn_with_rcnn_forward.7} parent=0 // loop_header
    %s9 = sphi 0, %s13
    %p10 = scmp.ge.s32.totalorder %s9, 4
    %s19 = sphi 0, %s21
    %s22 = sphi 0, %s19
    %s23 = sphi 0, %s22
    %s39 = sphi 0, %s23
    %s45 = sphi 0, %s47
    %s48 = sphi 0, %s45
    %s49 = sphi 0, %s48
    %s65 = sphi 0, %s49
    %s69 = sphi 0, %s69
    %s71 = sphi 0, %s69
    %s72 = sphi 0, %s71
    %s86 = sphi 0, %s72
    %s92 = sphi 0, %s94
    %s95 = sphi 0, %s92
    %s96 = sphi 0, %s95
    %s112 = sphi 0, %s96
  $region4: #{dcn_with_rcnn_forward.7} parent=0 // loop_header_branch
    %12 = sbr.rel (%p10) target = $region8
  $region5: #{dcn_with_rcnn_forward.7} parent=0 // loop_body
    %s14 = ssub.s32 %s9, 1
    %s15 = ssub.s32 %s9, 2
    %s16 = sadd.s32 %s9, 1
    %s17 = ssub.s32 %s9, %s16
    %p18 = scmp.eq.s32.totalorder %s17, 0
    %s20 = sadd.s32 %s19, 1
    %s21 = scalar_select %p18, %s19, %s20
    %p24 = pneg %p18
    %p25 = scmp.eq.s32.totalorder %s9, 1
    %p26 = por %p24, %p25
    %p27 = scmp.ne.s32.totalorder %s19, %s22
    %p28 = scmp.eq.s32.totalorder %s9, 0
    %p29 = por %p27, %p28
    %p30 = scmp.ne.s32.totalorder %s19, %s22
    %p31 = scmp.eq.s32.totalorder %s14, 1
    %p32 = por %p30, %p31
    %p33 = scmp.ne.s32.totalorder %s22, %s23
    %p34 = scmp.eq.s32.totalorder %s14, 0
    %p35 = por %p33, %p34
    %p36 = scmp.ne.s32.totalorder %s22, %s23
    %p37 = scmp.eq.s32.totalorder %s15, 1
    %p38 = por %p36, %p37
    %p40 = scmp.ne.s32.totalorder %s23, %s39
    %p41 = scmp.eq.s32.totalorder %s15, 0
    %p42 = por %p40, %p41
    %s43 = ssub.s32 %s9, %s16
    %p44 = scmp.eq.s32.totalorder %s43, 0
    %s46 = sadd.s32 %s45, 1
    %s47 = scalar_select %p44, %s45, %s46
    %p50 = pneg %p44
    %p51 = scmp.eq.s32.totalorder %s9, 1
    %p52 = por %p50, %p51
    %p53 = scmp.ne.s32.totalorder %s45, %s48
    %p54 = scmp.eq.s32.totalorder %s9, 0
    %p55 = por %p53, %p54
    %p56 = scmp.ne.s32.totalorder %s45, %s48
    %p57 = scmp.eq.s32.totalorder %s14, 1
    %p58 = por %p56, %p57
    %p59 = scmp.ne.s32.totalorder %s48, %s49
    %p60 = scmp.eq.s32.totalorder %s14, 0
    %p61 = por %p59, %p60
    %p62 = scmp.ne.s32.totalorder %s48, %s49
    %p63 = scmp.eq.s32.totalorder %s15, 1
    %p64 = por %p62, %p63
    %p66 = scmp.ne.s32.totalorder %s49, %s65
    %p67 = scmp.eq.s32.totalorder %s15, 0
    %p68 = por %p66, %p67
    %s70 = sadd.s32 %s69, 1
    %p73 = scmp.eq.s32.totalorder %s9, 1
    %p74 = scmp.ne.s32.totalorder %s69, %s71
    %p75 = scmp.eq.s32.totalorder %s9, 0
    %p76 = por %p74, %p75
    %p77 = scmp.ne.s32.totalorder %s69, %s71
    %p78 = scmp.eq.s32.totalorder %s14, 1
    %p79 = por %p77, %p78
    %p80 = scmp.ne.s32.totalorder %s71, %s72
    %p81 = scmp.eq.s32.totalorder %s14, 0
    %p82 = por %p80, %p81
    %p83 = scmp.ne.s32.totalorder %s71, %s72
    %p84 = scmp.eq.s32.totalorder %s15, 1
    %p85 = por %p83, %p84
    %p87 = scmp.ne.s32.totalorder %s72, %s86
    %p88 = scmp.eq.s32.totalorder %s15, 0
    %p89 = por %p87, %p88
    %s90 = ssub.s32 %s9, %s16
    %p91 = scmp.eq.s32.totalorder %s90, 0
    %s93 = sadd.s32 %s92, 1
    %s94 = scalar_select %p91, %s92, %s93
    %p97 = pneg %p91
    %p98 = scmp.eq.s32.totalorder %s9, 1
    %p99 = por %p97, %p98
    %p100 = scmp.ne.s32.totalorder %s92, %s95
    %p101 = scmp.eq.s32.totalorder %s9, 0
    %p102 = por %p100, %p101
    %p103 = scmp.ne.s32.totalorder %s92, %s95
    %p104 = scmp.eq.s32.totalorder %s14, 1
    %p105 = por %p103, %p104
    %p106 = scmp.ne.s32.totalorder %s95, %s96
    %p107 = scmp.eq.s32.totalorder %s14, 0
    %p108 = por %p106, %p107
    %p109 = scmp.ne.s32.totalorder %s95, %s96
    %p110 = scmp.eq.s32.totalorder %s15, 1
    %p111 = por %p109, %p110
    %p113 = scmp.ne.s32.totalorder %s96, %s112
    %p114 = scmp.eq.s32.totalorder %s15, 0
    %p115 = por %p113, %p114
    %p116 = scmp.le.s32.totalorder 1, %s9
    %p117 = scmp.lt.s32.totalorder %s9, 3
    %p118 = pnand %p116, %p117
    %p119 = pneg %p118
    // Predicated region
    $region9: #{dcn_with_rcnn_forward.7} parent=5 // pred_check
      _
    $region10: #{dcn_with_rcnn_forward.7} parent=5 // pred_check_branch
      %121 = sbr.rel (%p118) target = $region12
    $region11: #{dcn_with_rcnn_forward.7} parent=5 // pred_region
      %s122 = ssub.s32 %s9, 1
      // Predicated region
      $region13: #{dcn_with_rcnn_forward.7} parent=11 // pred_check
        %p123 = pneg %p82
      $region14: #{dcn_with_rcnn_forward.7} parent=11 // pred_check_branch
        %125 = sbr.rel (%p123) target = $region16
      $region15: #{dcn_with_rcnn_forward.7} parent=11 // pred_region
        _
      $region16: #{dcn_with_rcnn_forward.7} parent=11 // pred_fallthru
        _
    $region12: #{dcn_with_rcnn_forward.7} parent=5 // pred_fallthru
      _
    %p126 = scmp.lt.s32.totalorder %s9, 2
    // Predicated region
    $region17: #{dcn_with_rcnn_forward.7} parent=5 // pred_check
      %p127 = pneg %p126
    $region18: #{dcn_with_rcnn_forward.7} parent=5 // pred_check_branch
      %129 = sbr.rel (%p127) target = $region20
    $region19: #{dcn_with_rcnn_forward.7} parent=5 // pred_region
      // Predicated region
      $region21: #{dcn_with_rcnn_forward.7} parent=19 // pred_check
        %p130 = pneg %p29
      $region22: #{dcn_with_rcnn_forward.7} parent=19 // pred_check_branch
        %132 = sbr.rel (%p130) target = $region24
      $region23: #{dcn_with_rcnn_forward.7} parent=19 // pred_region
        %p133 = scmp.lt.s32.totalorder %s9, 1
        %s134 = scalar_select %p133, %s9, 1
        %s135 = smul.addr %s134, 8
        %s136 = smul.addr %s135, 2
        %s137 = scalar_lea.vmem %s0, %s136
      $region24: #{dcn_with_rcnn_forward.7} parent=19 // pred_fallthru
        _
      // Predicated region
      $region25: #{dcn_with_rcnn_forward.7} parent=19 // pred_check
        %p138 = pneg %p55
      $region26: #{dcn_with_rcnn_forward.7} parent=19 // pred_check_branch
        %140 = sbr.rel (%p138) target = $region28
      $region27: #{dcn_with_rcnn_forward.7} parent=19 // pred_region
        %p141 = scmp.lt.s32.totalorder %s9, 1
        %s142 = scalar_select %p141, %s9, 1
        %s143 = smul.addr %s142, 2
        %s144 = smul.addr %s143, 8
        %s145 = scalar_lea.vmem %s1, %s144
      $region28: #{dcn_with_rcnn_forward.7} parent=19 // pred_fallthru
        _
    $region20: #{dcn_with_rcnn_forward.7} parent=5 // pred_fallthru
      _
    %p146 = scmp.le.s32.totalorder 1, %s9
    %p147 = scmp.lt.s32.totalorder %s9, 3
    %p148 = pnand %p146, %p147
    %p149 = pneg %p148
    // Predicated region
    $region29: #{dcn_with_rcnn_forward.7} parent=5 // pred_check
      _
    $region30: #{dcn_with_rcnn_forward.7} parent=5 // pred_check_branch
      %151 = sbr.rel (%p148) target = $region32
    $region31: #{dcn_with_rcnn_forward.7} parent=5 // pred_region
      %s152 = ssub.s32 %s9, 1
      %p153 = scmp.lt.s32.totalorder %s14, 1
      %s154 = scalar_select %p153, %s14, 1
      %s155 = smul.addr %s154, 8
      %s156 = smul.addr %s155, 2
      %s157 = scalar_lea.vmem %s0, %s156
      %p158 = pneg %p35
      %p159 = pneg %p32
      %p160 = scmp.lt.s32.totalorder %s14, 1
      %s161 = scalar_select %p160, %s14, 1
      %s162 = smul.addr %s161, 2
      %s163 = smul.addr %s162, 8
      %s164 = scalar_lea.vmem %s1, %s163
      %p165 = pneg %p61
      %p166 = pneg %p58
      %p167 = pneg %p82
      %p168 = pneg %p79
      %p169 = pneg %p108
      %p170 = pneg %p105
      %p171 = scmp.lt.s32.totalorder %s14, 1
      %s172 = scalar_select %p171, %s14, 1
      %s173 = smul.addr %s172, 8
      %s174 = smul.addr %s173, 2
      %s175 = scalar_lea.vmem %s3, %s174
      %p176 = scmp.lt.s32.totalorder %s14, 1
      %s177 = scalar_select %p176, %s14, 1
      %s178 = smul.addr %s177, 8
      %s179 = smul.addr %s178, 2
      %s180 = scalar_lea.vmem %s0, %s179
      %p181 = scmp.lt.s32.totalorder %s14, 1
      %s182 = scalar_select %p181, %s14, 1
      %s183 = smul.addr %s182, 2
      %s184 = smul.addr %s183, 8
      %s185 = scalar_lea.vmem %s1, %s184
      %p186 = scmp.lt.s32.totalorder %s14, 1
      %s187 = scalar_select %p186, %s14, 1
      %s188 = smul.addr %s187, 8
      %s189 = smul.addr %s188, 2
      %s190 = scalar_lea.vmem %s3, %s189
      %p191 = scmp.eq.s32.totalorder %s14, 1
      %vm192 = vcmask 123904
      %193 = vst.msk [vmem:[#allocation2] sm:$0x3] %vm192, 0.0
      %194 = vst.msk [vmem:[#allocation3] sm:$0x3] %vm192, 0.0
      %s195 = scalar_select %p191, 7, 0
      %s196 = smul.u32 %s195, 2
      %s197 = scalar_lea.vmem %s180, %s196
      %v198 = vld [vmem:[%s197] sm:$0x3]
      %v199 = vld [vmem:[#allocation2] sm:$0x3]
      %v200 = vld [vmem:[%s185] sm:$0xff]
      %v201 = vld [vmem:[%s185 + $0x8] sm:$0xff]
      %vm202 = vcmask 130048
      %v204 = vsel %vm202, %v199, 0
      %206 = vmatprep.subr.mxu0 0.0
      %207 = vmatpush1.msra.mxu0 %v200
      %208 = vmatprep.subr.mxu0 0.0
      %209 = vmatpush1.msra.mxu0 %v201
      %210 = vmatprep.subr.mxu0 0.0
      %211 = vmatpush1.msra.mxu0 0.0
      %212 = vmatprep.subr.mxu0 0.0
      %213 = vmatpush1.msra.mxu0 0.0
      %214 = vmatprep.subr.mxu0 0.0
      %215 = vmatpush1.msra.mxu0 0.0
      %216 = vmatprep.subr.mxu0 0.0
      %217 = vmatpush1.msra.mxu0 0.0
      %218 = vmatprep.subr.mxu0 0.0
      %219 = vmatpush1.msra.mxu0 0.0
      %220 = vmatprep.subr.mxu0 0.0
      %221 = vmatpush1.msra.mxu0 0.0
      %222 = vmatprep.subr.mxu0 0.0
      %223 = vmatpush1.msra.mxu0 0.0
      %224 = vmatprep.subr.mxu0 0.0
      %225 = vmatpush1.msra.mxu0 0.0
      %226 = vmatprep.subr.mxu0 0.0
      %227 = vmatpush1.msra.mxu0 0.0
      %228 = vmatprep.subr.mxu0 0.0
      %229 = vmatpush1.msra.mxu0 0.0
      %230 = vmatprep.subr.mxu0 0.0
      %231 = vmatpush1.msra.mxu0 0.0
      %232 = vmatprep.subr.mxu0 0.0
      %233 = vmatpush1.msra.mxu0 0.0
      %234 = vmatprep.subr.mxu0 0.0
      %235 = vmatpush1.msra.mxu0 0.0
      %236 = vmatprep.subr.mxu0 0.0
      %237 = vmatpush1.msra.mxu0 0.0
      %238 = vmatprep.subr.mxu0 0.0
      %239 = vmatpush1.msra.mxu0 0.0
      %240 = vmatprep.subr.mxu0 0.0
      %241 = vmatpush1.msra.mxu0 0.0
      %242 = vmatprep.subr.mxu0 0.0
      %243 = vmatpush1.msra.mxu0 0.0
      %244 = vmatprep.subr.mxu0 0.0
      %245 = vmatpush1.msra.mxu0 0.0
      %246 = vmatprep.subr.mxu0 0.0
      %247 = vmatpush1.msra.mxu0 0.0
      %248 = vmatprep.subr.mxu0 0.0
      %249 = vmatpush1.msra.mxu0 0.0
      %250 = vmatprep.subr.mxu0 0.0
      %251 = vmatpush1.msra.mxu0 0.0
      %252 = vmatprep.subr.mxu0 0.0
      %253 = vmatpush1.msra.mxu0 0.0
      %254 = vmatprep.subr.mxu0 0.0
      %255 = vmatpush1.msra.mxu0 0.0
      %256 = vmatprep.subr.mxu0 0.0
      %257 = vmatpush1.msra.mxu0 0.0
      %258 = vmatprep.subr.mxu0 0.0
      %259 = vmatpush1.msra.mxu0 0.0
      %260 = vmatprep.subr.mxu0 0.0
      %261 = vmatpush1.msra.mxu0 0.0
      %262 = vmatprep.subr.mxu0 0.0
      %263 = vmatpush1.msra.mxu0 0.0
      %264 = vmatprep.subr.mxu0 0.0
      %265 = vmatpush1.msra.mxu0 0.0
      %266 = vmatprep.subr.mxu0 0.0
      %267 = vmatpush1.msra.mxu0 0.0
      %268 = vmatprep.subr.mxu0 0.0
      %269 = vmatpush1.msra.mxu0 0.0
      %270 = vmatprep.mubr.f32.mxu0 0.0
      %271 = vmatmul.mubr.f32.gmra.mrb[0].mxu0 %v204
      %v272 = vpop.f32.mrb[0].mxu0
      %v273 = vadd.f32 0.0, %v272
      %v274 = vpop.f32.mrb[0].mxu0
      %275 = vdwg.mxu0
      %v276 = vadd.f32 %v198, %v273
      %v277 = vxor.u32 %v276, 2147483648
      %v278 = vmul.f32 %v277, 1.442695
      %v279 = vpow.pop %v278
      %v280 = vadd.f32 %v279, 1.0
      %v281 = vrcp.pop %v280
      %v282 = vmul.f32 1.0, %v281
      %v283 = vtanh.pop %v276
      %v284 = vld [vmem:[#allocation3] sm:$0x3]
      %286 = vrot.lane.b32.xlu0 %v284, 16
      %v287 = vpop.permute.xlu0 %286
      %v289 = vmul.f32 %v282, %v287
      %291 = vrot.lane.b32.xlu0 %v283, 96
      %v292 = vpop.permute.xlu0 %291
      %v294 = vmul.f32 %v282, %v292
      %296 = vrot.lane.b32.xlu0 %v294, 16
      %v297 = vpop.permute.xlu0 %296
      %v299 = vadd.f32 %v289, %v297
      %v300 = vtanh.pop %v299
      %302 = vrot.lane.b32.xlu0 %v300, 32
      %v303 = vpop.permute.xlu0 %302
      %v305 = vmul.f32 %v282, %v303
      %s306 = scalar_lea.vmem %s2, %s196
      %v307 = vld [vmem:[%s306] sm:$0x3]
      %v308 = vsub.f32 1.0, %v307
      %310 = vset.pattern.permute.xlu0 0
      %311 = vperm.xlu0 %310, %v307
      %v312 = vpop.permute.xlu0 %311
      %v314 = vmul.f32 %v312, %v305
      %316 = vset.pattern.permute.xlu0 0
      %317 = vperm.xlu0 %316, %v308
      %v318 = vpop.permute.xlu0 %317
      %v320 = vmul.f32 %v318, %v199
      %322 = vrot.lane.b32.xlu0 %v320, 48
      %v323 = vpop.permute.xlu0 %322
      %v325 = vadd.f32 %v314, %v323
      %327 = vrot.lane.b32.xlu0 %v325, 80
      %v328 = vpop.permute.xlu0 %327
      %330 = vst.msk [vmem:[#allocation2] sm:$0x3] %vm192, %v328
      %v331 = vmul.f32 %v312, %v299
      %v332 = vld [vmem:[#allocation3] sm:$0x3]
      %v333 = vmul.f32 %v318, %v332
      %335 = vrot.lane.b32.xlu0 %v333, 16
      %v336 = vpop.permute.xlu0 %335
      %v338 = vadd.f32 %v331, %v336
      %340 = vrot.lane.b32.xlu0 %v338, 112
      %v341 = vpop.permute.xlu0 %340
      %343 = vst.msk [vmem:[#allocation3] sm:$0x3] %vm192, %v341
      %v344 = vld [vmem:[#allocation2] sm:$0x3]
      %v345 = vmul.f32 %v312, %v344
      %s346 = scalar_lea.vmem %s190, %s196
      %347 = vst.msk [vmem:[%s346] sm:$0x3] %vm192, %v345
      %s348 = scalar_select %p191, 6, 1
      %s349 = smul.u32 %s348, 2
      %s350 = scalar_lea.vmem %s180, %s349
      %v351 = vld [vmem:[%s350] sm:$0x3]
      %v352 = vld [vmem:[#allocation2] sm:$0x3]
      %v353 = vld [vmem:[%s185] sm:$0xff]
      %v354 = vld [vmem:[%s185 + $0x8] sm:$0xff]
      %v356 = vsel %vm202, %v352, 0
      %358 = vmatprep.subr.mxu0 0.0
      %359 = vmatpush1.msra.mxu0 %v353
      %360 = vmatprep.subr.mxu0 0.0
      %361 = vmatpush1.msra.mxu0 %v354
      %362 = vmatprep.subr.mxu0 0.0
      %363 = vmatpush1.msra.mxu0 0.0
      %364 = vmatprep.subr.mxu0 0.0
      %365 = vmatpush1.msra.mxu0 0.0
      %366 = vmatprep.subr.mxu0 0.0
      %367 = vmatpush1.msra.mxu0 0.0
      %368 = vmatprep.subr.mxu0 0.0
      %369 = vmatpush1.msra.mxu0 0.0
      %370 = vmatprep.subr.mxu0 0.0
      %371 = vmatpush1.msra.mxu0 0.0
      %372 = vmatprep.subr.mxu0 0.0
      %373 = vmatpush1.msra.mxu0 0.0
      %374 = vmatprep.subr.mxu0 0.0
      %375 = vmatpush1.msra.mxu0 0.0
      %376 = vmatprep.subr.mxu0 0.0
      %377 = vmatpush1.msra.mxu0 0.0
      %378 = vmatprep.subr.mxu0 0.0
      %379 = vmatpush1.msra.mxu0 0.0
      %380 = vmatprep.subr.mxu0 0.0
      %381 = vmatpush1.msra.mxu0 0.0
      %382 = vmatprep.subr.mxu0 0.0
      %383 = vmatpush1.msra.mxu0 0.0
      %384 = vmatprep.subr.mxu0 0.0
      %385 = vmatpush1.msra.mxu0 0.0
      %386 = vmatprep.subr.mxu0 0.0
      %387 = vmatpush1.msra.mxu0 0.0
      %388 = vmatprep.subr.mxu0 0.0
      %389 = vmatpush1.msra.mxu0 0.0
      %390 = vmatprep.subr.mxu0 0.0
      %391 = vmatpush1.msra.mxu0 0.0
      %392 = vmatprep.subr.mxu0 0.0
      %393 = vmatpush1.msra.mxu0 0.0
      %394 = vmatprep.subr.mxu0 0.0
      %395 = vmatpush1.msra.mxu0 0.0
      %396 = vmatprep.subr.mxu0 0.0
      %397 = vmatpush1.msra.mxu0 0.0
      %398 = vmatprep.subr.mxu0 0.0
      %399 = vmatpush1.msra.mxu0 0.0
      %400 = vmatprep.subr.mxu0 0.0
      %401 = vmatpush1.msra.mxu0 0.0
      %402 = vmatprep.subr.mxu0 0.0
      %403 = vmatpush1.msra.mxu0 0.0
      %404 = vmatprep.subr.mxu0 0.0
      %405 = vmatpush1.msra.mxu0 0.0
      %406 = vmatprep.subr.mxu0 0.0
      %407 = vmatpush1.msra.mxu0 0.0
      %408 = vmatprep.subr.mxu0 0.0
      %409 = vmatpush1.msra.mxu0 0.0
      %410 = vmatprep.subr.mxu0 0.0
      %411 = vmatpush1.msra.mxu0 0.0
      %412 = vmatprep.subr.mxu0 0.0
      %413 = vmatpush1.msra.mxu0 0.0
      %414 = vmatprep.subr.mxu0 0.0
      %415 = vmatpush1.msra.mxu0 0.0
      %416 = vmatprep.subr.mxu0 0.0
      %417 = vmatpush1.msra.mxu0 0.0
      %418 = vmatprep.subr.mxu0 0.0
      %419 = vmatpush1.msra.mxu0 0.0
      %420 = vmatprep.subr.mxu0 0.0
      %421 = vmatpush1.msra.mxu0 0.0
      %422 = vmatprep.mubr.f32.mxu0 0.0
      %423 = vmatmul.mubr.f32.gmra.mrb[0].mxu0 %v356
      %v424 = vpop.f32.mrb[0].mxu0
      %v425 = vadd.f32 0.0, %v424
      %v426 = vpop.f32.mrb[0].mxu0
      %427 = vdwg.mxu0
      %v428 = vadd.f32 %v351, %v425
      %v429 = vxor.u32 %v428, 2147483648
      %v430 = vmul.f32 %v429, 1.442695
      %v431 = vpow.pop %v430
      %v432 = vadd.f32 %v431, 1.0
      %v433 = vrcp.pop %v432
      %v434 = vmul.f32 1.0, %v433
      %v435 = vtanh.pop %v428
      %v436 = vld [vmem:[#allocation3] sm:$0x3]
      %438 = vrot.lane.b32.xlu0 %v436, 16
      %v439 = vpop.permute.xlu0 %438
      %v441 = vmul.f32 %v434, %v439
      %443 = vrot.lane.b32.xlu0 %v435, 96
      %v444 = vpop.permute.xlu0 %443
      %v446 = vmul.f32 %v434, %v444
      %448 = vrot.lane.b32.xlu0 %v446, 16
      %v449 = vpop.permute.xlu0 %448
      %v451 = vadd.f32 %v441, %v449
      %v452 = vtanh.pop %v451
      %454 = vrot.lane.b32.xlu0 %v452, 32
      %v455 = vpop.permute.xlu0 %454
      %v457 = vmul.f32 %v434, %v455
      %s458 = scalar_lea.vmem %s2, %s349
      %v459 = vld [vmem:[%s458] sm:$0x3]
      %v460 = vsub.f32 1.0, %v459
      %462 = vset.pattern.permute.xlu0 0
      %463 = vperm.xlu0 %462, %v459
      %v464 = vpop.permute.xlu0 %463
      %v466 = vmul.f32 %v464, %v457
      %468 = vset.pattern.permute.xlu0 0
      %469 = vperm.xlu0 %468, %v460
      %v470 = vpop.permute.xlu0 %469
      %v472 = vmul.f32 %v470, %v352
      %474 = vrot.lane.b32.xlu0 %v472, 48
      %v475 = vpop.permute.xlu0 %474
      %v477 = vadd.f32 %v466, %v475
      %479 = vrot.lane.b32.xlu0 %v477, 80
      %v480 = vpop.permute.xlu0 %479
      %482 = vst.msk [vmem:[#allocation2] sm:$0x3] %vm192, %v480
      %v483 = vmul.f32 %v464, %v451
      %v484 = vld [vmem:[#allocation3] sm:$0x3]
      %v485 = vmul.f32 %v470, %v484
      %487 = vrot.lane.b32.xlu0 %v485, 16
      %v488 = vpop.permute.xlu0 %487
      %v490 = vadd.f32 %v483, %v488
      %492 = vrot.lane.b32.xlu0 %v490, 112
      %v493 = vpop.permute.xlu0 %492
      %495 = vst.msk [vmem:[#allocation3] sm:$0x3] %vm192, %v493
      %v496 = vld [vmem:[#allocation2] sm:$0x3]
      %v497 = vmul.f32 %v464, %v496
      %s498 = scalar_lea.vmem %s190, %s349
      %499 = vst.msk [vmem:[%s498] sm:$0x3] %vm192, %v497
      %s500 = scalar_select %p191, 5, 2
      %s501 = smul.u32 %s500, 2
      %s502 = scalar_lea.vmem %s180, %s501
      %v503 = vld [vmem:[%s502] sm:$0x3]
      %v504 = vld [vmem:[#allocation2] sm:$0x3]
      %v505 = vld [vmem:[%s185] sm:$0xff]
      %v506 = vld [vmem:[%s185 + $0x8] sm:$0xff]
      %v508 = vsel %vm202, %v504, 0
      %510 = vmatprep.subr.mxu0 0.0
      %511 = vmatpush1.msra.mxu0 %v505
      %512 = vmatprep.subr.mxu0 0.0
      %513 = vmatpush1.msra.mxu0 %v506
      %514 = vmatprep.subr.mxu0 0.0
      %515 = vmatpush1.msra.mxu0 0.0
      %516 = vmatprep.subr.mxu0 0.0
      %517 = vmatpush1.msra.mxu0 0.0
      %518 = vmatprep.subr.mxu0 0.0
      %519 = vmatpush1.msra.mxu0 0.0
      %520 = vmatprep.subr.mxu0 0.0
      %521 = vmatpush1.msra.mxu0 0.0
      %522 = vmatprep.subr.mxu0 0.0
      %523 = vmatpush1.msra.mxu0 0.0
      %524 = vmatprep.subr.mxu0 0.0
      %525 = vmatpush1.msra.mxu0 0.0
      %526 = vmatprep.subr.mxu0 0.0
      %527 = vmatpush1.msra.mxu0 0.0
      %528 = vmatprep.subr.mxu0 0.0
      %529 = vmatpush1.msra.mxu0 0.0
      %530 = vmatprep.subr.mxu0 0.0
      %531 = vmatpush1.msra.mxu0 0.0
      %532 = vmatprep.subr.mxu0 0.0
      %533 = vmatpush1.msra.mxu0 0.0
      %534 = vmatprep.subr.mxu0 0.0
      %535 = vmatpush1.msra.mxu0 0.0
      %536 = vmatprep.subr.mxu0 0.0
      %537 = vmatpush1.msra.mxu0 0.0
      %538 = vmatprep.subr.mxu0 0.0
      %539 = vmatpush1.msra.mxu0 0.0
      %540 = vmatprep.subr.mxu0 0.0
      %541 = vmatpush1.msra.mxu0 0.0
      %542 = vmatprep.subr.mxu0 0.0
      %543 = vmatpush1.msra.mxu0 0.0
      %544 = vmatprep.subr.mxu0 0.0
      %545 = vmatpush1.msra.mxu0 0.0
      %546 = vmatprep.subr.mxu0 0.0
      %547 = vmatpush1.msra.mxu0 0.0
      %548 = vmatprep.subr.mxu0 0.0
      %549 = vmatpush1.msra.mxu0 0.0
      %550 = vmatprep.subr.mxu0 0.0
      %551 = vmatpush1.msra.mxu0 0.0
      %552 = vmatprep.subr.mxu0 0.0
      %553 = vmatpush1.msra.mxu0 0.0
      %554 = vmatprep.subr.mxu0 0.0
      %555 = vmatpush1.msra.mxu0 0.0
      %556 = vmatprep.subr.mxu0 0.0
      %557 = vmatpush1.msra.mxu0 0.0
      %558 = vmatprep.subr.mxu0 0.0
      %559 = vmatpush1.msra.mxu0 0.0
      %560 = vmatprep.subr.mxu0 0.0
      %561 = vmatpush1.msra.mxu0 0.0
      %562 = vmatprep.subr.mxu0 0.0
      %563 = vmatpush1.msra.mxu0 0.0
      %564 = vmatprep.subr.mxu0 0.0
      %565 = vmatpush1.msra.mxu0 0.0
      %566 = vmatprep.subr.mxu0 0.0
      %567 = vmatpush1.msra.mxu0 0.0
      %568 = vmatprep.subr.mxu0 0.0
      %569 = vmatpush1.msra.mxu0 0.0
      %570 = vmatprep.subr.mxu0 0.0
      %571 = vmatpush1.msra.mxu0 0.0
      %572 = vmatprep.subr.mxu0 0.0
      %573 = vmatpush1.msra.mxu0 0.0
      %574 = vmatprep.mubr.f32.mxu0 0.0
      %575 = vmatmul.mubr.f32.gmra.mrb[0].mxu0 %v508
      %v576 = vpop.f32.mrb[0].mxu0
      %v577 = vadd.f32 0.0, %v576
      %v578 = vpop.f32.mrb[0].mxu0
      %579 = vdwg.mxu0
      %v580 = vadd.f32 %v503, %v577
      %v581 = vxor.u32 %v580, 2147483648
      %v582 = vmul.f32 %v581, 1.442695
      %v583 = vpow.pop %v582
      %v584 = vadd.f32 %v583, 1.0
      %v585 = vrcp.pop %v584
      %v586 = vmul.f32 1.0, %v585
      %v587 = vtanh.pop %v580
      %v588 = vld [vmem:[#allocation3] sm:$0x3]
      %590 = vrot.lane.b32.xlu0 %v588, 16
      %v591 = vpop.permute.xlu0 %590
      %v593 = vmul.f32 %v586, %v591
      %595 = vrot.lane.b32.xlu0 %v587, 96
      %v596 = vpop.permute.xlu0 %595
      %v598 = vmul.f32 %v586, %v596
      %600 = vrot.lane.b32.xlu0 %v598, 16
      %v601 = vpop.permute.xlu0 %600
      %v603 = vadd.f32 %v593, %v601
      %v604 = vtanh.pop %v603
      %606 = vrot.lane.b32.xlu0 %v604, 32
      %v607 = vpop.permute.xlu0 %606
      %v609 = vmul.f32 %v586, %v607
      %s610 = scalar_lea.vmem %s2, %s501
      %v611 = vld [vmem:[%s610] sm:$0x3]
      %v612 = vsub.f32 1.0, %v611
      %614 = vset.pattern.permute.xlu0 0
      %615 = vperm.xlu0 %614, %v611
      %v616 = vpop.permute.xlu0 %615
      %v618 = vmul.f32 %v616, %v609
      %620 = vset.pattern.permute.xlu0 0
      %621 = vperm.xlu0 %620, %v612
      %v622 = vpop.permute.xlu0 %621
      %v624 = vmul.f32 %v622, %v504
      %626 = vrot.lane.b32.xlu0 %v624, 48
      %v627 = vpop.permute.xlu0 %626
      %v629 = vadd.f32 %v618, %v627
      %631 = vrot.lane.b32.xlu0 %v629, 80
      %v632 = vpop.permute.xlu0 %631
      %634 = vst.msk [vmem:[#allocation2] sm:$0x3] %vm192, %v632
      %v635 = vmul.f32 %v616, %v603
      %v636 = vld [vmem:[#allocation3] sm:$0x3]
      %v637 = vmul.f32 %v622, %v636
      %639 = vrot.lane.b32.xlu0 %v637, 16
      %v640 = vpop.permute.xlu0 %639
      %v642 = vadd.f32 %v635, %v640
      %644 = vrot.lane.b32.xlu0 %v642, 112
      %v645 = vpop.permute.xlu0 %644
      %647 = vst.msk [vmem:[#allocation3] sm:$0x3] %vm192, %v645
      %v648 = vld [vmem:[#allocation2] sm:$0x3]
      %v649 = vmul.f32 %v616, %v648
      %s650 = scalar_lea.vmem %s190, %s501
      %651 = vst.msk [vmem:[%s650] sm:$0x3] %vm192, %v649
      %s652 = scalar_select %p191, 4, 3
      %s653 = smul.u32 %s652, 2
      %s654 = scalar_lea.vmem %s180, %s653
      %v655 = vld [vmem:[%s654] sm:$0x3]
      %v656 = vld [vmem:[#allocation2] sm:$0x3]
      %v657 = vld [vmem:[%s185] sm:$0xff]
      %v658 = vld [vmem:[%s185 + $0x8] sm:$0xff]
      %v660 = vsel %vm202, %v656, 0
      %662 = vmatprep.subr.mxu0 0.0
      %663 = vmatpush1.msra.mxu0 %v657
      %664 = vmatprep.subr.mxu0 0.0
      %665 = vmatpush1.msra.mxu0 %v658
      %666 = vmatprep.subr.mxu0 0.0
      %667 = vmatpush1.msra.mxu0 0.0
      %668 = vmatprep.subr.mxu0 0.0
      %669 = vmatpush1.msra.mxu0 0.0
      %670 = vmatprep.subr.mxu0 0.0
      %671 = vmatpush1.msra.mxu0 0.0
      %672 = vmatprep.subr.mxu0 0.0
      %673 = vmatpush1.msra.mxu0 0.0
      %674 = vmatprep.subr.mxu0 0.0
      %675 = vmatpush1.msra.mxu0 0.0
      %676 = vmatprep.subr.mxu0 0.0
      %677 = vmatpush1.msra.mxu0 0.0
      %678 = vmatprep.subr.mxu0 0.0
      %679 = vmatpush1.msra.mxu0 0.0
      %680 = vmatprep.subr.mxu0 0.0
      %681 = vmatpush1.msra.mxu0 0.0
      %682 = vmatprep.subr.mxu0 0.0
      %683 = vmatpush1.msra.mxu0 0.0
      %684 = vmatprep.subr.mxu0 0.0
      %685 = vmatpush1.msra.mxu0 0.0
      %686 = vmatprep.subr.mxu0 0.0
      %687 = vmatpush1.msra.mxu0 0.0
      %688 = vmatprep.subr.mxu0 0.0
      %689 = vmatpush1.msra.mxu0 0.0
      %690 = vmatprep.subr.mxu0 0.0
      %691 = vmatpush1.msra.mxu0 0.0
      %692 = vmatprep.subr.mxu0 0.0
      %693 = vmatpush1.msra.mxu0 0.0
      %694 = vmatprep.subr.mxu0 0.0
      %695 = vmatpush1.msra.mxu0 0.0
      %696 = vmatprep.subr.mxu0 0.0
      %697 = vmatpush1.msra.mxu0 0.0
      %698 = vmatprep.subr.mxu0 0.0
      %699 = vmatpush1.msra.mxu0 0.0
      %700 = vmatprep.subr.mxu0 0.0
      %701 = vmatpush1.msra.mxu0 0.0
      %702 = vmatprep.subr.mxu0 0.0
      %703 = vmatpush1.msra.mxu0 0.0
      %704 = vmatprep.subr.mxu0 0.0
      %705 = vmatpush1.msra.mxu0 0.0
      %706 = vmatprep.subr.mxu0 0.0
      %707 = vmatpush1.msra.mxu0 0.0
      %708 = vmatprep.subr.mxu0 0.0
      %709 = vmatpush1.msra.mxu0 0.0
      %710 = vmatprep.subr.mxu0 0.0
      %711 = vmatpush1.msra.mxu0 0.0
      %712 = vmatprep.subr.mxu0 0.0
      %713 = vmatpush1.msra.mxu0 0.0
      %714 = vmatprep.subr.mxu0 0.0
      %715 = vmatpush1.msra.mxu0 0.0
      %716 = vmatprep.subr.mxu0 0.0
      %717 = vmatpush1.msra.mxu0 0.0
      %718 = vmatprep.subr.mxu0 0.0
      %719 = vmatpush1.msra.mxu0 0.0
      %720 = vmatprep.subr.mxu0 0.0
      %721 = vmatpush1.msra.mxu0 0.0
      %722 = vmatprep.subr.mxu0 0.0
      %723 = vmatpush1.msra.mxu0 0.0
      %724 = vmatprep.subr.mxu0 0.0
      %725 = vmatpush1.msra.mxu0 0.0
      %726 = vmatprep.mubr.f32.mxu0 0.0
      %727 = vmatmul.mubr.f32.gmra.mrb[0].mxu0 %v660
      %v728 = vpop.f32.mrb[0].mxu0
      %v729 = vadd.f32 0.0, %v728
      %v730 = vpop.f32.mrb[0].mxu0
      %731 = vdwg.mxu0
      %v732 = vadd.f32 %v655, %v729
      %v733 = vxor.u32 %v732, 2147483648
      %v734 = vmul.f32 %v733, 1.442695
      %v735 = vpow.pop %v734
      %v736 = vadd.f32 %v735, 1.0
      %v737 = vrcp.pop %v736
      %v738 = vmul.f32 1.0, %v737
      %v739 = vtanh.pop %v732
      %v740 = vld [vmem:[#allocation3] sm:$0x3]
      %742 = vrot.lane.b32.xlu0 %v740, 16
      %v743 = vpop.permute.xlu0 %742
      %v745 = vmul.f32 %v738, %v743
      %747 = vrot.lane.b32.xlu0 %v739, 96
      %v748 = vpop.permute.xlu0 %747
      %v750 = vmul.f32 %v738, %v748
      %752 = vrot.lane.b32.xlu0 %v750, 16
      %v753 = vpop.permute.xlu0 %752
      %v755 = vadd.f32 %v745, %v753
      %v756 = vtanh.pop %v755
      %758 = vrot.lane.b32.xlu0 %v756, 32
      %v759 = vpop.permute.xlu0 %758
      %v761 = vmul.f32 %v738, %v759
      %s762 = scalar_lea.vmem %s2, %s653
      %v763 = vld [vmem:[%s762] sm:$0x3]
      %v764 = vsub.f32 1.0, %v763
      %766 = vset.pattern.permute.xlu0 0
      %767 = vperm.xlu0 %766, %v763
      %v768 = vpop.permute.xlu0 %767
      %v770 = vmul.f32 %v768, %v761
      %772 = vset.pattern.permute.xlu0 0
      %773 = vperm.xlu0 %772, %v764
      %v774 = vpop.permute.xlu0 %773
      %v776 = vmul.f32 %v774, %v656
      %778 = vrot.lane.b32.xlu0 %v776, 48
      %v779 = vpop.permute.xlu0 %778
      %v781 = vadd.f32 %v770, %v779
      %783 = vrot.lane.b32.xlu0 %v781, 80
      %v784 = vpop.permute.xlu0 %783
      %786 = vst.msk [vmem:[#allocation2] sm:$0x3] %vm192, %v784
      %v787 = vmul.f32 %v768, %v755
      %v788 = vld [vmem:[#allocation3] sm:$0x3]
      %v789 = vmul.f32 %v774, %v788
      %791 = vrot.lane.b32.xlu0 %v789, 16
      %v792 = vpop.permute.xlu0 %791
      %v794 = vadd.f32 %v787, %v792
      %796 = vrot.lane.b32.xlu0 %v794, 112
      %v797 = vpop.permute.xlu0 %796
      %799 = vst.msk [vmem:[#allocation3] sm:$0x3] %vm192, %v797
      %v800 = vld [vmem:[#allocation2] sm:$0x3]
      %v801 = vmul.f32 %v768, %v800
      %s802 = scalar_lea.vmem %s190, %s653
      %803 = vst.msk [vmem:[%s802] sm:$0x3] %vm192, %v801
      %s804 = scalar_select %p191, 3, 4
      %s805 = smul.u32 %s804, 2
      %s806 = scalar_lea.vmem %s180, %s805
      %v807 = vld [vmem:[%s806] sm:$0x3]
      %v808 = vld [vmem:[#allocation2] sm:$0x3]
      %v809 = vld [vmem:[%s185] sm:$0xff]
      %v810 = vld [vmem:[%s185 + $0x8] sm:$0xff]
      %v812 = vsel %vm202, %v808, 0
      %814 = vmatprep.subr.mxu0 0.0
      %815 = vmatpush1.msra.mxu0 %v809
      %816 = vmatprep.subr.mxu0 0.0
      %817 = vmatpush1.msra.mxu0 %v810
      %818 = vmatprep.subr.mxu0 0.0
      %819 = vmatpush1.msra.mxu0 0.0
      %820 = vmatprep.subr.mxu0 0.0
      %821 = vmatpush1.msra.mxu0 0.0
      %822 = vmatprep.subr.mxu0 0.0
      %823 = vmatpush1.msra.mxu0 0.0
      %824 = vmatprep.subr.mxu0 0.0
      %825 = vmatpush1.msra.mxu0 0.0
      %826 = vmatprep.subr.mxu0 0.0
      %827 = vmatpush1.msra.mxu0 0.0
      %828 = vmatprep.subr.mxu0 0.0
      %829 = vmatpush1.msra.mxu0 0.0
      %830 = vmatprep.subr.mxu0 0.0
      %831 = vmatpush1.msra.mxu0 0.0
      %832 = vmatprep.subr.mxu0 0.0
      %833 = vmatpush1.msra.mxu0 0.0
      %834 = vmatprep.subr.mxu0 0.0
      %835 = vmatpush1.msra.mxu0 0.0
      %836 = vmatprep.subr.mxu0 0.0
      %837 = vmatpush1.msra.mxu0 0.0
      %838 = vmatprep.subr.mxu0 0.0
      %839 = vmatpush1.msra.mxu0 0.0
      %840 = vmatprep.subr.mxu0 0.0
      %841 = vmatpush1.msra.mxu0 0.0
      %842 = vmatprep.subr.mxu0 0.0
      %843 = vmatpush1.msra.mxu0 0.0
      %844 = vmatprep.subr.mxu0 0.0
      %845 = vmatpush1.msra.mxu0 0.0
      %846 = vmatprep.subr.mxu0 0.0
      %847 = vmatpush1.msra.mxu0 0.0
      %848 = vmatprep.subr.mxu0 0.0
      %849 = vmatpush1.msra.mxu0 0.0
      %850 = vmatprep.subr.mxu0 0.0
      %851 = vmatpush1.msra.mxu0 0.0
      %852 = vmatprep.subr.mxu0 0.0
      %853 = vmatpush1.msra.mxu0 0.0
      %854 = vmatprep.subr.mxu0 0.0
      %855 = vmatpush1.msra.mxu0 0.0
      %856 = vmatprep.subr.mxu0 0.0
      %857 = vmatpush1.msra.mxu0 0.0
      %858 = vmatprep.subr.mxu0 0.0
      %859 = vmatpush1.msra.mxu0 0.0
      %860 = vmatprep.subr.mxu0 0.0
      %861 = vmatpush1.msra.mxu0 0.0
      %862 = vmatprep.subr.mxu0 0.0
      %863 = vmatpush1.msra.mxu0 0.0
      %864 = vmatprep.subr.mxu0 0.0
      %865 = vmatpush1.msra.mxu0 0.0
      %866 = vmatprep.subr.mxu0 0.0
      %867 = vmatpush1.msra.mxu0 0.0
      %868 = vmatprep.subr.mxu0 0.0
      %869 = vmatpush1.msra.mxu0 0.0
      %870 = vmatprep.subr.mxu0 0.0
      %871 = vmatpush1.msra.mxu0 0.0
      %872 = vmatprep.subr.mxu0 0.0
      %873 = vmatpush1.msra.mxu0 0.0
      %874 = vmatprep.subr.mxu0 0.0
      %875 = vmatpush1.msra.mxu0 0.0
      %876 = vmatprep.subr.mxu0 0.0
      %877 = vmatpush1.msra.mxu0 0.0
      %878 = vmatprep.mubr.f32.mxu0 0.0
      %879 = vmatmul.mubr.f32.gmra.mrb[0].mxu0 %v812
      %v880 = vpop.f32.mrb[0].mxu0
      %v881 = vadd.f32 0.0, %v880
      %v882 = vpop.f32.mrb[0].mxu0
      %883 = vdwg.mxu0
      %v884 = vadd.f32 %v807, %v881
      %v885 = vxor.u32 %v884, 2147483648
      %v886 = vmul.f32 %v885, 1.442695
      %v887 = vpow.pop %v886
      %v888 = vadd.f32 %v887, 1.0
      %v889 = vrcp.pop %v888
      %v890 = vmul.f32 1.0, %v889
      %v891 = vtanh.pop %v884
      %v892 = vld [vmem:[#allocation3] sm:$0x3]
      %894 = vrot.lane.b32.xlu0 %v892, 16
      %v895 = vpop.permute.xlu0 %894
      %v897 = vmul.f32 %v890, %v895
      %899 = vrot.lane.b32.xlu0 %v891, 96
      %v900 = vpop.permute.xlu0 %899
      %v902 = vmul.f32 %v890, %v900
      %904 = vrot.lane.b32.xlu0 %v902, 16
      %v905 = vpop.permute.xlu0 %904
      %v907 = vadd.f32 %v897, %v905
      %v908 = vtanh.pop %v907
      %910 = vrot.lane.b32.xlu0 %v908, 32
      %v911 = vpop.permute.xlu0 %910
      %v913 = vmul.f32 %v890, %v911
      %s914 = scalar_lea.vmem %s2, %s805
      %v915 = vld [vmem:[%s914] sm:$0x3]
      %v916 = vsub.f32 1.0, %v915
      %918 = vset.pattern.permute.xlu0 0
      %919 = vperm.xlu0 %918, %v915
      %v920 = vpop.permute.xlu0 %919
      %v922 = vmul.f32 %v920, %v913
      %924 = vset.pattern.permute.xlu0 0
      %925 = vperm.xlu0 %924, %v916
      %v926 = vpop.permute.xlu0 %925
      %v928 = vmul.f32 %v926, %v808
      %930 = vrot.lane.b32.xlu0 %v928, 48
      %v931 = vpop.permute.xlu0 %930
      %v933 = vadd.f32 %v922, %v931
      %935 = vrot.lane.b32.xlu0 %v933, 80
      %v936 = vpop.permute.xlu0 %935
      %938 = vst.msk [vmem:[#allocation2] sm:$0x3] %vm192, %v936
      %v939 = vmul.f32 %v920, %v907
      %v940 = vld [vmem:[#allocation3] sm:$0x3]
      %v941 = vmul.f32 %v926, %v940
      %943 = vrot.lane.b32.xlu0 %v941, 16
      %v944 = vpop.permute.xlu0 %943
      %v946 = vadd.f32 %v939, %v944
      %948 = vrot.lane.b32.xlu0 %v946, 112
      %v949 = vpop.permute.xlu0 %948
      %951 = vst.msk [vmem:[#allocation3] sm:$0x3] %vm192, %v949
      %v952 = vld [vmem:[#allocation2] sm:$0x3]
      %v953 = vmul.f32 %v920, %v952
      %s954 = scalar_lea.vmem %s190, %s805
      %955 = vst.msk [vmem:[%s954] sm:$0x3] %vm192, %v953
      %s956 = scalar_select %p191, 2, 5
      %s957 = smul.u32 %s956, 2
      %s958 = scalar_lea.vmem %s180, %s957
      %v959 = vld [vmem:[%s958] sm:$0x3]
      %v960 = vld [vmem:[#allocation2] sm:$0x3]
      %v961 = vld [vmem:[%s185] sm:$0xff]
      %v962 = vld [vmem:[%s185 + $0x8] sm:$0xff]
      %v964 = vsel %vm202, %v960, 0
      %966 = vmatprep.subr.mxu0 0.0
      %967 = vmatpush1.msra.mxu0 %v961
      %968 = vmatprep.subr.mxu0 0.0
      %969 = vmatpush1.msra.mxu0 %v962
      %970 = vmatprep.subr.mxu0 0.0
      %971 = vmatpush1.msra.mxu0 0.0
      %972 = vmatprep.subr.mxu0 0.0
      %973 = vmatpush1.msra.mxu0 0.0
      %974 = vmatprep.subr.mxu0 0.0
      %975 = vmatpush1.msra.mxu0 0.0
      %976 = vmatprep.subr.mxu0 0.0
      %977 = vmatpush1.msra.mxu0 0.0
      %978 = vmatprep.subr.mxu0 0.0
      %979 = vmatpush1.msra.mxu0 0.0
      %980 = vmatprep.subr.mxu0 0.0
      %981 = vmatpush1.msra.mxu0 0.0
      %982 = vmatprep.subr.mxu0 0.0
      %983 = vmatpush1.msra.mxu0 0.0
      %984 = vmatprep.subr.mxu0 0.0
      %985 = vmatpush1.msra.mxu0 0.0
      %986 = vmatprep.subr.mxu0 0.0
      %987 = vmatpush1.msra.mxu0 0.0
      %988 = vmatprep.subr.mxu0 0.0
      %989 = vmatpush1.msra.mxu0 0.0
      %990 = vmatprep.subr.mxu0 0.0
      %991 = vmatpush1.msra.mxu0 0.0
      %992 = vmatprep.subr.mxu0 0.0
      %993 = vmatpush1.msra.mxu0 0.0
      %994 = vmatprep.subr.mxu0 0.0
      %995 = vmatpush1.msra.mxu0 0.0
      %996 = vmatprep.subr.mxu0 0.0
      %997 = vmatpush1.msra.mxu0 0.0
      %998 = vmatprep.subr.mxu0 0.0
      %999 = vmatpush1.msra.mxu0 0.0
      %1000 = vmatprep.subr.mxu0 0.0
      %1001 = vmatpush1.msra.mxu0 0.0
      %1002 = vmatprep.subr.mxu0 0.0
      %1003 = vmatpush1.msra.mxu0 0.0
      %1004 = vmatprep.subr.mxu0 0.0
      %1005 = vmatpush1.msra.mxu0 0.0
      %1006 = vmatprep.subr.mxu0 0.0
      %1007 = vmatpush1.msra.mxu0 0.0
      %1008 = vmatprep.subr.mxu0 0.0
      %1009 = vmatpush1.msra.mxu0 0.0
      %1010 = vmatprep.subr.mxu0 0.0
      %1011 = vmatpush1.msra.mxu0 0.0
      %1012 = vmatprep.subr.mxu0 0.0
      %1013 = vmatpush1.msra.mxu0 0.0
      %1014 = vmatprep.subr.mxu0 0.0
      %1015 = vmatpush1.msra.mxu0 0.0
      %1016 = vmatprep.subr.mxu0 0.0
      %1017 = vmatpush1.msra.mxu0 0.0
      %1018 = vmatprep.subr.mxu0 0.0
      %1019 = vmatpush1.msra.mxu0 0.0
      %1020 = vmatprep.subr.mxu0 0.0
      %1021 = vmatpush1.msra.mxu0 0.0
      %1022 = vmatprep.subr.mxu0 0.0
      %1023 = vmatpush1.msra.mxu0 0.0
      %1024 = vmatprep.subr.mxu0 0.0
      %1025 = vmatpush1.msra.mxu0 0.0
      %1026 = vmatprep.subr.mxu0 0.0
      %1027 = vmatpush1.msra.mxu0 0.0
      %1028 = vmatprep.subr.mxu0 0.0
      %1029 = vmatpush1.msra.mxu0 0.0
      %1030 = vmatprep.mubr.f32.mxu0 0.0
      %1031 = vmatmul.mubr.f32.gmra.mrb[0].mxu0 %v964
      %v1032 = vpop.f32.mrb[0].mxu0
      %v1033 = vadd.f32 0.0, %v1032
      %v1034 = vpop.f32.mrb[0].mxu0
      %1035 = vdwg.mxu0
      %v1036 = vadd.f32 %v959, %v1033
      %v1037 = vxor.u32 %v1036, 2147483648
      %v1038 = vmul.f32 %v1037, 1.442695
      %v1039 = vpow.pop %v1038
      %v1040 = vadd.f32 %v1039, 1.0
      %v1041 = vrcp.pop %v1040
      %v1042 = vmul.f32 1.0, %v1041
      %v1043 = vtanh.pop %v1036
      %v1044 = vld [vmem:[#allocation3] sm:$0x3]
      %1046 = vrot.lane.b32.xlu0 %v1044, 16
      %v1047 = vpop.permute.xlu0 %1046
      %v1049 = vmul.f32 %v1042, %v1047
      %1051 = vrot.lane.b32.xlu0 %v1043, 96
      %v1052 = vpop.permute.xlu0 %1051
      %v1054 = vmul.f32 %v1042, %v1052
      %1056 = vrot.lane.b32.xlu0 %v1054, 16
      %v1057 = vpop.permute.xlu0 %1056
      %v1059 = vadd.f32 %v1049, %v1057
      %v1060 = vtanh.pop %v1059
      %1062 = vrot.lane.b32.xlu0 %v1060, 32
      %v1063 = vpop.permute.xlu0 %1062
      %v1065 = vmul.f32 %v1042, %v1063
      %s1066 = scalar_lea.vmem %s2, %s957
      %v1067 = vld [vmem:[%s1066] sm:$0x3]
      %v1068 = vsub.f32 1.0, %v1067
      %1070 = vset.pattern.permute.xlu0 0
      %1071 = vperm.xlu0 %1070, %v1067
      %v1072 = vpop.permute.xlu0 %1071
      %v1074 = vmul.f32 %v1072, %v1065
      %1076 = vset.pattern.permute.xlu0 0
      %1077 = vperm.xlu0 %1076, %v1068
      %v1078 = vpop.permute.xlu0 %1077
      %v1080 = vmul.f32 %v1078, %v960
      %1082 = vrot.lane.b32.xlu0 %v1080, 48
      %v1083 = vpop.permute.xlu0 %1082
      %v1085 = vadd.f32 %v1074, %v1083
      %1087 = vrot.lane.b32.xlu0 %v1085, 80
      %v1088 = vpop.permute.xlu0 %1087
      %1090 = vst.msk [vmem:[#allocation2] sm:$0x3] %vm192, %v1088
      %v1091 = vmul.f32 %v1072, %v1059
      %v1092 = vld [vmem:[#allocation3] sm:$0x3]
      %v1093 = vmul.f32 %v1078, %v1092
      %1095 = vrot.lane.b32.xlu0 %v1093, 16
      %v1096 = vpop.permute.xlu0 %1095
      %v1098 = vadd.f32 %v1091, %v1096
      %1100 = vrot.lane.b32.xlu0 %v1098, 112
      %v1101 = vpop.permute.xlu0 %1100
      %1103 = vst.msk [vmem:[#allocation3] sm:$0x3] %vm192, %v1101
      %v1104 = vld [vmem:[#allocation2] sm:$0x3]
      %v1105 = vmul.f32 %v1072, %v1104
      %s1106 = scalar_lea.vmem %s190, %s957
      %1107 = vst.msk [vmem:[%s1106] sm:$0x3] %vm192, %v1105
      %s1108 = scalar_select %p191, 1, 6
      %s1109 = smul.u32 %s1108, 2
      %s1110 = scalar_lea.vmem %s180, %s1109
      %v1111 = vld [vmem:[%s1110] sm:$0x3]
      %v1112 = vld [vmem:[#allocation2] sm:$0x3]
      %v1113 = vld [vmem:[%s185] sm:$0xff]
      %v1114 = vld [vmem:[%s185 + $0x8] sm:$0xff]
      %v1116 = vsel %vm202, %v1112, 0
      %1118 = vmatprep.subr.mxu0 0.0
      %1119 = vmatpush1.msra.mxu0 %v1113
      %1120 = vmatprep.subr.mxu0 0.0
      %1121 = vmatpush1.msra.mxu0 %v1114
      %1122 = vmatprep.subr.mxu0 0.0
      %1123 = vmatpush1.msra.mxu0 0.0
      %1124 = vmatprep.subr.mxu0 0.0
      %1125 = vmatpush1.msra.mxu0 0.0
      %1126 = vmatprep.subr.mxu0 0.0
      %1127 = vmatpush1.msra.mxu0 0.0
      %1128 = vmatprep.subr.mxu0 0.0
      %1129 = vmatpush1.msra.mxu0 0.0
      %1130 = vmatprep.subr.mxu0 0.0
      %1131 = vmatpush1.msra.mxu0 0.0
      %1132 = vmatprep.subr.mxu0 0.0
      %1133 = vmatpush1.msra.mxu0 0.0
      %1134 = vmatprep.subr.mxu0 0.0
      %1135 = vmatpush1.msra.mxu0 0.0
      %1136 = vmatprep.subr.mxu0 0.0
      %1137 = vmatpush1.msra.mxu0 0.0
      %1138 = vmatprep.subr.mxu0 0.0
      %1139 = vmatpush1.msra.mxu0 0.0
      %1140 = vmatprep.subr.mxu0 0.0
      %1141 = vmatpush1.msra.mxu0 0.0
      %1142 = vmatprep.subr.mxu0 0.0
      %1143 = vmatpush1.msra.mxu0 0.0
      %1144 = vmatprep.subr.mxu0 0.0
      %1145 = vmatpush1.msra.mxu0 0.0
      %1146 = vmatprep.subr.mxu0 0.0
      %1147 = vmatpush1.msra.mxu0 0.0
      %1148 = vmatprep.subr.mxu0 0.0
      %1149 = vmatpush1.msra.mxu0 0.0
      %1150 = vmatprep.subr.mxu0 0.0
      %1151 = vmatpush1.msra.mxu0 0.0
      %1152 = vmatprep.subr.mxu0 0.0
      %1153 = vmatpush1.msra.mxu0 0.0
      %1154 = vmatprep.subr.mxu0 0.0
      %1155 = vmatpush1.msra.mxu0 0.0
      %1156 = vmatprep.subr.mxu0 0.0
      %1157 = vmatpush1.msra.mxu0 0.0
      %1158 = vmatprep.subr.mxu0 0.0
      %1159 = vmatpush1.msra.mxu0 0.0
      %1160 = vmatprep.subr.mxu0 0.0
      %1161 = vmatpush1.msra.mxu0 0.0
      %1162 = vmatprep.subr.mxu0 0.0
      %1163 = vmatpush1.msra.mxu0 0.0
      %1164 = vmatprep.subr.mxu0 0.0
      %1165 = vmatpush1.msra.mxu0 0.0
      %1166 = vmatprep.subr.mxu0 0.0
      %1167 = vmatpush1.msra.mxu0 0.0
      %1168 = vmatprep.subr.mxu0 0.0
      %1169 = vmatpush1.msra.mxu0 0.0
      %1170 = vmatprep.subr.mxu0 0.0
      %1171 = vmatpush1.msra.mxu0 0.0
      %1172 = vmatprep.subr.mxu0 0.0
      %1173 = vmatpush1.msra.mxu0 0.0
      %1174 = vmatprep.subr.mxu0 0.0
      %1175 = vmatpush1.msra.mxu0 0.0
      %1176 = vmatprep.subr.mxu0 0.0
      %1177 = vmatpush1.msra.mxu0 0.0
      %1178 = vmatprep.subr.mxu0 0.0
      %1179 = vmatpush1.msra.mxu0 0.0
      %1180 = vmatprep.subr.mxu0 0.0
      %1181 = vmatpush1.msra.mxu0 0.0
      %1182 = vmatprep.mubr.f32.mxu0 0.0
      %1183 = vmatmul.mubr.f32.gmra.mrb[0].mxu0 %v1116
      %v1184 = vpop.f32.mrb[0].mxu0
      %v1185 = vadd.f32 0.0, %v1184
      %v1186 = vpop.f32.mrb[0].mxu0
      %1187 = vdwg.mxu0
      %v1188 = vadd.f32 %v1111, %v1185
      %v1189 = vxor.u32 %v1188, 2147483648
      %v1190 = vmul.f32 %v1189, 1.442695
      %v1191 = vpow.pop %v1190
      %v1192 = vadd.f32 %v1191, 1.0
      %v1193 = vrcp.pop %v1192
      %v1194 = vmul.f32 1.0, %v1193
      %v1195 = vtanh.pop %v1188
      %v1196 = vld [vmem:[#allocation3] sm:$0x3]
      %1198 = vrot.lane.b32.xlu0 %v1196, 16
      %v1199 = vpop.permute.xlu0 %1198
      %v1201 = vmul.f32 %v1194, %v1199
      %1203 = vrot.lane.b32.xlu0 %v1195, 96
      %v1204 = vpop.permute.xlu0 %1203
      %v1206 = vmul.f32 %v1194, %v1204
      %1208 = vrot.lane.b32.xlu0 %v1206, 16
      %v1209 = vpop.permute.xlu0 %1208
      %v1211 = vadd.f32 %v1201, %v1209
      %v1212 = vtanh.pop %v1211
      %1214 = vrot.lane.b32.xlu0 %v1212, 32
      %v1215 = vpop.permute.xlu0 %1214
      %v1217 = vmul.f32 %v1194, %v1215
      %s1218 = scalar_lea.vmem %s2, %s1109
      %v1219 = vld [vmem:[%s1218] sm:$0x3]
      %v1220 = vsub.f32 1.0, %v1219
      %1222 = vset.pattern.permute.xlu0 0
      %1223 = vperm.xlu0 %1222, %v1219
      %v1224 = vpop.permute.xlu0 %1223
      %v1226 = vmul.f32 %v1224, %v1217
      %1228 = vset.pattern.permute.xlu0 0
      %1229 = vperm.xlu0 %1228, %v1220
      %v1230 = vpop.permute.xlu0 %1229
      %v1232 = vmul.f32 %v1230, %v1112
      %1234 = vrot.lane.b32.xlu0 %v1232, 48
      %v1235 = vpop.permute.xlu0 %1234
      %v1237 = vadd.f32 %v1226, %v1235
      %1239 = vrot.lane.b32.xlu0 %v1237, 80
      %v1240 = vpop.permute.xlu0 %1239
      %1242 = vst.msk [vmem:[#allocation2] sm:$0x3] %vm192, %v1240
      %v1243 = vmul.f32 %v1224, %v1211
      %v1244 = vld [vmem:[#allocation3] sm:$0x3]
      %v1245 = vmul.f32 %v1230, %v1244
      %1247 = vrot.lane.b32.xlu0 %v1245, 16
      %v1248 = vpop.permute.xlu0 %1247
      %v1250 = vadd.f32 %v1243, %v1248
      %1252 = vrot.lane.b32.xlu0 %v1250, 112
      %v1253 = vpop.permute.xlu0 %1252
      %1255 = vst.msk [vmem:[#allocation3] sm:$0x3] %vm192, %v1253
      %v1256 = vld [vmem:[#allocation2] sm:$0x3]
      %v1257 = vmul.f32 %v1224, %v1256
      %s1258 = scalar_lea.vmem %s190, %s1109
      %1259 = vst.msk [vmem:[%s1258] sm:$0x3] %vm192, %v1257
      %s1260 = scalar_select %p191, 0, 7
      %s1261 = smul.u32 %s1260, 2
      %s1262 = scalar_lea.vmem %s180, %s1261
      %v1263 = vld [vmem:[%s1262] sm:$0x3]
      %v1264 = vld [vmem:[#allocation2] sm:$0x3]
      %v1265 = vld [vmem:[%s185] sm:$0xff]
      %v1266 = vld [vmem:[%s185 + $0x8] sm:$0xff]
      %v1268 = vsel %vm202, %v1264, 0
      %1270 = vmatprep.subr.mxu0 0.0
      %1271 = vmatpush1.msra.mxu0 %v1265
      %1272 = vmatprep.subr.mxu0 0.0
      %1273 = vmatpush1.msra.mxu0 %v1266
      %1274 = vmatprep.subr.mxu0 0.0
      %1275 = vmatpush1.msra.mxu0 0.0
      %1276 = vmatprep.subr.mxu0 0.0
      %1277 = vmatpush1.msra.mxu0 0.0
      %1278 = vmatprep.subr.mxu0 0.0
      %1279 = vmatpush1.msra.mxu0 0.0
      %1280 = vmatprep.subr.mxu0 0.0
      %1281 = vmatpush1.msra.mxu0 0.0
      %1282 = vmatprep.subr.mxu0 0.0
      %1283 = vmatpush1.msra.mxu0 0.0
      %1284 = vmatprep.subr.mxu0 0.0
      %1285 = vmatpush1.msra.mxu0 0.0
      %1286 = vmatprep.subr.mxu0 0.0
      %1287 = vmatpush1.msra.mxu0 0.0
      %1288 = vmatprep.subr.mxu0 0.0
      %1289 = vmatpush1.msra.mxu0 0.0
      %1290 = vmatprep.subr.mxu0 0.0
      %1291 = vmatpush1.msra.mxu0 0.0
      %1292 = vmatprep.subr.mxu0 0.0
      %1293 = vmatpush1.msra.mxu0 0.0
      %1294 = vmatprep.subr.mxu0 0.0
      %1295 = vmatpush1.msra.mxu0 0.0
      %1296 = vmatprep.subr.mxu0 0.0
      %1297 = vmatpush1.msra.mxu0 0.0
      %1298 = vmatprep.subr.mxu0 0.0
      %1299 = vmatpush1.msra.mxu0 0.0
      %1300 = vmatprep.subr.mxu0 0.0
      %1301 = vmatpush1.msra.mxu0 0.0
      %1302 = vmatprep.subr.mxu0 0.0
      %1303 = vmatpush1.msra.mxu0 0.0
      %1304 = vmatprep.subr.mxu0 0.0
      %1305 = vmatpush1.msra.mxu0 0.0
      %1306 = vmatprep.subr.mxu0 0.0
      %1307 = vmatpush1.msra.mxu0 0.0
      %1308 = vmatprep.subr.mxu0 0.0
      %1309 = vmatpush1.msra.mxu0 0.0
      %1310 = vmatprep.subr.mxu0 0.0
      %1311 = vmatpush1.msra.mxu0 0.0
      %1312 = vmatprep.subr.mxu0 0.0
      %1313 = vmatpush1.msra.mxu0 0.0
      %1314 = vmatprep.subr.mxu0 0.0
      %1315 = vmatpush1.msra.mxu0 0.0
      %1316 = vmatprep.subr.mxu0 0.0
      %1317 = vmatpush1.msra.mxu0 0.0
      %1318 = vmatprep.subr.mxu0 0.0
      %1319 = vmatpush1.msra.mxu0 0.0
      %1320 = vmatprep.subr.mxu0 0.0
      %1321 = vmatpush1.msra.mxu0 0.0
      %1322 = vmatprep.subr.mxu0 0.0
      %1323 = vmatpush1.msra.mxu0 0.0
      %1324 = vmatprep.subr.mxu0 0.0
      %1325 = vmatpush1.msra.mxu0 0.0
      %1326 = vmatprep.subr.mxu0 0.0
      %1327 = vmatpush1.msra.mxu0 0.0
      %1328 = vmatprep.subr.mxu0 0.0
      %1329 = vmatpush1.msra.mxu0 0.0
      %1330 = vmatprep.subr.mxu0 0.0
      %1331 = vmatpush1.msra.mxu0 0.0
      %1332 = vmatprep.subr.mxu0 0.0
      %1333 = vmatpush1.msra.mxu0 0.0
      %1334 = vmatprep.mubr.f32.mxu0 0.0
      %1335 = vmatmul.mubr.f32.gmra.mrb[0].mxu0 %v1268
      %v1336 = vpop.f32.mrb[0].mxu0
      %v1337 = vadd.f32 0.0, %v1336
      %v1338 = vpop.f32.mrb[0].mxu0
      %1339 = vdwg.mxu0
      %v1340 = vadd.f32 %v1263, %v1337
      %v1341 = vxor.u32 %v1340, 2147483648
      %v1342 = vmul.f32 %v1341, 1.442695
      %v1343 = vpow.pop %v1342
      %v1344 = vadd.f32 %v1343, 1.0
      %v1345 = vrcp.pop %v1344
      %v1346 = vmul.f32 1.0, %v1345
      %v1347 = vtanh.pop %v1340
      %v1348 = vld [vmem:[#allocation3] sm:$0x3]
      %1350 = vrot.lane.b32.xlu0 %v1348, 16
      %v1351 = vpop.permute.xlu0 %1350
      %v1353 = vmul.f32 %v1346, %v1351
      %1355 = vrot.lane.b32.xlu0 %v1347, 96
      %v1356 = vpop.permute.xlu0 %1355
      %v1358 = vmul.f32 %v1346, %v1356
      %1360 = vrot.lane.b32.xlu0 %v1358, 16
      %v1361 = vpop.permute.xlu0 %1360
      %v1363 = vadd.f32 %v1353, %v1361
      %v1364 = vtanh.pop %v1363
      %1366 = vrot.lane.b32.xlu0 %v1364, 32
      %v1367 = vpop.permute.xlu0 %1366
      %v1369 = vmul.f32 %v1346, %v1367
      %s1370 = scalar_lea.vmem %s2, %s1261
      %v1371 = vld [vmem:[%s1370] sm:$0x3]
      %v1372 = vsub.f32 1.0, %v1371
      %1374 = vset.pattern.permute.xlu0 0
      %1375 = vperm.xlu0 %1374, %v1371
      %v1376 = vpop.permute.xlu0 %1375
      %v1378 = vmul.f32 %v1376, %v1369
      %1380 = vset.pattern.permute.xlu0 0
      %1381 = vperm.xlu0 %1380, %v1372
      %v1382 = vpop.permute.xlu0 %1381
      %v1384 = vmul.f32 %v1382, %v1264
      %1386 = vrot.lane.b32.xlu0 %v1384, 48
      %v1387 = vpop.permute.xlu0 %1386
      %v1389 = vadd.f32 %v1378, %v1387
      %1391 = vrot.lane.b32.xlu0 %v1389, 80
      %v1392 = vpop.permute.xlu0 %1391
      %1394 = vst.msk [vmem:[#allocation2] sm:$0x3] %vm192, %v1392
      %v1395 = vmul.f32 %v1376, %v1363
      %v1396 = vld [vmem:[#allocation3] sm:$0x3]
      %v1397 = vmul.f32 %v1382, %v1396
      %1399 = vrot.lane.b32.xlu0 %v1397, 16
      %v1400 = vpop.permute.xlu0 %1399
      %v1402 = vadd.f32 %v1395, %v1400
      %1404 = vrot.lane.b32.xlu0 %v1402, 112
      %v1405 = vpop.permute.xlu0 %1404
      %1407 = vst.msk [vmem:[#allocation3] sm:$0x3] %vm192, %v1405
      %v1408 = vld [vmem:[#allocation2] sm:$0x3]
      %v1409 = vmul.f32 %v1376, %v1408
      %s1410 = scalar_lea.vmem %s190, %s1261
      %1411 = vst.msk [vmem:[%s1410] sm:$0x3] %vm192, %v1409
      %p1412 = scmp.lt.s32.totalorder %s14, 1
      %s1413 = scalar_select %p1412, %s14, 1
      %s1414 = smul.addr %s1413, 8
      %s1415 = smul.addr %s1414, 2
      %s1416 = scalar_lea.vmem %s3, %s1415
      // Predicated region
      $region33: #{dcn_with_rcnn_forward.7} parent=31 // pred_check
        %p1417 = pneg %p105
      $region34: #{dcn_with_rcnn_forward.7} parent=31 // pred_check_branch
        %1419 = sbr.rel (%p1417) target = $region36
      $region35: #{dcn_with_rcnn_forward.7} parent=31 // pred_region
        _
      $region36: #{dcn_with_rcnn_forward.7} parent=31 // pred_fallthru
        _
    $region32: #{dcn_with_rcnn_forward.7} parent=5 // pred_fallthru
      _
    %p1420 = scmp.le.s32.totalorder 2, %s9
    // Predicated region
    $region37: #{dcn_with_rcnn_forward.7} parent=5 // pred_check
      %p1421 = pneg %p1420
    $region38: #{dcn_with_rcnn_forward.7} parent=5 // pred_check_branch
      %1423 = sbr.rel (%p1421) target = $region40
    $region39: #{dcn_with_rcnn_forward.7} parent=5 // pred_region
      %s1424 = ssub.s32 %s9, 2
      // Predicated region
      $region41: #{dcn_with_rcnn_forward.7} parent=39 // pred_check
        %p1425 = pneg %p111
      $region42: #{dcn_with_rcnn_forward.7} parent=39 // pred_check_branch
        %1427 = sbr.rel (%p1425) target = $region44
      $region43: #{dcn_with_rcnn_forward.7} parent=39 // pred_region
        %p1428 = scmp.lt.s32.totalorder %s15, 1
        %s1429 = scalar_select %p1428, %s15, 1
        %s1430 = smul.addr %s1429, 8
        %s1431 = smul.addr %s1430, 2
        %s1432 = scalar_lea.vmem %s3, %s1431
      $region44: #{dcn_with_rcnn_forward.7} parent=39 // pred_fallthru
        _
    $region40: #{dcn_with_rcnn_forward.7} parent=5 // pred_fallthru
      _
  $region6: #{dcn_with_rcnn_forward.7} parent=0 // loop_footer
    %s13 = sadd.s32 1, %s9
  $region7: #{dcn_with_rcnn_forward.7} parent=0 // loop_footer_branch
    %8 = sbr.rel target = $region3
  $region8: #{dcn_with_rcnn_forward.7} parent=0 // loop_exit
    _

// kernel: dcn_with_rcnn_forward.8
$region0: #{dcn_with_rcnn_forward.8}
  #allocation0 [shape = 'u32[]', space=smem, size = 0x4, offset = 0x4, fixed_abs, tag = 'smem constant byte address 0x4 - core index']
  #allocation1 [shape = 'u32[144,128]{1,0:T(1,128)}', space=vmem, size = 0x12000, scoped, tag = 'internal scratch']
  %s0 = inlined_call_operand.vmem [shape: bf16[32,2048], index: 0, kind: input, shape index: {}]
  %s1 = inlined_call_operand.vmem [shape: bf16[2048,64], index: 1, kind: input, shape index: {}]
  %s2 = inlined_call_operand.vmem [shape: f32[1,64], index: 2, kind: input, shape index: {}]
  %s3 = inlined_call_operand.vmem [shape: f32[32,64], index: 3, kind: output, shape index: {}]
  %s4 = sld [smem:[#allocation0]]
  $region22: #{dcn_with_rcnn_forward.8} parent=0
    _
  %s6 = ssub.s32 1, %s4
  %s7 = scalar_select 0, %s6, %s4
  // Predicated region
  $region2: #{dcn_with_rcnn_forward.8} parent=0 // pred_check
    _
  $region3: #{dcn_with_rcnn_forward.8} parent=0 // pred_check_branch
    %9 = sbr.rel (0) target = $region5
  $region4: #{dcn_with_rcnn_forward.8} parent=0 // pred_region
    _
  $region5: #{dcn_with_rcnn_forward.8} parent=0 // pred_fallthru
    _
  // Predicated region
  $region6: #{dcn_with_rcnn_forward.8} parent=0 // pred_check
    _
  $region7: #{dcn_with_rcnn_forward.8} parent=0 // pred_check_branch
    %11 = sbr.rel (0) target = $region9
  $region8: #{dcn_with_rcnn_forward.8} parent=0 // pred_region
    _
  $region9: #{dcn_with_rcnn_forward.8} parent=0 // pred_fallthru
    _
  // Predicated region
  $region10: #{dcn_with_rcnn_forward.8} parent=0 // pred_check
    _
  $region11: #{dcn_with_rcnn_forward.8} parent=0 // pred_check_branch
    %13 = sbr.rel (0) target = $region13
  $region12: #{dcn_with_rcnn_forward.8} parent=0 // pred_region
    _
  $region13: #{dcn_with_rcnn_forward.8} parent=0 // pred_fallthru
    _
  %v15 = vld [vmem:[%s0] sm:$0xff]
  %v16 = vld [vmem:[%s0 + $0x8] sm:$0xff]
  %v17 = vld [vmem:[%s0 + $0x10] sm:$0xff]
  %v18 = vld [vmem:[%s0 + $0x18] sm:$0xff]
  %v19 = vld [vmem:[%s0 + $0x20] sm:$0xff]
  %v20 = vld [vmem:[%s0 + $0x28] sm:$0xff]
  %v21 = vld [vmem:[%s0 + $0x30] sm:$0xff]
  %v22 = vld [vmem:[%s0 + $0x38] sm:$0xff]
  %v23 = vld [vmem:[%s0 + $0x40] sm:$0xff]
  %v24 = vld [vmem:[%s0 + $0x48] sm:$0xff]
  %v25 = vld [vmem:[%s0 + $0x50] sm:$0xff]
  %v26 = vld [vmem:[%s0 + $0x58] sm:$0xff]
  %v27 = vld [vmem:[%s0 + $0x60] sm:$0xff]
  %v28 = vld [vmem:[%s0 + $0x68] sm:$0xff]
  %v29 = vld [vmem:[%s0 + $0x70] sm:$0xff]
  %v30 = vld [vmem:[%s0 + $0x78] sm:$0xff]
  %v31 = vld [vmem:[%s0 + $0x80] sm:$0xff]
  %v32 = vld [vmem:[%s0 + $0x88] sm:$0xff]
  %v33 = vld [vmem:[%s0 + $0x90] sm:$0xff]
  %v34 = vld [vmem:[%s0 + $0x98] sm:$0xff]
  %v35 = vld [vmem:[%s0 + $0xa0] sm:$0xff]
  %v36 = vld [vmem:[%s0 + $0xa8] sm:$0xff]
  %v37 = vld [vmem:[%s0 + $0xb0] sm:$0xff]
  %v38 = vld [vmem:[%s0 + $0xb8] sm:$0xff]
  %v39 = vld [vmem:[%s0 + $0xc0] sm:$0xff]
  %v40 = vld [vmem:[%s0 + $0xc8] sm:$0xff]
  %v41 = vld [vmem:[%s0 + $0xd0] sm:$0xff]
  %v42 = vld [vmem:[%s0 + $0xd8] sm:$0xff]
  %v43 = vld [vmem:[%s0 + $0xe0] sm:$0xff]
  %v44 = vld [vmem:[%s0 + $0xe8] sm:$0xff]
  %v45 = vld [vmem:[%s0 + $0xf0] sm:$0xff]
  %v46 = vld [vmem:[%s0 + $0xf8] sm:$0xff]
  %v47 = vld [vmem:[%s1] sm:$0xf]
  %v48 = vld [vmem:[%s1 + $0x4] sm:$0xf]
  %v49 = vld [vmem:[%s1 + $0x8] sm:$0xf]
  %v50 = vld [vmem:[%s1 + $0xc] sm:$0xf]
  %v51 = vld [vmem:[%s1 + $0x10] sm:$0xf]
  %v52 = vld [vmem:[%s1 + $0x14] sm:$0xf]
  %v53 = vld [vmem:[%s1 + $0x18] sm:$0xf]
  %v54 = vld [vmem:[%s1 + $0x1c] sm:$0xf]
  %v55 = vld [vmem:[%s1 + $0x20] sm:$0xf]
  %v56 = vld [vmem:[%s1 + $0x24] sm:$0xf]
  %v57 = vld [vmem:[%s1 + $0x28] sm:$0xf]
  %v58 = vld [vmem:[%s1 + $0x2c] sm:$0xf]
  %v59 = vld [vmem:[%s1 + $0x30] sm:$0xf]
  %v60 = vld [vmem:[%s1 + $0x34] sm:$0xf]
  %v61 = vld [vmem:[%s1 + $0x38] sm:$0xf]
  %v62 = vld [vmem:[%s1 + $0x3c] sm:$0xf]
  %v63 = vld [vmem:[%s1 + $0x40] sm:$0xf]
  %v64 = vld [vmem:[%s1 + $0x44] sm:$0xf]
  %v65 = vld [vmem:[%s1 + $0x48] sm:$0xf]
  %v66 = vld [vmem:[%s1 + $0x4c] sm:$0xf]
  %v67 = vld [vmem:[%s1 + $0x50] sm:$0xf]
  %v68 = vld [vmem:[%s1 + $0x54] sm:$0xf]
  %v69 = vld [vmem:[%s1 + $0x58] sm:$0xf]
  %v70 = vld [vmem:[%s1 + $0x5c] sm:$0xf]
  %v71 = vld [vmem:[%s1 + $0x60] sm:$0xf]
  %v72 = vld [vmem:[%s1 + $0x64] sm:$0xf]
  %v73 = vld [vmem:[%s1 + $0x68] sm:$0xf]
  %v74 = vld [vmem:[%s1 + $0x6c] sm:$0xf]
  %v75 = vld [vmem:[%s1 + $0x70] sm:$0xf]
  %v76 = vld [vmem:[%s1 + $0x74] sm:$0xf]
  %v77 = vld [vmem:[%s1 + $0x78] sm:$0xf]
  %v78 = vld [vmem:[%s1 + $0x7c] sm:$0xf]
  %v79 = vld [vmem:[%s1 + $0x80] sm:$0xf]
  %v80 = vld [vmem:[%s1 + $0x84] sm:$0xf]
  %v81 = vld [vmem:[%s1 + $0x88] sm:$0xf]
  %v82 = vld [vmem:[%s1 + $0x8c] sm:$0xf]
  %v83 = vld [vmem:[%s1 + $0x90] sm:$0xf]
  %v84 = vld [vmem:[%s1 + $0x94] sm:$0xf]
  %v85 = vld [vmem:[%s1 + $0x98] sm:$0xf]
  %v86 = vld [vmem:[%s1 + $0x9c] sm:$0xf]
  %v87 = vld [vmem:[%s1 + $0xa0] sm:$0xf]
  %v88 = vld [vmem:[%s1 + $0xa4] sm:$0xf]
  %v89 = vld [vmem:[%s1 + $0xa8] sm:$0xf]
  %v90 = vld [vmem:[%s1 + $0xac] sm:$0xf]
  %v91 = vld [vmem:[%s1 + $0xb0] sm:$0xf]
  %v92 = vld [vmem:[%s1 + $0xb4] sm:$0xf]
  %v93 = vld [vmem:[%s1 + $0xb8] sm:$0xf]
  %v94 = vld [vmem:[%s1 + $0xbc] sm:$0xf]
  %v95 = vld [vmem:[%s1 + $0xc0] sm:$0xf]
  %v96 = vld [vmem:[%s1 + $0xc4] sm:$0xf]
  %v97 = vld [vmem:[%s1 + $0xc8] sm:$0xf]
  %v98 = vld [vmem:[%s1 + $0xcc] sm:$0xf]
  %v99 = vld [vmem:[%s1 + $0xd0] sm:$0xf]
  %v100 = vld [vmem:[%s1 + $0xd4] sm:$0xf]
  %v101 = vld [vmem:[%s1 + $0xd8] sm:$0xf]
  %v102 = vld [vmem:[%s1 + $0xdc] sm:$0xf]
  %v103 = vld [vmem:[%s1 + $0xe0] sm:$0xf]
  %v104 = vld [vmem:[%s1 + $0xe4] sm:$0xf]
  %v105 = vld [vmem:[%s1 + $0xe8] sm:$0xf]
  %v106 = vld [vmem:[%s1 + $0xec] sm:$0xf]
  %v107 = vld [vmem:[%s1 + $0xf0] sm:$0xf]
  %v108 = vld [vmem:[%s1 + $0xf4] sm:$0xf]
  %v109 = vld [vmem:[%s1 + $0xf8] sm:$0xf]
  %v110 = vld [vmem:[%s1 + $0xfc] sm:$0xf]
  %v111 = vld [vmem:[%s1 + $0x100] sm:$0xf]
  %v112 = vld [vmem:[%s1 + $0x104] sm:$0xf]
  %v113 = vld [vmem:[%s1 + $0x108] sm:$0xf]
  %v114 = vld [vmem:[%s1 + $0x10c] sm:$0xf]
  %v115 = vld [vmem:[%s1 + $0x110] sm:$0xf]
  %v116 = vld [vmem:[%s1 + $0x114] sm:$0xf]
  %v117 = vld [vmem:[%s1 + $0x118] sm:$0xf]
  %v118 = vld [vmem:[%s1 + $0x11c] sm:$0xf]
  %v119 = vld [vmem:[%s1 + $0x120] sm:$0xf]
  %v120 = vld [vmem:[%s1 + $0x124] sm:$0xf]
  %v121 = vld [vmem:[%s1 + $0x128] sm:$0xf]
  %v122 = vld [vmem:[%s1 + $0x12c] sm:$0xf]
  %v123 = vld [vmem:[%s1 + $0x130] sm:$0xf]
  %v124 = vld [vmem:[%s1 + $0x134] sm:$0xf]
  %v125 = vld [vmem:[%s1 + $0x138] sm:$0xf]
  %v126 = vld [vmem:[%s1 + $0x13c] sm:$0xf]
  %v127 = vld [vmem:[%s1 + $0x140] sm:$0xf]
  %v128 = vld [vmem:[%s1 + $0x144] sm:$0xf]
  %v129 = vld [vmem:[%s1 + $0x148] sm:$0xf]
  %v130 = vld [vmem:[%s1 + $0x14c] sm:$0xf]
  %v131 = vld [vmem:[%s1 + $0x150] sm:$0xf]
  %v132 = vld [vmem:[%s1 + $0x154] sm:$0xf]
  %v133 = vld [vmem:[%s1 + $0x158] sm:$0xf]
  %v134 = vld [vmem:[%s1 + $0x15c] sm:$0xf]
  %v135 = vld [vmem:[%s1 + $0x160] sm:$0xf]
  %v136 = vld [vmem:[%s1 + $0x164] sm:$0xf]
  %v137 = vld [vmem:[%s1 + $0x168] sm:$0xf]
  %v138 = vld [vmem:[%s1 + $0x16c] sm:$0xf]
  %v139 = vld [vmem:[%s1 + $0x170] sm:$0xf]
  %v140 = vld [vmem:[%s1 + $0x174] sm:$0xf]
  %v141 = vld [vmem:[%s1 + $0x178] sm:$0xf]
  %v142 = vld [vmem:[%s1 + $0x17c] sm:$0xf]
  %v143 = vld [vmem:[%s1 + $0x180] sm:$0xf]
  %v144 = vld [vmem:[%s1 + $0x184] sm:$0xf]
  %v145 = vld [vmem:[%s1 + $0x188] sm:$0xf]
  %v146 = vld [vmem:[%s1 + $0x18c] sm:$0xf]
  %v147 = vld [vmem:[%s1 + $0x190] sm:$0xf]
  %v148 = vld [vmem:[%s1 + $0x194] sm:$0xf]
  %v149 = vld [vmem:[%s1 + $0x198] sm:$0xf]
  %v150 = vld [vmem:[%s1 + $0x19c] sm:$0xf]
  %v151 = vld [vmem:[%s1 + $0x1a0] sm:$0xf]
  %v152 = vld [vmem:[%s1 + $0x1a4] sm:$0xf]
  %v153 = vld [vmem:[%s1 + $0x1a8] sm:$0xf]
  %v154 = vld [vmem:[%s1 + $0x1ac] sm:$0xf]
  %v155 = vld [vmem:[%s1 + $0x1b0] sm:$0xf]
  %v156 = vld [vmem:[%s1 + $0x1b4] sm:$0xf]
  %v157 = vld [vmem:[%s1 + $0x1b8] sm:$0xf]
  %v158 = vld [vmem:[%s1 + $0x1bc] sm:$0xf]
  %v159 = vld [vmem:[%s1 + $0x1c0] sm:$0xf]
  %v160 = vld [vmem:[%s1 + $0x1c4] sm:$0xf]
  %v161 = vld [vmem:[%s1 + $0x1c8] sm:$0xf]
  %v162 = vld [vmem:[%s1 + $0x1cc] sm:$0xf]
  %v163 = vld [vmem:[%s1 + $0x1d0] sm:$0xf]
  %v164 = vld [vmem:[%s1 + $0x1d4] sm:$0xf]
  %v165 = vld [vmem:[%s1 + $0x1d8] sm:$0xf]
  %v166 = vld [vmem:[%s1 + $0x1dc] sm:$0xf]
  %v167 = vld [vmem:[%s1 + $0x1e0] sm:$0xf]
  %v168 = vld [vmem:[%s1 + $0x1e4] sm:$0xf]
  %v169 = vld [vmem:[%s1 + $0x1e8] sm:$0xf]
  %v170 = vld [vmem:[%s1 + $0x1ec] sm:$0xf]
  %v171 = vld [vmem:[%s1 + $0x1f0] sm:$0xf]
  %v172 = vld [vmem:[%s1 + $0x1f4] sm:$0xf]
  %v173 = vld [vmem:[%s1 + $0x1f8] sm:$0xf]
  %v174 = vld [vmem:[%s1 + $0x1fc] sm:$0xf]
  %v175 = vld [vmem:[%s1 + $0x200] sm:$0xf]
  %v176 = vld [vmem:[%s1 + $0x204] sm:$0xf]
  %v177 = vld [vmem:[%s1 + $0x208] sm:$0xf]
  %v178 = vld [vmem:[%s1 + $0x20c] sm:$0xf]
  %v179 = vld [vmem:[%s1 + $0x210] sm:$0xf]
  %v180 = vld [vmem:[%s1 + $0x214] sm:$0xf]
  %v181 = vld [vmem:[%s1 + $0x218] sm:$0xf]
  %v182 = vld [vmem:[%s1 + $0x21c] sm:$0xf]
  %v183 = vld [vmem:[%s1 + $0x220] sm:$0xf]
  %v184 = vld [vmem:[%s1 + $0x224] sm:$0xf]
  %v185 = vld [vmem:[%s1 + $0x228] sm:$0xf]
  %v186 = vld [vmem:[%s1 + $0x22c] sm:$0xf]
  %v187 = vld [vmem:[%s1 + $0x230] sm:$0xf]
  %v188 = vld [vmem:[%s1 + $0x234] sm:$0xf]
  %v189 = vld [vmem:[%s1 + $0x238] sm:$0xf]
  %v190 = vld [vmem:[%s1 + $0x23c] sm:$0xf]
  %v191 = vld [vmem:[%s1 + $0x240] sm:$0xf]
  %v192 = vld [vmem:[%s1 + $0x244] sm:$0xf]
  %v193 = vld [vmem:[%s1 + $0x248] sm:$0xf]
  %v194 = vld [vmem:[%s1 + $0x24c] sm:$0xf]
  %v195 = vld [vmem:[%s1 + $0x250] sm:$0xf]
  %v196 = vld [vmem:[%s1 + $0x254] sm:$0xf]
  %v197 = vld [vmem:[%s1 + $0x258] sm:$0xf]
  %v198 = vld [vmem:[%s1 + $0x25c] sm:$0xf]
  %v199 = vld [vmem:[%s1 + $0x260] sm:$0xf]
  %v200 = vld [vmem:[%s1 + $0x264] sm:$0xf]
  %v201 = vld [vmem:[%s1 + $0x268] sm:$0xf]
  %v202 = vld [vmem:[%s1 + $0x26c] sm:$0xf]
  %v203 = vld [vmem:[%s1 + $0x270] sm:$0xf]
  %v204 = vld [vmem:[%s1 + $0x274] sm:$0xf]
  %v205 = vld [vmem:[%s1 + $0x278] sm:$0xf]
  %v206 = vld [vmem:[%s1 + $0x27c] sm:$0xf]
  %v207 = vld [vmem:[%s1 + $0x280] sm:$0xf]
  %v208 = vld [vmem:[%s1 + $0x284] sm:$0xf]
  %v209 = vld [vmem:[%s1 + $0x288] sm:$0xf]
  %v210 = vld [vmem:[%s1 + $0x28c] sm:$0xf]
  %v211 = vld [vmem:[%s1 + $0x290] sm:$0xf]
  %v212 = vld [vmem:[%s1 + $0x294] sm:$0xf]
  %v213 = vld [vmem:[%s1 + $0x298] sm:$0xf]
  %v214 = vld [vmem:[%s1 + $0x29c] sm:$0xf]
  %v215 = vld [vmem:[%s1 + $0x2a0] sm:$0xf]
  %v216 = vld [vmem:[%s1 + $0x2a4] sm:$0xf]
  %v217 = vld [vmem:[%s1 + $0x2a8] sm:$0xf]
  %v218 = vld [vmem:[%s1 + $0x2ac] sm:$0xf]
  %v219 = vld [vmem:[%s1 + $0x2b0] sm:$0xf]
  %v220 = vld [vmem:[%s1 + $0x2b4] sm:$0xf]
  %v221 = vld [vmem:[%s1 + $0x2b8] sm:$0xf]
  %v222 = vld [vmem:[%s1 + $0x2bc] sm:$0xf]
  %v223 = vld [vmem:[%s1 + $0x2c0] sm:$0xf]
  %v224 = vld [vmem:[%s1 + $0x2c4] sm:$0xf]
  %v225 = vld [vmem:[%s1 + $0x2c8] sm:$0xf]
  %v226 = vld [vmem:[%s1 + $0x2cc] sm:$0xf]
  %v227 = vld [vmem:[%s1 + $0x2d0] sm:$0xf]
  %v228 = vld [vmem:[%s1 + $0x2d4] sm:$0xf]
  %v229 = vld [vmem:[%s1 + $0x2d8] sm:$0xf]
  %v230 = vld [vmem:[%s1 + $0x2dc] sm:$0xf]
  %v231 = vld [vmem:[%s1 + $0x2e0] sm:$0xf]
  %v232 = vld [vmem:[%s1 + $0x2e4] sm:$0xf]
  %v233 = vld [vmem:[%s1 + $0x2e8] sm:$0xf]
  %v234 = vld [vmem:[%s1 + $0x2ec] sm:$0xf]
  %v235 = vld [vmem:[%s1 + $0x2f0] sm:$0xf]
  %v236 = vld [vmem:[%s1 + $0x2f4] sm:$0xf]
  %v237 = vld [vmem:[%s1 + $0x2f8] sm:$0xf]
  %v238 = vld [vmem:[%s1 + $0x2fc] sm:$0xf]
  %v239 = vld [vmem:[%s1 + $0x300] sm:$0xf]
  %v240 = vld [vmem:[%s1 + $0x304] sm:$0xf]
  %v241 = vld [vmem:[%s1 + $0x308] sm:$0xf]
  %v242 = vld [vmem:[%s1 + $0x30c] sm:$0xf]
  %v243 = vld [vmem:[%s1 + $0x310] sm:$0xf]
  %v244 = vld [vmem:[%s1 + $0x314] sm:$0xf]
  %v245 = vld [vmem:[%s1 + $0x318] sm:$0xf]
  %v246 = vld [vmem:[%s1 + $0x31c] sm:$0xf]
  %v247 = vld [vmem:[%s1 + $0x320] sm:$0xf]
  %v248 = vld [vmem:[%s1 + $0x324] sm:$0xf]
  %v249 = vld [vmem:[%s1 + $0x328] sm:$0xf]
  %v250 = vld [vmem:[%s1 + $0x32c] sm:$0xf]
  %v251 = vld [vmem:[%s1 + $0x330] sm:$0xf]
  %v252 = vld [vmem:[%s1 + $0x334] sm:$0xf]
  %v253 = vld [vmem:[%s1 + $0x338] sm:$0xf]
  %v254 = vld [vmem:[%s1 + $0x33c] sm:$0xf]
  %v255 = vld [vmem:[%s1 + $0x340] sm:$0xf]
  %v256 = vld [vmem:[%s1 + $0x344] sm:$0xf]
  %v257 = vld [vmem:[%s1 + $0x348] sm:$0xf]
  %v258 = vld [vmem:[%s1 + $0x34c] sm:$0xf]
  %v259 = vld [vmem:[%s1 + $0x350] sm:$0xf]
  %v260 = vld [vmem:[%s1 + $0x354] sm:$0xf]
  %v261 = vld [vmem:[%s1 + $0x358] sm:$0xf]
  %v262 = vld [vmem:[%s1 + $0x35c] sm:$0xf]
  %v263 = vld [vmem:[%s1 + $0x360] sm:$0xf]
  %v264 = vld [vmem:[%s1 + $0x364] sm:$0xf]
  %v265 = vld [vmem:[%s1 + $0x368] sm:$0xf]
  %v266 = vld [vmem:[%s1 + $0x36c] sm:$0xf]
  %v267 = vld [vmem:[%s1 + $0x370] sm:$0xf]
  %v268 = vld [vmem:[%s1 + $0x374] sm:$0xf]
  %v269 = vld [vmem:[%s1 + $0x378] sm:$0xf]
  %v270 = vld [vmem:[%s1 + $0x37c] sm:$0xf]
  %v271 = vld [vmem:[%s1 + $0x380] sm:$0xf]
  %v272 = vld [vmem:[%s1 + $0x384] sm:$0xf]
  %v273 = vld [vmem:[%s1 + $0x388] sm:$0xf]
  %v274 = vld [vmem:[%s1 + $0x38c] sm:$0xf]
  %v275 = vld [vmem:[%s1 + $0x390] sm:$0xf]
  %v276 = vld [vmem:[%s1 + $0x394] sm:$0xf]
  %v277 = vld [vmem:[%s1 + $0x398] sm:$0xf]
  %v278 = vld [vmem:[%s1 + $0x39c] sm:$0xf]
  %v279 = vld [vmem:[%s1 + $0x3a0] sm:$0xf]
  %v280 = vld [vmem:[%s1 + $0x3a4] sm:$0xf]
  %v281 = vld [vmem:[%s1 + $0x3a8] sm:$0xf]
  %v282 = vld [vmem:[%s1 + $0x3ac] sm:$0xf]
  %v283 = vld [vmem:[%s1 + $0x3b0] sm:$0xf]
  %v284 = vld [vmem:[%s1 + $0x3b4] sm:$0xf]
  %v285 = vld [vmem:[%s1 + $0x3b8] sm:$0xf]
  %v286 = vld [vmem:[%s1 + $0x3bc] sm:$0xf]
  %v287 = vld [vmem:[%s1 + $0x3c0] sm:$0xf]
  %v288 = vld [vmem:[%s1 + $0x3c4] sm:$0xf]
  %v289 = vld [vmem:[%s1 + $0x3c8] sm:$0xf]
  %v290 = vld [vmem:[%s1 + $0x3cc] sm:$0xf]
  %v291 = vld [vmem:[%s1 + $0x3d0] sm:$0xf]
  %v292 = vld [vmem:[%s1 + $0x3d4] sm:$0xf]
  %v293 = vld [vmem:[%s1 + $0x3d8] sm:$0xf]
  %v294 = vld [vmem:[%s1 + $0x3dc] sm:$0xf]
  %v295 = vld [vmem:[%s1 + $0x3e0] sm:$0xf]
  %v296 = vld [vmem:[%s1 + $0x3e4] sm:$0xf]
  %v297 = vld [vmem:[%s1 + $0x3e8] sm:$0xf]
  %v298 = vld [vmem:[%s1 + $0x3ec] sm:$0xf]
  %v299 = vld [vmem:[%s1 + $0x3f0] sm:$0xf]
  %v300 = vld [vmem:[%s1 + $0x3f4] sm:$0xf]
  %v301 = vld [vmem:[%s1 + $0x3f8] sm:$0xf]
  %v302 = vld [vmem:[%s1 + $0x3fc] sm:$0xf]
  %v303 = vld [vmem:[%s2] sm:$0x1]
  %v305 = vlaneseq
  %v306 = vshrl.u32 %v305, 7
  %v307 = vsub.s32 0, %v306
  %v308 = vrot.slane %v303, %v307
  %v342 = vunpack.c.l.b16 %v15
  %v343 = vunpack.c.h.b16 %v15
  %v344 = vunpack.c.l.b16 %v16
  %v345 = vunpack.c.h.b16 %v16
  %v346 = vunpack.c.l.b16 %v17
  %v347 = vunpack.c.h.b16 %v17
  %v348 = vunpack.c.l.b16 %v18
  %v349 = vunpack.c.h.b16 %v18
  %v350 = vunpack.c.l.b16 %v19
  %v351 = vunpack.c.h.b16 %v19
  %v352 = vunpack.c.l.b16 %v20
  %v353 = vunpack.c.h.b16 %v20
  %v354 = vunpack.c.l.b16 %v21
  %v355 = vunpack.c.h.b16 %v21
  %v356 = vunpack.c.l.b16 %v22
  %v357 = vunpack.c.h.b16 %v22
  %v358 = vunpack.c.l.b16 %v23
  %v359 = vunpack.c.h.b16 %v23
  %v360 = vunpack.c.l.b16 %v24
  %v361 = vunpack.c.h.b16 %v24
  %v362 = vunpack.c.l.b16 %v25
  %v363 = vunpack.c.h.b16 %v25
  %v364 = vunpack.c.l.b16 %v26
  %v365 = vunpack.c.h.b16 %v26
  %v366 = vunpack.c.l.b16 %v27
  %v367 = vunpack.c.h.b16 %v27
  %v368 = vunpack.c.l.b16 %v28
  %v369 = vunpack.c.h.b16 %v28
  %v370 = vunpack.c.l.b16 %v29
  %v371 = vunpack.c.h.b16 %v29
  %v372 = vunpack.c.l.b16 %v30
  %v373 = vunpack.c.h.b16 %v30
  %v374 = vunpack.c.l.b16 %v31
  %v375 = vunpack.c.h.b16 %v31
  %v376 = vunpack.c.l.b16 %v32
  %v377 = vunpack.c.h.b16 %v32
  %v378 = vunpack.c.l.b16 %v33
  %v379 = vunpack.c.h.b16 %v33
  %v380 = vunpack.c.l.b16 %v34
  %v381 = vunpack.c.h.b16 %v34
  %v382 = vunpack.c.l.b16 %v35
  %v383 = vunpack.c.h.b16 %v35
  %v384 = vunpack.c.l.b16 %v36
  %v385 = vunpack.c.h.b16 %v36
  %v386 = vunpack.c.l.b16 %v37
  %v387 = vunpack.c.h.b16 %v37
  %v388 = vunpack.c.l.b16 %v38
  %v389 = vunpack.c.h.b16 %v38
  %v390 = vunpack.c.l.b16 %v39
  %v391 = vunpack.c.h.b16 %v39
  %v392 = vunpack.c.l.b16 %v40
  %v393 = vunpack.c.h.b16 %v40
  %v394 = vunpack.c.l.b16 %v41
  %v395 = vunpack.c.h.b16 %v41
  %v396 = vunpack.c.l.b16 %v42
  %v397 = vunpack.c.h.b16 %v42
  %v398 = vunpack.c.l.b16 %v43
  %v399 = vunpack.c.h.b16 %v43
  %v400 = vunpack.c.l.b16 %v44
  %v401 = vunpack.c.h.b16 %v44
  %v402 = vunpack.c.l.b16 %v45
  %v403 = vunpack.c.h.b16 %v45
  %v404 = vunpack.c.l.b16 %v46
  %v405 = vunpack.c.h.b16 %v46
  %v406 = vpack.c.b16 %v358, %v342
  %v407 = vpack.c.b16 %v359, %v343
  %v408 = vpack.c.b16 %v360, %v344
  %v409 = vpack.c.b16 %v361, %v345
  %v410 = vpack.c.b16 %v362, %v346
  %v411 = vpack.c.b16 %v363, %v347
  %v412 = vpack.c.b16 %v364, %v348
  %v413 = vpack.c.b16 %v365, %v349
  %v414 = vpack.c.b16 %v366, %v350
  %v415 = vpack.c.b16 %v367, %v351
  %v416 = vpack.c.b16 %v368, %v352
  %v417 = vpack.c.b16 %v369, %v353
  %v418 = vpack.c.b16 %v370, %v354
  %v419 = vpack.c.b16 %v371, %v355
  %v420 = vpack.c.b16 %v372, %v356
  %v421 = vpack.c.b16 %v373, %v357
  %v422 = vpack.c.b16 %v390, %v374
  %v423 = vpack.c.b16 %v391, %v375
  %v424 = vpack.c.b16 %v392, %v376
  %v425 = vpack.c.b16 %v393, %v377
  %v426 = vpack.c.b16 %v394, %v378
  %v427 = vpack.c.b16 %v395, %v379
  %v428 = vpack.c.b16 %v396, %v380
  %v429 = vpack.c.b16 %v397, %v381
  %v430 = vpack.c.b16 %v398, %v382
  %v431 = vpack.c.b16 %v399, %v383
  %v432 = vpack.c.b16 %v400, %v384
  %v433 = vpack.c.b16 %v401, %v385
  %v434 = vpack.c.b16 %v402, %v386
  %v435 = vpack.c.b16 %v403, %v387
  %v436 = vpack.c.b16 %v404, %v388
  %v437 = vpack.c.b16 %v405, %v389
  %v726 = vunpack.c.l.b16 %v47
  %v727 = vunpack.c.l.b16 %v48
  %v728 = vunpack.c.l.b16 %v49
  %v729 = vunpack.c.l.b16 %v50
  %v730 = vunpack.c.l.b16 %v51
  %v731 = vunpack.c.l.b16 %v52
  %v732 = vunpack.c.l.b16 %v53
  %v733 = vunpack.c.l.b16 %v54
  %v734 = vunpack.c.l.b16 %v55
  %v735 = vunpack.c.l.b16 %v56
  %v736 = vunpack.c.l.b16 %v57
  %v737 = vunpack.c.l.b16 %v58
  %v738 = vunpack.c.l.b16 %v59
  %v739 = vunpack.c.l.b16 %v60
  %v740 = vunpack.c.l.b16 %v61
  %v741 = vunpack.c.l.b16 %v62
  %v742 = vunpack.c.l.b16 %v63
  %v743 = vunpack.c.l.b16 %v64
  %v744 = vunpack.c.l.b16 %v65
  %v745 = vunpack.c.l.b16 %v66
  %v746 = vunpack.c.l.b16 %v67
  %v747 = vunpack.c.l.b16 %v68
  %v748 = vunpack.c.l.b16 %v69
  %v749 = vunpack.c.l.b16 %v70
  %v750 = vunpack.c.l.b16 %v71
  %v751 = vunpack.c.l.b16 %v72
  %v752 = vunpack.c.l.b16 %v73
  %v753 = vunpack.c.l.b16 %v74
  %v754 = vunpack.c.l.b16 %v75
  %v755 = vunpack.c.l.b16 %v76
  %v756 = vunpack.c.l.b16 %v77
  %v757 = vunpack.c.l.b16 %v78
  %v758 = vunpack.c.l.b16 %v79
  %v759 = vunpack.c.l.b16 %v80
  %v760 = vunpack.c.l.b16 %v81
  %v761 = vunpack.c.l.b16 %v82
  %v762 = vunpack.c.l.b16 %v83
  %v763 = vunpack.c.l.b16 %v84
  %v764 = vunpack.c.l.b16 %v85
  %v765 = vunpack.c.l.b16 %v86
  %v766 = vunpack.c.l.b16 %v87
  %v767 = vunpack.c.l.b16 %v88
  %v768 = vunpack.c.l.b16 %v89
  %v769 = vunpack.c.l.b16 %v90
  %v770 = vunpack.c.l.b16 %v91
  %v771 = vunpack.c.l.b16 %v92
  %v772 = vunpack.c.l.b16 %v93
  %v773 = vunpack.c.l.b16 %v94
  %v774 = vunpack.c.l.b16 %v95
  %v775 = vunpack.c.l.b16 %v96
  %v776 = vunpack.c.l.b16 %v97
  %v777 = vunpack.c.l.b16 %v98
  %v778 = vunpack.c.l.b16 %v99
  %v779 = vunpack.c.l.b16 %v100
  %v780 = vunpack.c.l.b16 %v101
  %v781 = vunpack.c.l.b16 %v102
  %v782 = vunpack.c.l.b16 %v103
  %v783 = vunpack.c.l.b16 %v104
  %v784 = vunpack.c.l.b16 %v105
  %v785 = vunpack.c.l.b16 %v106
  %v786 = vunpack.c.l.b16 %v107
  %v787 = vunpack.c.l.b16 %v108
  %v788 = vunpack.c.l.b16 %v109
  %v789 = vunpack.c.l.b16 %v110
  %v790 = vunpack.c.l.b16 %v111
  %v791 = vunpack.c.l.b16 %v112
  %v792 = vunpack.c.l.b16 %v113
  %v793 = vunpack.c.l.b16 %v114
  %v794 = vunpack.c.l.b16 %v115
  %v795 = vunpack.c.l.b16 %v116
  %v796 = vunpack.c.l.b16 %v117
  %v797 = vunpack.c.l.b16 %v118
  %v798 = vunpack.c.l.b16 %v119
  %v799 = vunpack.c.l.b16 %v120
  %v800 = vunpack.c.l.b16 %v121
  %v801 = vunpack.c.l.b16 %v122
  %v802 = vunpack.c.l.b16 %v123
  %v803 = vunpack.c.l.b16 %v124
  %v804 = vunpack.c.l.b16 %v125
  %v805 = vunpack.c.l.b16 %v126
  %v806 = vunpack.c.l.b16 %v127
  %v807 = vunpack.c.l.b16 %v128
  %v808 = vunpack.c.l.b16 %v129
  %v809 = vunpack.c.l.b16 %v130
  %v810 = vunpack.c.l.b16 %v131
  %v811 = vunpack.c.l.b16 %v132
  %v812 = vunpack.c.l.b16 %v133
  %v813 = vunpack.c.l.b16 %v134
  %v814 = vunpack.c.l.b16 %v135
  %v815 = vunpack.c.l.b16 %v136
  %v816 = vunpack.c.l.b16 %v137
  %v817 = vunpack.c.l.b16 %v138
  %v818 = vunpack.c.l.b16 %v139
  %v819 = vunpack.c.l.b16 %v140
  %v820 = vunpack.c.l.b16 %v141
  %v821 = vunpack.c.l.b16 %v142
  %v822 = vunpack.c.l.b16 %v143
  %v823 = vunpack.c.l.b16 %v144
  %v824 = vunpack.c.l.b16 %v145
  %v825 = vunpack.c.l.b16 %v146
  %v826 = vunpack.c.l.b16 %v147
  %v827 = vunpack.c.l.b16 %v148
  %v828 = vunpack.c.l.b16 %v149
  %v829 = vunpack.c.l.b16 %v150
  %v830 = vunpack.c.l.b16 %v151
  %v831 = vunpack.c.l.b16 %v152
  %v832 = vunpack.c.l.b16 %v153
  %v833 = vunpack.c.l.b16 %v154
  %v834 = vunpack.c.l.b16 %v155
  %v835 = vunpack.c.l.b16 %v156
  %v836 = vunpack.c.l.b16 %v157
  %v837 = vunpack.c.l.b16 %v158
  %v838 = vunpack.c.l.b16 %v159
  %v839 = vunpack.c.l.b16 %v160
  %v840 = vunpack.c.l.b16 %v161
  %v841 = vunpack.c.l.b16 %v162
  %v842 = vunpack.c.l.b16 %v163
  %v843 = vunpack.c.l.b16 %v164
  %v844 = vunpack.c.l.b16 %v165
  %v845 = vunpack.c.l.b16 %v166
  %v846 = vunpack.c.l.b16 %v167
  %v847 = vunpack.c.l.b16 %v168
  %v848 = vunpack.c.l.b16 %v169
  %v849 = vunpack.c.l.b16 %v170
  %v850 = vunpack.c.l.b16 %v171
  %v851 = vunpack.c.l.b16 %v172
  %v852 = vunpack.c.l.b16 %v173
  %v853 = vunpack.c.l.b16 %v174
  %v854 = vunpack.c.l.b16 %v175
  %v855 = vunpack.c.l.b16 %v176
  %v856 = vunpack.c.l.b16 %v177
  %v857 = vunpack.c.l.b16 %v178
  %v858 = vunpack.c.l.b16 %v179
  %v859 = vunpack.c.l.b16 %v180
  %v860 = vunpack.c.l.b16 %v181
  %v861 = vunpack.c.l.b16 %v182
  %v862 = vunpack.c.l.b16 %v183
  %v863 = vunpack.c.l.b16 %v184
  %v864 = vunpack.c.l.b16 %v185
  %v865 = vunpack.c.l.b16 %v186
  %v866 = vunpack.c.l.b16 %v187
  %v867 = vunpack.c.l.b16 %v188
  %v868 = vunpack.c.l.b16 %v189
  %v869 = vunpack.c.l.b16 %v190
  %v870 = vunpack.c.l.b16 %v191
  %v871 = vunpack.c.l.b16 %v192
  %v872 = vunpack.c.l.b16 %v193
  %v873 = vunpack.c.l.b16 %v194
  %v874 = vunpack.c.l.b16 %v195
  %v875 = vunpack.c.l.b16 %v196
  %v876 = vunpack.c.l.b16 %v197
  %v877 = vunpack.c.l.b16 %v198
  %v878 = vunpack.c.l.b16 %v199
  %v879 = vunpack.c.l.b16 %v200
  %v880 = vunpack.c.l.b16 %v201
  %v881 = vunpack.c.l.b16 %v202
  %v882 = vunpack.c.l.b16 %v203
  %v883 = vunpack.c.l.b16 %v204
  %v884 = vunpack.c.l.b16 %v205
  %v885 = vunpack.c.l.b16 %v206
  %v886 = vunpack.c.l.b16 %v207
  %v887 = vunpack.c.l.b16 %v208
  %v888 = vunpack.c.l.b16 %v209
  %v889 = vunpack.c.l.b16 %v210
  %v890 = vunpack.c.l.b16 %v211
  %v891 = vunpack.c.l.b16 %v212
  %v892 = vunpack.c.l.b16 %v213
  %v893 = vunpack.c.l.b16 %v214
  %v894 = vunpack.c.l.b16 %v215
  %v895 = vunpack.c.l.b16 %v216
  %v896 = vunpack.c.l.b16 %v217
  %v897 = vunpack.c.l.b16 %v218
  %v898 = vunpack.c.l.b16 %v219
  %v899 = vunpack.c.l.b16 %v220
  %v900 = vunpack.c.l.b16 %v221
  %v901 = vunpack.c.l.b16 %v222
  %v902 = vunpack.c.l.b16 %v223
  %v903 = vunpack.c.l.b16 %v224
  %v904 = vunpack.c.l.b16 %v225
  %v905 = vunpack.c.l.b16 %v226
  %v906 = vunpack.c.l.b16 %v227
  %v907 = vunpack.c.l.b16 %v228
  %v908 = vunpack.c.l.b16 %v229
  %v909 = vunpack.c.l.b16 %v230
  %v910 = vunpack.c.l.b16 %v231
  %v911 = vunpack.c.l.b16 %v232
  %v912 = vunpack.c.l.b16 %v233
  %v913 = vunpack.c.l.b16 %v234
  %v914 = vunpack.c.l.b16 %v235
  %v915 = vunpack.c.l.b16 %v236
  %v916 = vunpack.c.l.b16 %v237
  %v917 = vunpack.c.l.b16 %v238
  %v918 = vunpack.c.l.b16 %v239
  %v919 = vunpack.c.l.b16 %v240
  %v920 = vunpack.c.l.b16 %v241
  %v921 = vunpack.c.l.b16 %v242
  %v922 = vunpack.c.l.b16 %v243
  %v923 = vunpack.c.l.b16 %v244
  %v924 = vunpack.c.l.b16 %v245
  %v925 = vunpack.c.l.b16 %v246
  %v926 = vunpack.c.l.b16 %v247
  %v927 = vunpack.c.l.b16 %v248
  %v928 = vunpack.c.l.b16 %v249
  %v929 = vunpack.c.l.b16 %v250
  %v930 = vunpack.c.l.b16 %v251
  %v931 = vunpack.c.l.b16 %v252
  %v932 = vunpack.c.l.b16 %v253
  %v933 = vunpack.c.l.b16 %v254
  %v934 = vunpack.c.l.b16 %v255
  %v935 = vunpack.c.l.b16 %v256
  %v936 = vunpack.c.l.b16 %v257
  %v937 = vunpack.c.l.b16 %v258
  %v938 = vunpack.c.l.b16 %v259
  %v939 = vunpack.c.l.b16 %v260
  %v940 = vunpack.c.l.b16 %v261
  %v941 = vunpack.c.l.b16 %v262
  %v942 = vunpack.c.l.b16 %v263
  %v943 = vunpack.c.l.b16 %v264
  %v944 = vunpack.c.l.b16 %v265
  %v945 = vunpack.c.l.b16 %v266
  %v946 = vunpack.c.l.b16 %v267
  %v947 = vunpack.c.l.b16 %v268
  %v948 = vunpack.c.l.b16 %v269
  %v949 = vunpack.c.l.b16 %v270
  %v950 = vunpack.c.l.b16 %v271
  %v951 = vunpack.c.l.b16 %v272
  %v952 = vunpack.c.l.b16 %v273
  %v953 = vunpack.c.l.b16 %v274
  %v954 = vunpack.c.l.b16 %v275
  %v955 = vunpack.c.l.b16 %v276
  %v956 = vunpack.c.l.b16 %v277
  %v957 = vunpack.c.l.b16 %v278
  %v958 = vunpack.c.l.b16 %v279
  %v959 = vunpack.c.l.b16 %v280
  %v960 = vunpack.c.l.b16 %v281
  %v961 = vunpack.c.l.b16 %v282
  %v962 = vunpack.c.l.b16 %v283
  %v963 = vunpack.c.l.b16 %v284
  %v964 = vunpack.c.l.b16 %v285
  %v965 = vunpack.c.l.b16 %v286
  %v966 = vunpack.c.l.b16 %v287
  %v967 = vunpack.c.l.b16 %v288
  %v968 = vunpack.c.l.b16 %v289
  %v969 = vunpack.c.l.b16 %v290
  %v970 = vunpack.c.l.b16 %v291
  %v971 = vunpack.c.l.b16 %v292
  %v972 = vunpack.c.l.b16 %v293
  %v973 = vunpack.c.l.b16 %v294
  %v974 = vunpack.c.l.b16 %v295
  %v975 = vunpack.c.l.b16 %v296
  %v976 = vunpack.c.l.b16 %v297
  %v977 = vunpack.c.l.b16 %v298
  %v978 = vunpack.c.l.b16 %v299
  %v979 = vunpack.c.l.b16 %v300
  %v980 = vunpack.c.l.b16 %v301
  %v981 = vunpack.c.l.b16 %v302
  %v982 = vpack.c.b16 %v727, %v726
  %v983 = vpack.c.b16 %v729, %v728
  %v984 = vpack.c.b16 %v731, %v730
  %v985 = vpack.c.b16 %v733, %v732
  %v986 = vpack.c.b16 %v735, %v734
  %v987 = vpack.c.b16 %v737, %v736
  %v988 = vpack.c.b16 %v739, %v738
  %v989 = vpack.c.b16 %v741, %v740
  %v990 = vpack.c.b16 %v743, %v742
  %v991 = vpack.c.b16 %v745, %v744
  %v992 = vpack.c.b16 %v747, %v746
  %v993 = vpack.c.b16 %v749, %v748
  %v994 = vpack.c.b16 %v751, %v750
  %v995 = vpack.c.b16 %v753, %v752
  %v996 = vpack.c.b16 %v755, %v754
  %v997 = vpack.c.b16 %v757, %v756
  %v998 = vpack.c.b16 %v759, %v758
  %v999 = vpack.c.b16 %v761, %v760
  %v1000 = vpack.c.b16 %v763, %v762
  %v1001 = vpack.c.b16 %v765, %v764
  %v1002 = vpack.c.b16 %v767, %v766
  %v1003 = vpack.c.b16 %v769, %v768
  %v1004 = vpack.c.b16 %v771, %v770
  %v1005 = vpack.c.b16 %v773, %v772
  %v1006 = vpack.c.b16 %v775, %v774
  %v1007 = vpack.c.b16 %v777, %v776
  %v1008 = vpack.c.b16 %v779, %v778
  %v1009 = vpack.c.b16 %v781, %v780
  %v1010 = vpack.c.b16 %v783, %v782
  %v1011 = vpack.c.b16 %v785, %v784
  %v1012 = vpack.c.b16 %v787, %v786
  %v1013 = vpack.c.b16 %v789, %v788
  %v1014 = vpack.c.b16 %v791, %v790
  %v1015 = vpack.c.b16 %v793, %v792
  %v1016 = vpack.c.b16 %v795, %v794
  %v1017 = vpack.c.b16 %v797, %v796
  %v1018 = vpack.c.b16 %v799, %v798
  %v1019 = vpack.c.b16 %v801, %v800
  %v1020 = vpack.c.b16 %v803, %v802
  %v1021 = vpack.c.b16 %v805, %v804
  %v1022 = vpack.c.b16 %v807, %v806
  %v1023 = vpack.c.b16 %v809, %v808
  %v1024 = vpack.c.b16 %v811, %v810
  %v1025 = vpack.c.b16 %v813, %v812
  %v1026 = vpack.c.b16 %v815, %v814
  %v1027 = vpack.c.b16 %v817, %v816
  %v1028 = vpack.c.b16 %v819, %v818
  %v1029 = vpack.c.b16 %v821, %v820
  %v1030 = vpack.c.b16 %v823, %v822
  %v1031 = vpack.c.b16 %v825, %v824
  %v1032 = vpack.c.b16 %v827, %v826
  %v1033 = vpack.c.b16 %v829, %v828
  %v1034 = vpack.c.b16 %v831, %v830
  %v1035 = vpack.c.b16 %v833, %v832
  %v1036 = vpack.c.b16 %v835, %v834
  %v1037 = vpack.c.b16 %v837, %v836
  %v1038 = vpack.c.b16 %v839, %v838
  %v1039 = vpack.c.b16 %v841, %v840
  %v1040 = vpack.c.b16 %v843, %v842
  %v1041 = vpack.c.b16 %v845, %v844
  %v1042 = vpack.c.b16 %v847, %v846
  %v1043 = vpack.c.b16 %v849, %v848
  %v1044 = vpack.c.b16 %v851, %v850
  %v1045 = vpack.c.b16 %v853, %v852
  %v1046 = vpack.c.b16 %v855, %v854
  %v1047 = vpack.c.b16 %v857, %v856
  %v1048 = vpack.c.b16 %v859, %v858
  %v1049 = vpack.c.b16 %v861, %v860
  %v1050 = vpack.c.b16 %v863, %v862
  %v1051 = vpack.c.b16 %v865, %v864
  %v1052 = vpack.c.b16 %v867, %v866
  %v1053 = vpack.c.b16 %v869, %v868
  %v1054 = vpack.c.b16 %v871, %v870
  %v1055 = vpack.c.b16 %v873, %v872
  %v1056 = vpack.c.b16 %v875, %v874
  %v1057 = vpack.c.b16 %v877, %v876
  %v1058 = vpack.c.b16 %v879, %v878
  %v1059 = vpack.c.b16 %v881, %v880
  %v1060 = vpack.c.b16 %v883, %v882
  %v1061 = vpack.c.b16 %v885, %v884
  %v1062 = vpack.c.b16 %v887, %v886
  %v1063 = vpack.c.b16 %v889, %v888
  %v1064 = vpack.c.b16 %v891, %v890
  %v1065 = vpack.c.b16 %v893, %v892
  %v1066 = vpack.c.b16 %v895, %v894
  %v1067 = vpack.c.b16 %v897, %v896
  %v1068 = vpack.c.b16 %v899, %v898
  %v1069 = vpack.c.b16 %v901, %v900
  %v1070 = vpack.c.b16 %v903, %v902
  %v1071 = vpack.c.b16 %v905, %v904
  %v1072 = vpack.c.b16 %v907, %v906
  %v1073 = vpack.c.b16 %v909, %v908
  %v1074 = vpack.c.b16 %v911, %v910
  %v1075 = vpack.c.b16 %v913, %v912
  %v1076 = vpack.c.b16 %v915, %v914
  %v1077 = vpack.c.b16 %v917, %v916
  %v1078 = vpack.c.b16 %v919, %v918
  %v1079 = vpack.c.b16 %v921, %v920
  %v1080 = vpack.c.b16 %v923, %v922
  %v1081 = vpack.c.b16 %v925, %v924
  %v1082 = vpack.c.b16 %v927, %v926
  %v1083 = vpack.c.b16 %v929, %v928
  %v1084 = vpack.c.b16 %v931, %v930
  %v1085 = vpack.c.b16 %v933, %v932
  %v1086 = vpack.c.b16 %v935, %v934
  %v1087 = vpack.c.b16 %v937, %v936
  %v1088 = vpack.c.b16 %v939, %v938
  %v1089 = vpack.c.b16 %v941, %v940
  %v1090 = vpack.c.b16 %v943, %v942
  %v1091 = vpack.c.b16 %v945, %v944
  %v1092 = vpack.c.b16 %v947, %v946
  %v1093 = vpack.c.b16 %v949, %v948
  %v1094 = vpack.c.b16 %v951, %v950
  %v1095 = vpack.c.b16 %v953, %v952
  %v1096 = vpack.c.b16 %v955, %v954
  %v1097 = vpack.c.b16 %v957, %v956
  %v1098 = vpack.c.b16 %v959, %v958
  %v1099 = vpack.c.b16 %v961, %v960
  %v1100 = vpack.c.b16 %v963, %v962
  %v1101 = vpack.c.b16 %v965, %v964
  %v1102 = vpack.c.b16 %v967, %v966
  %v1103 = vpack.c.b16 %v969, %v968
  %v1104 = vpack.c.b16 %v971, %v970
  %v1105 = vpack.c.b16 %v973, %v972
  %v1106 = vpack.c.b16 %v975, %v974
  %v1107 = vpack.c.b16 %v977, %v976
  %v1108 = vpack.c.b16 %v979, %v978
  %v1109 = vpack.c.b16 %v981, %v980
  %1238 = vmatprep.subr.bf16.mxu0 0
  %1239 = vmatpush1.bf16.msra.mxu0 %v982
  %1240 = vmatprep.subr.bf16.mxu0 0
  %1241 = vmatpush1.bf16.msra.mxu0 %v983
  %1242 = vmatprep.subr.bf16.mxu0 0
  %1243 = vmatpush1.bf16.msra.mxu0 %v984
  %1244 = vmatprep.subr.bf16.mxu0 0
  %1245 = vmatpush1.bf16.msra.mxu0 %v985
  %1246 = vmatprep.subr.bf16.mxu0 0
  %1247 = vmatpush1.bf16.msra.mxu0 %v986
  %1248 = vmatprep.subr.bf16.mxu0 0
  %1249 = vmatpush1.bf16.msra.mxu0 %v987
  %1250 = vmatprep.subr.bf16.mxu0 0
  %1251 = vmatpush1.bf16.msra.mxu0 %v988
  %1252 = vmatprep.subr.bf16.mxu0 0
  %1253 = vmatpush1.bf16.msra.mxu0 %v989
  %1254 = vmatprep.subr.bf16.mxu0 0
  %1255 = vmatpush1.bf16.msra.mxu0 %v990
  %1256 = vmatprep.subr.bf16.mxu0 0
  %1257 = vmatpush1.bf16.msra.mxu0 %v991
  %1258 = vmatprep.subr.bf16.mxu0 0
  %1259 = vmatpush1.bf16.msra.mxu0 %v992
  %1260 = vmatprep.subr.bf16.mxu0 0
  %1261 = vmatpush1.bf16.msra.mxu0 %v993
  %1262 = vmatprep.subr.bf16.mxu0 0
  %1263 = vmatpush1.bf16.msra.mxu0 %v994
  %1264 = vmatprep.subr.bf16.mxu0 0
  %1265 = vmatpush1.bf16.msra.mxu0 %v995
  %1266 = vmatprep.subr.bf16.mxu0 0
  %1267 = vmatpush1.bf16.msra.mxu0 %v996
  %1268 = vmatprep.subr.bf16.mxu0 0
  %1269 = vmatpush1.bf16.msra.mxu0 %v997
  %1270 = vmatprep.mubr.bf16.mxu0 %v407
  %1271 = vmatmul.mubr.bf16.gmra.mrb[0].mxu0 %v406
  %v1272 = vpop.f32.mrb[0].mxu0
  %v1273 = vadd.f32 %v308, %v1272
  %v1274 = vpop.f32.mrb[0].mxu0
  %v1275 = vpop.f32.mrb[0].mxu0
  %v1276 = vadd.f32 %v308, %v1275
  %v1277 = vpop.f32.mrb[0].mxu0
  %1278 = vmatprep.mubr.bf16.mxu0 %v423
  %1279 = vmatmul.mubr.bf16.gmra.mrb[0].mxu0 %v422
  %v1280 = vpop.f32.mrb[0].mxu0
  %v1281 = vadd.f32 %v308, %v1280
  %v1282 = vpop.f32.mrb[0].mxu0
  %v1283 = vpop.f32.mrb[0].mxu0
  %v1284 = vadd.f32 %v308, %v1283
  %v1285 = vpop.f32.mrb[0].mxu0
  %1286 = vdwg.mxu0
  %1287 = vmatprep.subr.bf16.mxu0 0
  %1288 = vmatpush1.bf16.msra.mxu0 %v998
  %1289 = vmatprep.subr.bf16.mxu0 0
  %1290 = vmatpush1.bf16.msra.mxu0 %v999
  %1291 = vmatprep.subr.bf16.mxu0 0
  %1292 = vmatpush1.bf16.msra.mxu0 %v1000
  %1293 = vmatprep.subr.bf16.mxu0 0
  %1294 = vmatpush1.bf16.msra.mxu0 %v1001
  %1295 = vmatprep.subr.bf16.mxu0 0
  %1296 = vmatpush1.bf16.msra.mxu0 %v1002
  %1297 = vmatprep.subr.bf16.mxu0 0
  %1298 = vmatpush1.bf16.msra.mxu0 %v1003
  %1299 = vmatprep.subr.bf16.mxu0 0
  %1300 = vmatpush1.bf16.msra.mxu0 %v1004
  %1301 = vmatprep.subr.bf16.mxu0 0
  %1302 = vmatpush1.bf16.msra.mxu0 %v1005
  %1303 = vmatprep.subr.bf16.mxu0 0
  %1304 = vmatpush1.bf16.msra.mxu0 %v1006
  %1305 = vmatprep.subr.bf16.mxu0 0
  %1306 = vmatpush1.bf16.msra.mxu0 %v1007
  %1307 = vmatprep.subr.bf16.mxu0 0
  %1308 = vmatpush1.bf16.msra.mxu0 %v1008
  %1309 = vmatprep.subr.bf16.mxu0 0
  %1310 = vmatpush1.bf16.msra.mxu0 %v1009
  %1311 = vmatprep.subr.bf16.mxu0 0
  %1312 = vmatpush1.bf16.msra.mxu0 %v1010
  %1313 = vmatprep.subr.bf16.mxu0 0
  %1314 = vmatpush1.bf16.msra.mxu0 %v1011
  %1315 = vmatprep.subr.bf16.mxu0 0
  %1316 = vmatpush1.bf16.msra.mxu0 %v1012
  %1317 = vmatprep.subr.bf16.mxu0 0
  %1318 = vmatpush1.bf16.msra.mxu0 %v1013
  %1319 = vmatprep.mubr.bf16.mxu0 %v409
  %1320 = vmatmul.mubr.bf16.gmra.mrb[0].mxu0 %v408
  %v1321 = vpop.f32.mrb[0].mxu0
  %v1322 = vadd.f32 %v1273, %v1321
  %v1323 = vpop.f32.mrb[0].mxu0
  %v1324 = vpop.f32.mrb[0].mxu0
  %v1325 = vadd.f32 %v1276, %v1324
  %v1326 = vpop.f32.mrb[0].mxu0
  %1327 = vmatprep.mubr.bf16.mxu0 %v425
  %1328 = vmatmul.mubr.bf16.gmra.mrb[0].mxu0 %v424
  %v1329 = vpop.f32.mrb[0].mxu0
  %v1330 = vadd.f32 %v1281, %v1329
  %v1331 = vpop.f32.mrb[0].mxu0
  %v1332 = vpop.f32.mrb[0].mxu0
  %v1333 = vadd.f32 %v1284, %v1332
  %v1334 = vpop.f32.mrb[0].mxu0
  %1335 = vdwg.mxu0
  %1336 = vmatprep.subr.bf16.mxu0 0
  %1337 = vmatpush1.bf16.msra.mxu0 %v1014
  %1338 = vmatprep.subr.bf16.mxu0 0
  %1339 = vmatpush1.bf16.msra.mxu0 %v1015
  %1340 = vmatprep.subr.bf16.mxu0 0
  %1341 = vmatpush1.bf16.msra.mxu0 %v1016
  %1342 = vmatprep.subr.bf16.mxu0 0
  %1343 = vmatpush1.bf16.msra.mxu0 %v1017
  %1344 = vmatprep.subr.bf16.mxu0 0
  %1345 = vmatpush1.bf16.msra.mxu0 %v1018
  %1346 = vmatprep.subr.bf16.mxu0 0
  %1347 = vmatpush1.bf16.msra.mxu0 %v1019
  %1348 = vmatprep.subr.bf16.mxu0 0
  %1349 = vmatpush1.bf16.msra.mxu0 %v1020
  %1350 = vmatprep.subr.bf16.mxu0 0
  %1351 = vmatpush1.bf16.msra.mxu0 %v1021
  %1352 = vmatprep.subr.bf16.mxu0 0
  %1353 = vmatpush1.bf16.msra.mxu0 %v1022
  %1354 = vmatprep.subr.bf16.mxu0 0
  %1355 = vmatpush1.bf16.msra.mxu0 %v1023
  %1356 = vmatprep.subr.bf16.mxu0 0
  %1357 = vmatpush1.bf16.msra.mxu0 %v1024
  %1358 = vmatprep.subr.bf16.mxu0 0
  %1359 = vmatpush1.bf16.msra.mxu0 %v1025
  %1360 = vmatprep.subr.bf16.mxu0 0
  %1361 = vmatpush1.bf16.msra.mxu0 %v1026
  %1362 = vmatprep.subr.bf16.mxu0 0
  %1363 = vmatpush1.bf16.msra.mxu0 %v1027
  %1364 = vmatprep.subr.bf16.mxu0 0
  %1365 = vmatpush1.bf16.msra.mxu0 %v1028
  %1366 = vmatprep.subr.bf16.mxu0 0
  %1367 = vmatpush1.bf16.msra.mxu0 %v1029
  %1368 = vmatprep.mubr.bf16.mxu0 %v411
  %1369 = vmatmul.mubr.bf16.gmra.mrb[0].mxu0 %v410
  %v1370 = vpop.f32.mrb[0].mxu0
  %v1371 = vadd.f32 %v1322, %v1370
  %v1372 = vpop.f32.mrb[0].mxu0
  %v1373 = vpop.f32.mrb[0].mxu0
  %v1374 = vadd.f32 %v1325, %v1373
  %v1375 = vpop.f32.mrb[0].mxu0
  %1376 = vmatprep.mubr.bf16.mxu0 %v427
  %1377 = vmatmul.mubr.bf16.gmra.mrb[0].mxu0 %v426
  %v1378 = vpop.f32.mrb[0].mxu0
  %v1379 = vadd.f32 %v1330, %v1378
  %v1380 = vpop.f32.mrb[0].mxu0
  %v1381 = vpop.f32.mrb[0].mxu0
  %v1382 = vadd.f32 %v1333, %v1381
  %v1383 = vpop.f32.mrb[0].mxu0
  %1384 = vdwg.mxu0
  %1385 = vmatprep.subr.bf16.mxu0 0
  %1386 = vmatpush1.bf16.msra.mxu0 %v1030
  %1387 = vmatprep.subr.bf16.mxu0 0
  %1388 = vmatpush1.bf16.msra.mxu0 %v1031
  %1389 = vmatprep.subr.bf16.mxu0 0
  %1390 = vmatpush1.bf16.msra.mxu0 %v1032
  %1391 = vmatprep.subr.bf16.mxu0 0
  %1392 = vmatpush1.bf16.msra.mxu0 %v1033
  %1393 = vmatprep.subr.bf16.mxu0 0
  %1394 = vmatpush1.bf16.msra.mxu0 %v1034
  %1395 = vmatprep.subr.bf16.mxu0 0
  %1396 = vmatpush1.bf16.msra.mxu0 %v1035
  %1397 = vmatprep.subr.bf16.mxu0 0
  %1398 = vmatpush1.bf16.msra.mxu0 %v1036
  %1399 = vmatprep.subr.bf16.mxu0 0
  %1400 = vmatpush1.bf16.msra.mxu0 %v1037
  %1401 = vmatprep.subr.bf16.mxu0 0
  %1402 = vmatpush1.bf16.msra.mxu0 %v1038
  %1403 = vmatprep.subr.bf16.mxu0 0
  %1404 = vmatpush1.bf16.msra.mxu0 %v1039
  %1405 = vmatprep.subr.bf16.mxu0 0
  %1406 = vmatpush1.bf16.msra.mxu0 %v1040
  %1407 = vmatprep.subr.bf16.mxu0 0
  %1408 = vmatpush1.bf16.msra.mxu0 %v1041
  %1409 = vmatprep.subr.bf16.mxu0 0
  %1410 = vmatpush1.bf16.msra.mxu0 %v1042
  %1411 = vmatprep.subr.bf16.mxu0 0
  %1412 = vmatpush1.bf16.msra.mxu0 %v1043
  %1413 = vmatprep.subr.bf16.mxu0 0
  %1414 = vmatpush1.bf16.msra.mxu0 %v1044
  %1415 = vmatprep.subr.bf16.mxu0 0
  %1416 = vmatpush1.bf16.msra.mxu0 %v1045
  %1417 = vmatprep.mubr.bf16.mxu0 %v413
  %1418 = vmatmul.mubr.bf16.gmra.mrb[0].mxu0 %v412
  %v1419 = vpop.f32.mrb[0].mxu0
  %v1420 = vadd.f32 %v1371, %v1419
  %v1421 = vpop.f32.mrb[0].mxu0
  %v1422 = vpop.f32.mrb[0].mxu0
  %v1423 = vadd.f32 %v1374, %v1422
  %v1424 = vpop.f32.mrb[0].mxu0
  %1425 = vmatprep.mubr.bf16.mxu0 %v429
  %1426 = vmatmul.mubr.bf16.gmra.mrb[0].mxu0 %v428
  %v1427 = vpop.f32.mrb[0].mxu0
  %v1428 = vadd.f32 %v1379, %v1427
  %v1429 = vpop.f32.mrb[0].mxu0
  %v1430 = vpop.f32.mrb[0].mxu0
  %v1431 = vadd.f32 %v1382, %v1430
  %v1432 = vpop.f32.mrb[0].mxu0
  %1433 = vdwg.mxu0
  %1434 = vmatprep.subr.bf16.mxu0 0
  %1435 = vmatpush1.bf16.msra.mxu0 %v1046
  %1436 = vmatprep.subr.bf16.mxu0 0
  %1437 = vmatpush1.bf16.msra.mxu0 %v1047
  %1438 = vmatprep.subr.bf16.mxu0 0
  %1439 = vmatpush1.bf16.msra.mxu0 %v1048
  %1440 = vmatprep.subr.bf16.mxu0 0
  %1441 = vmatpush1.bf16.msra.mxu0 %v1049
  %1442 = vmatprep.subr.bf16.mxu0 0
  %1443 = vmatpush1.bf16.msra.mxu0 %v1050
  %1444 = vmatprep.subr.bf16.mxu0 0
  %1445 = vmatpush1.bf16.msra.mxu0 %v1051
  %1446 = vmatprep.subr.bf16.mxu0 0
  %1447 = vmatpush1.bf16.msra.mxu0 %v1052
  %1448 = vmatprep.subr.bf16.mxu0 0
  %1449 = vmatpush1.bf16.msra.mxu0 %v1053
  %1450 = vmatprep.subr.bf16.mxu0 0
  %1451 = vmatpush1.bf16.msra.mxu0 %v1054
  %1452 = vmatprep.subr.bf16.mxu0 0
  %1453 = vmatpush1.bf16.msra.mxu0 %v1055
  %1454 = vmatprep.subr.bf16.mxu0 0
  %1455 = vmatpush1.bf16.msra.mxu0 %v1056
  %1456 = vmatprep.subr.bf16.mxu0 0
  %1457 = vmatpush1.bf16.msra.mxu0 %v1057
  %1458 = vmatprep.subr.bf16.mxu0 0
  %1459 = vmatpush1.bf16.msra.mxu0 %v1058
  %1460 = vmatprep.subr.bf16.mxu0 0
  %1461 = vmatpush1.bf16.msra.mxu0 %v1059
  %1462 = vmatprep.subr.bf16.mxu0 0
  %1463 = vmatpush1.bf16.msra.mxu0 %v1060
  %1464 = vmatprep.subr.bf16.mxu0 0
  %1465 = vmatpush1.bf16.msra.mxu0 %v1061
  %1466 = vmatprep.mubr.bf16.mxu0 %v415
  %1467 = vmatmul.mubr.bf16.gmra.mrb[0].mxu0 %v414
  %v1468 = vpop.f32.mrb[0].mxu0
  %v1469 = vadd.f32 %v1420, %v1468
  %v1470 = vpop.f32.mrb[0].mxu0
  %v1471 = vpop.f32.mrb[0].mxu0
  %v1472 = vadd.f32 %v1423, %v1471
  %v1473 = vpop.f32.mrb[0].mxu0
  %1474 = vmatprep.mubr.bf16.mxu0 %v431
  %1475 = vmatmul.mubr.bf16.gmra.mrb[0].mxu0 %v430
  %v1476 = vpop.f32.mrb[0].mxu0
  %v1477 = vadd.f32 %v1428, %v1476
  %v1478 = vpop.f32.mrb[0].mxu0
  %v1479 = vpop.f32.mrb[0].mxu0
  %v1480 = vadd.f32 %v1431, %v1479
  %v1481 = vpop.f32.mrb[0].mxu0
  %1482 = vdwg.mxu0
  %1483 = vmatprep.subr.bf16.mxu0 0
  %1484 = vmatpush1.bf16.msra.mxu0 %v1062
  %1485 = vmatprep.subr.bf16.mxu0 0
  %1486 = vmatpush1.bf16.msra.mxu0 %v1063
  %1487 = vmatprep.subr.bf16.mxu0 0
  %1488 = vmatpush1.bf16.msra.mxu0 %v1064
  %1489 = vmatprep.subr.bf16.mxu0 0
  %1490 = vmatpush1.bf16.msra.mxu0 %v1065
  %1491 = vmatprep.subr.bf16.mxu0 0
  %1492 = vmatpush1.bf16.msra.mxu0 %v1066
  %1493 = vmatprep.subr.bf16.mxu0 0
  %1494 = vmatpush1.bf16.msra.mxu0 %v1067
  %1495 = vmatprep.subr.bf16.mxu0 0
  %1496 = vmatpush1.bf16.msra.mxu0 %v1068
  %1497 = vmatprep.subr.bf16.mxu0 0
  %1498 = vmatpush1.bf16.msra.mxu0 %v1069
  %1499 = vmatprep.subr.bf16.mxu0 0
  %1500 = vmatpush1.bf16.msra.mxu0 %v1070
  %1501 = vmatprep.subr.bf16.mxu0 0
  %1502 = vmatpush1.bf16.msra.mxu0 %v1071
  %1503 = vmatprep.subr.bf16.mxu0 0
  %1504 = vmatpush1.bf16.msra.mxu0 %v1072
  %1505 = vmatprep.subr.bf16.mxu0 0
  %1506 = vmatpush1.bf16.msra.mxu0 %v1073
  %1507 = vmatprep.subr.bf16.mxu0 0
  %1508 = vmatpush1.bf16.msra.mxu0 %v1074
  %1509 = vmatprep.subr.bf16.mxu0 0
  %1510 = vmatpush1.bf16.msra.mxu0 %v1075
  %1511 = vmatprep.subr.bf16.mxu0 0
  %1512 = vmatpush1.bf16.msra.mxu0 %v1076
  %1513 = vmatprep.subr.bf16.mxu0 0
  %1514 = vmatpush1.bf16.msra.mxu0 %v1077
  %1515 = vmatprep.mubr.bf16.mxu0 %v417
  %1516 = vmatmul.mubr.bf16.gmra.mrb[0].mxu0 %v416
  %v1517 = vpop.f32.mrb[0].mxu0
  %v1518 = vadd.f32 %v1469, %v1517
  %v1519 = vpop.f32.mrb[0].mxu0
  %v1520 = vpop.f32.mrb[0].mxu0
  %v1521 = vadd.f32 %v1472, %v1520
  %v1522 = vpop.f32.mrb[0].mxu0
  %1523 = vmatprep.mubr.bf16.mxu0 %v433
  %1524 = vmatmul.mubr.bf16.gmra.mrb[0].mxu0 %v432
  %v1525 = vpop.f32.mrb[0].mxu0
  %v1526 = vadd.f32 %v1477, %v1525
  %v1527 = vpop.f32.mrb[0].mxu0
  %v1528 = vpop.f32.mrb[0].mxu0
  %v1529 = vadd.f32 %v1480, %v1528
  %v1530 = vpop.f32.mrb[0].mxu0
  %1531 = vdwg.mxu0
  %1532 = vmatprep.subr.bf16.mxu0 0
  %1533 = vmatpush1.bf16.msra.mxu0 %v1078
  %1534 = vmatprep.subr.bf16.mxu0 0
  %1535 = vmatpush1.bf16.msra.mxu0 %v1079
  %1536 = vmatprep.subr.bf16.mxu0 0
  %1537 = vmatpush1.bf16.msra.mxu0 %v1080
  %1538 = vmatprep.subr.bf16.mxu0 0
  %1539 = vmatpush1.bf16.msra.mxu0 %v1081
  %1540 = vmatprep.subr.bf16.mxu0 0
  %1541 = vmatpush1.bf16.msra.mxu0 %v1082
  %1542 = vmatprep.subr.bf16.mxu0 0
  %1543 = vmatpush1.bf16.msra.mxu0 %v1083
  %1544 = vmatprep.subr.bf16.mxu0 0
  %1545 = vmatpush1.bf16.msra.mxu0 %v1084
  %1546 = vmatprep.subr.bf16.mxu0 0
  %1547 = vmatpush1.bf16.msra.mxu0 %v1085
  %1548 = vmatprep.subr.bf16.mxu0 0
  %1549 = vmatpush1.bf16.msra.mxu0 %v1086
  %1550 = vmatprep.subr.bf16.mxu0 0
  %1551 = vmatpush1.bf16.msra.mxu0 %v1087
  %1552 = vmatprep.subr.bf16.mxu0 0
  %1553 = vmatpush1.bf16.msra.mxu0 %v1088
  %1554 = vmatprep.subr.bf16.mxu0 0
  %1555 = vmatpush1.bf16.msra.mxu0 %v1089
  %1556 = vmatprep.subr.bf16.mxu0 0
  %1557 = vmatpush1.bf16.msra.mxu0 %v1090
  %1558 = vmatprep.subr.bf16.mxu0 0
  %1559 = vmatpush1.bf16.msra.mxu0 %v1091
  %1560 = vmatprep.subr.bf16.mxu0 0
  %1561 = vmatpush1.bf16.msra.mxu0 %v1092
  %1562 = vmatprep.subr.bf16.mxu0 0
  %1563 = vmatpush1.bf16.msra.mxu0 %v1093
  %1564 = vmatprep.mubr.bf16.mxu0 %v419
  %1565 = vmatmul.mubr.bf16.gmra.mrb[0].mxu0 %v418
  %v1566 = vpop.f32.mrb[0].mxu0
  %v1567 = vadd.f32 %v1518, %v1566
  %v1568 = vpop.f32.mrb[0].mxu0
  %v1569 = vpop.f32.mrb[0].mxu0
  %v1570 = vadd.f32 %v1521, %v1569
  %v1571 = vpop.f32.mrb[0].mxu0
  %1572 = vmatprep.mubr.bf16.mxu0 %v435
  %1573 = vmatmul.mubr.bf16.gmra.mrb[0].mxu0 %v434
  %v1574 = vpop.f32.mrb[0].mxu0
  %v1575 = vadd.f32 %v1526, %v1574
  %v1576 = vpop.f32.mrb[0].mxu0
  %v1577 = vpop.f32.mrb[0].mxu0
  %v1578 = vadd.f32 %v1529, %v1577
  %v1579 = vpop.f32.mrb[0].mxu0
  %1580 = vdwg.mxu0
  %1581 = vmatprep.subr.bf16.mxu0 0
  %1582 = vmatpush1.bf16.msra.mxu0 %v1094
  %1583 = vmatprep.subr.bf16.mxu0 0
  %1584 = vmatpush1.bf16.msra.mxu0 %v1095
  %1585 = vmatprep.subr.bf16.mxu0 0
  %1586 = vmatpush1.bf16.msra.mxu0 %v1096
  %1587 = vmatprep.subr.bf16.mxu0 0
  %1588 = vmatpush1.bf16.msra.mxu0 %v1097
  %1589 = vmatprep.subr.bf16.mxu0 0
  %1590 = vmatpush1.bf16.msra.mxu0 %v1098
  %1591 = vmatprep.subr.bf16.mxu0 0
  %1592 = vmatpush1.bf16.msra.mxu0 %v1099
  %1593 = vmatprep.subr.bf16.mxu0 0
  %1594 = vmatpush1.bf16.msra.mxu0 %v1100
  %1595 = vmatprep.subr.bf16.mxu0 0
  %1596 = vmatpush1.bf16.msra.mxu0 %v1101
  %1597 = vmatprep.subr.bf16.mxu0 0
  %1598 = vmatpush1.bf16.msra.mxu0 %v1102
  %1599 = vmatprep.subr.bf16.mxu0 0
  %1600 = vmatpush1.bf16.msra.mxu0 %v1103
  %1601 = vmatprep.subr.bf16.mxu0 0
  %1602 = vmatpush1.bf16.msra.mxu0 %v1104
  %1603 = vmatprep.subr.bf16.mxu0 0
  %1604 = vmatpush1.bf16.msra.mxu0 %v1105
  %1605 = vmatprep.subr.bf16.mxu0 0
  %1606 = vmatpush1.bf16.msra.mxu0 %v1106
  %1607 = vmatprep.subr.bf16.mxu0 0
  %1608 = vmatpush1.bf16.msra.mxu0 %v1107
  %1609 = vmatprep.subr.bf16.mxu0 0
  %1610 = vmatpush1.bf16.msra.mxu0 %v1108
  %1611 = vmatprep.subr.bf16.mxu0 0
  %1612 = vmatpush1.bf16.msra.mxu0 %v1109
  %1613 = vmatprep.mubr.bf16.mxu0 %v421
  %1614 = vmatmul.mubr.bf16.gmra.mrb[0].mxu0 %v420
  %v1615 = vpop.f32.mrb[0].mxu0
  %v1616 = vadd.f32 %v1567, %v1615
  %v1617 = vpop.f32.mrb[0].mxu0
  %v1618 = vpop.f32.mrb[0].mxu0
  %v1619 = vadd.f32 %v1570, %v1618
  %v1620 = vpop.f32.mrb[0].mxu0
  %1621 = vmatprep.mubr.bf16.mxu0 %v437
  %1622 = vmatmul.mubr.bf16.gmra.mrb[0].mxu0 %v436
  %v1623 = vpop.f32.mrb[0].mxu0
  %v1624 = vadd.f32 %v1575, %v1623
  %v1625 = vpop.f32.mrb[0].mxu0
  %v1626 = vpop.f32.mrb[0].mxu0
  %v1627 = vadd.f32 %v1578, %v1626
  %v1628 = vpop.f32.mrb[0].mxu0
  %1629 = vdwg.mxu0
  %vm1630 = vcmask 523264
  %1631 = vst.msk [vmem:[%s3] sm:$0xff] %vm1630, %v1616
  %1632 = vst.msk [vmem:[%s3 + $0x8] sm:$0xff] %vm1630, %v1619
  %1633 = vst.msk [vmem:[%s3 + $0x10] sm:$0xff] %vm1630, %v1624
  %1634 = vst.msk [vmem:[%s3 + $0x18] sm:$0xff] %vm1630, %v1627
  // Predicated region
  $region14: #{dcn_with_rcnn_forward.8} parent=0 // pred_check
    _
  $region15: #{dcn_with_rcnn_forward.8} parent=0 // pred_check_branch
    %1636 = sbr.rel (0) target = $region17
  $region16: #{dcn_with_rcnn_forward.8} parent=0 // pred_region
    _
  $region17: #{dcn_with_rcnn_forward.8} parent=0 // pred_fallthru
    _
  // Predicated region
  $region18: #{dcn_with_rcnn_forward.8} parent=0 // pred_check
    _
  $region19: #{dcn_with_rcnn_forward.8} parent=0 // pred_check_branch
    %1638 = sbr.rel (0) target = $region21
  $region20: #{dcn_with_rcnn_forward.8} parent=0 // pred_region
    _
  $region21: #{dcn_with_rcnn_forward.8} parent=0 // pred_fallthru
    _

// kernel: dcn_with_rcnn_forward.11
$region0: #{dcn_with_rcnn_forward.11}
  #allocation0 [shape = 'u32[]', space=smem, size = 0x4, offset = 0x4, fixed_abs, tag = 'smem constant byte address 0x4 - core index']
  #allocation1 [shape = 'u32[144,128]{1,0:T(1,128)}', space=vmem, size = 0x12000, scoped, tag = 'internal scratch']
  %s0 = inlined_call_operand.vmem [shape: f32[2,16,64], index: 0, kind: input, shape index: {}]
  %s1 = inlined_call_operand.vmem [shape: f32[2,8,332], index: 1, kind: input, shape index: {}]
  %s2 = inlined_call_operand.vmem [shape: f32[2,16,1], index: 2, kind: input, shape index: {}]
  %s3 = inlined_call_operand.vmem [shape: f32[2,8,1], index: 3, kind: input, shape index: {}]
  %s4 = inlined_call_operand.vmem [shape: f32[64,64], index: 4, kind: input, shape index: {}]
  %s5 = inlined_call_operand.vmem [shape: f32[1,64], index: 5, kind: input, shape index: {}]
  %s6 = inlined_call_operand.vmem [shape: f32[64,4], index: 6, kind: input, shape index: {}]
  %s7 = inlined_call_operand.vmem [shape: f32[1,4], index: 7, kind: input, shape index: {}]
  %s8 = inlined_call_operand.vmem [shape: f32[332,332], index: 8, kind: input, shape index: {}]
  %s9 = inlined_call_operand.vmem [shape: f32[1,332], index: 9, kind: input, shape index: {}]
  %s10 = inlined_call_operand.vmem [shape: f32[332,4], index: 10, kind: input, shape index: {}]
  %s11 = inlined_call_operand.vmem [shape: f32[1,4], index: 11, kind: input, shape index: {}]
  %s12 = inlined_call_operand.vmem [shape: f32[64,198], index: 12, kind: input, shape index: {}]
  %s13 = inlined_call_operand.vmem [shape: f32[332,198], index: 13, kind: input, shape index: {}]
  %s14 = inlined_call_operand.vmem [shape: f32[1,198], index: 14, kind: input, shape index: {}]
  %s15 = inlined_call_operand.vmem [shape: f32[198,10], index: 15, kind: input, shape index: {}]
  %s16 = inlined_call_operand.vmem [shape: f32[1,10], index: 16, kind: input, shape index: {}]
  %s17 = inlined_call_operand.hbm [shape: f32[2,1,10], index: 17, kind: output, shape index: {}]
  %s18 = sld [smem:[#allocation0]]
  $region101: #{dcn_with_rcnn_forward.11} parent=0
    _
  %s20 = ssub.s32 1, %s18
  %s21 = scalar_select 0, %s20, %s18
  $region1: #{dcn_with_rcnn_forward.11} parent=0
    #allocation2 [shape = 'u8[1024]{0}', space=vmem, size = 0x400, scoped, tag = 'output window, operand 0']
    #allocation3 [shape = 's32[2]{0}', space=sflag, size = 0x8, scoped, tag = 'scoped memory for dcn_with_rcnn_forward.11']
    %22 = vsyncpa [#allocation3], 0
    %s23 = scalar_lea.sflag [#allocation3], 1
    %24 = vsyncpa %s23, 0
    loop: start=0, step=1, limit=4
    $region2: #{dcn_with_rcnn_forward.11} parent=1 // loop_pre_header
      _
    $region3: #{dcn_with_rcnn_forward.11} parent=1 // loop_header
      %s26 = sphi 0, %s30
      %p27 = scmp.ge.s32.totalorder %s26, 4
      %s36 = sphi 0, %s38
      %s39 = sphi 0, %s36
      %s40 = sphi 0, %s39
      %s56 = sphi 0, %s40
      %s62 = sphi 0, %s64
      %s65 = sphi 0, %s62
      %s66 = sphi 0, %s65
      %s82 = sphi 0, %s66
      %s88 = sphi 0, %s90
      %s91 = sphi 0, %s88
      %s92 = sphi 0, %s91
      %s108 = sphi 0, %s92
      %s114 = sphi 0, %s116
      %s117 = sphi 0, %s114
      %s118 = sphi 0, %s117
      %s134 = sphi 0, %s118
      %s138 = sphi 0, %s138
      %s140 = sphi 0, %s138
      %s141 = sphi 0, %s140
      %s155 = sphi 0, %s141
      %s159 = sphi 0, %s159
      %s161 = sphi 0, %s159
      %s162 = sphi 0, %s161
      %s176 = sphi 0, %s162
      %s180 = sphi 0, %s180
      %s182 = sphi 0, %s180
      %s183 = sphi 0, %s182
      %s197 = sphi 0, %s183
      %s201 = sphi 0, %s201
      %s203 = sphi 0, %s201
      %s204 = sphi 0, %s203
      %s218 = sphi 0, %s204
      %s222 = sphi 0, %s222
      %s224 = sphi 0, %s222
      %s225 = sphi 0, %s224
      %s239 = sphi 0, %s225
      %s243 = sphi 0, %s243
      %s245 = sphi 0, %s243
      %s246 = sphi 0, %s245
      %s260 = sphi 0, %s246
      %s264 = sphi 0, %s264
      %s266 = sphi 0, %s264
      %s267 = sphi 0, %s266
      %s281 = sphi 0, %s267
      %s285 = sphi 0, %s285
      %s287 = sphi 0, %s285
      %s288 = sphi 0, %s287
      %s302 = sphi 0, %s288
      %s306 = sphi 0, %s306
      %s308 = sphi 0, %s306
      %s309 = sphi 0, %s308
      %s323 = sphi 0, %s309
      %s327 = sphi 0, %s327
      %s329 = sphi 0, %s327
      %s330 = sphi 0, %s329
      %s344 = sphi 0, %s330
      %s348 = sphi 0, %s348
      %s350 = sphi 0, %s348
      %s351 = sphi 0, %s350
      %s365 = sphi 0, %s351
      %s369 = sphi 0, %s369
      %s371 = sphi 0, %s369
      %s372 = sphi 0, %s371
      %s386 = sphi 0, %s372
      %s390 = sphi 0, %s390
      %s392 = sphi 0, %s390
      %s393 = sphi 0, %s392
      %s407 = sphi 0, %s393
      %s413 = sphi 0, %s415
      %s416 = sphi 0, %s413
      %s417 = sphi 0, %s416
      %s433 = sphi 0, %s417
    $region4: #{dcn_with_rcnn_forward.11} parent=1 // loop_header_branch
      %29 = sbr.rel (%p27) target = $region8
    $region5: #{dcn_with_rcnn_forward.11} parent=1 // loop_body
      %s31 = ssub.s32 %s26, 1
      %s32 = ssub.s32 %s26, 2
      %s33 = sadd.s32 %s26, 1
      %s34 = ssub.s32 %s26, %s33
      %p35 = scmp.eq.s32.totalorder %s34, 0
      %s37 = sadd.s32 %s36, 1
      %s38 = scalar_select %p35, %s36, %s37
      %p41 = pneg %p35
      %p42 = scmp.eq.s32.totalorder %s26, 1
      %p43 = por %p41, %p42
      %p44 = scmp.ne.s32.totalorder %s36, %s39
      %p45 = scmp.eq.s32.totalorder %s26, 0
      %p46 = por %p44, %p45
      %p47 = scmp.ne.s32.totalorder %s36, %s39
      %p48 = scmp.eq.s32.totalorder %s31, 1
      %p49 = por %p47, %p48
      %p50 = scmp.ne.s32.totalorder %s39, %s40
      %p51 = scmp.eq.s32.totalorder %s31, 0
      %p52 = por %p50, %p51
      %p53 = scmp.ne.s32.totalorder %s39, %s40
      %p54 = scmp.eq.s32.totalorder %s32, 1
      %p55 = por %p53, %p54
      %p57 = scmp.ne.s32.totalorder %s40, %s56
      %p58 = scmp.eq.s32.totalorder %s32, 0
      %p59 = por %p57, %p58
      %s60 = ssub.s32 %s26, %s33
      %p61 = scmp.eq.s32.totalorder %s60, 0
      %s63 = sadd.s32 %s62, 1
      %s64 = scalar_select %p61, %s62, %s63
      %p67 = pneg %p61
      %p68 = scmp.eq.s32.totalorder %s26, 1
      %p69 = por %p67, %p68
      %p70 = scmp.ne.s32.totalorder %s62, %s65
      %p71 = scmp.eq.s32.totalorder %s26, 0
      %p72 = por %p70, %p71
      %p73 = scmp.ne.s32.totalorder %s62, %s65
      %p74 = scmp.eq.s32.totalorder %s31, 1
      %p75 = por %p73, %p74
      %p76 = scmp.ne.s32.totalorder %s65, %s66
      %p77 = scmp.eq.s32.totalorder %s31, 0
      %p78 = por %p76, %p77
      %p79 = scmp.ne.s32.totalorder %s65, %s66
      %p80 = scmp.eq.s32.totalorder %s32, 1
      %p81 = por %p79, %p80
      %p83 = scmp.ne.s32.totalorder %s66, %s82
      %p84 = scmp.eq.s32.totalorder %s32, 0
      %p85 = por %p83, %p84
      %s86 = ssub.s32 %s26, %s33
      %p87 = scmp.eq.s32.totalorder %s86, 0
      %s89 = sadd.s32 %s88, 1
      %s90 = scalar_select %p87, %s88, %s89
      %p93 = pneg %p87
      %p94 = scmp.eq.s32.totalorder %s26, 1
      %p95 = por %p93, %p94
      %p96 = scmp.ne.s32.totalorder %s88, %s91
      %p97 = scmp.eq.s32.totalorder %s26, 0
      %p98 = por %p96, %p97
      %p99 = scmp.ne.s32.totalorder %s88, %s91
      %p100 = scmp.eq.s32.totalorder %s31, 1
      %p101 = por %p99, %p100
      %p102 = scmp.ne.s32.totalorder %s91, %s92
      %p103 = scmp.eq.s32.totalorder %s31, 0
      %p104 = por %p102, %p103
      %p105 = scmp.ne.s32.totalorder %s91, %s92
      %p106 = scmp.eq.s32.totalorder %s32, 1
      %p107 = por %p105, %p106
      %p109 = scmp.ne.s32.totalorder %s92, %s108
      %p110 = scmp.eq.s32.totalorder %s32, 0
      %p111 = por %p109, %p110
      %s112 = ssub.s32 %s26, %s33
      %p113 = scmp.eq.s32.totalorder %s112, 0
      %s115 = sadd.s32 %s114, 1
      %s116 = scalar_select %p113, %s114, %s115
      %p119 = pneg %p113
      %p120 = scmp.eq.s32.totalorder %s26, 1
      %p121 = por %p119, %p120
      %p122 = scmp.ne.s32.totalorder %s114, %s117
      %p123 = scmp.eq.s32.totalorder %s26, 0
      %p124 = por %p122, %p123
      %p125 = scmp.ne.s32.totalorder %s114, %s117
      %p126 = scmp.eq.s32.totalorder %s31, 1
      %p127 = por %p125, %p126
      %p128 = scmp.ne.s32.totalorder %s117, %s118
      %p129 = scmp.eq.s32.totalorder %s31, 0
      %p130 = por %p128, %p129
      %p131 = scmp.ne.s32.totalorder %s117, %s118
      %p132 = scmp.eq.s32.totalorder %s32, 1
      %p133 = por %p131, %p132
      %p135 = scmp.ne.s32.totalorder %s118, %s134
      %p136 = scmp.eq.s32.totalorder %s32, 0
      %p137 = por %p135, %p136
      %s139 = sadd.s32 %s138, 1
      %p142 = scmp.eq.s32.totalorder %s26, 1
      %p143 = scmp.ne.s32.totalorder %s138, %s140
      %p144 = scmp.eq.s32.totalorder %s26, 0
      %p145 = por %p143, %p144
      %p146 = scmp.ne.s32.totalorder %s138, %s140
      %p147 = scmp.eq.s32.totalorder %s31, 1
      %p148 = por %p146, %p147
      %p149 = scmp.ne.s32.totalorder %s140, %s141
      %p150 = scmp.eq.s32.totalorder %s31, 0
      %p151 = por %p149, %p150
      %p152 = scmp.ne.s32.totalorder %s140, %s141
      %p153 = scmp.eq.s32.totalorder %s32, 1
      %p154 = por %p152, %p153
      %p156 = scmp.ne.s32.totalorder %s141, %s155
      %p157 = scmp.eq.s32.totalorder %s32, 0
      %p158 = por %p156, %p157
      %s160 = sadd.s32 %s159, 1
      %p163 = scmp.eq.s32.totalorder %s26, 1
      %p164 = scmp.ne.s32.totalorder %s159, %s161
      %p165 = scmp.eq.s32.totalorder %s26, 0
      %p166 = por %p164, %p165
      %p167 = scmp.ne.s32.totalorder %s159, %s161
      %p168 = scmp.eq.s32.totalorder %s31, 1
      %p169 = por %p167, %p168
      %p170 = scmp.ne.s32.totalorder %s161, %s162
      %p171 = scmp.eq.s32.totalorder %s31, 0
      %p172 = por %p170, %p171
      %p173 = scmp.ne.s32.totalorder %s161, %s162
      %p174 = scmp.eq.s32.totalorder %s32, 1
      %p175 = por %p173, %p174
      %p177 = scmp.ne.s32.totalorder %s162, %s176
      %p178 = scmp.eq.s32.totalorder %s32, 0
      %p179 = por %p177, %p178
      %s181 = sadd.s32 %s180, 1
      %p184 = scmp.eq.s32.totalorder %s26, 1
      %p185 = scmp.ne.s32.totalorder %s180, %s182
      %p186 = scmp.eq.s32.totalorder %s26, 0
      %p187 = por %p185, %p186
      %p188 = scmp.ne.s32.totalorder %s180, %s182
      %p189 = scmp.eq.s32.totalorder %s31, 1
      %p190 = por %p188, %p189
      %p191 = scmp.ne.s32.totalorder %s182, %s183
      %p192 = scmp.eq.s32.totalorder %s31, 0
      %p193 = por %p191, %p192
      %p194 = scmp.ne.s32.totalorder %s182, %s183
      %p195 = scmp.eq.s32.totalorder %s32, 1
      %p196 = por %p194, %p195
      %p198 = scmp.ne.s32.totalorder %s183, %s197
      %p199 = scmp.eq.s32.totalorder %s32, 0
      %p200 = por %p198, %p199
      %s202 = sadd.s32 %s201, 1
      %p205 = scmp.eq.s32.totalorder %s26, 1
      %p206 = scmp.ne.s32.totalorder %s201, %s203
      %p207 = scmp.eq.s32.totalorder %s26, 0
      %p208 = por %p206, %p207
      %p209 = scmp.ne.s32.totalorder %s201, %s203
      %p210 = scmp.eq.s32.totalorder %s31, 1
      %p211 = por %p209, %p210
      %p212 = scmp.ne.s32.totalorder %s203, %s204
      %p213 = scmp.eq.s32.totalorder %s31, 0
      %p214 = por %p212, %p213
      %p215 = scmp.ne.s32.totalorder %s203, %s204
      %p216 = scmp.eq.s32.totalorder %s32, 1
      %p217 = por %p215, %p216
      %p219 = scmp.ne.s32.totalorder %s204, %s218
      %p220 = scmp.eq.s32.totalorder %s32, 0
      %p221 = por %p219, %p220
      %s223 = sadd.s32 %s222, 1
      %p226 = scmp.eq.s32.totalorder %s26, 1
      %p227 = scmp.ne.s32.totalorder %s222, %s224
      %p228 = scmp.eq.s32.totalorder %s26, 0
      %p229 = por %p227, %p228
      %p230 = scmp.ne.s32.totalorder %s222, %s224
      %p231 = scmp.eq.s32.totalorder %s31, 1
      %p232 = por %p230, %p231
      %p233 = scmp.ne.s32.totalorder %s224, %s225
      %p234 = scmp.eq.s32.totalorder %s31, 0
      %p235 = por %p233, %p234
      %p236 = scmp.ne.s32.totalorder %s224, %s225
      %p237 = scmp.eq.s32.totalorder %s32, 1
      %p238 = por %p236, %p237
      %p240 = scmp.ne.s32.totalorder %s225, %s239
      %p241 = scmp.eq.s32.totalorder %s32, 0
      %p242 = por %p240, %p241
      %s244 = sadd.s32 %s243, 1
      %p247 = scmp.eq.s32.totalorder %s26, 1
      %p248 = scmp.ne.s32.totalorder %s243, %s245
      %p249 = scmp.eq.s32.totalorder %s26, 0
      %p250 = por %p248, %p249
      %p251 = scmp.ne.s32.totalorder %s243, %s245
      %p252 = scmp.eq.s32.totalorder %s31, 1
      %p253 = por %p251, %p252
      %p254 = scmp.ne.s32.totalorder %s245, %s246
      %p255 = scmp.eq.s32.totalorder %s31, 0
      %p256 = por %p254, %p255
      %p257 = scmp.ne.s32.totalorder %s245, %s246
      %p258 = scmp.eq.s32.totalorder %s32, 1
      %p259 = por %p257, %p258
      %p261 = scmp.ne.s32.totalorder %s246, %s260
      %p262 = scmp.eq.s32.totalorder %s32, 0
      %p263 = por %p261, %p262
      %s265 = sadd.s32 %s264, 1
      %p268 = scmp.eq.s32.totalorder %s26, 1
      %p269 = scmp.ne.s32.totalorder %s264, %s266
      %p270 = scmp.eq.s32.totalorder %s26, 0
      %p271 = por %p269, %p270
      %p272 = scmp.ne.s32.totalorder %s264, %s266
      %p273 = scmp.eq.s32.totalorder %s31, 1
      %p274 = por %p272, %p273
      %p275 = scmp.ne.s32.totalorder %s266, %s267
      %p276 = scmp.eq.s32.totalorder %s31, 0
      %p277 = por %p275, %p276
      %p278 = scmp.ne.s32.totalorder %s266, %s267
      %p279 = scmp.eq.s32.totalorder %s32, 1
      %p280 = por %p278, %p279
      %p282 = scmp.ne.s32.totalorder %s267, %s281
      %p283 = scmp.eq.s32.totalorder %s32, 0
      %p284 = por %p282, %p283
      %s286 = sadd.s32 %s285, 1
      %p289 = scmp.eq.s32.totalorder %s26, 1
      %p290 = scmp.ne.s32.totalorder %s285, %s287
      %p291 = scmp.eq.s32.totalorder %s26, 0
      %p292 = por %p290, %p291
      %p293 = scmp.ne.s32.totalorder %s285, %s287
      %p294 = scmp.eq.s32.totalorder %s31, 1
      %p295 = por %p293, %p294
      %p296 = scmp.ne.s32.totalorder %s287, %s288
      %p297 = scmp.eq.s32.totalorder %s31, 0
      %p298 = por %p296, %p297
      %p299 = scmp.ne.s32.totalorder %s287, %s288
      %p300 = scmp.eq.s32.totalorder %s32, 1
      %p301 = por %p299, %p300
      %p303 = scmp.ne.s32.totalorder %s288, %s302
      %p304 = scmp.eq.s32.totalorder %s32, 0
      %p305 = por %p303, %p304
      %s307 = sadd.s32 %s306, 1
      %p310 = scmp.eq.s32.totalorder %s26, 1
      %p311 = scmp.ne.s32.totalorder %s306, %s308
      %p312 = scmp.eq.s32.totalorder %s26, 0
      %p313 = por %p311, %p312
      %p314 = scmp.ne.s32.totalorder %s306, %s308
      %p315 = scmp.eq.s32.totalorder %s31, 1
      %p316 = por %p314, %p315
      %p317 = scmp.ne.s32.totalorder %s308, %s309
      %p318 = scmp.eq.s32.totalorder %s31, 0
      %p319 = por %p317, %p318
      %p320 = scmp.ne.s32.totalorder %s308, %s309
      %p321 = scmp.eq.s32.totalorder %s32, 1
      %p322 = por %p320, %p321
      %p324 = scmp.ne.s32.totalorder %s309, %s323
      %p325 = scmp.eq.s32.totalorder %s32, 0
      %p326 = por %p324, %p325
      %s328 = sadd.s32 %s327, 1
      %p331 = scmp.eq.s32.totalorder %s26, 1
      %p332 = scmp.ne.s32.totalorder %s327, %s329
      %p333 = scmp.eq.s32.totalorder %s26, 0
      %p334 = por %p332, %p333
      %p335 = scmp.ne.s32.totalorder %s327, %s329
      %p336 = scmp.eq.s32.totalorder %s31, 1
      %p337 = por %p335, %p336
      %p338 = scmp.ne.s32.totalorder %s329, %s330
      %p339 = scmp.eq.s32.totalorder %s31, 0
      %p340 = por %p338, %p339
      %p341 = scmp.ne.s32.totalorder %s329, %s330
      %p342 = scmp.eq.s32.totalorder %s32, 1
      %p343 = por %p341, %p342
      %p345 = scmp.ne.s32.totalorder %s330, %s344
      %p346 = scmp.eq.s32.totalorder %s32, 0
      %p347 = por %p345, %p346
      %s349 = sadd.s32 %s348, 1
      %p352 = scmp.eq.s32.totalorder %s26, 1
      %p353 = scmp.ne.s32.totalorder %s348, %s350
      %p354 = scmp.eq.s32.totalorder %s26, 0
      %p355 = por %p353, %p354
      %p356 = scmp.ne.s32.totalorder %s348, %s350
      %p357 = scmp.eq.s32.totalorder %s31, 1
      %p358 = por %p356, %p357
      %p359 = scmp.ne.s32.totalorder %s350, %s351
      %p360 = scmp.eq.s32.totalorder %s31, 0
      %p361 = por %p359, %p360
      %p362 = scmp.ne.s32.totalorder %s350, %s351
      %p363 = scmp.eq.s32.totalorder %s32, 1
      %p364 = por %p362, %p363
      %p366 = scmp.ne.s32.totalorder %s351, %s365
      %p367 = scmp.eq.s32.totalorder %s32, 0
      %p368 = por %p366, %p367
      %s370 = sadd.s32 %s369, 1
      %p373 = scmp.eq.s32.totalorder %s26, 1
      %p374 = scmp.ne.s32.totalorder %s369, %s371
      %p375 = scmp.eq.s32.totalorder %s26, 0
      %p376 = por %p374, %p375
      %p377 = scmp.ne.s32.totalorder %s369, %s371
      %p378 = scmp.eq.s32.totalorder %s31, 1
      %p379 = por %p377, %p378
      %p380 = scmp.ne.s32.totalorder %s371, %s372
      %p381 = scmp.eq.s32.totalorder %s31, 0
      %p382 = por %p380, %p381
      %p383 = scmp.ne.s32.totalorder %s371, %s372
      %p384 = scmp.eq.s32.totalorder %s32, 1
      %p385 = por %p383, %p384
      %p387 = scmp.ne.s32.totalorder %s372, %s386
      %p388 = scmp.eq.s32.totalorder %s32, 0
      %p389 = por %p387, %p388
      %s391 = sadd.s32 %s390, 1
      %p394 = scmp.eq.s32.totalorder %s26, 1
      %p395 = scmp.ne.s32.totalorder %s390, %s392
      %p396 = scmp.eq.s32.totalorder %s26, 0
      %p397 = por %p395, %p396
      %p398 = scmp.ne.s32.totalorder %s390, %s392
      %p399 = scmp.eq.s32.totalorder %s31, 1
      %p400 = por %p398, %p399
      %p401 = scmp.ne.s32.totalorder %s392, %s393
      %p402 = scmp.eq.s32.totalorder %s31, 0
      %p403 = por %p401, %p402
      %p404 = scmp.ne.s32.totalorder %s392, %s393
      %p405 = scmp.eq.s32.totalorder %s32, 1
      %p406 = por %p404, %p405
      %p408 = scmp.ne.s32.totalorder %s393, %s407
      %p409 = scmp.eq.s32.totalorder %s32, 0
      %p410 = por %p408, %p409
      %s411 = ssub.s32 %s26, %s33
      %p412 = scmp.eq.s32.totalorder %s411, 0
      %s414 = sadd.s32 %s413, 1
      %s415 = scalar_select %p412, %s413, %s414
      %p418 = pneg %p412
      %p419 = scmp.eq.s32.totalorder %s26, 1
      %p420 = por %p418, %p419
      %p421 = scmp.ne.s32.totalorder %s413, %s416
      %p422 = scmp.eq.s32.totalorder %s26, 0
      %p423 = por %p421, %p422
      %p424 = scmp.ne.s32.totalorder %s413, %s416
      %p425 = scmp.eq.s32.totalorder %s31, 1
      %p426 = por %p424, %p425
      %p427 = scmp.ne.s32.totalorder %s416, %s417
      %p428 = scmp.eq.s32.totalorder %s31, 0
      %p429 = por %p427, %p428
      %p430 = scmp.ne.s32.totalorder %s416, %s417
      %p431 = scmp.eq.s32.totalorder %s32, 1
      %p432 = por %p430, %p431
      %p434 = scmp.ne.s32.totalorder %s417, %s433
      %p435 = scmp.eq.s32.totalorder %s32, 0
      %p436 = por %p434, %p435
      %p437 = scmp.le.s32.totalorder 1, %s26
      %p438 = scmp.lt.s32.totalorder %s26, 3
      %p439 = pnand %p437, %p438
      %p440 = pneg %p439
      // Predicated region
      $region9: #{dcn_with_rcnn_forward.11} parent=5 // pred_check
        _
      $region10: #{dcn_with_rcnn_forward.11} parent=5 // pred_check_branch
        %442 = sbr.rel (%p439) target = $region12
      $region11: #{dcn_with_rcnn_forward.11} parent=5 // pred_region
        %s443 = ssub.s32 %s26, 1
        // Predicated region
        $region13: #{dcn_with_rcnn_forward.11} parent=11 // pred_check
          %p444 = pneg %p151
        $region14: #{dcn_with_rcnn_forward.11} parent=11 // pred_check_branch
          %446 = sbr.rel (%p444) target = $region16
        $region15: #{dcn_with_rcnn_forward.11} parent=11 // pred_region
          _
        $region16: #{dcn_with_rcnn_forward.11} parent=11 // pred_fallthru
          _
        // Predicated region
        $region17: #{dcn_with_rcnn_forward.11} parent=11 // pred_check
          %p447 = pneg %p172
        $region18: #{dcn_with_rcnn_forward.11} parent=11 // pred_check_branch
          %449 = sbr.rel (%p447) target = $region20
        $region19: #{dcn_with_rcnn_forward.11} parent=11 // pred_region
          _
        $region20: #{dcn_with_rcnn_forward.11} parent=11 // pred_fallthru
          _
        // Predicated region
        $region21: #{dcn_with_rcnn_forward.11} parent=11 // pred_check
          %p450 = pneg %p193
        $region22: #{dcn_with_rcnn_forward.11} parent=11 // pred_check_branch
          %452 = sbr.rel (%p450) target = $region24
        $region23: #{dcn_with_rcnn_forward.11} parent=11 // pred_region
          _
        $region24: #{dcn_with_rcnn_forward.11} parent=11 // pred_fallthru
          _
        // Predicated region
        $region25: #{dcn_with_rcnn_forward.11} parent=11 // pred_check
          %p453 = pneg %p214
        $region26: #{dcn_with_rcnn_forward.11} parent=11 // pred_check_branch
          %455 = sbr.rel (%p453) target = $region28
        $region27: #{dcn_with_rcnn_forward.11} parent=11 // pred_region
          _
        $region28: #{dcn_with_rcnn_forward.11} parent=11 // pred_fallthru
          _
        // Predicated region
        $region29: #{dcn_with_rcnn_forward.11} parent=11 // pred_check
          %p456 = pneg %p235
        $region30: #{dcn_with_rcnn_forward.11} parent=11 // pred_check_branch
          %458 = sbr.rel (%p456) target = $region32
        $region31: #{dcn_with_rcnn_forward.11} parent=11 // pred_region
          _
        $region32: #{dcn_with_rcnn_forward.11} parent=11 // pred_fallthru
          _
        // Predicated region
        $region33: #{dcn_with_rcnn_forward.11} parent=11 // pred_check
          %p459 = pneg %p256
        $region34: #{dcn_with_rcnn_forward.11} parent=11 // pred_check_branch
          %461 = sbr.rel (%p459) target = $region36
        $region35: #{dcn_with_rcnn_forward.11} parent=11 // pred_region
          _
        $region36: #{dcn_with_rcnn_forward.11} parent=11 // pred_fallthru
          _
        // Predicated region
        $region37: #{dcn_with_rcnn_forward.11} parent=11 // pred_check
          %p462 = pneg %p277
        $region38: #{dcn_with_rcnn_forward.11} parent=11 // pred_check_branch
          %464 = sbr.rel (%p462) target = $region40
        $region39: #{dcn_with_rcnn_forward.11} parent=11 // pred_region
          _
        $region40: #{dcn_with_rcnn_forward.11} parent=11 // pred_fallthru
          _
        // Predicated region
        $region41: #{dcn_with_rcnn_forward.11} parent=11 // pred_check
          %p465 = pneg %p298
        $region42: #{dcn_with_rcnn_forward.11} parent=11 // pred_check_branch
          %467 = sbr.rel (%p465) target = $region44
        $region43: #{dcn_with_rcnn_forward.11} parent=11 // pred_region
          _
        $region44: #{dcn_with_rcnn_forward.11} parent=11 // pred_fallthru
          _
        // Predicated region
        $region45: #{dcn_with_rcnn_forward.11} parent=11 // pred_check
          %p468 = pneg %p319
        $region46: #{dcn_with_rcnn_forward.11} parent=11 // pred_check_branch
          %470 = sbr.rel (%p468) target = $region48
        $region47: #{dcn_with_rcnn_forward.11} parent=11 // pred_region
          _
        $region48: #{dcn_with_rcnn_forward.11} parent=11 // pred_fallthru
          _
        // Predicated region
        $region49: #{dcn_with_rcnn_forward.11} parent=11 // pred_check
          %p471 = pneg %p340
        $region50: #{dcn_with_rcnn_forward.11} parent=11 // pred_check_branch
          %473 = sbr.rel (%p471) target = $region52
        $region51: #{dcn_with_rcnn_forward.11} parent=11 // pred_region
          _
        $region52: #{dcn_with_rcnn_forward.11} parent=11 // pred_fallthru
          _
        // Predicated region
        $region53: #{dcn_with_rcnn_forward.11} parent=11 // pred_check
          %p474 = pneg %p361
        $region54: #{dcn_with_rcnn_forward.11} parent=11 // pred_check_branch
          %476 = sbr.rel (%p474) target = $region56
        $region55: #{dcn_with_rcnn_forward.11} parent=11 // pred_region
          _
        $region56: #{dcn_with_rcnn_forward.11} parent=11 // pred_fallthru
          _
        // Predicated region
        $region57: #{dcn_with_rcnn_forward.11} parent=11 // pred_check
          %p477 = pneg %p382
        $region58: #{dcn_with_rcnn_forward.11} parent=11 // pred_check_branch
          %479 = sbr.rel (%p477) target = $region60
        $region59: #{dcn_with_rcnn_forward.11} parent=11 // pred_region
          _
        $region60: #{dcn_with_rcnn_forward.11} parent=11 // pred_fallthru
          _
        // Predicated region
        $region61: #{dcn_with_rcnn_forward.11} parent=11 // pred_check
          %p480 = pneg %p403
        $region62: #{dcn_with_rcnn_forward.11} parent=11 // pred_check_branch
          %482 = sbr.rel (%p480) target = $region64
        $region63: #{dcn_with_rcnn_forward.11} parent=11 // pred_region
          _
        $region64: #{dcn_with_rcnn_forward.11} parent=11 // pred_fallthru
          _
      $region12: #{dcn_with_rcnn_forward.11} parent=5 // pred_fallthru
        _
      %p483 = scmp.lt.s32.totalorder %s26, 2
      // Predicated region
      $region65: #{dcn_with_rcnn_forward.11} parent=5 // pred_check
        %p484 = pneg %p483
      $region66: #{dcn_with_rcnn_forward.11} parent=5 // pred_check_branch
        %486 = sbr.rel (%p484) target = $region68
      $region67: #{dcn_with_rcnn_forward.11} parent=5 // pred_region
        // Predicated region
        $region69: #{dcn_with_rcnn_forward.11} parent=67 // pred_check
          %p487 = pneg %p46
        $region70: #{dcn_with_rcnn_forward.11} parent=67 // pred_check_branch
          %489 = sbr.rel (%p487) target = $region72
        $region71: #{dcn_with_rcnn_forward.11} parent=67 // pred_region
          %p490 = scmp.lt.s32.totalorder %s26, 1
          %s491 = scalar_select %p490, %s26, 1
          %s492 = smul.addr %s491, 2
          %s493 = smul.addr %s492, 8
          %s494 = scalar_lea.vmem %s0, %s493
        $region72: #{dcn_with_rcnn_forward.11} parent=67 // pred_fallthru
          _
        // Predicated region
        $region73: #{dcn_with_rcnn_forward.11} parent=67 // pred_check
          %p495 = pneg %p72
        $region74: #{dcn_with_rcnn_forward.11} parent=67 // pred_check_branch
          %497 = sbr.rel (%p495) target = $region76
        $region75: #{dcn_with_rcnn_forward.11} parent=67 // pred_region
          %p498 = scmp.lt.s32.totalorder %s26, 1
          %s499 = scalar_select %p498, %s26, 1
          %s500 = smul.addr %s499, 3
          %s501 = smul.addr %s500, 8
          %s502 = scalar_lea.vmem %s1, %s501
        $region76: #{dcn_with_rcnn_forward.11} parent=67 // pred_fallthru
          _
        // Predicated region
        $region77: #{dcn_with_rcnn_forward.11} parent=67 // pred_check
          %p503 = pneg %p98
        $region78: #{dcn_with_rcnn_forward.11} parent=67 // pred_check_branch
          %505 = sbr.rel (%p503) target = $region80
        $region79: #{dcn_with_rcnn_forward.11} parent=67 // pred_region
          %p506 = scmp.lt.s32.totalorder %s26, 1
          %s507 = scalar_select %p506, %s26, 1
          %s508 = smul.addr %s507, 2
          %s509 = smul.addr %s508, 8
          %s510 = scalar_lea.vmem %s2, %s509
        $region80: #{dcn_with_rcnn_forward.11} parent=67 // pred_fallthru
          _
        // Predicated region
        $region81: #{dcn_with_rcnn_forward.11} parent=67 // pred_check
          %p511 = pneg %p124
        $region82: #{dcn_with_rcnn_forward.11} parent=67 // pred_check_branch
          %513 = sbr.rel (%p511) target = $region84
        $region83: #{dcn_with_rcnn_forward.11} parent=67 // pred_region
          %p514 = scmp.lt.s32.totalorder %s26, 1
          %s515 = scalar_select %p514, %s26, 1
          %s516 = smul.addr %s515, 8
          %s517 = scalar_lea.vmem %s3, %s516
        $region84: #{dcn_with_rcnn_forward.11} parent=67 // pred_fallthru
          _
      $region68: #{dcn_with_rcnn_forward.11} parent=5 // pred_fallthru
        _
      %p518 = scmp.le.s32.totalorder 1, %s26
      %p519 = scmp.lt.s32.totalorder %s26, 3
      %p520 = pnand %p518, %p519
      %p521 = pneg %p520
      // Predicated region
      $region85: #{dcn_with_rcnn_forward.11} parent=5 // pred_check
        _
      $region86: #{dcn_with_rcnn_forward.11} parent=5 // pred_check_branch
        %523 = sbr.rel (%p520) target = $region88
      $region87: #{dcn_with_rcnn_forward.11} parent=5 // pred_region
        %s524 = ssub.s32 %s26, 1
        %p525 = scmp.lt.s32.totalorder %s31, 1
        %s526 = scalar_select %p525, %s31, 1
        %s527 = smul.addr %s526, 2
        %s528 = smul.addr %s527, 8
        %s529 = scalar_lea.vmem %s0, %s528
        %p530 = pneg %p52
        %p531 = pneg %p49
        %p532 = scmp.lt.s32.totalorder %s31, 1
        %s533 = scalar_select %p532, %s31, 1
        %s534 = smul.addr %s533, 3
        %s535 = smul.addr %s534, 8
        %s536 = scalar_lea.vmem %s1, %s535
        %p537 = pneg %p78
        %p538 = pneg %p75
        %p539 = scmp.lt.s32.totalorder %s31, 1
        %s540 = scalar_select %p539, %s31, 1
        %s541 = smul.addr %s540, 2
        %s542 = smul.addr %s541, 8
        %s543 = scalar_lea.vmem %s2, %s542
        %p544 = pneg %p104
        %p545 = pneg %p101
        %p546 = scmp.lt.s32.totalorder %s31, 1
        %s547 = scalar_select %p546, %s31, 1
        %s548 = smul.addr %s547, 8
        %s549 = scalar_lea.vmem %s3, %s548
        %p550 = pneg %p130
        %p551 = pneg %p127
        %p552 = pneg %p151
        %p553 = pneg %p148
        %p554 = pneg %p172
        %p555 = pneg %p169
        %p556 = pneg %p193
        %p557 = pneg %p190
        %p558 = pneg %p214
        %p559 = pneg %p211
        %p560 = pneg %p235
        %p561 = pneg %p232
        %p562 = pneg %p256
        %p563 = pneg %p253
        %p564 = pneg %p277
        %p565 = pneg %p274
        %p566 = pneg %p298
        %p567 = pneg %p295
        %p568 = pneg %p319
        %p569 = pneg %p316
        %p570 = pneg %p340
        %p571 = pneg %p337
        %p572 = pneg %p361
        %p573 = pneg %p358
        %p574 = pneg %p382
        %p575 = pneg %p379
        %p576 = pneg %p403
        %p577 = pneg %p400
        %p578 = pneg %p429
        %p579 = pneg %p426
        %s580 = sand.u32 %s416, 1
        %s581 = scalar_lea.sflag [#allocation3], %s580
        %s582 = sand.u32 %s416, 1
        %s583 = scalar_lea.vmem [#allocation2], %s582
        %p584 = scmp.lt.s32.totalorder %s31, 1
        %s585 = scalar_select %p584, %s31, 1
        %s586 = smul.addr %s585, 2
        %s587 = smul.addr %s586, 8
        %s588 = scalar_lea.vmem %s0, %s587
        %p589 = scmp.lt.s32.totalorder %s31, 1
        %s590 = scalar_select %p589, %s31, 1
        %s591 = smul.addr %s590, 3
        %s592 = smul.addr %s591, 8
        %s593 = scalar_lea.vmem %s1, %s592
        %p594 = scmp.lt.s32.totalorder %s31, 1
        %s595 = scalar_select %p594, %s31, 1
        %s596 = smul.addr %s595, 2
        %s597 = smul.addr %s596, 8
        %s598 = scalar_lea.vmem %s2, %s597
        %p599 = scmp.lt.s32.totalorder %s31, 1
        %s600 = scalar_select %p599, %s31, 1
        %s601 = smul.addr %s600, 8
        %s602 = scalar_lea.vmem %s3, %s601
        %v603 = vld [vmem:[%s588] sm:$0xff]
        %v604 = vld [vmem:[%s588 + $0x8] sm:$0xff]
        %v605 = vld [vmem:[%s598] sm:$0xff]
        %v606 = vld [vmem:[%s598 + $0x8] sm:$0xff]
        %v607 = vld [vmem:[%s4] sm:$0xff]
        %v608 = vld [vmem:[%s4 + $0x8] sm:$0xff]
        %v609 = vld [vmem:[%s4 + $0x10] sm:$0xff]
        %v610 = vld [vmem:[%s4 + $0x18] sm:$0xff]
        %v611 = vld [vmem:[%s4 + $0x20] sm:$0xff]
        %v612 = vld [vmem:[%s4 + $0x28] sm:$0xff]
        %v613 = vld [vmem:[%s4 + $0x30] sm:$0xff]
        %v614 = vld [vmem:[%s4 + $0x38] sm:$0xff]
        %v615 = vld [vmem:[%s5] sm:$0x1]
        %v616 = vld [vmem:[%s6] sm:$0xff]
        %v617 = vld [vmem:[%s6 + $0x8] sm:$0xff]
        %v618 = vld [vmem:[%s6 + $0x10] sm:$0xff]
        %v619 = vld [vmem:[%s6 + $0x18] sm:$0xff]
        %v620 = vld [vmem:[%s6 + $0x20] sm:$0xff]
        %v621 = vld [vmem:[%s6 + $0x28] sm:$0xff]
        %v622 = vld [vmem:[%s6 + $0x30] sm:$0xff]
        %v623 = vld [vmem:[%s6 + $0x38] sm:$0xff]
        %v624 = vld [vmem:[%s7] sm:$0x1]
        %v626 = vlaneseq
        %v627 = vshrl.u32 %v626, 7
        %v628 = vsub.s32 0, %v627
        %v629 = vrot.slane %v615, %v628
        %vm631 = vcmask 523264
        %v633 = vsel %vm631, %v603, 0
        %v636 = vsel %vm631, %v604, 0
        %638 = vmatprep.subr.mxu0 0.0
        %639 = vmatpush1.msra.mxu0 %v607
        %640 = vmatprep.subr.mxu0 0.0
        %641 = vmatpush1.msra.mxu0 %v608
        %642 = vmatprep.subr.mxu0 0.0
        %643 = vmatpush1.msra.mxu0 %v609
        %644 = vmatprep.subr.mxu0 0.0
        %645 = vmatpush1.msra.mxu0 %v610
        %646 = vmatprep.subr.mxu0 0.0
        %647 = vmatpush1.msra.mxu0 %v611
        %648 = vmatprep.subr.mxu0 0.0
        %649 = vmatpush1.msra.mxu0 %v612
        %650 = vmatprep.subr.mxu0 0.0
        %651 = vmatpush1.msra.mxu0 %v613
        %652 = vmatprep.subr.mxu0 0.0
        %653 = vmatpush1.msra.mxu0 %v614
        %654 = vmatprep.subr.mxu0 0.0
        %655 = vmatpush1.msra.mxu0 0.0
        %656 = vmatprep.subr.mxu0 0.0
        %657 = vmatpush1.msra.mxu0 0.0
        %658 = vmatprep.subr.mxu0 0.0
        %659 = vmatpush1.msra.mxu0 0.0
        %660 = vmatprep.subr.mxu0 0.0
        %661 = vmatpush1.msra.mxu0 0.0
        %662 = vmatprep.subr.mxu0 0.0
        %663 = vmatpush1.msra.mxu0 0.0
        %664 = vmatprep.subr.mxu0 0.0
        %665 = vmatpush1.msra.mxu0 0.0
        %666 = vmatprep.subr.mxu0 0.0
        %667 = vmatpush1.msra.mxu0 0.0
        %668 = vmatprep.subr.mxu0 0.0
        %669 = vmatpush1.msra.mxu0 0.0
        %670 = vmatprep.subr.mxu0 0.0
        %671 = vmatpush1.msra.mxu0 0.0
        %672 = vmatprep.subr.mxu0 0.0
        %673 = vmatpush1.msra.mxu0 0.0
        %674 = vmatprep.subr.mxu0 0.0
        %675 = vmatpush1.msra.mxu0 0.0
        %676 = vmatprep.subr.mxu0 0.0
        %677 = vmatpush1.msra.mxu0 0.0
        %678 = vmatprep.subr.mxu0 0.0
        %679 = vmatpush1.msra.mxu0 0.0
        %680 = vmatprep.subr.mxu0 0.0
        %681 = vmatpush1.msra.mxu0 0.0
        %682 = vmatprep.subr.mxu0 0.0
        %683 = vmatpush1.msra.mxu0 0.0
        %684 = vmatprep.subr.mxu0 0.0
        %685 = vmatpush1.msra.mxu0 0.0
        %686 = vmatprep.subr.mxu0 0.0
        %687 = vmatpush1.msra.mxu0 0.0
        %688 = vmatprep.subr.mxu0 0.0
        %689 = vmatpush1.msra.mxu0 0.0
        %690 = vmatprep.subr.mxu0 0.0
        %691 = vmatpush1.msra.mxu0 0.0
        %692 = vmatprep.subr.mxu0 0.0
        %693 = vmatpush1.msra.mxu0 0.0
        %694 = vmatprep.subr.mxu0 0.0
        %695 = vmatpush1.msra.mxu0 0.0
        %696 = vmatprep.subr.mxu0 0.0
        %697 = vmatpush1.msra.mxu0 0.0
        %698 = vmatprep.subr.mxu0 0.0
        %699 = vmatpush1.msra.mxu0 0.0
        %700 = vmatprep.subr.mxu0 0.0
        %701 = vmatpush1.msra.mxu0 0.0
        %702 = vmatprep.mubr.f32.mxu0 0.0
        %703 = vmatmul.mubr.f32.gmra.mrb[0].mxu0 %v633
        %v704 = vpop.f32.mrb[0].mxu0
        %v705 = vadd.f32 %v629, %v704
        %v706 = vpop.f32.mrb[0].mxu0
        %707 = vmatprep.mubr.f32.mxu0 0.0
        %708 = vmatmul.mubr.f32.gmra.mrb[0].mxu0 %v636
        %v709 = vpop.f32.mrb[0].mxu0
        %v710 = vadd.f32 %v629, %v709
        %v711 = vpop.f32.mrb[0].mxu0
        %712 = vdwg.mxu0
        %v713 = vmax.f32 %v705, 0.0
        %v714 = vmax.f32 %v710, 0.0
        %v716 = vlaneseq
        %v717 = vshrl.u32 %v716, 7
        %v718 = vsub.s32 0, %v717
        %v719 = vrot.slane %v624, %v718
        %v722 = vsel %vm631, %v713, 0
        %v725 = vsel %vm631, %v714, 0
        %727 = vmatprep.subr.mxu0 0.0
        %728 = vmatpush1.msra.mxu0 %v616
        %729 = vmatprep.subr.mxu0 0.0
        %730 = vmatpush1.msra.mxu0 %v617
        %731 = vmatprep.subr.mxu0 0.0
        %732 = vmatpush1.msra.mxu0 %v618
        %733 = vmatprep.subr.mxu0 0.0
        %734 = vmatpush1.msra.mxu0 %v619
        %735 = vmatprep.subr.mxu0 0.0
        %736 = vmatpush1.msra.mxu0 %v620
        %737 = vmatprep.subr.mxu0 0.0
        %738 = vmatpush1.msra.mxu0 %v621
        %739 = vmatprep.subr.mxu0 0.0
        %740 = vmatpush1.msra.mxu0 %v622
        %741 = vmatprep.subr.mxu0 0.0
        %742 = vmatpush1.msra.mxu0 %v623
        %743 = vmatprep.subr.mxu0 0.0
        %744 = vmatpush1.msra.mxu0 0.0
        %745 = vmatprep.subr.mxu0 0.0
        %746 = vmatpush1.msra.mxu0 0.0
        %747 = vmatprep.subr.mxu0 0.0
        %748 = vmatpush1.msra.mxu0 0.0
        %749 = vmatprep.subr.mxu0 0.0
        %750 = vmatpush1.msra.mxu0 0.0
        %751 = vmatprep.subr.mxu0 0.0
        %752 = vmatpush1.msra.mxu0 0.0
        %753 = vmatprep.subr.mxu0 0.0
        %754 = vmatpush1.msra.mxu0 0.0
        %755 = vmatprep.subr.mxu0 0.0
        %756 = vmatpush1.msra.mxu0 0.0
        %757 = vmatprep.subr.mxu0 0.0
        %758 = vmatpush1.msra.mxu0 0.0
        %759 = vmatprep.subr.mxu0 0.0
        %760 = vmatpush1.msra.mxu0 0.0
        %761 = vmatprep.subr.mxu0 0.0
        %762 = vmatpush1.msra.mxu0 0.0
        %763 = vmatprep.subr.mxu0 0.0
        %764 = vmatpush1.msra.mxu0 0.0
        %765 = vmatprep.subr.mxu0 0.0
        %766 = vmatpush1.msra.mxu0 0.0
        %767 = vmatprep.subr.mxu0 0.0
        %768 = vmatpush1.msra.mxu0 0.0
        %769 = vmatprep.subr.mxu0 0.0
        %770 = vmatpush1.msra.mxu0 0.0
        %771 = vmatprep.subr.mxu0 0.0
        %772 = vmatpush1.msra.mxu0 0.0
        %773 = vmatprep.subr.mxu0 0.0
        %774 = vmatpush1.msra.mxu0 0.0
        %775 = vmatprep.subr.mxu0 0.0
        %776 = vmatpush1.msra.mxu0 0.0
        %777 = vmatprep.subr.mxu0 0.0
        %778 = vmatpush1.msra.mxu0 0.0
        %779 = vmatprep.subr.mxu0 0.0
        %780 = vmatpush1.msra.mxu0 0.0
        %781 = vmatprep.subr.mxu0 0.0
        %782 = vmatpush1.msra.mxu0 0.0
        %783 = vmatprep.subr.mxu0 0.0
        %784 = vmatpush1.msra.mxu0 0.0
        %785 = vmatprep.subr.mxu0 0.0
        %786 = vmatpush1.msra.mxu0 0.0
        %787 = vmatprep.subr.mxu0 0.0
        %788 = vmatpush1.msra.mxu0 0.0
        %789 = vmatprep.subr.mxu0 0.0
        %790 = vmatpush1.msra.mxu0 0.0
        %791 = vmatprep.mubr.f32.mxu0 0.0
        %792 = vmatmul.mubr.f32.gmra.mrb[0].mxu0 %v722
        %v793 = vpop.f32.mrb[0].mxu0
        %v794 = vadd.f32 %v719, %v793
        %v795 = vpop.f32.mrb[0].mxu0
        %796 = vmatprep.mubr.f32.mxu0 0.0
        %797 = vmatmul.mubr.f32.gmra.mrb[0].mxu0 %v725
        %v798 = vpop.f32.mrb[0].mxu0
        %v799 = vadd.f32 %v719, %v798
        %v800 = vpop.f32.mrb[0].mxu0
        %801 = vdwg.mxu0
        %vm802 = vcmp.gt.f32.partialorder %v605, 0.0
        %vm803 = vcmp.gt.f32.partialorder %v606, 0.0
        %v804 = vsel %vm802, 0.0, -1e+30
        %v805 = vsel %vm803, 0.0, -1e+30
        %807 = vset.pattern.permute.xlu0 0
        %808 = vperm.xlu0 %807, %v804
        %v809 = vpop.permute.xlu0 %808
        %812 = vset.pattern.permute.xlu0 0
        %813 = vperm.xlu0 %812, %v805
        %v814 = vpop.permute.xlu0 %813
        %v816 = vadd.f32 %v794, %v809
        %v817 = vadd.f32 %v799, %v814
        %vm818 = vcmask 31744
        %v819 = vsel %vm818, %v816, -inf
        %v820 = vsel %vm818, %v817, -inf
        %v821 = vmax.f32 %v819, %v820
        %v822 = vrot.slane %v821, 4
        %v823 = vmax.f32 %v821, %v822
        %v824 = vrot.slane %v823, 2
        %v825 = vmax.f32 %v823, %v824
        %v826 = vrot.slane %v825, 1
        %v827 = vmax.f32 %v825, %v826
        %v828 = vsub.f32 %v816, %v827
        %v829 = vsub.f32 %v817, %v827
        %v830 = vmul.f32 %v828, 1.442695
        %v831 = vpow.pop %v830
        %v832 = vmul.f32 %v829, 1.442695
        %v833 = vpow.pop %v832
        %v834 = vsel %vm818, %v831, 0.0
        %v835 = vsel %vm818, %v833, 0.0
        %v836 = vadd.f32 %v834, %v835
        %v837 = vrot.slane %v836, 4
        %v838 = vadd.f32 %v836, %v837
        %v839 = vrot.slane %v838, 2
        %v840 = vadd.f32 %v838, %v839
        %v841 = vrot.slane %v840, 1
        %v842 = vadd.f32 %v840, %v841
        %v843 = vrcp.pop %v842
        %v844 = vmul.f32 %v831, %v843
        %v845 = vmul.f32 %v833, %v843
        %v846 = vsel %vm818, %v844, 0.0
        %847 = vadd.xlane.f32.xlu0 %v846
        %v848 = vpop.xlane.xlu0 %847
        %v849 = vsel %vm818, %v845, 0.0
        %850 = vadd.xlane.f32.xlu0 %v849
        %v851 = vpop.xlane.xlu0 %850
        %v852 = vrcp.pop 4.0
        %v853 = vmul.f32 %v848, %v852
        %v854 = vmul.f32 %v851, %v852
        %v855 = vmul.f32 %v853, %v603
        %v856 = vmul.f32 %v854, %v604
        %v857 = vsel %vm631, %v855, 0.0
        %v858 = vsel %vm631, %v856, 0.0
        %v859 = vadd.f32 %v857, %v858
        %v860 = vrot.slane %v859, 4
        %v861 = vadd.f32 %v859, %v860
        %v862 = vrot.slane %v861, 2
        %v863 = vadd.f32 %v861, %v862
        %v864 = vrot.slane %v863, 1
        %v865 = vadd.f32 %v863, %v864
        %v866 = vld [vmem:[%s593] sm:$0xff]
        %v867 = vld [vmem:[%s593 + $0x8] sm:$0xff]
        %v868 = vld [vmem:[%s593 + $0x10] sm:$0xff]
        %v869 = vld [vmem:[%s602] sm:$0xff]
        %v870 = vld [vmem:[%s8] sm:$0xff]
        %v871 = vld [vmem:[%s8 + $0x8] sm:$0xff]
        %v872 = vld [vmem:[%s8 + $0x10] sm:$0xff]
        %v873 = vld [vmem:[%s8 + $0x18] sm:$0xff]
        %v874 = vld [vmem:[%s8 + $0x20] sm:$0xff]
        %v875 = vld [vmem:[%s8 + $0x28] sm:$0xff]
        %v876 = vld [vmem:[%s8 + $0x30] sm:$0xff]
        %v877 = vld [vmem:[%s8 + $0x38] sm:$0xff]
        %v878 = vld [vmem:[%s8 + $0x40] sm:$0xff]
        %v879 = vld [vmem:[%s8 + $0x48] sm:$0xff]
        %v880 = vld [vmem:[%s8 + $0x50] sm:$0xff]
        %v881 = vld [vmem:[%s8 + $0x58] sm:$0xff]
        %v882 = vld [vmem:[%s8 + $0x60] sm:$0xff]
        %v883 = vld [vmem:[%s8 + $0x68] sm:$0xff]
        %v884 = vld [vmem:[%s8 + $0x70] sm:$0xff]
        %v885 = vld [vmem:[%s8 + $0x78] sm:$0xff]
        %v886 = vld [vmem:[%s8 + $0x80] sm:$0xff]
        %v887 = vld [vmem:[%s8 + $0x88] sm:$0xff]
        %v888 = vld [vmem:[%s8 + $0x90] sm:$0xff]
        %v889 = vld [vmem:[%s8 + $0x98] sm:$0xff]
        %v890 = vld [vmem:[%s8 + $0xa0] sm:$0xff]
        %v891 = vld [vmem:[%s8 + $0xa8] sm:$0xff]
        %v892 = vld [vmem:[%s8 + $0xb0] sm:$0xff]
        %v893 = vld [vmem:[%s8 + $0xb8] sm:$0xff]
        %v894 = vld [vmem:[%s8 + $0xc0] sm:$0xff]
        %v895 = vld [vmem:[%s8 + $0xc8] sm:$0xff]
        %v896 = vld [vmem:[%s8 + $0xd0] sm:$0xff]
        %v897 = vld [vmem:[%s8 + $0xd8] sm:$0xff]
        %v898 = vld [vmem:[%s8 + $0xe0] sm:$0xff]
        %v899 = vld [vmem:[%s8 + $0xe8] sm:$0xff]
        %v900 = vld [vmem:[%s8 + $0xf0] sm:$0xff]
        %v901 = vld [vmem:[%s8 + $0xf8] sm:$0xff]
        %v902 = vld [vmem:[%s8 + $0x100] sm:$0xff]
        %v903 = vld [vmem:[%s8 + $0x108] sm:$0xff]
        %v904 = vld [vmem:[%s8 + $0x110] sm:$0xff]
        %v905 = vld [vmem:[%s8 + $0x118] sm:$0xff]
        %v906 = vld [vmem:[%s8 + $0x120] sm:$0xff]
        %v907 = vld [vmem:[%s8 + $0x128] sm:$0xff]
        %v908 = vld [vmem:[%s8 + $0x130] sm:$0xff]
        %v909 = vld [vmem:[%s8 + $0x138] sm:$0xff]
        %v910 = vld [vmem:[%s8 + $0x140] sm:$0xff]
        %v911 = vld [vmem:[%s8 + $0x148] sm:$0xff]
        %v912 = vld [vmem:[%s8 + $0x150] sm:$0xff]
        %v913 = vld [vmem:[%s8 + $0x158] sm:$0xff]
        %v914 = vld [vmem:[%s8 + $0x160] sm:$0xff]
        %v915 = vld [vmem:[%s8 + $0x168] sm:$0xff]
        %v916 = vld [vmem:[%s8 + $0x170] sm:$0xff]
        %v917 = vld [vmem:[%s8 + $0x178] sm:$0xff]
        %v918 = vld [vmem:[%s8 + $0x180] sm:$0xff]
        %v919 = vld [vmem:[%s8 + $0x188] sm:$0xff]
        %v920 = vld [vmem:[%s8 + $0x190] sm:$0xff]
        %v921 = vld [vmem:[%s8 + $0x198] sm:$0xff]
        %v922 = vld [vmem:[%s8 + $0x1a0] sm:$0xff]
        %v923 = vld [vmem:[%s8 + $0x1a8] sm:$0xff]
        %v924 = vld [vmem:[%s8 + $0x1b0] sm:$0xff]
        %v925 = vld [vmem:[%s8 + $0x1b8] sm:$0xff]
        %v926 = vld [vmem:[%s8 + $0x1c0] sm:$0xff]
        %v927 = vld [vmem:[%s8 + $0x1c8] sm:$0xff]
        %v928 = vld [vmem:[%s8 + $0x1d0] sm:$0xff]
        %v929 = vld [vmem:[%s8 + $0x1d8] sm:$0xff]
        %v930 = vld [vmem:[%s8 + $0x1e0] sm:$0xff]
        %v931 = vld [vmem:[%s8 + $0x1e8] sm:$0xff]
        %v932 = vld [vmem:[%s8 + $0x1f0] sm:$0xff]
        %v933 = vld [vmem:[%s8 + $0x1f8] sm:$0xff]
        %v934 = vld [vmem:[%s8 + $0x200] sm:$0xff]
        %v935 = vld [vmem:[%s8 + $0x208] sm:$0xff]
        %v936 = vld [vmem:[%s8 + $0x210] sm:$0xff]
        %v937 = vld [vmem:[%s8 + $0x218] sm:$0xff]
        %v938 = vld [vmem:[%s8 + $0x220] sm:$0xff]
        %v939 = vld [vmem:[%s8 + $0x228] sm:$0xff]
        %v940 = vld [vmem:[%s8 + $0x230] sm:$0xff]
        %v941 = vld [vmem:[%s8 + $0x238] sm:$0xff]
        %v942 = vld [vmem:[%s8 + $0x240] sm:$0xff]
        %v943 = vld [vmem:[%s8 + $0x248] sm:$0xff]
        %v944 = vld [vmem:[%s8 + $0x250] sm:$0xff]
        %v945 = vld [vmem:[%s8 + $0x258] sm:$0xff]
        %v946 = vld [vmem:[%s8 + $0x260] sm:$0xff]
        %v947 = vld [vmem:[%s8 + $0x268] sm:$0xff]
        %v948 = vld [vmem:[%s8 + $0x270] sm:$0xff]
        %v949 = vld [vmem:[%s8 + $0x278] sm:$0xff]
        %v950 = vld [vmem:[%s8 + $0x280] sm:$0xff]
        %v951 = vld [vmem:[%s8 + $0x288] sm:$0xff]
        %v952 = vld [vmem:[%s8 + $0x290] sm:$0xff]
        %v953 = vld [vmem:[%s8 + $0x298] sm:$0xff]
        %v954 = vld [vmem:[%s8 + $0x2a0] sm:$0xff]
        %v955 = vld [vmem:[%s8 + $0x2a8] sm:$0xff]
        %v956 = vld [vmem:[%s8 + $0x2b0] sm:$0xff]
        %v957 = vld [vmem:[%s8 + $0x2b8] sm:$0xff]
        %v958 = vld [vmem:[%s8 + $0x2c0] sm:$0xff]
        %v959 = vld [vmem:[%s8 + $0x2c8] sm:$0xff]
        %v960 = vld [vmem:[%s8 + $0x2d0] sm:$0xff]
        %v961 = vld [vmem:[%s8 + $0x2d8] sm:$0xff]
        %v962 = vld [vmem:[%s8 + $0x2e0] sm:$0xff]
        %v963 = vld [vmem:[%s8 + $0x2e8] sm:$0xff]
        %v964 = vld [vmem:[%s8 + $0x2f0] sm:$0xff]
        %v965 = vld [vmem:[%s8 + $0x2f8] sm:$0xff]
        %v966 = vld [vmem:[%s8 + $0x300] sm:$0xff]
        %v967 = vld [vmem:[%s8 + $0x308] sm:$0xff]
        %v968 = vld [vmem:[%s8 + $0x310] sm:$0xff]
        %v969 = vld [vmem:[%s8 + $0x318] sm:$0xff]
        %v970 = vld [vmem:[%s8 + $0x320] sm:$0xff]
        %v971 = vld [vmem:[%s8 + $0x328] sm:$0xff]
        %v972 = vld [vmem:[%s8 + $0x330] sm:$0xff]
        %v973 = vld [vmem:[%s8 + $0x338] sm:$0xff]
        %v974 = vld [vmem:[%s8 + $0x340] sm:$0xff]
        %v975 = vld [vmem:[%s8 + $0x348] sm:$0xff]
        %v976 = vld [vmem:[%s8 + $0x350] sm:$0xff]
        %v977 = vld [vmem:[%s8 + $0x358] sm:$0xff]
        %v978 = vld [vmem:[%s8 + $0x360] sm:$0xff]
        %v979 = vld [vmem:[%s8 + $0x368] sm:$0xff]
        %v980 = vld [vmem:[%s8 + $0x370] sm:$0xff]
        %v981 = vld [vmem:[%s8 + $0x378] sm:$0xff]
        %v982 = vld [vmem:[%s8 + $0x380] sm:$0xff]
        %v983 = vld [vmem:[%s8 + $0x388] sm:$0xff]
        %v984 = vld [vmem:[%s8 + $0x390] sm:$0xff]
        %v985 = vld [vmem:[%s8 + $0x398] sm:$0xff]
        %v986 = vld [vmem:[%s8 + $0x3a0] sm:$0xff]
        %v987 = vld [vmem:[%s8 + $0x3a8] sm:$0xff]
        %v988 = vld [vmem:[%s8 + $0x3b0] sm:$0xff]
        %v989 = vld [vmem:[%s8 + $0x3b8] sm:$0xff]
        %v990 = vld [vmem:[%s8 + $0x3c0] sm:$0xff]
        %v991 = vld [vmem:[%s8 + $0x3c8] sm:$0xff]
        %v992 = vld [vmem:[%s8 + $0x3d0] sm:$0xff]
        %v993 = vld [vmem:[%s8 + $0x3d8] sm:$0xf]
        %v994 = vld [vmem:[%s8 + $0x3e0] sm:$0xf]
        %v995 = vld [vmem:[%s8 + $0x3e8] sm:$0xf]
        %v996 = vld [vmem:[%s9] sm:$0x7]
        %v997 = vld [vmem:[%s10] sm:$0xff]
        %v998 = vld [vmem:[%s10 + $0x8] sm:$0xff]
        %v999 = vld [vmem:[%s10 + $0x10] sm:$0xff]
        %v1000 = vld [vmem:[%s10 + $0x18] sm:$0xff]
        %v1001 = vld [vmem:[%s10 + $0x20] sm:$0xff]
        %v1002 = vld [vmem:[%s10 + $0x28] sm:$0xff]
        %v1003 = vld [vmem:[%s10 + $0x30] sm:$0xff]
        %v1004 = vld [vmem:[%s10 + $0x38] sm:$0xff]
        %v1005 = vld [vmem:[%s10 + $0x40] sm:$0xff]
        %v1006 = vld [vmem:[%s10 + $0x48] sm:$0xff]
        %v1007 = vld [vmem:[%s10 + $0x50] sm:$0xff]
        %v1008 = vld [vmem:[%s10 + $0x58] sm:$0xff]
        %v1009 = vld [vmem:[%s10 + $0x60] sm:$0xff]
        %v1010 = vld [vmem:[%s10 + $0x68] sm:$0xff]
        %v1011 = vld [vmem:[%s10 + $0x70] sm:$0xff]
        %v1012 = vld [vmem:[%s10 + $0x78] sm:$0xff]
        %v1013 = vld [vmem:[%s10 + $0x80] sm:$0xff]
        %v1014 = vld [vmem:[%s10 + $0x88] sm:$0xff]
        %v1015 = vld [vmem:[%s10 + $0x90] sm:$0xff]
        %v1016 = vld [vmem:[%s10 + $0x98] sm:$0xff]
        %v1017 = vld [vmem:[%s10 + $0xa0] sm:$0xff]
        %v1018 = vld [vmem:[%s10 + $0xa8] sm:$0xff]
        %v1019 = vld [vmem:[%s10 + $0xb0] sm:$0xff]
        %v1020 = vld [vmem:[%s10 + $0xb8] sm:$0xff]
        %v1021 = vld [vmem:[%s10 + $0xc0] sm:$0xff]
        %v1022 = vld [vmem:[%s10 + $0xc8] sm:$0xff]
        %v1023 = vld [vmem:[%s10 + $0xd0] sm:$0xff]
        %v1024 = vld [vmem:[%s10 + $0xd8] sm:$0xff]
        %v1025 = vld [vmem:[%s10 + $0xe0] sm:$0xff]
        %v1026 = vld [vmem:[%s10 + $0xe8] sm:$0xff]
        %v1027 = vld [vmem:[%s10 + $0xf0] sm:$0xff]
        %v1028 = vld [vmem:[%s10 + $0xf8] sm:$0xff]
        %v1029 = vld [vmem:[%s10 + $0x100] sm:$0xff]
        %v1030 = vld [vmem:[%s10 + $0x108] sm:$0xff]
        %v1031 = vld [vmem:[%s10 + $0x110] sm:$0xff]
        %v1032 = vld [vmem:[%s10 + $0x118] sm:$0xff]
        %v1033 = vld [vmem:[%s10 + $0x120] sm:$0xff]
        %v1034 = vld [vmem:[%s10 + $0x128] sm:$0xff]
        %v1035 = vld [vmem:[%s10 + $0x130] sm:$0xff]
        %v1036 = vld [vmem:[%s10 + $0x138] sm:$0xff]
        %v1037 = vld [vmem:[%s10 + $0x140] sm:$0xff]
        %v1038 = vld [vmem:[%s10 + $0x148] sm:$0xf]
        %v1039 = vld [vmem:[%s11] sm:$0x1]
        %v1041 = vlaneseq
        %v1042 = vshrl.u32 %v1041, 7
        %v1043 = vsub.s32 0, %v1042
        %v1044 = vrot.slane %v996, %v1043
        %v1045 = vlaneseq
        %v1046 = vshrl.u32 %v1045, 7
        %v1047 = vsub.s32 1, %v1046
        %v1048 = vrot.slane %v996, %v1047
        %v1049 = vlaneseq
        %v1050 = vshrl.u32 %v1049, 7
        %v1051 = vsub.s32 2, %v1050
        %v1052 = vrot.slane %v996, %v1051
        %vm1056 = vcmask 621568
        %v1058 = vsel %vm1056, %v868, 0
        %vm1060 = vcmask 1043456
        %v1062 = vsel %vm1060, %v993, 0
        %v1065 = vsel %vm1060, %v994, 0
        %v1068 = vsel %vm1060, %v995, 0
        %1070 = vmatprep.subr.mxu0 %v871
        %1071 = vmatpush1.msra.mxu0 %v870
        %1072 = vmatprep.subr.mxu0 %v874
        %1073 = vmatpush1.msra.mxu0 %v873
        %1074 = vmatprep.subr.mxu0 %v877
        %1075 = vmatpush1.msra.mxu0 %v876
        %1076 = vmatprep.subr.mxu0 %v880
        %1077 = vmatpush1.msra.mxu0 %v879
        %1078 = vmatprep.subr.mxu0 %v883
        %1079 = vmatpush1.msra.mxu0 %v882
        %1080 = vmatprep.subr.mxu0 %v886
        %1081 = vmatpush1.msra.mxu0 %v885
        %1082 = vmatprep.subr.mxu0 %v889
        %1083 = vmatpush1.msra.mxu0 %v888
        %1084 = vmatprep.subr.mxu0 %v892
        %1085 = vmatpush1.msra.mxu0 %v891
        %1086 = vmatprep.subr.mxu0 %v895
        %1087 = vmatpush1.msra.mxu0 %v894
        %1088 = vmatprep.subr.mxu0 %v898
        %1089 = vmatpush1.msra.mxu0 %v897
        %1090 = vmatprep.subr.mxu0 %v901
        %1091 = vmatpush1.msra.mxu0 %v900
        %1092 = vmatprep.subr.mxu0 %v904
        %1093 = vmatpush1.msra.mxu0 %v903
        %1094 = vmatprep.subr.mxu0 %v907
        %1095 = vmatpush1.msra.mxu0 %v906
        %1096 = vmatprep.subr.mxu0 %v910
        %1097 = vmatpush1.msra.mxu0 %v909
        %1098 = vmatprep.subr.mxu0 %v913
        %1099 = vmatpush1.msra.mxu0 %v912
        %1100 = vmatprep.subr.mxu0 %v916
        %1101 = vmatpush1.msra.mxu0 %v915
        %1102 = vmatprep.subr.mxu0 %v919
        %1103 = vmatpush1.msra.mxu0 %v918
        %1104 = vmatprep.subr.mxu0 %v922
        %1105 = vmatpush1.msra.mxu0 %v921
        %1106 = vmatprep.subr.mxu0 %v925
        %1107 = vmatpush1.msra.mxu0 %v924
        %1108 = vmatprep.subr.mxu0 %v928
        %1109 = vmatpush1.msra.mxu0 %v927
        %1110 = vmatprep.subr.mxu0 %v931
        %1111 = vmatpush1.msra.mxu0 %v930
        %1112 = vmatprep.subr.mxu0 %v934
        %1113 = vmatpush1.msra.mxu0 %v933
        %1114 = vmatprep.subr.mxu0 %v937
        %1115 = vmatpush1.msra.mxu0 %v936
        %1116 = vmatprep.subr.mxu0 %v940
        %1117 = vmatpush1.msra.mxu0 %v939
        %1118 = vmatprep.subr.mxu0 %v943
        %1119 = vmatpush1.msra.mxu0 %v942
        %1120 = vmatprep.subr.mxu0 %v946
        %1121 = vmatpush1.msra.mxu0 %v945
        %1122 = vmatprep.subr.mxu0 %v949
        %1123 = vmatpush1.msra.mxu0 %v948
        %1124 = vmatprep.subr.mxu0 %v952
        %1125 = vmatpush1.msra.mxu0 %v951
        %1126 = vmatprep.subr.mxu0 %v955
        %1127 = vmatpush1.msra.mxu0 %v954
        %1128 = vmatprep.subr.mxu0 %v958
        %1129 = vmatpush1.msra.mxu0 %v957
        %1130 = vmatprep.subr.mxu0 %v961
        %1131 = vmatpush1.msra.mxu0 %v960
        %1132 = vmatprep.subr.mxu0 %v964
        %1133 = vmatpush1.msra.mxu0 %v963
        %1134 = vmatprep.mubr.f32.mxu0 %v867
        %1135 = vmatmul.mubr.f32.gmra.mrb[0].mxu0 %v866
        %v1136 = vpop.f32.mrb[0].mxu0
        %v1137 = vadd.f32 %v1044, %v1136
        %v1138 = vpop.f32.mrb[0].mxu0
        %v1139 = vadd.f32 %v1048, %v1138
        %1140 = vdwg.mxu0
        %1141 = vmatprep.subr.mxu0 %v967
        %1142 = vmatpush1.msra.mxu0 %v966
        %1143 = vmatprep.subr.mxu0 %v970
        %1144 = vmatpush1.msra.mxu0 %v969
        %1145 = vmatprep.subr.mxu0 %v973
        %1146 = vmatpush1.msra.mxu0 %v972
        %1147 = vmatprep.subr.mxu0 %v976
        %1148 = vmatpush1.msra.mxu0 %v975
        %1149 = vmatprep.subr.mxu0 %v979
        %1150 = vmatpush1.msra.mxu0 %v978
        %1151 = vmatprep.subr.mxu0 %v982
        %1152 = vmatpush1.msra.mxu0 %v981
        %1153 = vmatprep.subr.mxu0 %v985
        %1154 = vmatpush1.msra.mxu0 %v984
        %1155 = vmatprep.subr.mxu0 %v988
        %1156 = vmatpush1.msra.mxu0 %v987
        %1157 = vmatprep.subr.mxu0 %v991
        %1158 = vmatpush1.msra.mxu0 %v990
        %1159 = vmatprep.subr.mxu0 %v1065
        %1160 = vmatpush1.msra.mxu0 %v1062
        %1161 = vmatprep.subr.mxu0 0.0
        %1162 = vmatpush1.msra.mxu0 0.0
        %1163 = vmatprep.subr.mxu0 0.0
        %1164 = vmatpush1.msra.mxu0 0.0
        %1165 = vmatprep.subr.mxu0 0.0
        %1166 = vmatpush1.msra.mxu0 0.0
        %1167 = vmatprep.subr.mxu0 0.0
        %1168 = vmatpush1.msra.mxu0 0.0
        %1169 = vmatprep.subr.mxu0 0.0
        %1170 = vmatpush1.msra.mxu0 0.0
        %1171 = vmatprep.subr.mxu0 0.0
        %1172 = vmatpush1.msra.mxu0 0.0
        %1173 = vmatprep.subr.mxu0 0.0
        %1174 = vmatpush1.msra.mxu0 0.0
        %1175 = vmatprep.subr.mxu0 0.0
        %1176 = vmatpush1.msra.mxu0 0.0
        %1177 = vmatprep.subr.mxu0 0.0
        %1178 = vmatpush1.msra.mxu0 0.0
        %1179 = vmatprep.subr.mxu0 0.0
        %1180 = vmatpush1.msra.mxu0 0.0
        %1181 = vmatprep.subr.mxu0 0.0
        %1182 = vmatpush1.msra.mxu0 0.0
        %1183 = vmatprep.subr.mxu0 0.0
        %1184 = vmatpush1.msra.mxu0 0.0
        %1185 = vmatprep.subr.mxu0 0.0
        %1186 = vmatpush1.msra.mxu0 0.0
        %1187 = vmatprep.subr.mxu0 0.0
        %1188 = vmatpush1.msra.mxu0 0.0
        %1189 = vmatprep.subr.mxu0 0.0
        %1190 = vmatpush1.msra.mxu0 0.0
        %1191 = vmatprep.subr.mxu0 0.0
        %1192 = vmatpush1.msra.mxu0 0.0
        %1193 = vmatprep.subr.mxu0 0.0
        %1194 = vmatpush1.msra.mxu0 0.0
        %1195 = vmatprep.subr.mxu0 0.0
        %1196 = vmatpush1.msra.mxu0 0.0
        %1197 = vmatprep.subr.mxu0 0.0
        %1198 = vmatpush1.msra.mxu0 0.0
        %1199 = vmatprep.subr.mxu0 0.0
        %1200 = vmatpush1.msra.mxu0 0.0
        %1201 = vmatprep.subr.mxu0 0.0
        %1202 = vmatpush1.msra.mxu0 0.0
        %1203 = vmatprep.subr.mxu0 0.0
        %1204 = vmatpush1.msra.mxu0 0.0
        %1205 = vmatprep.mubr.f32.mxu0 0.0
        %1206 = vmatmul.mubr.f32.gmra.mrb[0].mxu0 %v1058
        %v1207 = vpop.f32.mrb[0].mxu0
        %v1208 = vadd.f32 %v1137, %v1207
        %v1209 = vpop.f32.mrb[0].mxu0
        %v1210 = vadd.f32 %v1139, %v1209
        %1211 = vdwg.mxu0
        %1212 = vmatprep.subr.mxu0 0.0
        %1213 = vmatpush1.msra.mxu0 %v872
        %1214 = vmatprep.subr.mxu0 0.0
        %1215 = vmatpush1.msra.mxu0 %v875
        %1216 = vmatprep.subr.mxu0 0.0
        %1217 = vmatpush1.msra.mxu0 %v878
        %1218 = vmatprep.subr.mxu0 0.0
        %1219 = vmatpush1.msra.mxu0 %v881
        %1220 = vmatprep.subr.mxu0 0.0
        %1221 = vmatpush1.msra.mxu0 %v884
        %1222 = vmatprep.subr.mxu0 0.0
        %1223 = vmatpush1.msra.mxu0 %v887
        %1224 = vmatprep.subr.mxu0 0.0
        %1225 = vmatpush1.msra.mxu0 %v890
        %1226 = vmatprep.subr.mxu0 0.0
        %1227 = vmatpush1.msra.mxu0 %v893
        %1228 = vmatprep.subr.mxu0 0.0
        %1229 = vmatpush1.msra.mxu0 %v896
        %1230 = vmatprep.subr.mxu0 0.0
        %1231 = vmatpush1.msra.mxu0 %v899
        %1232 = vmatprep.subr.mxu0 0.0
        %1233 = vmatpush1.msra.mxu0 %v902
        %1234 = vmatprep.subr.mxu0 0.0
        %1235 = vmatpush1.msra.mxu0 %v905
        %1236 = vmatprep.subr.mxu0 0.0
        %1237 = vmatpush1.msra.mxu0 %v908
        %1238 = vmatprep.subr.mxu0 0.0
        %1239 = vmatpush1.msra.mxu0 %v911
        %1240 = vmatprep.subr.mxu0 0.0
        %1241 = vmatpush1.msra.mxu0 %v914
        %1242 = vmatprep.subr.mxu0 0.0
        %1243 = vmatpush1.msra.mxu0 %v917
        %1244 = vmatprep.subr.mxu0 0.0
        %1245 = vmatpush1.msra.mxu0 %v920
        %1246 = vmatprep.subr.mxu0 0.0
        %1247 = vmatpush1.msra.mxu0 %v923
        %1248 = vmatprep.subr.mxu0 0.0
        %1249 = vmatpush1.msra.mxu0 %v926
        %1250 = vmatprep.subr.mxu0 0.0
        %1251 = vmatpush1.msra.mxu0 %v929
        %1252 = vmatprep.subr.mxu0 0.0
        %1253 = vmatpush1.msra.mxu0 %v932
        %1254 = vmatprep.subr.mxu0 0.0
        %1255 = vmatpush1.msra.mxu0 %v935
        %1256 = vmatprep.subr.mxu0 0.0
        %1257 = vmatpush1.msra.mxu0 %v938
        %1258 = vmatprep.subr.mxu0 0.0
        %1259 = vmatpush1.msra.mxu0 %v941
        %1260 = vmatprep.subr.mxu0 0.0
        %1261 = vmatpush1.msra.mxu0 %v944
        %1262 = vmatprep.subr.mxu0 0.0
        %1263 = vmatpush1.msra.mxu0 %v947
        %1264 = vmatprep.subr.mxu0 0.0
        %1265 = vmatpush1.msra.mxu0 %v950
        %1266 = vmatprep.subr.mxu0 0.0
        %1267 = vmatpush1.msra.mxu0 %v953
        %1268 = vmatprep.subr.mxu0 0.0
        %1269 = vmatpush1.msra.mxu0 %v956
        %1270 = vmatprep.subr.mxu0 0.0
        %1271 = vmatpush1.msra.mxu0 %v959
        %1272 = vmatprep.subr.mxu0 0.0
        %1273 = vmatpush1.msra.mxu0 %v962
        %1274 = vmatprep.subr.mxu0 0.0
        %1275 = vmatpush1.msra.mxu0 %v965
        %1276 = vmatprep.mubr.f32.mxu0 %v867
        %1277 = vmatmul.mubr.f32.gmra.mrb[0].mxu0 %v866
        %v1278 = vpop.f32.mrb[0].mxu0
        %v1279 = vadd.f32 %v1052, %v1278
        %v1280 = vpop.f32.mrb[0].mxu0
        %1281 = vdwg.mxu0
        %1282 = vmatprep.subr.mxu0 0.0
        %1283 = vmatpush1.msra.mxu0 %v968
        %1284 = vmatprep.subr.mxu0 0.0
        %1285 = vmatpush1.msra.mxu0 %v971
        %1286 = vmatprep.subr.mxu0 0.0
        %1287 = vmatpush1.msra.mxu0 %v974
        %1288 = vmatprep.subr.mxu0 0.0
        %1289 = vmatpush1.msra.mxu0 %v977
        %1290 = vmatprep.subr.mxu0 0.0
        %1291 = vmatpush1.msra.mxu0 %v980
        %1292 = vmatprep.subr.mxu0 0.0
        %1293 = vmatpush1.msra.mxu0 %v983
        %1294 = vmatprep.subr.mxu0 0.0
        %1295 = vmatpush1.msra.mxu0 %v986
        %1296 = vmatprep.subr.mxu0 0.0
        %1297 = vmatpush1.msra.mxu0 %v989
        %1298 = vmatprep.subr.mxu0 0.0
        %1299 = vmatpush1.msra.mxu0 %v992
        %1300 = vmatprep.subr.mxu0 0.0
        %1301 = vmatpush1.msra.mxu0 %v1068
        %1302 = vmatprep.subr.mxu0 0.0
        %1303 = vmatpush1.msra.mxu0 0.0
        %1304 = vmatprep.subr.mxu0 0.0
        %1305 = vmatpush1.msra.mxu0 0.0
        %1306 = vmatprep.subr.mxu0 0.0
        %1307 = vmatpush1.msra.mxu0 0.0
        %1308 = vmatprep.subr.mxu0 0.0
        %1309 = vmatpush1.msra.mxu0 0.0
        %1310 = vmatprep.subr.mxu0 0.0
        %1311 = vmatpush1.msra.mxu0 0.0
        %1312 = vmatprep.subr.mxu0 0.0
        %1313 = vmatpush1.msra.mxu0 0.0
        %1314 = vmatprep.subr.mxu0 0.0
        %1315 = vmatpush1.msra.mxu0 0.0
        %1316 = vmatprep.subr.mxu0 0.0
        %1317 = vmatpush1.msra.mxu0 0.0
        %1318 = vmatprep.subr.mxu0 0.0
        %1319 = vmatpush1.msra.mxu0 0.0
        %1320 = vmatprep.subr.mxu0 0.0
        %1321 = vmatpush1.msra.mxu0 0.0
        %1322 = vmatprep.subr.mxu0 0.0
        %1323 = vmatpush1.msra.mxu0 0.0
        %1324 = vmatprep.subr.mxu0 0.0
        %1325 = vmatpush1.msra.mxu0 0.0
        %1326 = vmatprep.subr.mxu0 0.0
        %1327 = vmatpush1.msra.mxu0 0.0
        %1328 = vmatprep.subr.mxu0 0.0
        %1329 = vmatpush1.msra.mxu0 0.0
        %1330 = vmatprep.subr.mxu0 0.0
        %1331 = vmatpush1.msra.mxu0 0.0
        %1332 = vmatprep.subr.mxu0 0.0
        %1333 = vmatpush1.msra.mxu0 0.0
        %1334 = vmatprep.subr.mxu0 0.0
        %1335 = vmatpush1.msra.mxu0 0.0
        %1336 = vmatprep.subr.mxu0 0.0
        %1337 = vmatpush1.msra.mxu0 0.0
        %1338 = vmatprep.subr.mxu0 0.0
        %1339 = vmatpush1.msra.mxu0 0.0
        %1340 = vmatprep.subr.mxu0 0.0
        %1341 = vmatpush1.msra.mxu0 0.0
        %1342 = vmatprep.subr.mxu0 0.0
        %1343 = vmatpush1.msra.mxu0 0.0
        %1344 = vmatprep.subr.mxu0 0.0
        %1345 = vmatpush1.msra.mxu0 0.0
        %1346 = vmatprep.mubr.f32.mxu0 0.0
        %1347 = vmatmul.mubr.f32.gmra.mrb[0].mxu0 %v1058
        %v1348 = vpop.f32.mrb[0].mxu0
        %v1349 = vadd.f32 %v1279, %v1348
        %v1350 = vpop.f32.mrb[0].mxu0
        %1351 = vdwg.mxu0
        %v1352 = vmax.f32 %v1208, 0.0
        %v1353 = vmax.f32 %v1210, 0.0
        %v1354 = vmax.f32 %v1349, 0.0
        %v1356 = vlaneseq
        %v1357 = vshrl.u32 %v1356, 7
        %v1358 = vsub.s32 0, %v1357
        %v1359 = vrot.slane %v1039, %v1358
        %v1362 = vsel %vm1056, %v1354, 0
        %v1365 = vsel %vm1060, %v1038, 0
        %1367 = vmatprep.subr.mxu0 0.0
        %1368 = vmatpush1.msra.mxu0 %v997
        %1369 = vmatprep.subr.mxu0 0.0
        %1370 = vmatpush1.msra.mxu0 %v998
        %1371 = vmatprep.subr.mxu0 0.0
        %1372 = vmatpush1.msra.mxu0 %v999
        %1373 = vmatprep.subr.mxu0 0.0
        %1374 = vmatpush1.msra.mxu0 %v1000
        %1375 = vmatprep.subr.mxu0 0.0
        %1376 = vmatpush1.msra.mxu0 %v1001
        %1377 = vmatprep.subr.mxu0 0.0
        %1378 = vmatpush1.msra.mxu0 %v1002
        %1379 = vmatprep.subr.mxu0 0.0
        %1380 = vmatpush1.msra.mxu0 %v1003
        %1381 = vmatprep.subr.mxu0 0.0
        %1382 = vmatpush1.msra.mxu0 %v1004
        %1383 = vmatprep.subr.mxu0 0.0
        %1384 = vmatpush1.msra.mxu0 %v1005
        %1385 = vmatprep.subr.mxu0 0.0
        %1386 = vmatpush1.msra.mxu0 %v1006
        %1387 = vmatprep.subr.mxu0 0.0
        %1388 = vmatpush1.msra.mxu0 %v1007
        %1389 = vmatprep.subr.mxu0 0.0
        %1390 = vmatpush1.msra.mxu0 %v1008
        %1391 = vmatprep.subr.mxu0 0.0
        %1392 = vmatpush1.msra.mxu0 %v1009
        %1393 = vmatprep.subr.mxu0 0.0
        %1394 = vmatpush1.msra.mxu0 %v1010
        %1395 = vmatprep.subr.mxu0 0.0
        %1396 = vmatpush1.msra.mxu0 %v1011
        %1397 = vmatprep.subr.mxu0 0.0
        %1398 = vmatpush1.msra.mxu0 %v1012
        %1399 = vmatprep.subr.mxu0 0.0
        %1400 = vmatpush1.msra.mxu0 %v1013
        %1401 = vmatprep.subr.mxu0 0.0
        %1402 = vmatpush1.msra.mxu0 %v1014
        %1403 = vmatprep.subr.mxu0 0.0
        %1404 = vmatpush1.msra.mxu0 %v1015
        %1405 = vmatprep.subr.mxu0 0.0
        %1406 = vmatpush1.msra.mxu0 %v1016
        %1407 = vmatprep.subr.mxu0 0.0
        %1408 = vmatpush1.msra.mxu0 %v1017
        %1409 = vmatprep.subr.mxu0 0.0
        %1410 = vmatpush1.msra.mxu0 %v1018
        %1411 = vmatprep.subr.mxu0 0.0
        %1412 = vmatpush1.msra.mxu0 %v1019
        %1413 = vmatprep.subr.mxu0 0.0
        %1414 = vmatpush1.msra.mxu0 %v1020
        %1415 = vmatprep.subr.mxu0 0.0
        %1416 = vmatpush1.msra.mxu0 %v1021
        %1417 = vmatprep.subr.mxu0 0.0
        %1418 = vmatpush1.msra.mxu0 %v1022
        %1419 = vmatprep.subr.mxu0 0.0
        %1420 = vmatpush1.msra.mxu0 %v1023
        %1421 = vmatprep.subr.mxu0 0.0
        %1422 = vmatpush1.msra.mxu0 %v1024
        %1423 = vmatprep.subr.mxu0 0.0
        %1424 = vmatpush1.msra.mxu0 %v1025
        %1425 = vmatprep.subr.mxu0 0.0
        %1426 = vmatpush1.msra.mxu0 %v1026
        %1427 = vmatprep.subr.mxu0 0.0
        %1428 = vmatpush1.msra.mxu0 %v1027
        %1429 = vmatprep.subr.mxu0 0.0
        %1430 = vmatpush1.msra.mxu0 %v1028
        %1431 = vmatprep.mubr.f32.mxu0 %v1353
        %1432 = vmatmul.mubr.f32.gmra.mrb[0].mxu0 %v1352
        %v1433 = vpop.f32.mrb[0].mxu0
        %v1434 = vadd.f32 %v1359, %v1433
        %v1435 = vpop.f32.mrb[0].mxu0
        %1436 = vdwg.mxu0
        %1437 = vmatprep.subr.mxu0 0.0
        %1438 = vmatpush1.msra.mxu0 %v1029
        %1439 = vmatprep.subr.mxu0 0.0
        %1440 = vmatpush1.msra.mxu0 %v1030
        %1441 = vmatprep.subr.mxu0 0.0
        %1442 = vmatpush1.msra.mxu0 %v1031
        %1443 = vmatprep.subr.mxu0 0.0
        %1444 = vmatpush1.msra.mxu0 %v1032
        %1445 = vmatprep.subr.mxu0 0.0
        %1446 = vmatpush1.msra.mxu0 %v1033
        %1447 = vmatprep.subr.mxu0 0.0
        %1448 = vmatpush1.msra.mxu0 %v1034
        %1449 = vmatprep.subr.mxu0 0.0
        %1450 = vmatpush1.msra.mxu0 %v1035
        %1451 = vmatprep.subr.mxu0 0.0
        %1452 = vmatpush1.msra.mxu0 %v1036
        %1453 = vmatprep.subr.mxu0 0.0
        %1454 = vmatpush1.msra.mxu0 %v1037
        %1455 = vmatprep.subr.mxu0 0.0
        %1456 = vmatpush1.msra.mxu0 %v1365
        %1457 = vmatprep.subr.mxu0 0.0
        %1458 = vmatpush1.msra.mxu0 0.0
        %1459 = vmatprep.subr.mxu0 0.0
        %1460 = vmatpush1.msra.mxu0 0.0
        %1461 = vmatprep.subr.mxu0 0.0
        %1462 = vmatpush1.msra.mxu0 0.0
        %1463 = vmatprep.subr.mxu0 0.0
        %1464 = vmatpush1.msra.mxu0 0.0
        %1465 = vmatprep.subr.mxu0 0.0
        %1466 = vmatpush1.msra.mxu0 0.0
        %1467 = vmatprep.subr.mxu0 0.0
        %1468 = vmatpush1.msra.mxu0 0.0
        %1469 = vmatprep.subr.mxu0 0.0
        %1470 = vmatpush1.msra.mxu0 0.0
        %1471 = vmatprep.subr.mxu0 0.0
        %1472 = vmatpush1.msra.mxu0 0.0
        %1473 = vmatprep.subr.mxu0 0.0
        %1474 = vmatpush1.msra.mxu0 0.0
        %1475 = vmatprep.subr.mxu0 0.0
        %1476 = vmatpush1.msra.mxu0 0.0
        %1477 = vmatprep.subr.mxu0 0.0
        %1478 = vmatpush1.msra.mxu0 0.0
        %1479 = vmatprep.subr.mxu0 0.0
        %1480 = vmatpush1.msra.mxu0 0.0
        %1481 = vmatprep.subr.mxu0 0.0
        %1482 = vmatpush1.msra.mxu0 0.0
        %1483 = vmatprep.subr.mxu0 0.0
        %1484 = vmatpush1.msra.mxu0 0.0
        %1485 = vmatprep.subr.mxu0 0.0
        %1486 = vmatpush1.msra.mxu0 0.0
        %1487 = vmatprep.subr.mxu0 0.0
        %1488 = vmatpush1.msra.mxu0 0.0
        %1489 = vmatprep.subr.mxu0 0.0
        %1490 = vmatpush1.msra.mxu0 0.0
        %1491 = vmatprep.subr.mxu0 0.0
        %1492 = vmatpush1.msra.mxu0 0.0
        %1493 = vmatprep.subr.mxu0 0.0
        %1494 = vmatpush1.msra.mxu0 0.0
        %1495 = vmatprep.subr.mxu0 0.0
        %1496 = vmatpush1.msra.mxu0 0.0
        %1497 = vmatprep.subr.mxu0 0.0
        %1498 = vmatpush1.msra.mxu0 0.0
        %1499 = vmatprep.subr.mxu0 0.0
        %1500 = vmatpush1.msra.mxu0 0.0
        %1501 = vmatprep.mubr.f32.mxu0 0.0
        %1502 = vmatmul.mubr.f32.gmra.mrb[0].mxu0 %v1362
        %v1503 = vpop.f32.mrb[0].mxu0
        %v1504 = vadd.f32 %v1434, %v1503
        %v1505 = vpop.f32.mrb[0].mxu0
        %1506 = vdwg.mxu0
        %vm1507 = vcmp.gt.f32.partialorder %v869, 0.0
        %v1508 = vsel %vm1507, 0.0, -1e+30
        %1510 = vset.pattern.permute.xlu0 0
        %1511 = vperm.xlu0 %1510, %v1508
        %v1512 = vpop.permute.xlu0 %1511
        %v1514 = vadd.f32 %v1504, %v1512
        %v1515 = vsel %vm818, %v1514, -inf
        %v1516 = vrot.slane %v1515, 4
        %v1517 = vmax.f32 %v1515, %v1516
        %v1518 = vrot.slane %v1517, 2
        %v1519 = vmax.f32 %v1517, %v1518
        %v1520 = vrot.slane %v1519, 1
        %v1521 = vmax.f32 %v1519, %v1520
        %v1522 = vsub.f32 %v1514, %v1521
        %v1523 = vmul.f32 %v1522, 1.442695
        %v1524 = vpow.pop %v1523
        %v1525 = vsel %vm818, %v1524, 0.0
        %v1526 = vrot.slane %v1525, 4
        %v1527 = vadd.f32 %v1525, %v1526
        %v1528 = vrot.slane %v1527, 2
        %v1529 = vadd.f32 %v1527, %v1528
        %v1530 = vrot.slane %v1529, 1
        %v1531 = vadd.f32 %v1529, %v1530
        %v1532 = vrcp.pop %v1531
        %v1533 = vmul.f32 %v1524, %v1532
        %v1534 = vsel %vm818, %v1533, 0.0
        %1535 = vadd.xlane.f32.xlu0 %v1534
        %v1536 = vpop.xlane.xlu0 %1535
        %v1537 = vmul.f32 %v1536, %v852
        %v1538 = vmul.f32 %v1537, %v866
        %v1539 = vmul.f32 %v1537, %v867
        %v1540 = vmul.f32 %v1537, %v868
        %v1541 = vrot.slane %v1538, 4
        %v1542 = vadd.f32 %v1538, %v1541
        %v1543 = vrot.slane %v1542, 2
        %v1544 = vadd.f32 %v1542, %v1543
        %v1545 = vrot.slane %v1544, 1
        %v1546 = vadd.f32 %v1544, %v1545
        %v1547 = vrot.slane %v1539, 4
        %v1548 = vadd.f32 %v1539, %v1547
        %v1549 = vrot.slane %v1548, 2
        %v1550 = vadd.f32 %v1548, %v1549
        %v1551 = vrot.slane %v1550, 1
        %v1552 = vadd.f32 %v1550, %v1551
        %v1553 = vsel %vm1056, %v1540, 0.0
        %v1554 = vrot.slane %v1553, 4
        %v1555 = vadd.f32 %v1553, %v1554
        %v1556 = vrot.slane %v1555, 2
        %v1557 = vadd.f32 %v1555, %v1556
        %v1558 = vrot.slane %v1557, 1
        %v1559 = vadd.f32 %v1557, %v1558
        %v1560 = vld [vmem:[%s12] sm:$0xff]
        %v1561 = vld [vmem:[%s12 + $0x8] sm:$0xff]
        %v1562 = vld [vmem:[%s12 + $0x10] sm:$0xff]
        %v1563 = vld [vmem:[%s12 + $0x18] sm:$0xff]
        %v1564 = vld [vmem:[%s12 + $0x20] sm:$0xff]
        %v1565 = vld [vmem:[%s12 + $0x28] sm:$0xff]
        %v1566 = vld [vmem:[%s12 + $0x30] sm:$0xff]
        %v1567 = vld [vmem:[%s12 + $0x38] sm:$0xff]
        %v1568 = vld [vmem:[%s12 + $0x40] sm:$0xff]
        %v1569 = vld [vmem:[%s12 + $0x48] sm:$0xff]
        %v1570 = vld [vmem:[%s12 + $0x50] sm:$0xff]
        %v1571 = vld [vmem:[%s12 + $0x58] sm:$0xff]
        %v1572 = vld [vmem:[%s12 + $0x60] sm:$0xff]
        %v1573 = vld [vmem:[%s12 + $0x68] sm:$0xff]
        %v1574 = vld [vmem:[%s12 + $0x70] sm:$0xff]
        %v1575 = vld [vmem:[%s12 + $0x78] sm:$0xff]
        %v1576 = vld [vmem:[%s13] sm:$0xff]
        %v1577 = vld [vmem:[%s13 + $0x8] sm:$0xff]
        %v1578 = vld [vmem:[%s13 + $0x10] sm:$0xff]
        %v1579 = vld [vmem:[%s13 + $0x18] sm:$0xff]
        %v1580 = vld [vmem:[%s13 + $0x20] sm:$0xff]
        %v1581 = vld [vmem:[%s13 + $0x28] sm:$0xff]
        %v1582 = vld [vmem:[%s13 + $0x30] sm:$0xff]
        %v1583 = vld [vmem:[%s13 + $0x38] sm:$0xff]
        %v1584 = vld [vmem:[%s13 + $0x40] sm:$0xff]
        %v1585 = vld [vmem:[%s13 + $0x48] sm:$0xff]
        %v1586 = vld [vmem:[%s13 + $0x50] sm:$0xff]
        %v1587 = vld [vmem:[%s13 + $0x58] sm:$0xff]
        %v1588 = vld [vmem:[%s13 + $0x60] sm:$0xff]
        %v1589 = vld [vmem:[%s13 + $0x68] sm:$0xff]
        %v1590 = vld [vmem:[%s13 + $0x70] sm:$0xff]
        %v1591 = vld [vmem:[%s13 + $0x78] sm:$0xff]
        %v1592 = vld [vmem:[%s13 + $0x80] sm:$0xff]
        %v1593 = vld [vmem:[%s13 + $0x88] sm:$0xff]
        %v1594 = vld [vmem:[%s13 + $0x90] sm:$0xff]
        %v1595 = vld [vmem:[%s13 + $0x98] sm:$0xff]
        %v1596 = vld [vmem:[%s13 + $0xa0] sm:$0xff]
        %v1597 = vld [vmem:[%s13 + $0xa8] sm:$0xff]
        %v1598 = vld [vmem:[%s13 + $0xb0] sm:$0xff]
        %v1599 = vld [vmem:[%s13 + $0xb8] sm:$0xff]
        %v1600 = vld [vmem:[%s13 + $0xc0] sm:$0xff]
        %v1601 = vld [vmem:[%s13 + $0xc8] sm:$0xff]
        %v1602 = vld [vmem:[%s13 + $0xd0] sm:$0xff]
        %v1603 = vld [vmem:[%s13 + $0xd8] sm:$0xff]
        %v1604 = vld [vmem:[%s13 + $0xe0] sm:$0xff]
        %v1605 = vld [vmem:[%s13 + $0xe8] sm:$0xff]
        %v1606 = vld [vmem:[%s13 + $0xf0] sm:$0xff]
        %v1607 = vld [vmem:[%s13 + $0xf8] sm:$0xff]
        %v1608 = vld [vmem:[%s13 + $0x100] sm:$0xff]
        %v1609 = vld [vmem:[%s13 + $0x108] sm:$0xff]
        %v1610 = vld [vmem:[%s13 + $0x110] sm:$0xff]
        %v1611 = vld [vmem:[%s13 + $0x118] sm:$0xff]
        %v1612 = vld [vmem:[%s13 + $0x120] sm:$0xff]
        %v1613 = vld [vmem:[%s13 + $0x128] sm:$0xff]
        %v1614 = vld [vmem:[%s13 + $0x130] sm:$0xff]
        %v1615 = vld [vmem:[%s13 + $0x138] sm:$0xff]
        %v1616 = vld [vmem:[%s13 + $0x140] sm:$0xff]
        %v1617 = vld [vmem:[%s13 + $0x148] sm:$0xff]
        %v1618 = vld [vmem:[%s13 + $0x150] sm:$0xff]
        %v1619 = vld [vmem:[%s13 + $0x158] sm:$0xff]
        %v1620 = vld [vmem:[%s13 + $0x160] sm:$0xff]
        %v1621 = vld [vmem:[%s13 + $0x168] sm:$0xff]
        %v1622 = vld [vmem:[%s13 + $0x170] sm:$0xff]
        %v1623 = vld [vmem:[%s13 + $0x178] sm:$0xff]
        %v1624 = vld [vmem:[%s13 + $0x180] sm:$0xff]
        %v1625 = vld [vmem:[%s13 + $0x188] sm:$0xff]
        %v1626 = vld [vmem:[%s13 + $0x190] sm:$0xff]
        %v1627 = vld [vmem:[%s13 + $0x198] sm:$0xff]
        %v1628 = vld [vmem:[%s13 + $0x1a0] sm:$0xff]
        %v1629 = vld [vmem:[%s13 + $0x1a8] sm:$0xff]
        %v1630 = vld [vmem:[%s13 + $0x1b0] sm:$0xff]
        %v1631 = vld [vmem:[%s13 + $0x1b8] sm:$0xff]
        %v1632 = vld [vmem:[%s13 + $0x1c0] sm:$0xff]
        %v1633 = vld [vmem:[%s13 + $0x1c8] sm:$0xff]
        %v1634 = vld [vmem:[%s13 + $0x1d0] sm:$0xff]
        %v1635 = vld [vmem:[%s13 + $0x1d8] sm:$0xff]
        %v1636 = vld [vmem:[%s13 + $0x1e0] sm:$0xff]
        %v1637 = vld [vmem:[%s13 + $0x1e8] sm:$0xff]
        %v1638 = vld [vmem:[%s13 + $0x1f0] sm:$0xff]
        %v1639 = vld [vmem:[%s13 + $0x1f8] sm:$0xff]
        %v1640 = vld [vmem:[%s13 + $0x200] sm:$0xff]
        %v1641 = vld [vmem:[%s13 + $0x208] sm:$0xff]
        %v1642 = vld [vmem:[%s13 + $0x210] sm:$0xff]
        %v1643 = vld [vmem:[%s13 + $0x218] sm:$0xff]
        %v1644 = vld [vmem:[%s13 + $0x220] sm:$0xff]
        %v1645 = vld [vmem:[%s13 + $0x228] sm:$0xff]
        %v1646 = vld [vmem:[%s13 + $0x230] sm:$0xff]
        %v1647 = vld [vmem:[%s13 + $0x238] sm:$0xff]
        %v1648 = vld [vmem:[%s13 + $0x240] sm:$0xff]
        %v1649 = vld [vmem:[%s13 + $0x248] sm:$0xff]
        %v1650 = vld [vmem:[%s13 + $0x250] sm:$0xff]
        %v1651 = vld [vmem:[%s13 + $0x258] sm:$0xff]
        %v1652 = vld [vmem:[%s13 + $0x260] sm:$0xff]
        %v1653 = vld [vmem:[%s13 + $0x268] sm:$0xff]
        %v1654 = vld [vmem:[%s13 + $0x270] sm:$0xff]
        %v1655 = vld [vmem:[%s13 + $0x278] sm:$0xff]
        %v1656 = vld [vmem:[%s13 + $0x280] sm:$0xff]
        %v1657 = vld [vmem:[%s13 + $0x288] sm:$0xff]
        %v1658 = vld [vmem:[%s13 + $0x290] sm:$0xf]
        %v1659 = vld [vmem:[%s13 + $0x298] sm:$0xf]
        %v1661 = vsel %vm1056, %v1559, 0
        %v1664 = vsel %vm1060, %v1658, 0
        %v1667 = vsel %vm1060, %v1659, 0
        %1669 = vmatprep.subr.mxu0 %v1577
        %1670 = vmatpush1.msra.mxu0 %v1576
        %1671 = vmatprep.subr.mxu0 %v1579
        %1672 = vmatpush1.msra.mxu0 %v1578
        %1673 = vmatprep.subr.mxu0 %v1581
        %1674 = vmatpush1.msra.mxu0 %v1580
        %1675 = vmatprep.subr.mxu0 %v1583
        %1676 = vmatpush1.msra.mxu0 %v1582
        %1677 = vmatprep.subr.mxu0 %v1585
        %1678 = vmatpush1.msra.mxu0 %v1584
        %1679 = vmatprep.subr.mxu0 %v1587
        %1680 = vmatpush1.msra.mxu0 %v1586
        %1681 = vmatprep.subr.mxu0 %v1589
        %1682 = vmatpush1.msra.mxu0 %v1588
        %1683 = vmatprep.subr.mxu0 %v1591
        %1684 = vmatpush1.msra.mxu0 %v1590
        %1685 = vmatprep.subr.mxu0 %v1593
        %1686 = vmatpush1.msra.mxu0 %v1592
        %1687 = vmatprep.subr.mxu0 %v1595
        %1688 = vmatpush1.msra.mxu0 %v1594
        %1689 = vmatprep.subr.mxu0 %v1597
        %1690 = vmatpush1.msra.mxu0 %v1596
        %1691 = vmatprep.subr.mxu0 %v1599
        %1692 = vmatpush1.msra.mxu0 %v1598
        %1693 = vmatprep.subr.mxu0 %v1601
        %1694 = vmatpush1.msra.mxu0 %v1600
        %1695 = vmatprep.subr.mxu0 %v1603
        %1696 = vmatpush1.msra.mxu0 %v1602
        %1697 = vmatprep.subr.mxu0 %v1605
        %1698 = vmatpush1.msra.mxu0 %v1604
        %1699 = vmatprep.subr.mxu0 %v1607
        %1700 = vmatpush1.msra.mxu0 %v1606
        %1701 = vmatprep.subr.mxu0 %v1609
        %1702 = vmatpush1.msra.mxu0 %v1608
        %1703 = vmatprep.subr.mxu0 %v1611
        %1704 = vmatpush1.msra.mxu0 %v1610
        %1705 = vmatprep.subr.mxu0 %v1613
        %1706 = vmatpush1.msra.mxu0 %v1612
        %1707 = vmatprep.subr.mxu0 %v1615
        %1708 = vmatpush1.msra.mxu0 %v1614
        %1709 = vmatprep.subr.mxu0 %v1617
        %1710 = vmatpush1.msra.mxu0 %v1616
        %1711 = vmatprep.subr.mxu0 %v1619
        %1712 = vmatpush1.msra.mxu0 %v1618
        %1713 = vmatprep.subr.mxu0 %v1621
        %1714 = vmatpush1.msra.mxu0 %v1620
        %1715 = vmatprep.subr.mxu0 %v1623
        %1716 = vmatpush1.msra.mxu0 %v1622
        %1717 = vmatprep.subr.mxu0 %v1625
        %1718 = vmatpush1.msra.mxu0 %v1624
        %1719 = vmatprep.subr.mxu0 %v1627
        %1720 = vmatpush1.msra.mxu0 %v1626
        %1721 = vmatprep.subr.mxu0 %v1629
        %1722 = vmatpush1.msra.mxu0 %v1628
        %1723 = vmatprep.subr.mxu0 %v1631
        %1724 = vmatpush1.msra.mxu0 %v1630
        %1725 = vmatprep.subr.mxu0 %v1633
        %1726 = vmatpush1.msra.mxu0 %v1632
        %1727 = vmatprep.subr.mxu0 %v1635
        %1728 = vmatpush1.msra.mxu0 %v1634
        %1729 = vmatprep.subr.mxu0 %v1637
        %1730 = vmatpush1.msra.mxu0 %v1636
        %1731 = vmatprep.subr.mxu0 %v1639
        %1732 = vmatpush1.msra.mxu0 %v1638
        %1733 = vmatprep.mubr.f32.mxu0 %v1552
        %1734 = vmatmul.mubr.f32.gmra.mrb[0].mxu0 %v1546
        %v1735 = vpop.f32.mrb[0].mxu0
        %v1736 = vadd.f32 0.0, %v1735
        %v1737 = vpop.f32.mrb[0].mxu0
        %v1738 = vadd.f32 0.0, %v1737
        %1739 = vdwg.mxu0
        %1740 = vmatprep.subr.mxu0 %v1641
        %1741 = vmatpush1.msra.mxu0 %v1640
        %1742 = vmatprep.subr.mxu0 %v1643
        %1743 = vmatpush1.msra.mxu0 %v1642
        %1744 = vmatprep.subr.mxu0 %v1645
        %1745 = vmatpush1.msra.mxu0 %v1644
        %1746 = vmatprep.subr.mxu0 %v1647
        %1747 = vmatpush1.msra.mxu0 %v1646
        %1748 = vmatprep.subr.mxu0 %v1649
        %1749 = vmatpush1.msra.mxu0 %v1648
        %1750 = vmatprep.subr.mxu0 %v1651
        %1751 = vmatpush1.msra.mxu0 %v1650
        %1752 = vmatprep.subr.mxu0 %v1653
        %1753 = vmatpush1.msra.mxu0 %v1652
        %1754 = vmatprep.subr.mxu0 %v1655
        %1755 = vmatpush1.msra.mxu0 %v1654
        %1756 = vmatprep.subr.mxu0 %v1657
        %1757 = vmatpush1.msra.mxu0 %v1656
        %1758 = vmatprep.subr.mxu0 %v1667
        %1759 = vmatpush1.msra.mxu0 %v1664
        %1760 = vmatprep.subr.mxu0 0.0
        %1761 = vmatpush1.msra.mxu0 0.0
        %1762 = vmatprep.subr.mxu0 0.0
        %1763 = vmatpush1.msra.mxu0 0.0
        %1764 = vmatprep.subr.mxu0 0.0
        %1765 = vmatpush1.msra.mxu0 0.0
        %1766 = vmatprep.subr.mxu0 0.0
        %1767 = vmatpush1.msra.mxu0 0.0
        %1768 = vmatprep.subr.mxu0 0.0
        %1769 = vmatpush1.msra.mxu0 0.0
        %1770 = vmatprep.subr.mxu0 0.0
        %1771 = vmatpush1.msra.mxu0 0.0
        %1772 = vmatprep.subr.mxu0 0.0
        %1773 = vmatpush1.msra.mxu0 0.0
        %1774 = vmatprep.subr.mxu0 0.0
        %1775 = vmatpush1.msra.mxu0 0.0
        %1776 = vmatprep.subr.mxu0 0.0
        %1777 = vmatpush1.msra.mxu0 0.0
        %1778 = vmatprep.subr.mxu0 0.0
        %1779 = vmatpush1.msra.mxu0 0.0
        %1780 = vmatprep.subr.mxu0 0.0
        %1781 = vmatpush1.msra.mxu0 0.0
        %1782 = vmatprep.subr.mxu0 0.0
        %1783 = vmatpush1.msra.mxu0 0.0
        %1784 = vmatprep.subr.mxu0 0.0
        %1785 = vmatpush1.msra.mxu0 0.0
        %1786 = vmatprep.subr.mxu0 0.0
        %1787 = vmatpush1.msra.mxu0 0.0
        %1788 = vmatprep.subr.mxu0 0.0
        %1789 = vmatpush1.msra.mxu0 0.0
        %1790 = vmatprep.subr.mxu0 0.0
        %1791 = vmatpush1.msra.mxu0 0.0
        %1792 = vmatprep.subr.mxu0 0.0
        %1793 = vmatpush1.msra.mxu0 0.0
        %1794 = vmatprep.subr.mxu0 0.0
        %1795 = vmatpush1.msra.mxu0 0.0
        %1796 = vmatprep.subr.mxu0 0.0
        %1797 = vmatpush1.msra.mxu0 0.0
        %1798 = vmatprep.subr.mxu0 0.0
        %1799 = vmatpush1.msra.mxu0 0.0
        %1800 = vmatprep.subr.mxu0 0.0
        %1801 = vmatpush1.msra.mxu0 0.0
        %1802 = vmatprep.subr.mxu0 0.0
        %1803 = vmatpush1.msra.mxu0 0.0
        %1804 = vmatprep.mubr.f32.mxu0 0.0
        %1805 = vmatmul.mubr.f32.gmra.mrb[0].mxu0 %v1661
        %v1806 = vpop.f32.mrb[0].mxu0
        %v1807 = vadd.f32 %v1736, %v1806
        %v1808 = vpop.f32.mrb[0].mxu0
        %v1809 = vadd.f32 %v1738, %v1808
        %1810 = vdwg.mxu0
        %v1812 = vsel %vm631, %v865, 0
        %1814 = vmatprep.subr.mxu0 %v1561
        %1815 = vmatpush1.msra.mxu0 %v1560
        %1816 = vmatprep.subr.mxu0 %v1563
        %1817 = vmatpush1.msra.mxu0 %v1562
        %1818 = vmatprep.subr.mxu0 %v1565
        %1819 = vmatpush1.msra.mxu0 %v1564
        %1820 = vmatprep.subr.mxu0 %v1567
        %1821 = vmatpush1.msra.mxu0 %v1566
        %1822 = vmatprep.subr.mxu0 %v1569
        %1823 = vmatpush1.msra.mxu0 %v1568
        %1824 = vmatprep.subr.mxu0 %v1571
        %1825 = vmatpush1.msra.mxu0 %v1570
        %1826 = vmatprep.subr.mxu0 %v1573
        %1827 = vmatpush1.msra.mxu0 %v1572
        %1828 = vmatprep.subr.mxu0 %v1575
        %1829 = vmatpush1.msra.mxu0 %v1574
        %1830 = vmatprep.subr.mxu0 0.0
        %1831 = vmatpush1.msra.mxu0 0.0
        %1832 = vmatprep.subr.mxu0 0.0
        %1833 = vmatpush1.msra.mxu0 0.0
        %1834 = vmatprep.subr.mxu0 0.0
        %1835 = vmatpush1.msra.mxu0 0.0
        %1836 = vmatprep.subr.mxu0 0.0
        %1837 = vmatpush1.msra.mxu0 0.0
        %1838 = vmatprep.subr.mxu0 0.0
        %1839 = vmatpush1.msra.mxu0 0.0
        %1840 = vmatprep.subr.mxu0 0.0
        %1841 = vmatpush1.msra.mxu0 0.0
        %1842 = vmatprep.subr.mxu0 0.0
        %1843 = vmatpush1.msra.mxu0 0.0
        %1844 = vmatprep.subr.mxu0 0.0
        %1845 = vmatpush1.msra.mxu0 0.0
        %1846 = vmatprep.subr.mxu0 0.0
        %1847 = vmatpush1.msra.mxu0 0.0
        %1848 = vmatprep.subr.mxu0 0.0
        %1849 = vmatpush1.msra.mxu0 0.0
        %1850 = vmatprep.subr.mxu0 0.0
        %1851 = vmatpush1.msra.mxu0 0.0
        %1852 = vmatprep.subr.mxu0 0.0
        %1853 = vmatpush1.msra.mxu0 0.0
        %1854 = vmatprep.subr.mxu0 0.0
        %1855 = vmatpush1.msra.mxu0 0.0
        %1856 = vmatprep.subr.mxu0 0.0
        %1857 = vmatpush1.msra.mxu0 0.0
        %1858 = vmatprep.subr.mxu0 0.0
        %1859 = vmatpush1.msra.mxu0 0.0
        %1860 = vmatprep.subr.mxu0 0.0
        %1861 = vmatpush1.msra.mxu0 0.0
        %1862 = vmatprep.subr.mxu0 0.0
        %1863 = vmatpush1.msra.mxu0 0.0
        %1864 = vmatprep.subr.mxu0 0.0
        %1865 = vmatpush1.msra.mxu0 0.0
        %1866 = vmatprep.subr.mxu0 0.0
        %1867 = vmatpush1.msra.mxu0 0.0
        %1868 = vmatprep.subr.mxu0 0.0
        %1869 = vmatpush1.msra.mxu0 0.0
        %1870 = vmatprep.subr.mxu0 0.0
        %1871 = vmatpush1.msra.mxu0 0.0
        %1872 = vmatprep.subr.mxu0 0.0
        %1873 = vmatpush1.msra.mxu0 0.0
        %1874 = vmatprep.subr.mxu0 0.0
        %1875 = vmatpush1.msra.mxu0 0.0
        %1876 = vmatprep.subr.mxu0 0.0
        %1877 = vmatpush1.msra.mxu0 0.0
        %1878 = vmatprep.mubr.f32.mxu0 0.0
        %1879 = vmatmul.mubr.f32.gmra.mrb[0].mxu0 %v1812
        %v1880 = vpop.f32.mrb[0].mxu0
        %v1881 = vadd.f32 %v1807, %v1880
        %v1882 = vpop.f32.mrb[0].mxu0
        %v1883 = vadd.f32 %v1809, %v1882
        %1884 = vdwg.mxu0
        %v1885 = vld [vmem:[%s14] sm:$0x3]
        %v1887 = vlaneseq
        %v1888 = vshrl.u32 %v1887, 7
        %v1889 = vsub.s32 0, %v1888
        %v1890 = vrot.slane %v1885, %v1889
        %v1891 = vlaneseq
        %v1892 = vshrl.u32 %v1891, 7
        %v1893 = vsub.s32 1, %v1892
        %v1894 = vrot.slane %v1885, %v1893
        %v1897 = vadd.f32 %v1881, %v1890
        %v1898 = vadd.f32 %v1883, %v1894
        %v1899 = vmax.f32 %v1897, 0.0
        %v1900 = vmax.f32 %v1898, 0.0
        %v1901 = vld [vmem:[%s15] sm:$0xff]
        %v1902 = vld [vmem:[%s15 + $0x8] sm:$0xff]
        %v1903 = vld [vmem:[%s15 + $0x10] sm:$0xff]
        %v1904 = vld [vmem:[%s15 + $0x18] sm:$0xff]
        %v1905 = vld [vmem:[%s15 + $0x20] sm:$0xff]
        %v1906 = vld [vmem:[%s15 + $0x28] sm:$0xff]
        %v1907 = vld [vmem:[%s15 + $0x30] sm:$0xff]
        %v1908 = vld [vmem:[%s15 + $0x38] sm:$0xff]
        %v1909 = vld [vmem:[%s15 + $0x40] sm:$0xff]
        %v1910 = vld [vmem:[%s15 + $0x48] sm:$0xff]
        %v1911 = vld [vmem:[%s15 + $0x50] sm:$0xff]
        %v1912 = vld [vmem:[%s15 + $0x58] sm:$0xff]
        %v1913 = vld [vmem:[%s15 + $0x60] sm:$0xff]
        %v1914 = vld [vmem:[%s15 + $0x68] sm:$0xff]
        %v1915 = vld [vmem:[%s15 + $0x70] sm:$0xff]
        %v1916 = vld [vmem:[%s15 + $0x78] sm:$0xff]
        %v1917 = vld [vmem:[%s15 + $0x80] sm:$0xff]
        %v1918 = vld [vmem:[%s15 + $0x88] sm:$0xff]
        %v1919 = vld [vmem:[%s15 + $0x90] sm:$0xff]
        %v1920 = vld [vmem:[%s15 + $0x98] sm:$0xff]
        %v1921 = vld [vmem:[%s15 + $0xa0] sm:$0xff]
        %v1922 = vld [vmem:[%s15 + $0xa8] sm:$0xff]
        %v1923 = vld [vmem:[%s15 + $0xb0] sm:$0xff]
        %v1924 = vld [vmem:[%s15 + $0xb8] sm:$0xff]
        %v1925 = vld [vmem:[%s15 + $0xc0] sm:$0x3f]
        %v1926 = vld [vmem:[%s16] sm:$0x1]
        %vm1927 = vcmask 572416
        %v1929 = vsel %vm1927, %v1900, 0
        %vm1931 = vcmask 1045504
        %v1933 = vsel %vm1931, %v1925, 0
        %1935 = vmatprep.subr.mxu0 0.0
        %1936 = vmatpush1.msra.mxu0 %v1901
        %1937 = vmatprep.subr.mxu0 0.0
        %1938 = vmatpush1.msra.mxu0 %v1902
        %1939 = vmatprep.subr.mxu0 0.0
        %1940 = vmatpush1.msra.mxu0 %v1903
        %1941 = vmatprep.subr.mxu0 0.0
        %1942 = vmatpush1.msra.mxu0 %v1904
        %1943 = vmatprep.subr.mxu0 0.0
        %1944 = vmatpush1.msra.mxu0 %v1905
        %1945 = vmatprep.subr.mxu0 0.0
        %1946 = vmatpush1.msra.mxu0 %v1906
        %1947 = vmatprep.subr.mxu0 0.0
        %1948 = vmatpush1.msra.mxu0 %v1907
        %1949 = vmatprep.subr.mxu0 0.0
        %1950 = vmatpush1.msra.mxu0 %v1908
        %1951 = vmatprep.subr.mxu0 0.0
        %1952 = vmatpush1.msra.mxu0 %v1909
        %1953 = vmatprep.subr.mxu0 0.0
        %1954 = vmatpush1.msra.mxu0 %v1910
        %1955 = vmatprep.subr.mxu0 0.0
        %1956 = vmatpush1.msra.mxu0 %v1911
        %1957 = vmatprep.subr.mxu0 0.0
        %1958 = vmatpush1.msra.mxu0 %v1912
        %1959 = vmatprep.subr.mxu0 0.0
        %1960 = vmatpush1.msra.mxu0 %v1913
        %1961 = vmatprep.subr.mxu0 0.0
        %1962 = vmatpush1.msra.mxu0 %v1914
        %1963 = vmatprep.subr.mxu0 0.0
        %1964 = vmatpush1.msra.mxu0 %v1915
        %1965 = vmatprep.subr.mxu0 0.0
        %1966 = vmatpush1.msra.mxu0 %v1916
        %1967 = vmatprep.subr.mxu0 0.0
        %1968 = vmatpush1.msra.mxu0 %v1917
        %1969 = vmatprep.subr.mxu0 0.0
        %1970 = vmatpush1.msra.mxu0 %v1918
        %1971 = vmatprep.subr.mxu0 0.0
        %1972 = vmatpush1.msra.mxu0 %v1919
        %1973 = vmatprep.subr.mxu0 0.0
        %1974 = vmatpush1.msra.mxu0 %v1920
        %1975 = vmatprep.subr.mxu0 0.0
        %1976 = vmatpush1.msra.mxu0 %v1921
        %1977 = vmatprep.subr.mxu0 0.0
        %1978 = vmatpush1.msra.mxu0 %v1922
        %1979 = vmatprep.subr.mxu0 0.0
        %1980 = vmatpush1.msra.mxu0 %v1923
        %1981 = vmatprep.subr.mxu0 0.0
        %1982 = vmatpush1.msra.mxu0 %v1924
        %1983 = vmatprep.subr.mxu0 0.0
        %1984 = vmatpush1.msra.mxu0 %v1933
        %1985 = vmatprep.subr.mxu0 0.0
        %1986 = vmatpush1.msra.mxu0 0.0
        %1987 = vmatprep.subr.mxu0 0.0
        %1988 = vmatpush1.msra.mxu0 0.0
        %1989 = vmatprep.subr.mxu0 0.0
        %1990 = vmatpush1.msra.mxu0 0.0
        %1991 = vmatprep.subr.mxu0 0.0
        %1992 = vmatpush1.msra.mxu0 0.0
        %1993 = vmatprep.subr.mxu0 0.0
        %1994 = vmatpush1.msra.mxu0 0.0
        %1995 = vmatprep.subr.mxu0 0.0
        %1996 = vmatpush1.msra.mxu0 0.0
        %1997 = vmatprep.subr.mxu0 0.0
        %1998 = vmatpush1.msra.mxu0 0.0
        %1999 = vmatprep.mubr.f32.mxu0 %v1929
        %2000 = vmatmul.mubr.f32.gmra.mrb[0].mxu0 %v1899
        %v2001 = vpop.f32.mrb[0].mxu0
        %v2002 = vadd.f32 %v1926, %v2001
        %v2003 = vpop.f32.mrb[0].mxu0
        %2004 = vdwg.mxu0
        %vm2005 = vcmask 73728
        %2006 = vst.msk [vmem:[%s583] sm:$0x1] %vm2005, %v2002
        %s2007 = sand.u32 %s416, 1
        %s2008 = scalar_lea.sflag [#allocation3], %s2007
        %s2009 = sand.u32 %s416, 1
        %s2010 = scalar_lea.vmem [#allocation2], %s2009
        // Predicated region
        $region89: #{dcn_with_rcnn_forward.11} parent=87 // pred_check
          %p2011 = pneg %p426
        $region90: #{dcn_with_rcnn_forward.11} parent=87 // pred_check_branch
          %2013 = sbr.rel (%p2011) target = $region92
        $region91: #{dcn_with_rcnn_forward.11} parent=87 // pred_region
          %s2015 = ssub.s32 16, 16
          %2016 = vsyncadd %s2008, %s2015
          %s2017 = smul.addr %s31, 16
          %s2018 = scalar_lea.hbm %s17, %s2017
          %s2020 = sshll.u32 %s2010, 4
          %s2021 = int_to_ptr.vmem [resolvable:$true] %s2020
          %2023 = dma.vmem_to_hbm [thread:$0]  %s2021, 16, %s2018, %s2008
        $region92: #{dcn_with_rcnn_forward.11} parent=87 // pred_fallthru
          _
      $region88: #{dcn_with_rcnn_forward.11} parent=5 // pred_fallthru
        _
      %p2024 = scmp.le.s32.totalorder 2, %s26
      // Predicated region
      $region93: #{dcn_with_rcnn_forward.11} parent=5 // pred_check
        %p2025 = pneg %p2024
      $region94: #{dcn_with_rcnn_forward.11} parent=5 // pred_check_branch
        %2027 = sbr.rel (%p2025) target = $region96
      $region95: #{dcn_with_rcnn_forward.11} parent=5 // pred_region
        %s2028 = ssub.s32 %s26, 2
        // Predicated region
        $region97: #{dcn_with_rcnn_forward.11} parent=95 // pred_check
          %p2029 = pneg %p432
        $region98: #{dcn_with_rcnn_forward.11} parent=95 // pred_check_branch
          %2031 = sbr.rel (%p2029) target = $region100
        $region99: #{dcn_with_rcnn_forward.11} parent=95 // pred_region
          %s2032 = sand.u32 %s417, 1
          %s2033 = scalar_lea.sflag [#allocation3], %s2032
          %s2034 = sand.u32 %s417, 1
          %s2035 = scalar_lea.vmem [#allocation2], %s2034
          %2036 = dma.done %s2033, 16
        $region100: #{dcn_with_rcnn_forward.11} parent=95 // pred_fallthru
          _
      $region96: #{dcn_with_rcnn_forward.11} parent=5 // pred_fallthru
        _
    $region6: #{dcn_with_rcnn_forward.11} parent=1 // loop_footer
      %s30 = sadd.s32 1, %s26
    $region7: #{dcn_with_rcnn_forward.11} parent=1 // loop_footer_branch
      %25 = sbr.rel target = $region3
    $region8: #{dcn_with_rcnn_forward.11} parent=1 // loop_exit
      _
    %2037 = vsyncpa [#allocation3], 1
    %s2038 = scalar_lea.sflag [#allocation3], 1
    %2039 = vsyncpa %s2038, 1

// kernel: dcn_with_rcnn_forward.9
$region0: #{dcn_with_rcnn_forward.9}
  #allocation0 [shape = 'u32[]', space=smem, size = 0x4, offset = 0x4, fixed_abs, tag = 'smem constant byte address 0x4 - core index']
  #allocation1 [shape = 'u32[144,128]{1,0:T(1,128)}', space=vmem, size = 0x12000, scoped, tag = 'internal scratch']
  %s0 = inlined_call_operand.vmem [shape: f32[2,19,64], index: 0, kind: input, shape index: {}]
  %s1 = inlined_call_operand.vmem [shape: f32[2,11,332], index: 1, kind: input, shape index: {}]
  %s2 = inlined_call_operand.vmem [shape: f32[2,1,19], index: 2, kind: input, shape index: {}]
  %s3 = inlined_call_operand.vmem [shape: f32[2,1,11], index: 3, kind: input, shape index: {}]
  %s4 = inlined_call_operand.vmem [shape: f32[64,64], index: 4, kind: input, shape index: {}]
  %s5 = inlined_call_operand.vmem [shape: f32[332,64], index: 5, kind: input, shape index: {}]
  %s6 = inlined_call_operand.vmem [shape: f32[64,64], index: 6, kind: input, shape index: {}]
  %s7 = inlined_call_operand.vmem [shape: f32[332,64], index: 7, kind: input, shape index: {}]
  %s8 = inlined_call_operand.vmem [shape: f32[1,64], index: 8, kind: input, shape index: {}]
  %s9 = inlined_call_operand.vmem [shape: f32[332,332], index: 9, kind: input, shape index: {}]
  %s10 = inlined_call_operand.vmem [shape: f32[64,332], index: 10, kind: input, shape index: {}]
  %s11 = inlined_call_operand.vmem [shape: f32[1,332], index: 11, kind: input, shape index: {}]
  %s12 = inlined_call_operand.vmem [shape: f32[2,16,64], index: 12, kind: output, shape index: {0}]
  %s13 = inlined_call_operand.vmem [shape: f32[2,8,332], index: 13, kind: output, shape index: {1}]
  %14 = xla_tuple %s12, %s13
  %s15 = sld [smem:[#allocation0]]
  $region89: #{dcn_with_rcnn_forward.9} parent=0
    _
  %s17 = ssub.s32 1, %s15
  %s18 = scalar_select 0, %s17, %s15
  loop: start=0, step=1, limit=4
  $region2: #{dcn_with_rcnn_forward.9} parent=0 // loop_pre_header
    _
  $region3: #{dcn_with_rcnn_forward.9} parent=0 // loop_header
    %s20 = sphi 0, %s24
    %p21 = scmp.ge.s32.totalorder %s20, 4
    %s30 = sphi 0, %s32
    %s33 = sphi 0, %s30
    %s34 = sphi 0, %s33
    %s50 = sphi 0, %s34
    %s56 = sphi 0, %s58
    %s59 = sphi 0, %s56
    %s60 = sphi 0, %s59
    %s76 = sphi 0, %s60
    %s82 = sphi 0, %s84
    %s85 = sphi 0, %s82
    %s86 = sphi 0, %s85
    %s102 = sphi 0, %s86
    %s108 = sphi 0, %s110
    %s111 = sphi 0, %s108
    %s112 = sphi 0, %s111
    %s128 = sphi 0, %s112
    %s132 = sphi 0, %s132
    %s134 = sphi 0, %s132
    %s135 = sphi 0, %s134
    %s149 = sphi 0, %s135
    %s153 = sphi 0, %s153
    %s155 = sphi 0, %s153
    %s156 = sphi 0, %s155
    %s170 = sphi 0, %s156
    %s174 = sphi 0, %s174
    %s176 = sphi 0, %s174
    %s177 = sphi 0, %s176
    %s191 = sphi 0, %s177
    %s195 = sphi 0, %s195
    %s197 = sphi 0, %s195
    %s198 = sphi 0, %s197
    %s212 = sphi 0, %s198
    %s216 = sphi 0, %s216
    %s218 = sphi 0, %s216
    %s219 = sphi 0, %s218
    %s233 = sphi 0, %s219
    %s237 = sphi 0, %s237
    %s239 = sphi 0, %s237
    %s240 = sphi 0, %s239
    %s254 = sphi 0, %s240
    %s258 = sphi 0, %s258
    %s260 = sphi 0, %s258
    %s261 = sphi 0, %s260
    %s275 = sphi 0, %s261
    %s279 = sphi 0, %s279
    %s281 = sphi 0, %s279
    %s282 = sphi 0, %s281
    %s296 = sphi 0, %s282
    %s302 = sphi 0, %s304
    %s305 = sphi 0, %s302
    %s306 = sphi 0, %s305
    %s322 = sphi 0, %s306
    %s328 = sphi 0, %s330
    %s331 = sphi 0, %s328
    %s332 = sphi 0, %s331
    %s348 = sphi 0, %s332
  $region4: #{dcn_with_rcnn_forward.9} parent=0 // loop_header_branch
    %23 = sbr.rel (%p21) target = $region8
  $region5: #{dcn_with_rcnn_forward.9} parent=0 // loop_body
    %s25 = ssub.s32 %s20, 1
    %s26 = ssub.s32 %s20, 2
    %s27 = sadd.s32 %s20, 1
    %s28 = ssub.s32 %s20, %s27
    %p29 = scmp.eq.s32.totalorder %s28, 0
    %s31 = sadd.s32 %s30, 1
    %s32 = scalar_select %p29, %s30, %s31
    %p35 = pneg %p29
    %p36 = scmp.eq.s32.totalorder %s20, 1
    %p37 = por %p35, %p36
    %p38 = scmp.ne.s32.totalorder %s30, %s33
    %p39 = scmp.eq.s32.totalorder %s20, 0
    %p40 = por %p38, %p39
    %p41 = scmp.ne.s32.totalorder %s30, %s33
    %p42 = scmp.eq.s32.totalorder %s25, 1
    %p43 = por %p41, %p42
    %p44 = scmp.ne.s32.totalorder %s33, %s34
    %p45 = scmp.eq.s32.totalorder %s25, 0
    %p46 = por %p44, %p45
    %p47 = scmp.ne.s32.totalorder %s33, %s34
    %p48 = scmp.eq.s32.totalorder %s26, 1
    %p49 = por %p47, %p48
    %p51 = scmp.ne.s32.totalorder %s34, %s50
    %p52 = scmp.eq.s32.totalorder %s26, 0
    %p53 = por %p51, %p52
    %s54 = ssub.s32 %s20, %s27
    %p55 = scmp.eq.s32.totalorder %s54, 0
    %s57 = sadd.s32 %s56, 1
    %s58 = scalar_select %p55, %s56, %s57
    %p61 = pneg %p55
    %p62 = scmp.eq.s32.totalorder %s20, 1
    %p63 = por %p61, %p62
    %p64 = scmp.ne.s32.totalorder %s56, %s59
    %p65 = scmp.eq.s32.totalorder %s20, 0
    %p66 = por %p64, %p65
    %p67 = scmp.ne.s32.totalorder %s56, %s59
    %p68 = scmp.eq.s32.totalorder %s25, 1
    %p69 = por %p67, %p68
    %p70 = scmp.ne.s32.totalorder %s59, %s60
    %p71 = scmp.eq.s32.totalorder %s25, 0
    %p72 = por %p70, %p71
    %p73 = scmp.ne.s32.totalorder %s59, %s60
    %p74 = scmp.eq.s32.totalorder %s26, 1
    %p75 = por %p73, %p74
    %p77 = scmp.ne.s32.totalorder %s60, %s76
    %p78 = scmp.eq.s32.totalorder %s26, 0
    %p79 = por %p77, %p78
    %s80 = ssub.s32 %s20, %s27
    %p81 = scmp.eq.s32.totalorder %s80, 0
    %s83 = sadd.s32 %s82, 1
    %s84 = scalar_select %p81, %s82, %s83
    %p87 = pneg %p81
    %p88 = scmp.eq.s32.totalorder %s20, 1
    %p89 = por %p87, %p88
    %p90 = scmp.ne.s32.totalorder %s82, %s85
    %p91 = scmp.eq.s32.totalorder %s20, 0
    %p92 = por %p90, %p91
    %p93 = scmp.ne.s32.totalorder %s82, %s85
    %p94 = scmp.eq.s32.totalorder %s25, 1
    %p95 = por %p93, %p94
    %p96 = scmp.ne.s32.totalorder %s85, %s86
    %p97 = scmp.eq.s32.totalorder %s25, 0
    %p98 = por %p96, %p97
    %p99 = scmp.ne.s32.totalorder %s85, %s86
    %p100 = scmp.eq.s32.totalorder %s26, 1
    %p101 = por %p99, %p100
    %p103 = scmp.ne.s32.totalorder %s86, %s102
    %p104 = scmp.eq.s32.totalorder %s26, 0
    %p105 = por %p103, %p104
    %s106 = ssub.s32 %s20, %s27
    %p107 = scmp.eq.s32.totalorder %s106, 0
    %s109 = sadd.s32 %s108, 1
    %s110 = scalar_select %p107, %s108, %s109
    %p113 = pneg %p107
    %p114 = scmp.eq.s32.totalorder %s20, 1
    %p115 = por %p113, %p114
    %p116 = scmp.ne.s32.totalorder %s108, %s111
    %p117 = scmp.eq.s32.totalorder %s20, 0
    %p118 = por %p116, %p117
    %p119 = scmp.ne.s32.totalorder %s108, %s111
    %p120 = scmp.eq.s32.totalorder %s25, 1
    %p121 = por %p119, %p120
    %p122 = scmp.ne.s32.totalorder %s111, %s112
    %p123 = scmp.eq.s32.totalorder %s25, 0
    %p124 = por %p122, %p123
    %p125 = scmp.ne.s32.totalorder %s111, %s112
    %p126 = scmp.eq.s32.totalorder %s26, 1
    %p127 = por %p125, %p126
    %p129 = scmp.ne.s32.totalorder %s112, %s128
    %p130 = scmp.eq.s32.totalorder %s26, 0
    %p131 = por %p129, %p130
    %s133 = sadd.s32 %s132, 1
    %p136 = scmp.eq.s32.totalorder %s20, 1
    %p137 = scmp.ne.s32.totalorder %s132, %s134
    %p138 = scmp.eq.s32.totalorder %s20, 0
    %p139 = por %p137, %p138
    %p140 = scmp.ne.s32.totalorder %s132, %s134
    %p141 = scmp.eq.s32.totalorder %s25, 1
    %p142 = por %p140, %p141
    %p143 = scmp.ne.s32.totalorder %s134, %s135
    %p144 = scmp.eq.s32.totalorder %s25, 0
    %p145 = por %p143, %p144
    %p146 = scmp.ne.s32.totalorder %s134, %s135
    %p147 = scmp.eq.s32.totalorder %s26, 1
    %p148 = por %p146, %p147
    %p150 = scmp.ne.s32.totalorder %s135, %s149
    %p151 = scmp.eq.s32.totalorder %s26, 0
    %p152 = por %p150, %p151
    %s154 = sadd.s32 %s153, 1
    %p157 = scmp.eq.s32.totalorder %s20, 1
    %p158 = scmp.ne.s32.totalorder %s153, %s155
    %p159 = scmp.eq.s32.totalorder %s20, 0
    %p160 = por %p158, %p159
    %p161 = scmp.ne.s32.totalorder %s153, %s155
    %p162 = scmp.eq.s32.totalorder %s25, 1
    %p163 = por %p161, %p162
    %p164 = scmp.ne.s32.totalorder %s155, %s156
    %p165 = scmp.eq.s32.totalorder %s25, 0
    %p166 = por %p164, %p165
    %p167 = scmp.ne.s32.totalorder %s155, %s156
    %p168 = scmp.eq.s32.totalorder %s26, 1
    %p169 = por %p167, %p168
    %p171 = scmp.ne.s32.totalorder %s156, %s170
    %p172 = scmp.eq.s32.totalorder %s26, 0
    %p173 = por %p171, %p172
    %s175 = sadd.s32 %s174, 1
    %p178 = scmp.eq.s32.totalorder %s20, 1
    %p179 = scmp.ne.s32.totalorder %s174, %s176
    %p180 = scmp.eq.s32.totalorder %s20, 0
    %p181 = por %p179, %p180
    %p182 = scmp.ne.s32.totalorder %s174, %s176
    %p183 = scmp.eq.s32.totalorder %s25, 1
    %p184 = por %p182, %p183
    %p185 = scmp.ne.s32.totalorder %s176, %s177
    %p186 = scmp.eq.s32.totalorder %s25, 0
    %p187 = por %p185, %p186
    %p188 = scmp.ne.s32.totalorder %s176, %s177
    %p189 = scmp.eq.s32.totalorder %s26, 1
    %p190 = por %p188, %p189
    %p192 = scmp.ne.s32.totalorder %s177, %s191
    %p193 = scmp.eq.s32.totalorder %s26, 0
    %p194 = por %p192, %p193
    %s196 = sadd.s32 %s195, 1
    %p199 = scmp.eq.s32.totalorder %s20, 1
    %p200 = scmp.ne.s32.totalorder %s195, %s197
    %p201 = scmp.eq.s32.totalorder %s20, 0
    %p202 = por %p200, %p201
    %p203 = scmp.ne.s32.totalorder %s195, %s197
    %p204 = scmp.eq.s32.totalorder %s25, 1
    %p205 = por %p203, %p204
    %p206 = scmp.ne.s32.totalorder %s197, %s198
    %p207 = scmp.eq.s32.totalorder %s25, 0
    %p208 = por %p206, %p207
    %p209 = scmp.ne.s32.totalorder %s197, %s198
    %p210 = scmp.eq.s32.totalorder %s26, 1
    %p211 = por %p209, %p210
    %p213 = scmp.ne.s32.totalorder %s198, %s212
    %p214 = scmp.eq.s32.totalorder %s26, 0
    %p215 = por %p213, %p214
    %s217 = sadd.s32 %s216, 1
    %p220 = scmp.eq.s32.totalorder %s20, 1
    %p221 = scmp.ne.s32.totalorder %s216, %s218
    %p222 = scmp.eq.s32.totalorder %s20, 0
    %p223 = por %p221, %p222
    %p224 = scmp.ne.s32.totalorder %s216, %s218
    %p225 = scmp.eq.s32.totalorder %s25, 1
    %p226 = por %p224, %p225
    %p227 = scmp.ne.s32.totalorder %s218, %s219
    %p228 = scmp.eq.s32.totalorder %s25, 0
    %p229 = por %p227, %p228
    %p230 = scmp.ne.s32.totalorder %s218, %s219
    %p231 = scmp.eq.s32.totalorder %s26, 1
    %p232 = por %p230, %p231
    %p234 = scmp.ne.s32.totalorder %s219, %s233
    %p235 = scmp.eq.s32.totalorder %s26, 0
    %p236 = por %p234, %p235
    %s238 = sadd.s32 %s237, 1
    %p241 = scmp.eq.s32.totalorder %s20, 1
    %p242 = scmp.ne.s32.totalorder %s237, %s239
    %p243 = scmp.eq.s32.totalorder %s20, 0
    %p244 = por %p242, %p243
    %p245 = scmp.ne.s32.totalorder %s237, %s239
    %p246 = scmp.eq.s32.totalorder %s25, 1
    %p247 = por %p245, %p246
    %p248 = scmp.ne.s32.totalorder %s239, %s240
    %p249 = scmp.eq.s32.totalorder %s25, 0
    %p250 = por %p248, %p249
    %p251 = scmp.ne.s32.totalorder %s239, %s240
    %p252 = scmp.eq.s32.totalorder %s26, 1
    %p253 = por %p251, %p252
    %p255 = scmp.ne.s32.totalorder %s240, %s254
    %p256 = scmp.eq.s32.totalorder %s26, 0
    %p257 = por %p255, %p256
    %s259 = sadd.s32 %s258, 1
    %p262 = scmp.eq.s32.totalorder %s20, 1
    %p263 = scmp.ne.s32.totalorder %s258, %s260
    %p264 = scmp.eq.s32.totalorder %s20, 0
    %p265 = por %p263, %p264
    %p266 = scmp.ne.s32.totalorder %s258, %s260
    %p267 = scmp.eq.s32.totalorder %s25, 1
    %p268 = por %p266, %p267
    %p269 = scmp.ne.s32.totalorder %s260, %s261
    %p270 = scmp.eq.s32.totalorder %s25, 0
    %p271 = por %p269, %p270
    %p272 = scmp.ne.s32.totalorder %s260, %s261
    %p273 = scmp.eq.s32.totalorder %s26, 1
    %p274 = por %p272, %p273
    %p276 = scmp.ne.s32.totalorder %s261, %s275
    %p277 = scmp.eq.s32.totalorder %s26, 0
    %p278 = por %p276, %p277
    %s280 = sadd.s32 %s279, 1
    %p283 = scmp.eq.s32.totalorder %s20, 1
    %p284 = scmp.ne.s32.totalorder %s279, %s281
    %p285 = scmp.eq.s32.totalorder %s20, 0
    %p286 = por %p284, %p285
    %p287 = scmp.ne.s32.totalorder %s279, %s281
    %p288 = scmp.eq.s32.totalorder %s25, 1
    %p289 = por %p287, %p288
    %p290 = scmp.ne.s32.totalorder %s281, %s282
    %p291 = scmp.eq.s32.totalorder %s25, 0
    %p292 = por %p290, %p291
    %p293 = scmp.ne.s32.totalorder %s281, %s282
    %p294 = scmp.eq.s32.totalorder %s26, 1
    %p295 = por %p293, %p294
    %p297 = scmp.ne.s32.totalorder %s282, %s296
    %p298 = scmp.eq.s32.totalorder %s26, 0
    %p299 = por %p297, %p298
    %s300 = ssub.s32 %s20, %s27
    %p301 = scmp.eq.s32.totalorder %s300, 0
    %s303 = sadd.s32 %s302, 1
    %s304 = scalar_select %p301, %s302, %s303
    %p307 = pneg %p301
    %p308 = scmp.eq.s32.totalorder %s20, 1
    %p309 = por %p307, %p308
    %p310 = scmp.ne.s32.totalorder %s302, %s305
    %p311 = scmp.eq.s32.totalorder %s20, 0
    %p312 = por %p310, %p311
    %p313 = scmp.ne.s32.totalorder %s302, %s305
    %p314 = scmp.eq.s32.totalorder %s25, 1
    %p315 = por %p313, %p314
    %p316 = scmp.ne.s32.totalorder %s305, %s306
    %p317 = scmp.eq.s32.totalorder %s25, 0
    %p318 = por %p316, %p317
    %p319 = scmp.ne.s32.totalorder %s305, %s306
    %p320 = scmp.eq.s32.totalorder %s26, 1
    %p321 = por %p319, %p320
    %p323 = scmp.ne.s32.totalorder %s306, %s322
    %p324 = scmp.eq.s32.totalorder %s26, 0
    %p325 = por %p323, %p324
    %s326 = ssub.s32 %s20, %s27
    %p327 = scmp.eq.s32.totalorder %s326, 0
    %s329 = sadd.s32 %s328, 1
    %s330 = scalar_select %p327, %s328, %s329
    %p333 = pneg %p327
    %p334 = scmp.eq.s32.totalorder %s20, 1
    %p335 = por %p333, %p334
    %p336 = scmp.ne.s32.totalorder %s328, %s331
    %p337 = scmp.eq.s32.totalorder %s20, 0
    %p338 = por %p336, %p337
    %p339 = scmp.ne.s32.totalorder %s328, %s331
    %p340 = scmp.eq.s32.totalorder %s25, 1
    %p341 = por %p339, %p340
    %p342 = scmp.ne.s32.totalorder %s331, %s332
    %p343 = scmp.eq.s32.totalorder %s25, 0
    %p344 = por %p342, %p343
    %p345 = scmp.ne.s32.totalorder %s331, %s332
    %p346 = scmp.eq.s32.totalorder %s26, 1
    %p347 = por %p345, %p346
    %p349 = scmp.ne.s32.totalorder %s332, %s348
    %p350 = scmp.eq.s32.totalorder %s26, 0
    %p351 = por %p349, %p350
    %p352 = scmp.le.s32.totalorder 1, %s20
    %p353 = scmp.lt.s32.totalorder %s20, 3
    %p354 = pnand %p352, %p353
    %p355 = pneg %p354
    // Predicated region
    $region9: #{dcn_with_rcnn_forward.9} parent=5 // pred_check
      _
    $region10: #{dcn_with_rcnn_forward.9} parent=5 // pred_check_branch
      %357 = sbr.rel (%p354) target = $region12
    $region11: #{dcn_with_rcnn_forward.9} parent=5 // pred_region
      %s358 = ssub.s32 %s20, 1
      // Predicated region
      $region13: #{dcn_with_rcnn_forward.9} parent=11 // pred_check
        %p359 = pneg %p145
      $region14: #{dcn_with_rcnn_forward.9} parent=11 // pred_check_branch
        %361 = sbr.rel (%p359) target = $region16
      $region15: #{dcn_with_rcnn_forward.9} parent=11 // pred_region
        _
      $region16: #{dcn_with_rcnn_forward.9} parent=11 // pred_fallthru
        _
      // Predicated region
      $region17: #{dcn_with_rcnn_forward.9} parent=11 // pred_check
        %p362 = pneg %p166
      $region18: #{dcn_with_rcnn_forward.9} parent=11 // pred_check_branch
        %364 = sbr.rel (%p362) target = $region20
      $region19: #{dcn_with_rcnn_forward.9} parent=11 // pred_region
        _
      $region20: #{dcn_with_rcnn_forward.9} parent=11 // pred_fallthru
        _
      // Predicated region
      $region21: #{dcn_with_rcnn_forward.9} parent=11 // pred_check
        %p365 = pneg %p187
      $region22: #{dcn_with_rcnn_forward.9} parent=11 // pred_check_branch
        %367 = sbr.rel (%p365) target = $region24
      $region23: #{dcn_with_rcnn_forward.9} parent=11 // pred_region
        _
      $region24: #{dcn_with_rcnn_forward.9} parent=11 // pred_fallthru
        _
      // Predicated region
      $region25: #{dcn_with_rcnn_forward.9} parent=11 // pred_check
        %p368 = pneg %p208
      $region26: #{dcn_with_rcnn_forward.9} parent=11 // pred_check_branch
        %370 = sbr.rel (%p368) target = $region28
      $region27: #{dcn_with_rcnn_forward.9} parent=11 // pred_region
        _
      $region28: #{dcn_with_rcnn_forward.9} parent=11 // pred_fallthru
        _
      // Predicated region
      $region29: #{dcn_with_rcnn_forward.9} parent=11 // pred_check
        %p371 = pneg %p229
      $region30: #{dcn_with_rcnn_forward.9} parent=11 // pred_check_branch
        %373 = sbr.rel (%p371) target = $region32
      $region31: #{dcn_with_rcnn_forward.9} parent=11 // pred_region
        _
      $region32: #{dcn_with_rcnn_forward.9} parent=11 // pred_fallthru
        _
      // Predicated region
      $region33: #{dcn_with_rcnn_forward.9} parent=11 // pred_check
        %p374 = pneg %p250
      $region34: #{dcn_with_rcnn_forward.9} parent=11 // pred_check_branch
        %376 = sbr.rel (%p374) target = $region36
      $region35: #{dcn_with_rcnn_forward.9} parent=11 // pred_region
        _
      $region36: #{dcn_with_rcnn_forward.9} parent=11 // pred_fallthru
        _
      // Predicated region
      $region37: #{dcn_with_rcnn_forward.9} parent=11 // pred_check
        %p377 = pneg %p271
      $region38: #{dcn_with_rcnn_forward.9} parent=11 // pred_check_branch
        %379 = sbr.rel (%p377) target = $region40
      $region39: #{dcn_with_rcnn_forward.9} parent=11 // pred_region
        _
      $region40: #{dcn_with_rcnn_forward.9} parent=11 // pred_fallthru
        _
      // Predicated region
      $region41: #{dcn_with_rcnn_forward.9} parent=11 // pred_check
        %p380 = pneg %p292
      $region42: #{dcn_with_rcnn_forward.9} parent=11 // pred_check_branch
        %382 = sbr.rel (%p380) target = $region44
      $region43: #{dcn_with_rcnn_forward.9} parent=11 // pred_region
        _
      $region44: #{dcn_with_rcnn_forward.9} parent=11 // pred_fallthru
        _
    $region12: #{dcn_with_rcnn_forward.9} parent=5 // pred_fallthru
      _
    %p383 = scmp.lt.s32.totalorder %s20, 2
    // Predicated region
    $region45: #{dcn_with_rcnn_forward.9} parent=5 // pred_check
      %p384 = pneg %p383
    $region46: #{dcn_with_rcnn_forward.9} parent=5 // pred_check_branch
      %386 = sbr.rel (%p384) target = $region48
    $region47: #{dcn_with_rcnn_forward.9} parent=5 // pred_region
      // Predicated region
      $region49: #{dcn_with_rcnn_forward.9} parent=47 // pred_check
        %p387 = pneg %p40
      $region50: #{dcn_with_rcnn_forward.9} parent=47 // pred_check_branch
        %389 = sbr.rel (%p387) target = $region52
      $region51: #{dcn_with_rcnn_forward.9} parent=47 // pred_region
        %p390 = scmp.lt.s32.totalorder %s20, 1
        %s391 = scalar_select %p390, %s20, 1
        %s392 = smul.addr %s391, 3
        %s393 = smul.addr %s392, 8
        %s394 = scalar_lea.vmem %s0, %s393
      $region52: #{dcn_with_rcnn_forward.9} parent=47 // pred_fallthru
        _
      // Predicated region
      $region53: #{dcn_with_rcnn_forward.9} parent=47 // pred_check
        %p395 = pneg %p66
      $region54: #{dcn_with_rcnn_forward.9} parent=47 // pred_check_branch
        %397 = sbr.rel (%p395) target = $region56
      $region55: #{dcn_with_rcnn_forward.9} parent=47 // pred_region
        %p398 = scmp.lt.s32.totalorder %s20, 1
        %s399 = scalar_select %p398, %s20, 1
        %s400 = smul.addr %s399, 6
        %s401 = smul.addr %s400, 8
        %s402 = scalar_lea.vmem %s1, %s401
      $region56: #{dcn_with_rcnn_forward.9} parent=47 // pred_fallthru
        _
      // Predicated region
      $region57: #{dcn_with_rcnn_forward.9} parent=47 // pred_check
        %p403 = pneg %p92
      $region58: #{dcn_with_rcnn_forward.9} parent=47 // pred_check_branch
        %405 = sbr.rel (%p403) target = $region60
      $region59: #{dcn_with_rcnn_forward.9} parent=47 // pred_region
        %p406 = scmp.lt.s32.totalorder %s20, 1
        %s407 = scalar_select %p406, %s20, 1
        %s408 = scalar_lea.vmem %s2, %s407
      $region60: #{dcn_with_rcnn_forward.9} parent=47 // pred_fallthru
        _
      // Predicated region
      $region61: #{dcn_with_rcnn_forward.9} parent=47 // pred_check
        %p409 = pneg %p118
      $region62: #{dcn_with_rcnn_forward.9} parent=47 // pred_check_branch
        %411 = sbr.rel (%p409) target = $region64
      $region63: #{dcn_with_rcnn_forward.9} parent=47 // pred_region
        %p412 = scmp.lt.s32.totalorder %s20, 1
        %s413 = scalar_select %p412, %s20, 1
        %s414 = scalar_lea.vmem %s3, %s413
      $region64: #{dcn_with_rcnn_forward.9} parent=47 // pred_fallthru
        _
    $region48: #{dcn_with_rcnn_forward.9} parent=5 // pred_fallthru
      _
    %p415 = scmp.le.s32.totalorder 1, %s20
    %p416 = scmp.lt.s32.totalorder %s20, 3
    %p417 = pnand %p415, %p416
    %p418 = pneg %p417
    // Predicated region
    $region65: #{dcn_with_rcnn_forward.9} parent=5 // pred_check
      _
    $region66: #{dcn_with_rcnn_forward.9} parent=5 // pred_check_branch
      %420 = sbr.rel (%p417) target = $region68
    $region67: #{dcn_with_rcnn_forward.9} parent=5 // pred_region
      %s421 = ssub.s32 %s20, 1
      %p422 = scmp.lt.s32.totalorder %s25, 1
      %s423 = scalar_select %p422, %s25, 1
      %s424 = smul.addr %s423, 3
      %s425 = smul.addr %s424, 8
      %s426 = scalar_lea.vmem %s0, %s425
      %p427 = pneg %p46
      %p428 = pneg %p43
      %p429 = scmp.lt.s32.totalorder %s25, 1
      %s430 = scalar_select %p429, %s25, 1
      %s431 = smul.addr %s430, 6
      %s432 = smul.addr %s431, 8
      %s433 = scalar_lea.vmem %s1, %s432
      %p434 = pneg %p72
      %p435 = pneg %p69
      %p436 = scmp.lt.s32.totalorder %s25, 1
      %s437 = scalar_select %p436, %s25, 1
      %s438 = scalar_lea.vmem %s2, %s437
      %p439 = pneg %p98
      %p440 = pneg %p95
      %p441 = scmp.lt.s32.totalorder %s25, 1
      %s442 = scalar_select %p441, %s25, 1
      %s443 = scalar_lea.vmem %s3, %s442
      %p444 = pneg %p124
      %p445 = pneg %p121
      %p446 = pneg %p145
      %p447 = pneg %p142
      %p448 = pneg %p166
      %p449 = pneg %p163
      %p450 = pneg %p187
      %p451 = pneg %p184
      %p452 = pneg %p208
      %p453 = pneg %p205
      %p454 = pneg %p229
      %p455 = pneg %p226
      %p456 = pneg %p250
      %p457 = pneg %p247
      %p458 = pneg %p271
      %p459 = pneg %p268
      %p460 = pneg %p292
      %p461 = pneg %p289
      %p462 = pneg %p318
      %p463 = pneg %p315
      %p464 = scmp.lt.s32.totalorder %s25, 1
      %s465 = scalar_select %p464, %s25, 1
      %s466 = smul.addr %s465, 2
      %s467 = smul.addr %s466, 8
      %s468 = scalar_lea.vmem %s12, %s467
      %p469 = pneg %p344
      %p470 = pneg %p341
      %p471 = scmp.lt.s32.totalorder %s25, 1
      %s472 = scalar_select %p471, %s25, 1
      %s473 = smul.addr %s472, 3
      %s474 = smul.addr %s473, 8
      %s475 = scalar_lea.vmem %s13, %s474
      %p476 = scmp.lt.s32.totalorder %s25, 1
      %s477 = scalar_select %p476, %s25, 1
      %s478 = smul.addr %s477, 3
      %s479 = smul.addr %s478, 8
      %s480 = scalar_lea.vmem %s0, %s479
      %p481 = scmp.lt.s32.totalorder %s25, 1
      %s482 = scalar_select %p481, %s25, 1
      %s483 = smul.addr %s482, 6
      %s484 = smul.addr %s483, 8
      %s485 = scalar_lea.vmem %s1, %s484
      %p486 = scmp.lt.s32.totalorder %s25, 1
      %s487 = scalar_select %p486, %s25, 1
      %s488 = scalar_lea.vmem %s2, %s487
      %p489 = scmp.lt.s32.totalorder %s25, 1
      %s490 = scalar_select %p489, %s25, 1
      %s491 = scalar_lea.vmem %s3, %s490
      %p492 = scmp.lt.s32.totalorder %s25, 1
      %s493 = scalar_select %p492, %s25, 1
      %s494 = smul.addr %s493, 2
      %s495 = smul.addr %s494, 8
      %s496 = scalar_lea.vmem %s12, %s495
      %p497 = scmp.lt.s32.totalorder %s25, 1
      %s498 = scalar_select %p497, %s25, 1
      %s499 = smul.addr %s498, 3
      %s500 = smul.addr %s499, 8
      %s501 = scalar_lea.vmem %s13, %s500
      %v502 = vld [vmem:[%s480] sm:$0xff]
      %v503 = vld [vmem:[%s480 + $0x8] sm:$0xff]
      %v504 = vld [vmem:[%s480 + $0x10] sm:$0x7]
      %v505 = vld [vmem:[%s485] sm:$0xff]
      %v506 = vld [vmem:[%s485 + $0x8] sm:$0xff]
      %v507 = vld [vmem:[%s485 + $0x10] sm:$0xff]
      %v508 = vld [vmem:[%s485 + $0x18] sm:$0x7]
      %v509 = vld [vmem:[%s485 + $0x20] sm:$0x7]
      %v510 = vld [vmem:[%s485 + $0x28] sm:$0x7]
      %v511 = vld [vmem:[%s491] sm:$0x1]
      %vm512 = vcmp.gt.f32.partialorder %v511, 0.0
      %v513 = vsel %vm512, 0.0, -1e+30
      %v514 = vld [vmem:[%s488] sm:$0x1]
      %vm515 = vcmp.gt.f32.partialorder %v514, 0.0
      %v516 = vsel %vm515, 0.0, -1e+30
      %v517 = vld [vmem:[%s4] sm:$0xff]
      %v518 = vld [vmem:[%s4 + $0x8] sm:$0xff]
      %v519 = vld [vmem:[%s4 + $0x10] sm:$0xff]
      %v520 = vld [vmem:[%s4 + $0x18] sm:$0xff]
      %v521 = vld [vmem:[%s4 + $0x20] sm:$0xff]
      %v522 = vld [vmem:[%s4 + $0x28] sm:$0xff]
      %v523 = vld [vmem:[%s4 + $0x30] sm:$0xff]
      %v524 = vld [vmem:[%s4 + $0x38] sm:$0xff]
      %vm525 = vcmask 523264
      %v527 = vsel %vm525, %v502, 0
      %v530 = vsel %vm525, %v503, 0
      %v533 = vsel %vm525, %v504, 0
      %535 = vmatprep.subr.mxu0 0.0
      %536 = vmatpush1.msra.mxu0 %v517
      %537 = vmatprep.subr.mxu0 0.0
      %538 = vmatpush1.msra.mxu0 %v518
      %539 = vmatprep.subr.mxu0 0.0
      %540 = vmatpush1.msra.mxu0 %v519
      %541 = vmatprep.subr.mxu0 0.0
      %542 = vmatpush1.msra.mxu0 %v520
      %543 = vmatprep.subr.mxu0 0.0
      %544 = vmatpush1.msra.mxu0 %v521
      %545 = vmatprep.subr.mxu0 0.0
      %546 = vmatpush1.msra.mxu0 %v522
      %547 = vmatprep.subr.mxu0 0.0
      %548 = vmatpush1.msra.mxu0 %v523
      %549 = vmatprep.subr.mxu0 0.0
      %550 = vmatpush1.msra.mxu0 %v524
      %551 = vmatprep.subr.mxu0 0.0
      %552 = vmatpush1.msra.mxu0 0.0
      %553 = vmatprep.subr.mxu0 0.0
      %554 = vmatpush1.msra.mxu0 0.0
      %555 = vmatprep.subr.mxu0 0.0
      %556 = vmatpush1.msra.mxu0 0.0
      %557 = vmatprep.subr.mxu0 0.0
      %558 = vmatpush1.msra.mxu0 0.0
      %559 = vmatprep.subr.mxu0 0.0
      %560 = vmatpush1.msra.mxu0 0.0
      %561 = vmatprep.subr.mxu0 0.0
      %562 = vmatpush1.msra.mxu0 0.0
      %563 = vmatprep.subr.mxu0 0.0
      %564 = vmatpush1.msra.mxu0 0.0
      %565 = vmatprep.subr.mxu0 0.0
      %566 = vmatpush1.msra.mxu0 0.0
      %567 = vmatprep.subr.mxu0 0.0
      %568 = vmatpush1.msra.mxu0 0.0
      %569 = vmatprep.subr.mxu0 0.0
      %570 = vmatpush1.msra.mxu0 0.0
      %571 = vmatprep.subr.mxu0 0.0
      %572 = vmatpush1.msra.mxu0 0.0
      %573 = vmatprep.subr.mxu0 0.0
      %574 = vmatpush1.msra.mxu0 0.0
      %575 = vmatprep.subr.mxu0 0.0
      %576 = vmatpush1.msra.mxu0 0.0
      %577 = vmatprep.subr.mxu0 0.0
      %578 = vmatpush1.msra.mxu0 0.0
      %579 = vmatprep.subr.mxu0 0.0
      %580 = vmatpush1.msra.mxu0 0.0
      %581 = vmatprep.subr.mxu0 0.0
      %582 = vmatpush1.msra.mxu0 0.0
      %583 = vmatprep.subr.mxu0 0.0
      %584 = vmatpush1.msra.mxu0 0.0
      %585 = vmatprep.subr.mxu0 0.0
      %586 = vmatpush1.msra.mxu0 0.0
      %587 = vmatprep.subr.mxu0 0.0
      %588 = vmatpush1.msra.mxu0 0.0
      %589 = vmatprep.subr.mxu0 0.0
      %590 = vmatpush1.msra.mxu0 0.0
      %591 = vmatprep.subr.mxu0 0.0
      %592 = vmatpush1.msra.mxu0 0.0
      %593 = vmatprep.subr.mxu0 0.0
      %594 = vmatpush1.msra.mxu0 0.0
      %595 = vmatprep.subr.mxu0 0.0
      %596 = vmatpush1.msra.mxu0 0.0
      %597 = vmatprep.subr.mxu0 0.0
      %598 = vmatpush1.msra.mxu0 0.0
      %599 = vmatprep.mubr.f32.mxu0 0.0
      %600 = vmatmul.mubr.f32.gmra.mrb[0].mxu0 %v527
      %v601 = vpop.f32.mrb[0].mxu0
      %v602 = vadd.f32 0.0, %v601
      %v603 = vpop.f32.mrb[0].mxu0
      %604 = vmatprep.mubr.f32.mxu0 0.0
      %605 = vmatmul.mubr.f32.gmra.mrb[0].mxu0 %v530
      %v606 = vpop.f32.mrb[0].mxu0
      %v607 = vadd.f32 0.0, %v606
      %v608 = vpop.f32.mrb[0].mxu0
      %609 = vmatprep.mubr.f32.mxu0 0.0
      %610 = vmatmul.mubr.f32.gmra.mrb[0].mxu0 %v533
      %v611 = vpop.f32.mrb[0].mxu0
      %v612 = vadd.f32 0.0, %v611
      %v613 = vpop.f32.mrb[0].mxu0
      %614 = vdwg.mxu0
      %v615 = vld [vmem:[%s5] sm:$0xff]
      %v616 = vld [vmem:[%s5 + $0x8] sm:$0xff]
      %v617 = vld [vmem:[%s5 + $0x10] sm:$0xff]
      %v618 = vld [vmem:[%s5 + $0x18] sm:$0xff]
      %v619 = vld [vmem:[%s5 + $0x20] sm:$0xff]
      %v620 = vld [vmem:[%s5 + $0x28] sm:$0xff]
      %v621 = vld [vmem:[%s5 + $0x30] sm:$0xff]
      %v622 = vld [vmem:[%s5 + $0x38] sm:$0xff]
      %v623 = vld [vmem:[%s5 + $0x40] sm:$0xff]
      %v624 = vld [vmem:[%s5 + $0x48] sm:$0xff]
      %v625 = vld [vmem:[%s5 + $0x50] sm:$0xff]
      %v626 = vld [vmem:[%s5 + $0x58] sm:$0xff]
      %v627 = vld [vmem:[%s5 + $0x60] sm:$0xff]
      %v628 = vld [vmem:[%s5 + $0x68] sm:$0xff]
      %v629 = vld [vmem:[%s5 + $0x70] sm:$0xff]
      %v630 = vld [vmem:[%s5 + $0x78] sm:$0xff]
      %v631 = vld [vmem:[%s5 + $0x80] sm:$0xff]
      %v632 = vld [vmem:[%s5 + $0x88] sm:$0xff]
      %v633 = vld [vmem:[%s5 + $0x90] sm:$0xff]
      %v634 = vld [vmem:[%s5 + $0x98] sm:$0xff]
      %v635 = vld [vmem:[%s5 + $0xa0] sm:$0xff]
      %v636 = vld [vmem:[%s5 + $0xa8] sm:$0xff]
      %v637 = vld [vmem:[%s5 + $0xb0] sm:$0xff]
      %v638 = vld [vmem:[%s5 + $0xb8] sm:$0xff]
      %v639 = vld [vmem:[%s5 + $0xc0] sm:$0xff]
      %v640 = vld [vmem:[%s5 + $0xc8] sm:$0xff]
      %v641 = vld [vmem:[%s5 + $0xd0] sm:$0xff]
      %v642 = vld [vmem:[%s5 + $0xd8] sm:$0xff]
      %v643 = vld [vmem:[%s5 + $0xe0] sm:$0xff]
      %v644 = vld [vmem:[%s5 + $0xe8] sm:$0xff]
      %v645 = vld [vmem:[%s5 + $0xf0] sm:$0xff]
      %v646 = vld [vmem:[%s5 + $0xf8] sm:$0xff]
      %v647 = vld [vmem:[%s5 + $0x100] sm:$0xff]
      %v648 = vld [vmem:[%s5 + $0x108] sm:$0xff]
      %v649 = vld [vmem:[%s5 + $0x110] sm:$0xff]
      %v650 = vld [vmem:[%s5 + $0x118] sm:$0xff]
      %v651 = vld [vmem:[%s5 + $0x120] sm:$0xff]
      %v652 = vld [vmem:[%s5 + $0x128] sm:$0xff]
      %v653 = vld [vmem:[%s5 + $0x130] sm:$0xff]
      %v654 = vld [vmem:[%s5 + $0x138] sm:$0xff]
      %v655 = vld [vmem:[%s5 + $0x140] sm:$0xff]
      %v656 = vld [vmem:[%s5 + $0x148] sm:$0xf]
      %vm657 = vcmask 621568
      %v659 = vsel %vm657, %v507, 0
      %v662 = vsel %vm657, %v510, 0
      %vm664 = vcmask 1043456
      %v666 = vsel %vm664, %v656, 0
      %668 = vmatprep.subr.mxu0 0.0
      %669 = vmatpush1.msra.mxu0 %v615
      %670 = vmatprep.subr.mxu0 0.0
      %671 = vmatpush1.msra.mxu0 %v616
      %672 = vmatprep.subr.mxu0 0.0
      %673 = vmatpush1.msra.mxu0 %v617
      %674 = vmatprep.subr.mxu0 0.0
      %675 = vmatpush1.msra.mxu0 %v618
      %676 = vmatprep.subr.mxu0 0.0
      %677 = vmatpush1.msra.mxu0 %v619
      %678 = vmatprep.subr.mxu0 0.0
      %679 = vmatpush1.msra.mxu0 %v620
      %680 = vmatprep.subr.mxu0 0.0
      %681 = vmatpush1.msra.mxu0 %v621
      %682 = vmatprep.subr.mxu0 0.0
      %683 = vmatpush1.msra.mxu0 %v622
      %684 = vmatprep.subr.mxu0 0.0
      %685 = vmatpush1.msra.mxu0 %v623
      %686 = vmatprep.subr.mxu0 0.0
      %687 = vmatpush1.msra.mxu0 %v624
      %688 = vmatprep.subr.mxu0 0.0
      %689 = vmatpush1.msra.mxu0 %v625
      %690 = vmatprep.subr.mxu0 0.0
      %691 = vmatpush1.msra.mxu0 %v626
      %692 = vmatprep.subr.mxu0 0.0
      %693 = vmatpush1.msra.mxu0 %v627
      %694 = vmatprep.subr.mxu0 0.0
      %695 = vmatpush1.msra.mxu0 %v628
      %696 = vmatprep.subr.mxu0 0.0
      %697 = vmatpush1.msra.mxu0 %v629
      %698 = vmatprep.subr.mxu0 0.0
      %699 = vmatpush1.msra.mxu0 %v630
      %700 = vmatprep.subr.mxu0 0.0
      %701 = vmatpush1.msra.mxu0 %v631
      %702 = vmatprep.subr.mxu0 0.0
      %703 = vmatpush1.msra.mxu0 %v632
      %704 = vmatprep.subr.mxu0 0.0
      %705 = vmatpush1.msra.mxu0 %v633
      %706 = vmatprep.subr.mxu0 0.0
      %707 = vmatpush1.msra.mxu0 %v634
      %708 = vmatprep.subr.mxu0 0.0
      %709 = vmatpush1.msra.mxu0 %v635
      %710 = vmatprep.subr.mxu0 0.0
      %711 = vmatpush1.msra.mxu0 %v636
      %712 = vmatprep.subr.mxu0 0.0
      %713 = vmatpush1.msra.mxu0 %v637
      %714 = vmatprep.subr.mxu0 0.0
      %715 = vmatpush1.msra.mxu0 %v638
      %716 = vmatprep.subr.mxu0 0.0
      %717 = vmatpush1.msra.mxu0 %v639
      %718 = vmatprep.subr.mxu0 0.0
      %719 = vmatpush1.msra.mxu0 %v640
      %720 = vmatprep.subr.mxu0 0.0
      %721 = vmatpush1.msra.mxu0 %v641
      %722 = vmatprep.subr.mxu0 0.0
      %723 = vmatpush1.msra.mxu0 %v642
      %724 = vmatprep.subr.mxu0 0.0
      %725 = vmatpush1.msra.mxu0 %v643
      %726 = vmatprep.subr.mxu0 0.0
      %727 = vmatpush1.msra.mxu0 %v644
      %728 = vmatprep.subr.mxu0 0.0
      %729 = vmatpush1.msra.mxu0 %v645
      %730 = vmatprep.subr.mxu0 0.0
      %731 = vmatpush1.msra.mxu0 %v646
      %732 = vmatprep.mubr.f32.mxu0 %v506
      %733 = vmatmul.mubr.f32.gmra.mrb[0].mxu0 %v505
      %v734 = vpop.f32.mrb[0].mxu0
      %v735 = vadd.f32 0.0, %v734
      %v736 = vpop.f32.mrb[0].mxu0
      %737 = vmatprep.mubr.f32.mxu0 %v509
      %738 = vmatmul.mubr.f32.gmra.mrb[0].mxu0 %v508
      %v739 = vpop.f32.mrb[0].mxu0
      %v740 = vadd.f32 0.0, %v739
      %v741 = vpop.f32.mrb[0].mxu0
      %742 = vdwg.mxu0
      %743 = vmatprep.subr.mxu0 0.0
      %744 = vmatpush1.msra.mxu0 %v647
      %745 = vmatprep.subr.mxu0 0.0
      %746 = vmatpush1.msra.mxu0 %v648
      %747 = vmatprep.subr.mxu0 0.0
      %748 = vmatpush1.msra.mxu0 %v649
      %749 = vmatprep.subr.mxu0 0.0
      %750 = vmatpush1.msra.mxu0 %v650
      %751 = vmatprep.subr.mxu0 0.0
      %752 = vmatpush1.msra.mxu0 %v651
      %753 = vmatprep.subr.mxu0 0.0
      %754 = vmatpush1.msra.mxu0 %v652
      %755 = vmatprep.subr.mxu0 0.0
      %756 = vmatpush1.msra.mxu0 %v653
      %757 = vmatprep.subr.mxu0 0.0
      %758 = vmatpush1.msra.mxu0 %v654
      %759 = vmatprep.subr.mxu0 0.0
      %760 = vmatpush1.msra.mxu0 %v655
      %761 = vmatprep.subr.mxu0 0.0
      %762 = vmatpush1.msra.mxu0 %v666
      %763 = vmatprep.subr.mxu0 0.0
      %764 = vmatpush1.msra.mxu0 0.0
      %765 = vmatprep.subr.mxu0 0.0
      %766 = vmatpush1.msra.mxu0 0.0
      %767 = vmatprep.subr.mxu0 0.0
      %768 = vmatpush1.msra.mxu0 0.0
      %769 = vmatprep.subr.mxu0 0.0
      %770 = vmatpush1.msra.mxu0 0.0
      %771 = vmatprep.subr.mxu0 0.0
      %772 = vmatpush1.msra.mxu0 0.0
      %773 = vmatprep.subr.mxu0 0.0
      %774 = vmatpush1.msra.mxu0 0.0
      %775 = vmatprep.subr.mxu0 0.0
      %776 = vmatpush1.msra.mxu0 0.0
      %777 = vmatprep.subr.mxu0 0.0
      %778 = vmatpush1.msra.mxu0 0.0
      %779 = vmatprep.subr.mxu0 0.0
      %780 = vmatpush1.msra.mxu0 0.0
      %781 = vmatprep.subr.mxu0 0.0
      %782 = vmatpush1.msra.mxu0 0.0
      %783 = vmatprep.subr.mxu0 0.0
      %784 = vmatpush1.msra.mxu0 0.0
      %785 = vmatprep.subr.mxu0 0.0
      %786 = vmatpush1.msra.mxu0 0.0
      %787 = vmatprep.subr.mxu0 0.0
      %788 = vmatpush1.msra.mxu0 0.0
      %789 = vmatprep.subr.mxu0 0.0
      %790 = vmatpush1.msra.mxu0 0.0
      %791 = vmatprep.subr.mxu0 0.0
      %792 = vmatpush1.msra.mxu0 0.0
      %793 = vmatprep.subr.mxu0 0.0
      %794 = vmatpush1.msra.mxu0 0.0
      %795 = vmatprep.subr.mxu0 0.0
      %796 = vmatpush1.msra.mxu0 0.0
      %797 = vmatprep.subr.mxu0 0.0
      %798 = vmatpush1.msra.mxu0 0.0
      %799 = vmatprep.subr.mxu0 0.0
      %800 = vmatpush1.msra.mxu0 0.0
      %801 = vmatprep.subr.mxu0 0.0
      %802 = vmatpush1.msra.mxu0 0.0
      %803 = vmatprep.subr.mxu0 0.0
      %804 = vmatpush1.msra.mxu0 0.0
      %805 = vmatprep.subr.mxu0 0.0
      %806 = vmatpush1.msra.mxu0 0.0
      %807 = vmatprep.mubr.f32.mxu0 0.0
      %808 = vmatmul.mubr.f32.gmra.mrb[0].mxu0 %v659
      %v809 = vpop.f32.mrb[0].mxu0
      %v810 = vadd.f32 %v735, %v809
      %v811 = vpop.f32.mrb[0].mxu0
      %812 = vmatprep.mubr.f32.mxu0 0.0
      %813 = vmatmul.mubr.f32.gmra.mrb[0].mxu0 %v662
      %v814 = vpop.f32.mrb[0].mxu0
      %v815 = vadd.f32 %v740, %v814
      %v816 = vpop.f32.mrb[0].mxu0
      %817 = vdwg.mxu0
      %vm818 = vcmask 130048
      %v820 = vsel %vm818, %v602, 0
      %v823 = vsel %vm818, %v607, 0
      %v826 = vsel %vm818, %v612, 0
      %v829 = vsel %vm818, %v810, 0
      %v832 = vsel %vm818, %v815, 0
      %834 = vmatprep.subr.mxu0 0.0
      %835 = vmatpush1.xpose.msra.mxu0 %v829
      %836 = vmatprep.subr.mxu0 0.0
      %837 = vmatpush1.xpose.msra.mxu0 %v832
      %838 = vmatprep.subr.mxu0 0.0
      %839 = vmatpush1.xpose.msra.mxu0 0.0
      %840 = vmatprep.subr.mxu0 0.0
      %841 = vmatpush1.xpose.msra.mxu0 0.0
      %842 = vmatprep.subr.mxu0 0.0
      %843 = vmatpush1.xpose.msra.mxu0 0.0
      %844 = vmatprep.subr.mxu0 0.0
      %845 = vmatpush1.xpose.msra.mxu0 0.0
      %846 = vmatprep.subr.mxu0 0.0
      %847 = vmatpush1.xpose.msra.mxu0 0.0
      %848 = vmatprep.subr.mxu0 0.0
      %849 = vmatpush1.xpose.msra.mxu0 0.0
      %850 = vmatprep.subr.mxu0 0.0
      %851 = vmatpush1.xpose.msra.mxu0 0.0
      %852 = vmatprep.subr.mxu0 0.0
      %853 = vmatpush1.xpose.msra.mxu0 0.0
      %854 = vmatprep.subr.mxu0 0.0
      %855 = vmatpush1.xpose.msra.mxu0 0.0
      %856 = vmatprep.subr.mxu0 0.0
      %857 = vmatpush1.xpose.msra.mxu0 0.0
      %858 = vmatprep.subr.mxu0 0.0
      %859 = vmatpush1.xpose.msra.mxu0 0.0
      %860 = vmatprep.subr.mxu0 0.0
      %861 = vmatpush1.xpose.msra.mxu0 0.0
      %862 = vmatprep.subr.mxu0 0.0
      %863 = vmatpush1.xpose.msra.mxu0 0.0
      %864 = vmatprep.subr.mxu0 0.0
      %865 = vmatpush1.xpose.msra.mxu0 0.0
      %866 = vmatprep.subr.mxu0 0.0
      %867 = vmatpush1.xpose.msra.mxu0 0.0
      %868 = vmatprep.subr.mxu0 0.0
      %869 = vmatpush1.xpose.msra.mxu0 0.0
      %870 = vmatprep.subr.mxu0 0.0
      %871 = vmatpush1.xpose.msra.mxu0 0.0
      %872 = vmatprep.subr.mxu0 0.0
      %873 = vmatpush1.xpose.msra.mxu0 0.0
      %874 = vmatprep.subr.mxu0 0.0
      %875 = vmatpush1.xpose.msra.mxu0 0.0
      %876 = vmatprep.subr.mxu0 0.0
      %877 = vmatpush1.xpose.msra.mxu0 0.0
      %878 = vmatprep.subr.mxu0 0.0
      %879 = vmatpush1.xpose.msra.mxu0 0.0
      %880 = vmatprep.subr.mxu0 0.0
      %881 = vmatpush1.xpose.msra.mxu0 0.0
      %882 = vmatprep.subr.mxu0 0.0
      %883 = vmatpush1.xpose.msra.mxu0 0.0
      %884 = vmatprep.subr.mxu0 0.0
      %885 = vmatpush1.xpose.msra.mxu0 0.0
      %886 = vmatprep.subr.mxu0 0.0
      %887 = vmatpush1.xpose.msra.mxu0 0.0
      %888 = vmatprep.subr.mxu0 0.0
      %889 = vmatpush1.xpose.msra.mxu0 0.0
      %890 = vmatprep.subr.mxu0 0.0
      %891 = vmatpush1.xpose.msra.mxu0 0.0
      %892 = vmatprep.subr.mxu0 0.0
      %893 = vmatpush1.xpose.msra.mxu0 0.0
      %894 = vmatprep.subr.mxu0 0.0
      %895 = vmatpush1.xpose.msra.mxu0 0.0
      %896 = vmatprep.subr.mxu0 0.0
      %897 = vmatpush1.xpose.msra.mxu0 0.0
      %898 = vmatprep.mubr.f32.mxu0 0.0
      %899 = vmatmul.mubr.f32.gmra.mrb[0].mxu0 %v820
      %v900 = vpop.f32.mrb[0].mxu0
      %v901 = vadd.f32 0.0, %v900
      %v902 = vpop.f32.mrb[0].mxu0
      %903 = vmatprep.mubr.f32.mxu0 0.0
      %904 = vmatmul.mubr.f32.gmra.mrb[0].mxu0 %v823
      %v905 = vpop.f32.mrb[0].mxu0
      %v906 = vadd.f32 0.0, %v905
      %v907 = vpop.f32.mrb[0].mxu0
      %908 = vmatprep.mubr.f32.mxu0 0.0
      %909 = vmatmul.mubr.f32.gmra.mrb[0].mxu0 %v826
      %v910 = vpop.f32.mrb[0].mxu0
      %v911 = vadd.f32 0.0, %v910
      %v912 = vpop.f32.mrb[0].mxu0
      %913 = vdwg.mxu0
      %v914 = vmul.f32 %v901, 0.25
      %v915 = vmul.f32 %v906, 0.25
      %v916 = vmul.f32 %v911, 0.25
      %v918 = vlaneseq
      %v919 = vshrl.u32 %v918, 7
      %v920 = vsub.s32 0, %v919
      %v921 = vrot.slane %v513, %v920
      %v923 = vadd.f32 %v914, %v921
      %v924 = vadd.f32 %v915, %v921
      %v925 = vadd.f32 %v916, %v921
      %vm926 = vcmask 89088
      %v927 = vsel %vm926, %v923, -inf
      %928 = vmax.xlane.f32.xlu0 %v927
      %v929 = vpop.xlane.xlu0 %928
      %v930 = vsel %vm926, %v924, -inf
      %931 = vmax.xlane.f32.xlu0 %v930
      %v932 = vpop.xlane.xlu0 %931
      %vm933 = vcmask 83968
      %v934 = vsel %vm933, %v925, -inf
      %935 = vmax.xlane.f32.xlu0 %v934
      %v936 = vpop.xlane.xlu0 %935
      %v937 = vsub.f32 %v923, %v929
      %v938 = vsub.f32 %v924, %v932
      %v939 = vsub.f32 %v925, %v936
      %v940 = vmul.f32 %v937, 1.442695
      %v941 = vpow.pop %v940
      %v942 = vmul.f32 %v938, 1.442695
      %v943 = vpow.pop %v942
      %v944 = vmul.f32 %v939, 1.442695
      %v945 = vpow.pop %v944
      %v946 = vsel %vm926, %v941, 0.0
      %947 = vadd.xlane.f32.xlu0 %v946
      %v948 = vpop.xlane.xlu0 %947
      %v949 = vsel %vm926, %v943, 0.0
      %950 = vadd.xlane.f32.xlu0 %v949
      %v951 = vpop.xlane.xlu0 %950
      %v952 = vsel %vm933, %v945, 0.0
      %953 = vadd.xlane.f32.xlu0 %v952
      %v954 = vpop.xlane.xlu0 %953
      %v955 = vrcp.pop %v948
      %v956 = vmul.f32 %v941, %v955
      %v957 = vrcp.pop %v951
      %v958 = vmul.f32 %v943, %v957
      %v959 = vrcp.pop %v954
      %v960 = vmul.f32 %v945, %v959
      %v961 = vadd.f32 %v956, 0.0
      %v962 = vadd.f32 %v958, 0.0
      %v963 = vadd.f32 %v960, 0.0
      %964 = vmatprep.subr.mxu0 0.0
      %965 = vmatpush1.xpose.msra.mxu0 %v820
      %966 = vmatprep.subr.mxu0 0.0
      %967 = vmatpush1.xpose.msra.mxu0 %v823
      %968 = vmatprep.subr.mxu0 0.0
      %969 = vmatpush1.xpose.msra.mxu0 %v826
      %970 = vmatprep.subr.mxu0 0.0
      %971 = vmatpush1.xpose.msra.mxu0 0.0
      %972 = vmatprep.subr.mxu0 0.0
      %973 = vmatpush1.xpose.msra.mxu0 0.0
      %974 = vmatprep.subr.mxu0 0.0
      %975 = vmatpush1.xpose.msra.mxu0 0.0
      %976 = vmatprep.subr.mxu0 0.0
      %977 = vmatpush1.xpose.msra.mxu0 0.0
      %978 = vmatprep.subr.mxu0 0.0
      %979 = vmatpush1.xpose.msra.mxu0 0.0
      %980 = vmatprep.subr.mxu0 0.0
      %981 = vmatpush1.xpose.msra.mxu0 0.0
      %982 = vmatprep.subr.mxu0 0.0
      %983 = vmatpush1.xpose.msra.mxu0 0.0
      %984 = vmatprep.subr.mxu0 0.0
      %985 = vmatpush1.xpose.msra.mxu0 0.0
      %986 = vmatprep.subr.mxu0 0.0
      %987 = vmatpush1.xpose.msra.mxu0 0.0
      %988 = vmatprep.subr.mxu0 0.0
      %989 = vmatpush1.xpose.msra.mxu0 0.0
      %990 = vmatprep.subr.mxu0 0.0
      %991 = vmatpush1.xpose.msra.mxu0 0.0
      %992 = vmatprep.subr.mxu0 0.0
      %993 = vmatpush1.xpose.msra.mxu0 0.0
      %994 = vmatprep.subr.mxu0 0.0
      %995 = vmatpush1.xpose.msra.mxu0 0.0
      %996 = vmatprep.subr.mxu0 0.0
      %997 = vmatpush1.xpose.msra.mxu0 0.0
      %998 = vmatprep.subr.mxu0 0.0
      %999 = vmatpush1.xpose.msra.mxu0 0.0
      %1000 = vmatprep.subr.mxu0 0.0
      %1001 = vmatpush1.xpose.msra.mxu0 0.0
      %1002 = vmatprep.subr.mxu0 0.0
      %1003 = vmatpush1.xpose.msra.mxu0 0.0
      %1004 = vmatprep.subr.mxu0 0.0
      %1005 = vmatpush1.xpose.msra.mxu0 0.0
      %1006 = vmatprep.subr.mxu0 0.0
      %1007 = vmatpush1.xpose.msra.mxu0 0.0
      %1008 = vmatprep.subr.mxu0 0.0
      %1009 = vmatpush1.xpose.msra.mxu0 0.0
      %1010 = vmatprep.subr.mxu0 0.0
      %1011 = vmatpush1.xpose.msra.mxu0 0.0
      %1012 = vmatprep.subr.mxu0 0.0
      %1013 = vmatpush1.xpose.msra.mxu0 0.0
      %1014 = vmatprep.subr.mxu0 0.0
      %1015 = vmatpush1.xpose.msra.mxu0 0.0
      %1016 = vmatprep.subr.mxu0 0.0
      %1017 = vmatpush1.xpose.msra.mxu0 0.0
      %1018 = vmatprep.subr.mxu0 0.0
      %1019 = vmatpush1.xpose.msra.mxu0 0.0
      %1020 = vmatprep.subr.mxu0 0.0
      %1021 = vmatpush1.xpose.msra.mxu0 0.0
      %1022 = vmatprep.subr.mxu0 0.0
      %1023 = vmatpush1.xpose.msra.mxu0 0.0
      %1024 = vmatprep.subr.mxu0 0.0
      %1025 = vmatpush1.xpose.msra.mxu0 0.0
      %1026 = vmatprep.subr.mxu0 0.0
      %1027 = vmatpush1.xpose.msra.mxu0 0.0
      %1028 = vmatprep.mubr.f32.mxu0 0.0
      %1029 = vmatmul.mubr.f32.gmra.mrb[0].mxu0 %v829
      %v1030 = vpop.f32.mrb[0].mxu0
      %v1031 = vadd.f32 0.0, %v1030
      %v1032 = vpop.f32.mrb[0].mxu0
      %1033 = vmatprep.mubr.f32.mxu0 0.0
      %1034 = vmatmul.mubr.f32.gmra.mrb[0].mxu0 %v832
      %v1035 = vpop.f32.mrb[0].mxu0
      %v1036 = vadd.f32 0.0, %v1035
      %v1037 = vpop.f32.mrb[0].mxu0
      %1038 = vdwg.mxu0
      %v1039 = vmul.f32 %v1031, 0.25
      %v1040 = vmul.f32 %v1036, 0.25
      %v1042 = vlaneseq
      %v1043 = vshrl.u32 %v1042, 7
      %v1044 = vsub.s32 0, %v1043
      %v1045 = vrot.slane %v516, %v1044
      %v1047 = vadd.f32 %v1039, %v1045
      %v1048 = vadd.f32 %v1040, %v1045
      %vm1049 = vcmask 154624
      %v1050 = vsel %vm1049, %v1047, -inf
      %1051 = vmax.xlane.f32.xlu0 %v1050
      %v1052 = vpop.xlane.xlu0 %1051
      %vm1053 = vcmask 149504
      %v1054 = vsel %vm1053, %v1048, -inf
      %1055 = vmax.xlane.f32.xlu0 %v1054
      %v1056 = vpop.xlane.xlu0 %1055
      %v1057 = vsub.f32 %v1047, %v1052
      %v1058 = vsub.f32 %v1048, %v1056
      %v1059 = vmul.f32 %v1057, 1.442695
      %v1060 = vpow.pop %v1059
      %v1061 = vmul.f32 %v1058, 1.442695
      %v1062 = vpow.pop %v1061
      %v1063 = vsel %vm1049, %v1060, 0.0
      %1064 = vadd.xlane.f32.xlu0 %v1063
      %v1065 = vpop.xlane.xlu0 %1064
      %v1066 = vsel %vm1053, %v1062, 0.0
      %1067 = vadd.xlane.f32.xlu0 %v1066
      %v1068 = vpop.xlane.xlu0 %1067
      %v1069 = vrcp.pop %v1065
      %v1070 = vmul.f32 %v1060, %v1069
      %v1071 = vrcp.pop %v1068
      %v1072 = vmul.f32 %v1062, %v1071
      %v1073 = vadd.f32 %v1070, 0.0
      %v1074 = vadd.f32 %v1072, 0.0
      %1075 = vrot.lane.b32.xlu0 %v602, 112
      %v1076 = vpop.permute.xlu0 %1075
      %1077 = vrot.lane.b32.xlu0 %v607, 112
      %v1078 = vpop.permute.xlu0 %1077
      %1079 = vrot.lane.b32.xlu0 %v612, 112
      %v1080 = vpop.permute.xlu0 %1079
      %1081 = vrot.lane.b32.xlu0 %v810, 112
      %v1082 = vpop.permute.xlu0 %1081
      %1083 = vrot.lane.b32.xlu0 %v815, 112
      %v1084 = vpop.permute.xlu0 %1083
      %v1085 = vsel %vm818, %v1076, 0
      %v1087 = vsel %vm818, %v1078, 0
      %v1089 = vsel %vm818, %v1080, 0
      %v1091 = vsel %vm818, %v1082, 0
      %v1093 = vsel %vm818, %v1084, 0
      %1095 = vmatprep.subr.mxu0 0.0
      %1096 = vmatpush1.xpose.msra.mxu0 %v1091
      %1097 = vmatprep.subr.mxu0 0.0
      %1098 = vmatpush1.xpose.msra.mxu0 %v1093
      %1099 = vmatprep.subr.mxu0 0.0
      %1100 = vmatpush1.xpose.msra.mxu0 0.0
      %1101 = vmatprep.subr.mxu0 0.0
      %1102 = vmatpush1.xpose.msra.mxu0 0.0
      %1103 = vmatprep.subr.mxu0 0.0
      %1104 = vmatpush1.xpose.msra.mxu0 0.0
      %1105 = vmatprep.subr.mxu0 0.0
      %1106 = vmatpush1.xpose.msra.mxu0 0.0
      %1107 = vmatprep.subr.mxu0 0.0
      %1108 = vmatpush1.xpose.msra.mxu0 0.0
      %1109 = vmatprep.subr.mxu0 0.0
      %1110 = vmatpush1.xpose.msra.mxu0 0.0
      %1111 = vmatprep.subr.mxu0 0.0
      %1112 = vmatpush1.xpose.msra.mxu0 0.0
      %1113 = vmatprep.subr.mxu0 0.0
      %1114 = vmatpush1.xpose.msra.mxu0 0.0
      %1115 = vmatprep.subr.mxu0 0.0
      %1116 = vmatpush1.xpose.msra.mxu0 0.0
      %1117 = vmatprep.subr.mxu0 0.0
      %1118 = vmatpush1.xpose.msra.mxu0 0.0
      %1119 = vmatprep.subr.mxu0 0.0
      %1120 = vmatpush1.xpose.msra.mxu0 0.0
      %1121 = vmatprep.subr.mxu0 0.0
      %1122 = vmatpush1.xpose.msra.mxu0 0.0
      %1123 = vmatprep.subr.mxu0 0.0
      %1124 = vmatpush1.xpose.msra.mxu0 0.0
      %1125 = vmatprep.subr.mxu0 0.0
      %1126 = vmatpush1.xpose.msra.mxu0 0.0
      %1127 = vmatprep.subr.mxu0 0.0
      %1128 = vmatpush1.xpose.msra.mxu0 0.0
      %1129 = vmatprep.subr.mxu0 0.0
      %1130 = vmatpush1.xpose.msra.mxu0 0.0
      %1131 = vmatprep.subr.mxu0 0.0
      %1132 = vmatpush1.xpose.msra.mxu0 0.0
      %1133 = vmatprep.subr.mxu0 0.0
      %1134 = vmatpush1.xpose.msra.mxu0 0.0
      %1135 = vmatprep.subr.mxu0 0.0
      %1136 = vmatpush1.xpose.msra.mxu0 0.0
      %1137 = vmatprep.subr.mxu0 0.0
      %1138 = vmatpush1.xpose.msra.mxu0 0.0
      %1139 = vmatprep.subr.mxu0 0.0
      %1140 = vmatpush1.xpose.msra.mxu0 0.0
      %1141 = vmatprep.subr.mxu0 0.0
      %1142 = vmatpush1.xpose.msra.mxu0 0.0
      %1143 = vmatprep.subr.mxu0 0.0
      %1144 = vmatpush1.xpose.msra.mxu0 0.0
      %1145 = vmatprep.subr.mxu0 0.0
      %1146 = vmatpush1.xpose.msra.mxu0 0.0
      %1147 = vmatprep.subr.mxu0 0.0
      %1148 = vmatpush1.xpose.msra.mxu0 0.0
      %1149 = vmatprep.subr.mxu0 0.0
      %1150 = vmatpush1.xpose.msra.mxu0 0.0
      %1151 = vmatprep.subr.mxu0 0.0
      %1152 = vmatpush1.xpose.msra.mxu0 0.0
      %1153 = vmatprep.subr.mxu0 0.0
      %1154 = vmatpush1.xpose.msra.mxu0 0.0
      %1155 = vmatprep.subr.mxu0 0.0
      %1156 = vmatpush1.xpose.msra.mxu0 0.0
      %1157 = vmatprep.subr.mxu0 0.0
      %1158 = vmatpush1.xpose.msra.mxu0 0.0
      %1159 = vmatprep.mubr.f32.mxu0 0.0
      %1160 = vmatmul.mubr.f32.gmra.mrb[0].mxu0 %v1085
      %v1161 = vpop.f32.mrb[0].mxu0
      %v1162 = vadd.f32 0.0, %v1161
      %v1163 = vpop.f32.mrb[0].mxu0
      %1164 = vmatprep.mubr.f32.mxu0 0.0
      %1165 = vmatmul.mubr.f32.gmra.mrb[0].mxu0 %v1087
      %v1166 = vpop.f32.mrb[0].mxu0
      %v1167 = vadd.f32 0.0, %v1166
      %v1168 = vpop.f32.mrb[0].mxu0
      %1169 = vmatprep.mubr.f32.mxu0 0.0
      %1170 = vmatmul.mubr.f32.gmra.mrb[0].mxu0 %v1089
      %v1171 = vpop.f32.mrb[0].mxu0
      %v1172 = vadd.f32 0.0, %v1171
      %v1173 = vpop.f32.mrb[0].mxu0
      %1174 = vdwg.mxu0
      %v1175 = vmul.f32 %v1162, 0.25
      %v1176 = vmul.f32 %v1167, 0.25
      %v1177 = vmul.f32 %v1172, 0.25
      %v1178 = vadd.f32 %v1175, %v921
      %v1179 = vadd.f32 %v1176, %v921
      %v1180 = vadd.f32 %v1177, %v921
      %v1181 = vsel %vm926, %v1178, -inf
      %1182 = vmax.xlane.f32.xlu0 %v1181
      %v1183 = vpop.xlane.xlu0 %1182
      %v1184 = vsel %vm926, %v1179, -inf
      %1185 = vmax.xlane.f32.xlu0 %v1184
      %v1186 = vpop.xlane.xlu0 %1185
      %v1187 = vsel %vm933, %v1180, -inf
      %1188 = vmax.xlane.f32.xlu0 %v1187
      %v1189 = vpop.xlane.xlu0 %1188
      %v1190 = vsub.f32 %v1178, %v1183
      %v1191 = vsub.f32 %v1179, %v1186
      %v1192 = vsub.f32 %v1180, %v1189
      %v1193 = vmul.f32 %v1190, 1.442695
      %v1194 = vpow.pop %v1193
      %v1195 = vmul.f32 %v1191, 1.442695
      %v1196 = vpow.pop %v1195
      %v1197 = vmul.f32 %v1192, 1.442695
      %v1198 = vpow.pop %v1197
      %v1199 = vsel %vm926, %v1194, 0.0
      %1200 = vadd.xlane.f32.xlu0 %v1199
      %v1201 = vpop.xlane.xlu0 %1200
      %v1202 = vsel %vm926, %v1196, 0.0
      %1203 = vadd.xlane.f32.xlu0 %v1202
      %v1204 = vpop.xlane.xlu0 %1203
      %v1205 = vsel %vm933, %v1198, 0.0
      %1206 = vadd.xlane.f32.xlu0 %v1205
      %v1207 = vpop.xlane.xlu0 %1206
      %v1208 = vrcp.pop %v1201
      %v1209 = vmul.f32 %v1194, %v1208
      %v1210 = vrcp.pop %v1204
      %v1211 = vmul.f32 %v1196, %v1210
      %v1212 = vrcp.pop %v1207
      %v1213 = vmul.f32 %v1198, %v1212
      %v1214 = vadd.f32 %v961, %v1209
      %v1215 = vadd.f32 %v962, %v1211
      %v1216 = vadd.f32 %v963, %v1213
      %1217 = vmatprep.subr.mxu0 0.0
      %1218 = vmatpush1.xpose.msra.mxu0 %v1085
      %1219 = vmatprep.subr.mxu0 0.0
      %1220 = vmatpush1.xpose.msra.mxu0 %v1087
      %1221 = vmatprep.subr.mxu0 0.0
      %1222 = vmatpush1.xpose.msra.mxu0 %v1089
      %1223 = vmatprep.subr.mxu0 0.0
      %1224 = vmatpush1.xpose.msra.mxu0 0.0
      %1225 = vmatprep.subr.mxu0 0.0
      %1226 = vmatpush1.xpose.msra.mxu0 0.0
      %1227 = vmatprep.subr.mxu0 0.0
      %1228 = vmatpush1.xpose.msra.mxu0 0.0
      %1229 = vmatprep.subr.mxu0 0.0
      %1230 = vmatpush1.xpose.msra.mxu0 0.0
      %1231 = vmatprep.subr.mxu0 0.0
      %1232 = vmatpush1.xpose.msra.mxu0 0.0
      %1233 = vmatprep.subr.mxu0 0.0
      %1234 = vmatpush1.xpose.msra.mxu0 0.0
      %1235 = vmatprep.subr.mxu0 0.0
      %1236 = vmatpush1.xpose.msra.mxu0 0.0
      %1237 = vmatprep.subr.mxu0 0.0
      %1238 = vmatpush1.xpose.msra.mxu0 0.0
      %1239 = vmatprep.subr.mxu0 0.0
      %1240 = vmatpush1.xpose.msra.mxu0 0.0
      %1241 = vmatprep.subr.mxu0 0.0
      %1242 = vmatpush1.xpose.msra.mxu0 0.0
      %1243 = vmatprep.subr.mxu0 0.0
      %1244 = vmatpush1.xpose.msra.mxu0 0.0
      %1245 = vmatprep.subr.mxu0 0.0
      %1246 = vmatpush1.xpose.msra.mxu0 0.0
      %1247 = vmatprep.subr.mxu0 0.0
      %1248 = vmatpush1.xpose.msra.mxu0 0.0
      %1249 = vmatprep.subr.mxu0 0.0
      %1250 = vmatpush1.xpose.msra.mxu0 0.0
      %1251 = vmatprep.subr.mxu0 0.0
      %1252 = vmatpush1.xpose.msra.mxu0 0.0
      %1253 = vmatprep.subr.mxu0 0.0
      %1254 = vmatpush1.xpose.msra.mxu0 0.0
      %1255 = vmatprep.subr.mxu0 0.0
      %1256 = vmatpush1.xpose.msra.mxu0 0.0
      %1257 = vmatprep.subr.mxu0 0.0
      %1258 = vmatpush1.xpose.msra.mxu0 0.0
      %1259 = vmatprep.subr.mxu0 0.0
      %1260 = vmatpush1.xpose.msra.mxu0 0.0
      %1261 = vmatprep.subr.mxu0 0.0
      %1262 = vmatpush1.xpose.msra.mxu0 0.0
      %1263 = vmatprep.subr.mxu0 0.0
      %1264 = vmatpush1.xpose.msra.mxu0 0.0
      %1265 = vmatprep.subr.mxu0 0.0
      %1266 = vmatpush1.xpose.msra.mxu0 0.0
      %1267 = vmatprep.subr.mxu0 0.0
      %1268 = vmatpush1.xpose.msra.mxu0 0.0
      %1269 = vmatprep.subr.mxu0 0.0
      %1270 = vmatpush1.xpose.msra.mxu0 0.0
      %1271 = vmatprep.subr.mxu0 0.0
      %1272 = vmatpush1.xpose.msra.mxu0 0.0
      %1273 = vmatprep.subr.mxu0 0.0
      %1274 = vmatpush1.xpose.msra.mxu0 0.0
      %1275 = vmatprep.subr.mxu0 0.0
      %1276 = vmatpush1.xpose.msra.mxu0 0.0
      %1277 = vmatprep.subr.mxu0 0.0
      %1278 = vmatpush1.xpose.msra.mxu0 0.0
      %1279 = vmatprep.subr.mxu0 0.0
      %1280 = vmatpush1.xpose.msra.mxu0 0.0
      %1281 = vmatprep.mubr.f32.mxu0 0.0
      %1282 = vmatmul.mubr.f32.gmra.mrb[0].mxu0 %v1091
      %v1283 = vpop.f32.mrb[0].mxu0
      %v1284 = vadd.f32 0.0, %v1283
      %v1285 = vpop.f32.mrb[0].mxu0
      %1286 = vmatprep.mubr.f32.mxu0 0.0
      %1287 = vmatmul.mubr.f32.gmra.mrb[0].mxu0 %v1093
      %v1288 = vpop.f32.mrb[0].mxu0
      %v1289 = vadd.f32 0.0, %v1288
      %v1290 = vpop.f32.mrb[0].mxu0
      %1291 = vdwg.mxu0
      %v1292 = vmul.f32 %v1284, 0.25
      %v1293 = vmul.f32 %v1289, 0.25
      %v1294 = vadd.f32 %v1292, %v1045
      %v1295 = vadd.f32 %v1293, %v1045
      %v1296 = vsel %vm1049, %v1294, -inf
      %1297 = vmax.xlane.f32.xlu0 %v1296
      %v1298 = vpop.xlane.xlu0 %1297
      %v1299 = vsel %vm1053, %v1295, -inf
      %1300 = vmax.xlane.f32.xlu0 %v1299
      %v1301 = vpop.xlane.xlu0 %1300
      %v1302 = vsub.f32 %v1294, %v1298
      %v1303 = vsub.f32 %v1295, %v1301
      %v1304 = vmul.f32 %v1302, 1.442695
      %v1305 = vpow.pop %v1304
      %v1306 = vmul.f32 %v1303, 1.442695
      %v1307 = vpow.pop %v1306
      %v1308 = vsel %vm1049, %v1305, 0.0
      %1309 = vadd.xlane.f32.xlu0 %v1308
      %v1310 = vpop.xlane.xlu0 %1309
      %v1311 = vsel %vm1053, %v1307, 0.0
      %1312 = vadd.xlane.f32.xlu0 %v1311
      %v1313 = vpop.xlane.xlu0 %1312
      %v1314 = vrcp.pop %v1310
      %v1315 = vmul.f32 %v1305, %v1314
      %v1316 = vrcp.pop %v1313
      %v1317 = vmul.f32 %v1307, %v1316
      %v1318 = vadd.f32 %v1073, %v1315
      %v1319 = vadd.f32 %v1074, %v1317
      %1320 = vrot.lane.b32.xlu0 %v602, 96
      %v1321 = vpop.permute.xlu0 %1320
      %1322 = vrot.lane.b32.xlu0 %v607, 96
      %v1323 = vpop.permute.xlu0 %1322
      %1324 = vrot.lane.b32.xlu0 %v612, 96
      %v1325 = vpop.permute.xlu0 %1324
      %1326 = vrot.lane.b32.xlu0 %v810, 96
      %v1327 = vpop.permute.xlu0 %1326
      %1328 = vrot.lane.b32.xlu0 %v815, 96
      %v1329 = vpop.permute.xlu0 %1328
      %v1330 = vsel %vm818, %v1321, 0
      %v1332 = vsel %vm818, %v1323, 0
      %v1334 = vsel %vm818, %v1325, 0
      %v1336 = vsel %vm818, %v1327, 0
      %v1338 = vsel %vm818, %v1329, 0
      %1340 = vmatprep.subr.mxu0 0.0
      %1341 = vmatpush1.xpose.msra.mxu0 %v1336
      %1342 = vmatprep.subr.mxu0 0.0
      %1343 = vmatpush1.xpose.msra.mxu0 %v1338
      %1344 = vmatprep.subr.mxu0 0.0
      %1345 = vmatpush1.xpose.msra.mxu0 0.0
      %1346 = vmatprep.subr.mxu0 0.0
      %1347 = vmatpush1.xpose.msra.mxu0 0.0
      %1348 = vmatprep.subr.mxu0 0.0
      %1349 = vmatpush1.xpose.msra.mxu0 0.0
      %1350 = vmatprep.subr.mxu0 0.0
      %1351 = vmatpush1.xpose.msra.mxu0 0.0
      %1352 = vmatprep.subr.mxu0 0.0
      %1353 = vmatpush1.xpose.msra.mxu0 0.0
      %1354 = vmatprep.subr.mxu0 0.0
      %1355 = vmatpush1.xpose.msra.mxu0 0.0
      %1356 = vmatprep.subr.mxu0 0.0
      %1357 = vmatpush1.xpose.msra.mxu0 0.0
      %1358 = vmatprep.subr.mxu0 0.0
      %1359 = vmatpush1.xpose.msra.mxu0 0.0
      %1360 = vmatprep.subr.mxu0 0.0
      %1361 = vmatpush1.xpose.msra.mxu0 0.0
      %1362 = vmatprep.subr.mxu0 0.0
      %1363 = vmatpush1.xpose.msra.mxu0 0.0
      %1364 = vmatprep.subr.mxu0 0.0
      %1365 = vmatpush1.xpose.msra.mxu0 0.0
      %1366 = vmatprep.subr.mxu0 0.0
      %1367 = vmatpush1.xpose.msra.mxu0 0.0
      %1368 = vmatprep.subr.mxu0 0.0
      %1369 = vmatpush1.xpose.msra.mxu0 0.0
      %1370 = vmatprep.subr.mxu0 0.0
      %1371 = vmatpush1.xpose.msra.mxu0 0.0
      %1372 = vmatprep.subr.mxu0 0.0
      %1373 = vmatpush1.xpose.msra.mxu0 0.0
      %1374 = vmatprep.subr.mxu0 0.0
      %1375 = vmatpush1.xpose.msra.mxu0 0.0
      %1376 = vmatprep.subr.mxu0 0.0
      %1377 = vmatpush1.xpose.msra.mxu0 0.0
      %1378 = vmatprep.subr.mxu0 0.0
      %1379 = vmatpush1.xpose.msra.mxu0 0.0
      %1380 = vmatprep.subr.mxu0 0.0
      %1381 = vmatpush1.xpose.msra.mxu0 0.0
      %1382 = vmatprep.subr.mxu0 0.0
      %1383 = vmatpush1.xpose.msra.mxu0 0.0
      %1384 = vmatprep.subr.mxu0 0.0
      %1385 = vmatpush1.xpose.msra.mxu0 0.0
      %1386 = vmatprep.subr.mxu0 0.0
      %1387 = vmatpush1.xpose.msra.mxu0 0.0
      %1388 = vmatprep.subr.mxu0 0.0
      %1389 = vmatpush1.xpose.msra.mxu0 0.0
      %1390 = vmatprep.subr.mxu0 0.0
      %1391 = vmatpush1.xpose.msra.mxu0 0.0
      %1392 = vmatprep.subr.mxu0 0.0
      %1393 = vmatpush1.xpose.msra.mxu0 0.0
      %1394 = vmatprep.subr.mxu0 0.0
      %1395 = vmatpush1.xpose.msra.mxu0 0.0
      %1396 = vmatprep.subr.mxu0 0.0
      %1397 = vmatpush1.xpose.msra.mxu0 0.0
      %1398 = vmatprep.subr.mxu0 0.0
      %1399 = vmatpush1.xpose.msra.mxu0 0.0
      %1400 = vmatprep.subr.mxu0 0.0
      %1401 = vmatpush1.xpose.msra.mxu0 0.0
      %1402 = vmatprep.subr.mxu0 0.0
      %1403 = vmatpush1.xpose.msra.mxu0 0.0
      %1404 = vmatprep.mubr.f32.mxu0 0.0
      %1405 = vmatmul.mubr.f32.gmra.mrb[0].mxu0 %v1330
      %v1406 = vpop.f32.mrb[0].mxu0
      %v1407 = vadd.f32 0.0, %v1406
      %v1408 = vpop.f32.mrb[0].mxu0
      %1409 = vmatprep.mubr.f32.mxu0 0.0
      %1410 = vmatmul.mubr.f32.gmra.mrb[0].mxu0 %v1332
      %v1411 = vpop.f32.mrb[0].mxu0
      %v1412 = vadd.f32 0.0, %v1411
      %v1413 = vpop.f32.mrb[0].mxu0
      %1414 = vmatprep.mubr.f32.mxu0 0.0
      %1415 = vmatmul.mubr.f32.gmra.mrb[0].mxu0 %v1334
      %v1416 = vpop.f32.mrb[0].mxu0
      %v1417 = vadd.f32 0.0, %v1416
      %v1418 = vpop.f32.mrb[0].mxu0
      %1419 = vdwg.mxu0
      %v1420 = vmul.f32 %v1407, 0.25
      %v1421 = vmul.f32 %v1412, 0.25
      %v1422 = vmul.f32 %v1417, 0.25
      %v1423 = vadd.f32 %v1420, %v921
      %v1424 = vadd.f32 %v1421, %v921
      %v1425 = vadd.f32 %v1422, %v921
      %v1426 = vsel %vm926, %v1423, -inf
      %1427 = vmax.xlane.f32.xlu0 %v1426
      %v1428 = vpop.xlane.xlu0 %1427
      %v1429 = vsel %vm926, %v1424, -inf
      %1430 = vmax.xlane.f32.xlu0 %v1429
      %v1431 = vpop.xlane.xlu0 %1430
      %v1432 = vsel %vm933, %v1425, -inf
      %1433 = vmax.xlane.f32.xlu0 %v1432
      %v1434 = vpop.xlane.xlu0 %1433
      %v1435 = vsub.f32 %v1423, %v1428
      %v1436 = vsub.f32 %v1424, %v1431
      %v1437 = vsub.f32 %v1425, %v1434
      %v1438 = vmul.f32 %v1435, 1.442695
      %v1439 = vpow.pop %v1438
      %v1440 = vmul.f32 %v1436, 1.442695
      %v1441 = vpow.pop %v1440
      %v1442 = vmul.f32 %v1437, 1.442695
      %v1443 = vpow.pop %v1442
      %v1444 = vsel %vm926, %v1439, 0.0
      %1445 = vadd.xlane.f32.xlu0 %v1444
      %v1446 = vpop.xlane.xlu0 %1445
      %v1447 = vsel %vm926, %v1441, 0.0
      %1448 = vadd.xlane.f32.xlu0 %v1447
      %v1449 = vpop.xlane.xlu0 %1448
      %v1450 = vsel %vm933, %v1443, 0.0
      %1451 = vadd.xlane.f32.xlu0 %v1450
      %v1452 = vpop.xlane.xlu0 %1451
      %v1453 = vrcp.pop %v1446
      %v1454 = vmul.f32 %v1439, %v1453
      %v1455 = vrcp.pop %v1449
      %v1456 = vmul.f32 %v1441, %v1455
      %v1457 = vrcp.pop %v1452
      %v1458 = vmul.f32 %v1443, %v1457
      %v1459 = vadd.f32 %v1214, %v1454
      %v1460 = vadd.f32 %v1215, %v1456
      %v1461 = vadd.f32 %v1216, %v1458
      %1462 = vmatprep.subr.mxu0 0.0
      %1463 = vmatpush1.xpose.msra.mxu0 %v1330
      %1464 = vmatprep.subr.mxu0 0.0
      %1465 = vmatpush1.xpose.msra.mxu0 %v1332
      %1466 = vmatprep.subr.mxu0 0.0
      %1467 = vmatpush1.xpose.msra.mxu0 %v1334
      %1468 = vmatprep.subr.mxu0 0.0
      %1469 = vmatpush1.xpose.msra.mxu0 0.0
      %1470 = vmatprep.subr.mxu0 0.0
      %1471 = vmatpush1.xpose.msra.mxu0 0.0
      %1472 = vmatprep.subr.mxu0 0.0
      %1473 = vmatpush1.xpose.msra.mxu0 0.0
      %1474 = vmatprep.subr.mxu0 0.0
      %1475 = vmatpush1.xpose.msra.mxu0 0.0
      %1476 = vmatprep.subr.mxu0 0.0
      %1477 = vmatpush1.xpose.msra.mxu0 0.0
      %1478 = vmatprep.subr.mxu0 0.0
      %1479 = vmatpush1.xpose.msra.mxu0 0.0
      %1480 = vmatprep.subr.mxu0 0.0
      %1481 = vmatpush1.xpose.msra.mxu0 0.0
      %1482 = vmatprep.subr.mxu0 0.0
      %1483 = vmatpush1.xpose.msra.mxu0 0.0
      %1484 = vmatprep.subr.mxu0 0.0
      %1485 = vmatpush1.xpose.msra.mxu0 0.0
      %1486 = vmatprep.subr.mxu0 0.0
      %1487 = vmatpush1.xpose.msra.mxu0 0.0
      %1488 = vmatprep.subr.mxu0 0.0
      %1489 = vmatpush1.xpose.msra.mxu0 0.0
      %1490 = vmatprep.subr.mxu0 0.0
      %1491 = vmatpush1.xpose.msra.mxu0 0.0
      %1492 = vmatprep.subr.mxu0 0.0
      %1493 = vmatpush1.xpose.msra.mxu0 0.0
      %1494 = vmatprep.subr.mxu0 0.0
      %1495 = vmatpush1.xpose.msra.mxu0 0.0
      %1496 = vmatprep.subr.mxu0 0.0
      %1497 = vmatpush1.xpose.msra.mxu0 0.0
      %1498 = vmatprep.subr.mxu0 0.0
      %1499 = vmatpush1.xpose.msra.mxu0 0.0
      %1500 = vmatprep.subr.mxu0 0.0
      %1501 = vmatpush1.xpose.msra.mxu0 0.0
      %1502 = vmatprep.subr.mxu0 0.0
      %1503 = vmatpush1.xpose.msra.mxu0 0.0
      %1504 = vmatprep.subr.mxu0 0.0
      %1505 = vmatpush1.xpose.msra.mxu0 0.0
      %1506 = vmatprep.subr.mxu0 0.0
      %1507 = vmatpush1.xpose.msra.mxu0 0.0
      %1508 = vmatprep.subr.mxu0 0.0
      %1509 = vmatpush1.xpose.msra.mxu0 0.0
      %1510 = vmatprep.subr.mxu0 0.0
      %1511 = vmatpush1.xpose.msra.mxu0 0.0
      %1512 = vmatprep.subr.mxu0 0.0
      %1513 = vmatpush1.xpose.msra.mxu0 0.0
      %1514 = vmatprep.subr.mxu0 0.0
      %1515 = vmatpush1.xpose.msra.mxu0 0.0
      %1516 = vmatprep.subr.mxu0 0.0
      %1517 = vmatpush1.xpose.msra.mxu0 0.0
      %1518 = vmatprep.subr.mxu0 0.0
      %1519 = vmatpush1.xpose.msra.mxu0 0.0
      %1520 = vmatprep.subr.mxu0 0.0
      %1521 = vmatpush1.xpose.msra.mxu0 0.0
      %1522 = vmatprep.subr.mxu0 0.0
      %1523 = vmatpush1.xpose.msra.mxu0 0.0
      %1524 = vmatprep.subr.mxu0 0.0
      %1525 = vmatpush1.xpose.msra.mxu0 0.0
      %1526 = vmatprep.mubr.f32.mxu0 0.0
      %1527 = vmatmul.mubr.f32.gmra.mrb[0].mxu0 %v1336
      %v1528 = vpop.f32.mrb[0].mxu0
      %v1529 = vadd.f32 0.0, %v1528
      %v1530 = vpop.f32.mrb[0].mxu0
      %1531 = vmatprep.mubr.f32.mxu0 0.0
      %1532 = vmatmul.mubr.f32.gmra.mrb[0].mxu0 %v1338
      %v1533 = vpop.f32.mrb[0].mxu0
      %v1534 = vadd.f32 0.0, %v1533
      %v1535 = vpop.f32.mrb[0].mxu0
      %1536 = vdwg.mxu0
      %v1537 = vmul.f32 %v1529, 0.25
      %v1538 = vmul.f32 %v1534, 0.25
      %v1539 = vadd.f32 %v1537, %v1045
      %v1540 = vadd.f32 %v1538, %v1045
      %v1541 = vsel %vm1049, %v1539, -inf
      %1542 = vmax.xlane.f32.xlu0 %v1541
      %v1543 = vpop.xlane.xlu0 %1542
      %v1544 = vsel %vm1053, %v1540, -inf
      %1545 = vmax.xlane.f32.xlu0 %v1544
      %v1546 = vpop.xlane.xlu0 %1545
      %v1547 = vsub.f32 %v1539, %v1543
      %v1548 = vsub.f32 %v1540, %v1546
      %v1549 = vmul.f32 %v1547, 1.442695
      %v1550 = vpow.pop %v1549
      %v1551 = vmul.f32 %v1548, 1.442695
      %v1552 = vpow.pop %v1551
      %v1553 = vsel %vm1049, %v1550, 0.0
      %1554 = vadd.xlane.f32.xlu0 %v1553
      %v1555 = vpop.xlane.xlu0 %1554
      %v1556 = vsel %vm1053, %v1552, 0.0
      %1557 = vadd.xlane.f32.xlu0 %v1556
      %v1558 = vpop.xlane.xlu0 %1557
      %v1559 = vrcp.pop %v1555
      %v1560 = vmul.f32 %v1550, %v1559
      %v1561 = vrcp.pop %v1558
      %v1562 = vmul.f32 %v1552, %v1561
      %v1563 = vadd.f32 %v1318, %v1560
      %v1564 = vadd.f32 %v1319, %v1562
      %1565 = vrot.lane.b32.xlu0 %v602, 80
      %v1566 = vpop.permute.xlu0 %1565
      %1567 = vrot.lane.b32.xlu0 %v607, 80
      %v1568 = vpop.permute.xlu0 %1567
      %1569 = vrot.lane.b32.xlu0 %v612, 80
      %v1570 = vpop.permute.xlu0 %1569
      %1571 = vrot.lane.b32.xlu0 %v810, 80
      %v1572 = vpop.permute.xlu0 %1571
      %1573 = vrot.lane.b32.xlu0 %v815, 80
      %v1574 = vpop.permute.xlu0 %1573
      %v1575 = vsel %vm818, %v1566, 0
      %v1577 = vsel %vm818, %v1568, 0
      %v1579 = vsel %vm818, %v1570, 0
      %v1581 = vsel %vm818, %v1572, 0
      %v1583 = vsel %vm818, %v1574, 0
      %1585 = vmatprep.subr.mxu0 0.0
      %1586 = vmatpush1.xpose.msra.mxu0 %v1581
      %1587 = vmatprep.subr.mxu0 0.0
      %1588 = vmatpush1.xpose.msra.mxu0 %v1583
      %1589 = vmatprep.subr.mxu0 0.0
      %1590 = vmatpush1.xpose.msra.mxu0 0.0
      %1591 = vmatprep.subr.mxu0 0.0
      %1592 = vmatpush1.xpose.msra.mxu0 0.0
      %1593 = vmatprep.subr.mxu0 0.0
      %1594 = vmatpush1.xpose.msra.mxu0 0.0
      %1595 = vmatprep.subr.mxu0 0.0
      %1596 = vmatpush1.xpose.msra.mxu0 0.0
      %1597 = vmatprep.subr.mxu0 0.0
      %1598 = vmatpush1.xpose.msra.mxu0 0.0
      %1599 = vmatprep.subr.mxu0 0.0
      %1600 = vmatpush1.xpose.msra.mxu0 0.0
      %1601 = vmatprep.subr.mxu0 0.0
      %1602 = vmatpush1.xpose.msra.mxu0 0.0
      %1603 = vmatprep.subr.mxu0 0.0
      %1604 = vmatpush1.xpose.msra.mxu0 0.0
      %1605 = vmatprep.subr.mxu0 0.0
      %1606 = vmatpush1.xpose.msra.mxu0 0.0
      %1607 = vmatprep.subr.mxu0 0.0
      %1608 = vmatpush1.xpose.msra.mxu0 0.0
      %1609 = vmatprep.subr.mxu0 0.0
      %1610 = vmatpush1.xpose.msra.mxu0 0.0
      %1611 = vmatprep.subr.mxu0 0.0
      %1612 = vmatpush1.xpose.msra.mxu0 0.0
      %1613 = vmatprep.subr.mxu0 0.0
      %1614 = vmatpush1.xpose.msra.mxu0 0.0
      %1615 = vmatprep.subr.mxu0 0.0
      %1616 = vmatpush1.xpose.msra.mxu0 0.0
      %1617 = vmatprep.subr.mxu0 0.0
      %1618 = vmatpush1.xpose.msra.mxu0 0.0
      %1619 = vmatprep.subr.mxu0 0.0
      %1620 = vmatpush1.xpose.msra.mxu0 0.0
      %1621 = vmatprep.subr.mxu0 0.0
      %1622 = vmatpush1.xpose.msra.mxu0 0.0
      %1623 = vmatprep.subr.mxu0 0.0
      %1624 = vmatpush1.xpose.msra.mxu0 0.0
      %1625 = vmatprep.subr.mxu0 0.0
      %1626 = vmatpush1.xpose.msra.mxu0 0.0
      %1627 = vmatprep.subr.mxu0 0.0
      %1628 = vmatpush1.xpose.msra.mxu0 0.0
      %1629 = vmatprep.subr.mxu0 0.0
      %1630 = vmatpush1.xpose.msra.mxu0 0.0
      %1631 = vmatprep.subr.mxu0 0.0
      %1632 = vmatpush1.xpose.msra.mxu0 0.0
      %1633 = vmatprep.subr.mxu0 0.0
      %1634 = vmatpush1.xpose.msra.mxu0 0.0
      %1635 = vmatprep.subr.mxu0 0.0
      %1636 = vmatpush1.xpose.msra.mxu0 0.0
      %1637 = vmatprep.subr.mxu0 0.0
      %1638 = vmatpush1.xpose.msra.mxu0 0.0
      %1639 = vmatprep.subr.mxu0 0.0
      %1640 = vmatpush1.xpose.msra.mxu0 0.0
      %1641 = vmatprep.subr.mxu0 0.0
      %1642 = vmatpush1.xpose.msra.mxu0 0.0
      %1643 = vmatprep.subr.mxu0 0.0
      %1644 = vmatpush1.xpose.msra.mxu0 0.0
      %1645 = vmatprep.subr.mxu0 0.0
      %1646 = vmatpush1.xpose.msra.mxu0 0.0
      %1647 = vmatprep.subr.mxu0 0.0
      %1648 = vmatpush1.xpose.msra.mxu0 0.0
      %1649 = vmatprep.mubr.f32.mxu0 0.0
      %1650 = vmatmul.mubr.f32.gmra.mrb[0].mxu0 %v1575
      %v1651 = vpop.f32.mrb[0].mxu0
      %v1652 = vadd.f32 0.0, %v1651
      %v1653 = vpop.f32.mrb[0].mxu0
      %1654 = vmatprep.mubr.f32.mxu0 0.0
      %1655 = vmatmul.mubr.f32.gmra.mrb[0].mxu0 %v1577
      %v1656 = vpop.f32.mrb[0].mxu0
      %v1657 = vadd.f32 0.0, %v1656
      %v1658 = vpop.f32.mrb[0].mxu0
      %1659 = vmatprep.mubr.f32.mxu0 0.0
      %1660 = vmatmul.mubr.f32.gmra.mrb[0].mxu0 %v1579
      %v1661 = vpop.f32.mrb[0].mxu0
      %v1662 = vadd.f32 0.0, %v1661
      %v1663 = vpop.f32.mrb[0].mxu0
      %1664 = vdwg.mxu0
      %v1665 = vmul.f32 %v1652, 0.25
      %v1666 = vmul.f32 %v1657, 0.25
      %v1667 = vmul.f32 %v1662, 0.25
      %v1668 = vadd.f32 %v1665, %v921
      %v1669 = vadd.f32 %v1666, %v921
      %v1670 = vadd.f32 %v1667, %v921
      %v1671 = vsel %vm926, %v1668, -inf
      %1672 = vmax.xlane.f32.xlu0 %v1671
      %v1673 = vpop.xlane.xlu0 %1672
      %v1674 = vsel %vm926, %v1669, -inf
      %1675 = vmax.xlane.f32.xlu0 %v1674
      %v1676 = vpop.xlane.xlu0 %1675
      %v1677 = vsel %vm933, %v1670, -inf
      %1678 = vmax.xlane.f32.xlu0 %v1677
      %v1679 = vpop.xlane.xlu0 %1678
      %v1680 = vsub.f32 %v1668, %v1673
      %v1681 = vsub.f32 %v1669, %v1676
      %v1682 = vsub.f32 %v1670, %v1679
      %v1683 = vmul.f32 %v1680, 1.442695
      %v1684 = vpow.pop %v1683
      %v1685 = vmul.f32 %v1681, 1.442695
      %v1686 = vpow.pop %v1685
      %v1687 = vmul.f32 %v1682, 1.442695
      %v1688 = vpow.pop %v1687
      %v1689 = vsel %vm926, %v1684, 0.0
      %1690 = vadd.xlane.f32.xlu0 %v1689
      %v1691 = vpop.xlane.xlu0 %1690
      %v1692 = vsel %vm926, %v1686, 0.0
      %1693 = vadd.xlane.f32.xlu0 %v1692
      %v1694 = vpop.xlane.xlu0 %1693
      %v1695 = vsel %vm933, %v1688, 0.0
      %1696 = vadd.xlane.f32.xlu0 %v1695
      %v1697 = vpop.xlane.xlu0 %1696
      %v1698 = vrcp.pop %v1691
      %v1699 = vmul.f32 %v1684, %v1698
      %v1700 = vrcp.pop %v1694
      %v1701 = vmul.f32 %v1686, %v1700
      %v1702 = vrcp.pop %v1697
      %v1703 = vmul.f32 %v1688, %v1702
      %v1704 = vadd.f32 %v1459, %v1699
      %v1705 = vadd.f32 %v1460, %v1701
      %v1706 = vadd.f32 %v1461, %v1703
      %1707 = vmatprep.subr.mxu0 0.0
      %1708 = vmatpush1.xpose.msra.mxu0 %v1575
      %1709 = vmatprep.subr.mxu0 0.0
      %1710 = vmatpush1.xpose.msra.mxu0 %v1577
      %1711 = vmatprep.subr.mxu0 0.0
      %1712 = vmatpush1.xpose.msra.mxu0 %v1579
      %1713 = vmatprep.subr.mxu0 0.0
      %1714 = vmatpush1.xpose.msra.mxu0 0.0
      %1715 = vmatprep.subr.mxu0 0.0
      %1716 = vmatpush1.xpose.msra.mxu0 0.0
      %1717 = vmatprep.subr.mxu0 0.0
      %1718 = vmatpush1.xpose.msra.mxu0 0.0
      %1719 = vmatprep.subr.mxu0 0.0
      %1720 = vmatpush1.xpose.msra.mxu0 0.0
      %1721 = vmatprep.subr.mxu0 0.0
      %1722 = vmatpush1.xpose.msra.mxu0 0.0
      %1723 = vmatprep.subr.mxu0 0.0
      %1724 = vmatpush1.xpose.msra.mxu0 0.0
      %1725 = vmatprep.subr.mxu0 0.0
      %1726 = vmatpush1.xpose.msra.mxu0 0.0
      %1727 = vmatprep.subr.mxu0 0.0
      %1728 = vmatpush1.xpose.msra.mxu0 0.0
      %1729 = vmatprep.subr.mxu0 0.0
      %1730 = vmatpush1.xpose.msra.mxu0 0.0
      %1731 = vmatprep.subr.mxu0 0.0
      %1732 = vmatpush1.xpose.msra.mxu0 0.0
      %1733 = vmatprep.subr.mxu0 0.0
      %1734 = vmatpush1.xpose.msra.mxu0 0.0
      %1735 = vmatprep.subr.mxu0 0.0
      %1736 = vmatpush1.xpose.msra.mxu0 0.0
      %1737 = vmatprep.subr.mxu0 0.0
      %1738 = vmatpush1.xpose.msra.mxu0 0.0
      %1739 = vmatprep.subr.mxu0 0.0
      %1740 = vmatpush1.xpose.msra.mxu0 0.0
      %1741 = vmatprep.subr.mxu0 0.0
      %1742 = vmatpush1.xpose.msra.mxu0 0.0
      %1743 = vmatprep.subr.mxu0 0.0
      %1744 = vmatpush1.xpose.msra.mxu0 0.0
      %1745 = vmatprep.subr.mxu0 0.0
      %1746 = vmatpush1.xpose.msra.mxu0 0.0
      %1747 = vmatprep.subr.mxu0 0.0
      %1748 = vmatpush1.xpose.msra.mxu0 0.0
      %1749 = vmatprep.subr.mxu0 0.0
      %1750 = vmatpush1.xpose.msra.mxu0 0.0
      %1751 = vmatprep.subr.mxu0 0.0
      %1752 = vmatpush1.xpose.msra.mxu0 0.0
      %1753 = vmatprep.subr.mxu0 0.0
      %1754 = vmatpush1.xpose.msra.mxu0 0.0
      %1755 = vmatprep.subr.mxu0 0.0
      %1756 = vmatpush1.xpose.msra.mxu0 0.0
      %1757 = vmatprep.subr.mxu0 0.0
      %1758 = vmatpush1.xpose.msra.mxu0 0.0
      %1759 = vmatprep.subr.mxu0 0.0
      %1760 = vmatpush1.xpose.msra.mxu0 0.0
      %1761 = vmatprep.subr.mxu0 0.0
      %1762 = vmatpush1.xpose.msra.mxu0 0.0
      %1763 = vmatprep.subr.mxu0 0.0
      %1764 = vmatpush1.xpose.msra.mxu0 0.0
      %1765 = vmatprep.subr.mxu0 0.0
      %1766 = vmatpush1.xpose.msra.mxu0 0.0
      %1767 = vmatprep.subr.mxu0 0.0
      %1768 = vmatpush1.xpose.msra.mxu0 0.0
      %1769 = vmatprep.subr.mxu0 0.0
      %1770 = vmatpush1.xpose.msra.mxu0 0.0
      %1771 = vmatprep.mubr.f32.mxu0 0.0
      %1772 = vmatmul.mubr.f32.gmra.mrb[0].mxu0 %v1581
      %v1773 = vpop.f32.mrb[0].mxu0
      %v1774 = vadd.f32 0.0, %v1773
      %v1775 = vpop.f32.mrb[0].mxu0
      %1776 = vmatprep.mubr.f32.mxu0 0.0
      %1777 = vmatmul.mubr.f32.gmra.mrb[0].mxu0 %v1583
      %v1778 = vpop.f32.mrb[0].mxu0
      %v1779 = vadd.f32 0.0, %v1778
      %v1780 = vpop.f32.mrb[0].mxu0
      %1781 = vdwg.mxu0
      %v1782 = vmul.f32 %v1774, 0.25
      %v1783 = vmul.f32 %v1779, 0.25
      %v1784 = vadd.f32 %v1782, %v1045
      %v1785 = vadd.f32 %v1783, %v1045
      %v1786 = vsel %vm1049, %v1784, -inf
      %1787 = vmax.xlane.f32.xlu0 %v1786
      %v1788 = vpop.xlane.xlu0 %1787
      %v1789 = vsel %vm1053, %v1785, -inf
      %1790 = vmax.xlane.f32.xlu0 %v1789
      %v1791 = vpop.xlane.xlu0 %1790
      %v1792 = vsub.f32 %v1784, %v1788
      %v1793 = vsub.f32 %v1785, %v1791
      %v1794 = vmul.f32 %v1792, 1.442695
      %v1795 = vpow.pop %v1794
      %v1796 = vmul.f32 %v1793, 1.442695
      %v1797 = vpow.pop %v1796
      %v1798 = vsel %vm1049, %v1795, 0.0
      %1799 = vadd.xlane.f32.xlu0 %v1798
      %v1800 = vpop.xlane.xlu0 %1799
      %v1801 = vsel %vm1053, %v1797, 0.0
      %1802 = vadd.xlane.f32.xlu0 %v1801
      %v1803 = vpop.xlane.xlu0 %1802
      %v1804 = vrcp.pop %v1800
      %v1805 = vmul.f32 %v1795, %v1804
      %v1806 = vrcp.pop %v1803
      %v1807 = vmul.f32 %v1797, %v1806
      %v1808 = vadd.f32 %v1563, %v1805
      %v1809 = vadd.f32 %v1564, %v1807
      %v1811 = vsel %vm926, %v1704, 0
      %v1814 = vsel %vm926, %v1705, 0
      %v1817 = vsel %vm926, %v1706, 0
      %vm1819 = vcmask 1042432
      %v1821 = vsel %vm1819, %v508, 0
      %v1824 = vsel %vm1819, %v509, 0
      %v1826 = vsel %vm1819, %v510, 0
      %1828 = vmatprep.subr.mxu0 %v506
      %1829 = vmatpush1.msra.mxu0 %v505
      %1830 = vmatprep.subr.mxu0 %v1824
      %1831 = vmatpush1.msra.mxu0 %v1821
      %1832 = vmatprep.subr.mxu0 0.0
      %1833 = vmatpush1.msra.mxu0 0.0
      %1834 = vmatprep.subr.mxu0 0.0
      %1835 = vmatpush1.msra.mxu0 0.0
      %1836 = vmatprep.subr.mxu0 0.0
      %1837 = vmatpush1.msra.mxu0 0.0
      %1838 = vmatprep.subr.mxu0 0.0
      %1839 = vmatpush1.msra.mxu0 0.0
      %1840 = vmatprep.subr.mxu0 0.0
      %1841 = vmatpush1.msra.mxu0 0.0
      %1842 = vmatprep.subr.mxu0 0.0
      %1843 = vmatpush1.msra.mxu0 0.0
      %1844 = vmatprep.subr.mxu0 0.0
      %1845 = vmatpush1.msra.mxu0 0.0
      %1846 = vmatprep.subr.mxu0 0.0
      %1847 = vmatpush1.msra.mxu0 0.0
      %1848 = vmatprep.subr.mxu0 0.0
      %1849 = vmatpush1.msra.mxu0 0.0
      %1850 = vmatprep.subr.mxu0 0.0
      %1851 = vmatpush1.msra.mxu0 0.0
      %1852 = vmatprep.subr.mxu0 0.0
      %1853 = vmatpush1.msra.mxu0 0.0
      %1854 = vmatprep.subr.mxu0 0.0
      %1855 = vmatpush1.msra.mxu0 0.0
      %1856 = vmatprep.subr.mxu0 0.0
      %1857 = vmatpush1.msra.mxu0 0.0
      %1858 = vmatprep.subr.mxu0 0.0
      %1859 = vmatpush1.msra.mxu0 0.0
      %1860 = vmatprep.subr.mxu0 0.0
      %1861 = vmatpush1.msra.mxu0 0.0
      %1862 = vmatprep.subr.mxu0 0.0
      %1863 = vmatpush1.msra.mxu0 0.0
      %1864 = vmatprep.subr.mxu0 0.0
      %1865 = vmatpush1.msra.mxu0 0.0
      %1866 = vmatprep.subr.mxu0 0.0
      %1867 = vmatpush1.msra.mxu0 0.0
      %1868 = vmatprep.subr.mxu0 0.0
      %1869 = vmatpush1.msra.mxu0 0.0
      %1870 = vmatprep.subr.mxu0 0.0
      %1871 = vmatpush1.msra.mxu0 0.0
      %1872 = vmatprep.subr.mxu0 0.0
      %1873 = vmatpush1.msra.mxu0 0.0
      %1874 = vmatprep.subr.mxu0 0.0
      %1875 = vmatpush1.msra.mxu0 0.0
      %1876 = vmatprep.subr.mxu0 0.0
      %1877 = vmatpush1.msra.mxu0 0.0
      %1878 = vmatprep.subr.mxu0 0.0
      %1879 = vmatpush1.msra.mxu0 0.0
      %1880 = vmatprep.subr.mxu0 0.0
      %1881 = vmatpush1.msra.mxu0 0.0
      %1882 = vmatprep.subr.mxu0 0.0
      %1883 = vmatpush1.msra.mxu0 0.0
      %1884 = vmatprep.subr.mxu0 0.0
      %1885 = vmatpush1.msra.mxu0 0.0
      %1886 = vmatprep.subr.mxu0 0.0
      %1887 = vmatpush1.msra.mxu0 0.0
      %1888 = vmatprep.subr.mxu0 0.0
      %1889 = vmatpush1.msra.mxu0 0.0
      %1890 = vmatprep.subr.mxu0 0.0
      %1891 = vmatpush1.msra.mxu0 0.0
      %1892 = vmatprep.mubr.f32.mxu0 0.0
      %1893 = vmatmul.mubr.f32.gmra.mrb[0].mxu0 %v1811
      %v1894 = vpop.f32.mrb[0].mxu0
      %v1895 = vadd.f32 0.0, %v1894
      %v1896 = vpop.f32.mrb[0].mxu0
      %v1897 = vadd.f32 0.0, %v1896
      %1898 = vmatprep.mubr.f32.mxu0 0.0
      %1899 = vmatmul.mubr.f32.gmra.mrb[0].mxu0 %v1814
      %v1900 = vpop.f32.mrb[0].mxu0
      %v1901 = vadd.f32 0.0, %v1900
      %v1902 = vpop.f32.mrb[0].mxu0
      %v1903 = vadd.f32 0.0, %v1902
      %1904 = vmatprep.mubr.f32.mxu0 0.0
      %1905 = vmatmul.mubr.f32.gmra.mrb[0].mxu0 %v1817
      %v1906 = vpop.f32.mrb[0].mxu0
      %v1907 = vpop.f32.mrb[0].mxu0
      %1908 = vdwg.mxu0
      %1909 = vmatprep.subr.mxu0 0.0
      %1910 = vmatpush1.msra.mxu0 %v507
      %1911 = vmatprep.subr.mxu0 0.0
      %1912 = vmatpush1.msra.mxu0 %v1826
      %1913 = vmatprep.subr.mxu0 0.0
      %1914 = vmatpush1.msra.mxu0 0.0
      %1915 = vmatprep.subr.mxu0 0.0
      %1916 = vmatpush1.msra.mxu0 0.0
      %1917 = vmatprep.subr.mxu0 0.0
      %1918 = vmatpush1.msra.mxu0 0.0
      %1919 = vmatprep.subr.mxu0 0.0
      %1920 = vmatpush1.msra.mxu0 0.0
      %1921 = vmatprep.subr.mxu0 0.0
      %1922 = vmatpush1.msra.mxu0 0.0
      %1923 = vmatprep.subr.mxu0 0.0
      %1924 = vmatpush1.msra.mxu0 0.0
      %1925 = vmatprep.subr.mxu0 0.0
      %1926 = vmatpush1.msra.mxu0 0.0
      %1927 = vmatprep.subr.mxu0 0.0
      %1928 = vmatpush1.msra.mxu0 0.0
      %1929 = vmatprep.subr.mxu0 0.0
      %1930 = vmatpush1.msra.mxu0 0.0
      %1931 = vmatprep.subr.mxu0 0.0
      %1932 = vmatpush1.msra.mxu0 0.0
      %1933 = vmatprep.subr.mxu0 0.0
      %1934 = vmatpush1.msra.mxu0 0.0
      %1935 = vmatprep.subr.mxu0 0.0
      %1936 = vmatpush1.msra.mxu0 0.0
      %1937 = vmatprep.subr.mxu0 0.0
      %1938 = vmatpush1.msra.mxu0 0.0
      %1939 = vmatprep.subr.mxu0 0.0
      %1940 = vmatpush1.msra.mxu0 0.0
      %1941 = vmatprep.subr.mxu0 0.0
      %1942 = vmatpush1.msra.mxu0 0.0
      %1943 = vmatprep.subr.mxu0 0.0
      %1944 = vmatpush1.msra.mxu0 0.0
      %1945 = vmatprep.subr.mxu0 0.0
      %1946 = vmatpush1.msra.mxu0 0.0
      %1947 = vmatprep.subr.mxu0 0.0
      %1948 = vmatpush1.msra.mxu0 0.0
      %1949 = vmatprep.subr.mxu0 0.0
      %1950 = vmatpush1.msra.mxu0 0.0
      %1951 = vmatprep.subr.mxu0 0.0
      %1952 = vmatpush1.msra.mxu0 0.0
      %1953 = vmatprep.subr.mxu0 0.0
      %1954 = vmatpush1.msra.mxu0 0.0
      %1955 = vmatprep.subr.mxu0 0.0
      %1956 = vmatpush1.msra.mxu0 0.0
      %1957 = vmatprep.subr.mxu0 0.0
      %1958 = vmatpush1.msra.mxu0 0.0
      %1959 = vmatprep.subr.mxu0 0.0
      %1960 = vmatpush1.msra.mxu0 0.0
      %1961 = vmatprep.subr.mxu0 0.0
      %1962 = vmatpush1.msra.mxu0 0.0
      %1963 = vmatprep.subr.mxu0 0.0
      %1964 = vmatpush1.msra.mxu0 0.0
      %1965 = vmatprep.subr.mxu0 0.0
      %1966 = vmatpush1.msra.mxu0 0.0
      %1967 = vmatprep.subr.mxu0 0.0
      %1968 = vmatpush1.msra.mxu0 0.0
      %1969 = vmatprep.subr.mxu0 0.0
      %1970 = vmatpush1.msra.mxu0 0.0
      %1971 = vmatprep.subr.mxu0 0.0
      %1972 = vmatpush1.msra.mxu0 0.0
      %1973 = vmatprep.mubr.f32.mxu0 0.0
      %1974 = vmatmul.mubr.f32.gmra.mrb[0].mxu0 %v1811
      %v1975 = vpop.f32.mrb[0].mxu0
      %v1976 = vadd.f32 0.0, %v1975
      %v1977 = vpop.f32.mrb[0].mxu0
      %1978 = vmatprep.mubr.f32.mxu0 0.0
      %1979 = vmatmul.mubr.f32.gmra.mrb[0].mxu0 %v1814
      %v1980 = vpop.f32.mrb[0].mxu0
      %v1981 = vadd.f32 0.0, %v1980
      %v1982 = vpop.f32.mrb[0].mxu0
      %1983 = vmatprep.mubr.f32.mxu0 0.0
      %1984 = vmatmul.mubr.f32.gmra.mrb[0].mxu0 %v1817
      %v1985 = vpop.f32.mrb[0].mxu0
      %v1986 = vpop.f32.mrb[0].mxu0
      %1987 = vdwg.mxu0
      %v1988 = vmul.f32 %v1895, 0.25
      %v1989 = vmul.f32 %v1897, 0.25
      %v1990 = vmul.f32 %v1976, 0.25
      %v1991 = vmul.f32 %v1901, 0.25
      %v1992 = vmul.f32 %v1903, 0.25
      %v1993 = vmul.f32 %v1981, 0.25
      %v1995 = vsel %vm1049, %v1808, 0
      %v1998 = vsel %vm1049, %v1809, 0
      %v2000 = vsel %vm1819, %v504, 0
      %2002 = vmatprep.subr.mxu0 0.0
      %2003 = vmatpush1.msra.mxu0 %v502
      %2004 = vmatprep.subr.mxu0 0.0
      %2005 = vmatpush1.msra.mxu0 %v503
      %2006 = vmatprep.subr.mxu0 0.0
      %2007 = vmatpush1.msra.mxu0 %v2000
      %2008 = vmatprep.subr.mxu0 0.0
      %2009 = vmatpush1.msra.mxu0 0.0
      %2010 = vmatprep.subr.mxu0 0.0
      %2011 = vmatpush1.msra.mxu0 0.0
      %2012 = vmatprep.subr.mxu0 0.0
      %2013 = vmatpush1.msra.mxu0 0.0
      %2014 = vmatprep.subr.mxu0 0.0
      %2015 = vmatpush1.msra.mxu0 0.0
      %2016 = vmatprep.subr.mxu0 0.0
      %2017 = vmatpush1.msra.mxu0 0.0
      %2018 = vmatprep.subr.mxu0 0.0
      %2019 = vmatpush1.msra.mxu0 0.0
      %2020 = vmatprep.subr.mxu0 0.0
      %2021 = vmatpush1.msra.mxu0 0.0
      %2022 = vmatprep.subr.mxu0 0.0
      %2023 = vmatpush1.msra.mxu0 0.0
      %2024 = vmatprep.subr.mxu0 0.0
      %2025 = vmatpush1.msra.mxu0 0.0
      %2026 = vmatprep.subr.mxu0 0.0
      %2027 = vmatpush1.msra.mxu0 0.0
      %2028 = vmatprep.subr.mxu0 0.0
      %2029 = vmatpush1.msra.mxu0 0.0
      %2030 = vmatprep.subr.mxu0 0.0
      %2031 = vmatpush1.msra.mxu0 0.0
      %2032 = vmatprep.subr.mxu0 0.0
      %2033 = vmatpush1.msra.mxu0 0.0
      %2034 = vmatprep.subr.mxu0 0.0
      %2035 = vmatpush1.msra.mxu0 0.0
      %2036 = vmatprep.subr.mxu0 0.0
      %2037 = vmatpush1.msra.mxu0 0.0
      %2038 = vmatprep.subr.mxu0 0.0
      %2039 = vmatpush1.msra.mxu0 0.0
      %2040 = vmatprep.subr.mxu0 0.0
      %2041 = vmatpush1.msra.mxu0 0.0
      %2042 = vmatprep.subr.mxu0 0.0
      %2043 = vmatpush1.msra.mxu0 0.0
      %2044 = vmatprep.subr.mxu0 0.0
      %2045 = vmatpush1.msra.mxu0 0.0
      %2046 = vmatprep.subr.mxu0 0.0
      %2047 = vmatpush1.msra.mxu0 0.0
      %2048 = vmatprep.subr.mxu0 0.0
      %2049 = vmatpush1.msra.mxu0 0.0
      %2050 = vmatprep.subr.mxu0 0.0
      %2051 = vmatpush1.msra.mxu0 0.0
      %2052 = vmatprep.subr.mxu0 0.0
      %2053 = vmatpush1.msra.mxu0 0.0
      %2054 = vmatprep.subr.mxu0 0.0
      %2055 = vmatpush1.msra.mxu0 0.0
      %2056 = vmatprep.subr.mxu0 0.0
      %2057 = vmatpush1.msra.mxu0 0.0
      %2058 = vmatprep.subr.mxu0 0.0
      %2059 = vmatpush1.msra.mxu0 0.0
      %2060 = vmatprep.subr.mxu0 0.0
      %2061 = vmatpush1.msra.mxu0 0.0
      %2062 = vmatprep.subr.mxu0 0.0
      %2063 = vmatpush1.msra.mxu0 0.0
      %2064 = vmatprep.subr.mxu0 0.0
      %2065 = vmatpush1.msra.mxu0 0.0
      %2066 = vmatprep.mubr.f32.mxu0 0.0
      %2067 = vmatmul.mubr.f32.gmra.mrb[0].mxu0 %v1995
      %v2068 = vpop.f32.mrb[0].mxu0
      %v2069 = vadd.f32 0.0, %v2068
      %v2070 = vpop.f32.mrb[0].mxu0
      %2071 = vmatprep.mubr.f32.mxu0 0.0
      %2072 = vmatmul.mubr.f32.gmra.mrb[0].mxu0 %v1998
      %v2073 = vpop.f32.mrb[0].mxu0
      %v2074 = vpop.f32.mrb[0].mxu0
      %2075 = vdwg.mxu0
      %v2076 = vmul.f32 %v2069, 0.25
      %v2077 = vld [vmem:[%s6] sm:$0xff]
      %v2078 = vld [vmem:[%s6 + $0x8] sm:$0xff]
      %v2079 = vld [vmem:[%s6 + $0x10] sm:$0xff]
      %v2080 = vld [vmem:[%s6 + $0x18] sm:$0xff]
      %v2081 = vld [vmem:[%s6 + $0x20] sm:$0xff]
      %v2082 = vld [vmem:[%s6 + $0x28] sm:$0xff]
      %v2083 = vld [vmem:[%s6 + $0x30] sm:$0xff]
      %v2084 = vld [vmem:[%s6 + $0x38] sm:$0xff]
      %v2085 = vld [vmem:[%s7] sm:$0xff]
      %v2086 = vld [vmem:[%s7 + $0x8] sm:$0xff]
      %v2087 = vld [vmem:[%s7 + $0x10] sm:$0xff]
      %v2088 = vld [vmem:[%s7 + $0x18] sm:$0xff]
      %v2089 = vld [vmem:[%s7 + $0x20] sm:$0xff]
      %v2090 = vld [vmem:[%s7 + $0x28] sm:$0xff]
      %v2091 = vld [vmem:[%s7 + $0x30] sm:$0xff]
      %v2092 = vld [vmem:[%s7 + $0x38] sm:$0xff]
      %v2093 = vld [vmem:[%s7 + $0x40] sm:$0xff]
      %v2094 = vld [vmem:[%s7 + $0x48] sm:$0xff]
      %v2095 = vld [vmem:[%s7 + $0x50] sm:$0xff]
      %v2096 = vld [vmem:[%s7 + $0x58] sm:$0xff]
      %v2097 = vld [vmem:[%s7 + $0x60] sm:$0xff]
      %v2098 = vld [vmem:[%s7 + $0x68] sm:$0xff]
      %v2099 = vld [vmem:[%s7 + $0x70] sm:$0xff]
      %v2100 = vld [vmem:[%s7 + $0x78] sm:$0xff]
      %v2101 = vld [vmem:[%s7 + $0x80] sm:$0xff]
      %v2102 = vld [vmem:[%s7 + $0x88] sm:$0xff]
      %v2103 = vld [vmem:[%s7 + $0x90] sm:$0xff]
      %v2104 = vld [vmem:[%s7 + $0x98] sm:$0xff]
      %v2105 = vld [vmem:[%s7 + $0xa0] sm:$0xff]
      %v2106 = vld [vmem:[%s7 + $0xa8] sm:$0xff]
      %v2107 = vld [vmem:[%s7 + $0xb0] sm:$0xff]
      %v2108 = vld [vmem:[%s7 + $0xb8] sm:$0xff]
      %v2109 = vld [vmem:[%s7 + $0xc0] sm:$0xff]
      %v2110 = vld [vmem:[%s7 + $0xc8] sm:$0xff]
      %v2111 = vld [vmem:[%s7 + $0xd0] sm:$0xff]
      %v2112 = vld [vmem:[%s7 + $0xd8] sm:$0xff]
      %v2113 = vld [vmem:[%s7 + $0xe0] sm:$0xff]
      %v2114 = vld [vmem:[%s7 + $0xe8] sm:$0xff]
      %v2115 = vld [vmem:[%s7 + $0xf0] sm:$0xff]
      %v2116 = vld [vmem:[%s7 + $0xf8] sm:$0xff]
      %v2117 = vld [vmem:[%s7 + $0x100] sm:$0xff]
      %v2118 = vld [vmem:[%s7 + $0x108] sm:$0xff]
      %v2119 = vld [vmem:[%s7 + $0x110] sm:$0xff]
      %v2120 = vld [vmem:[%s7 + $0x118] sm:$0xff]
      %v2121 = vld [vmem:[%s7 + $0x120] sm:$0xff]
      %v2122 = vld [vmem:[%s7 + $0x128] sm:$0xff]
      %v2123 = vld [vmem:[%s7 + $0x130] sm:$0xff]
      %v2124 = vld [vmem:[%s7 + $0x138] sm:$0xff]
      %v2125 = vld [vmem:[%s7 + $0x140] sm:$0xff]
      %v2126 = vld [vmem:[%s7 + $0x148] sm:$0xf]
      %v2128 = vsel %vm657, %v1990, 0
      %v2131 = vsel %vm657, %v1993, 0
      %v2134 = vsel %vm664, %v2126, 0
      %2136 = vmatprep.subr.mxu0 0.0
      %2137 = vmatpush1.msra.mxu0 %v2085
      %2138 = vmatprep.subr.mxu0 0.0
      %2139 = vmatpush1.msra.mxu0 %v2086
      %2140 = vmatprep.subr.mxu0 0.0
      %2141 = vmatpush1.msra.mxu0 %v2087
      %2142 = vmatprep.subr.mxu0 0.0
      %2143 = vmatpush1.msra.mxu0 %v2088
      %2144 = vmatprep.subr.mxu0 0.0
      %2145 = vmatpush1.msra.mxu0 %v2089
      %2146 = vmatprep.subr.mxu0 0.0
      %2147 = vmatpush1.msra.mxu0 %v2090
      %2148 = vmatprep.subr.mxu0 0.0
      %2149 = vmatpush1.msra.mxu0 %v2091
      %2150 = vmatprep.subr.mxu0 0.0
      %2151 = vmatpush1.msra.mxu0 %v2092
      %2152 = vmatprep.subr.mxu0 0.0
      %2153 = vmatpush1.msra.mxu0 %v2093
      %2154 = vmatprep.subr.mxu0 0.0
      %2155 = vmatpush1.msra.mxu0 %v2094
      %2156 = vmatprep.subr.mxu0 0.0
      %2157 = vmatpush1.msra.mxu0 %v2095
      %2158 = vmatprep.subr.mxu0 0.0
      %2159 = vmatpush1.msra.mxu0 %v2096
      %2160 = vmatprep.subr.mxu0 0.0
      %2161 = vmatpush1.msra.mxu0 %v2097
      %2162 = vmatprep.subr.mxu0 0.0
      %2163 = vmatpush1.msra.mxu0 %v2098
      %2164 = vmatprep.subr.mxu0 0.0
      %2165 = vmatpush1.msra.mxu0 %v2099
      %2166 = vmatprep.subr.mxu0 0.0
      %2167 = vmatpush1.msra.mxu0 %v2100
      %2168 = vmatprep.subr.mxu0 0.0
      %2169 = vmatpush1.msra.mxu0 %v2101
      %2170 = vmatprep.subr.mxu0 0.0
      %2171 = vmatpush1.msra.mxu0 %v2102
      %2172 = vmatprep.subr.mxu0 0.0
      %2173 = vmatpush1.msra.mxu0 %v2103
      %2174 = vmatprep.subr.mxu0 0.0
      %2175 = vmatpush1.msra.mxu0 %v2104
      %2176 = vmatprep.subr.mxu0 0.0
      %2177 = vmatpush1.msra.mxu0 %v2105
      %2178 = vmatprep.subr.mxu0 0.0
      %2179 = vmatpush1.msra.mxu0 %v2106
      %2180 = vmatprep.subr.mxu0 0.0
      %2181 = vmatpush1.msra.mxu0 %v2107
      %2182 = vmatprep.subr.mxu0 0.0
      %2183 = vmatpush1.msra.mxu0 %v2108
      %2184 = vmatprep.subr.mxu0 0.0
      %2185 = vmatpush1.msra.mxu0 %v2109
      %2186 = vmatprep.subr.mxu0 0.0
      %2187 = vmatpush1.msra.mxu0 %v2110
      %2188 = vmatprep.subr.mxu0 0.0
      %2189 = vmatpush1.msra.mxu0 %v2111
      %2190 = vmatprep.subr.mxu0 0.0
      %2191 = vmatpush1.msra.mxu0 %v2112
      %2192 = vmatprep.subr.mxu0 0.0
      %2193 = vmatpush1.msra.mxu0 %v2113
      %2194 = vmatprep.subr.mxu0 0.0
      %2195 = vmatpush1.msra.mxu0 %v2114
      %2196 = vmatprep.subr.mxu0 0.0
      %2197 = vmatpush1.msra.mxu0 %v2115
      %2198 = vmatprep.subr.mxu0 0.0
      %2199 = vmatpush1.msra.mxu0 %v2116
      %2200 = vmatprep.mubr.f32.mxu0 %v1989
      %2201 = vmatmul.mubr.f32.gmra.mrb[0].mxu0 %v1988
      %v2202 = vpop.f32.mrb[0].mxu0
      %v2203 = vadd.f32 0.0, %v2202
      %v2204 = vpop.f32.mrb[0].mxu0
      %2205 = vmatprep.mubr.f32.mxu0 %v1992
      %2206 = vmatmul.mubr.f32.gmra.mrb[0].mxu0 %v1991
      %v2207 = vpop.f32.mrb[0].mxu0
      %v2208 = vadd.f32 0.0, %v2207
      %v2209 = vpop.f32.mrb[0].mxu0
      %2210 = vdwg.mxu0
      %2211 = vmatprep.subr.mxu0 0.0
      %2212 = vmatpush1.msra.mxu0 %v2117
      %2213 = vmatprep.subr.mxu0 0.0
      %2214 = vmatpush1.msra.mxu0 %v2118
      %2215 = vmatprep.subr.mxu0 0.0
      %2216 = vmatpush1.msra.mxu0 %v2119
      %2217 = vmatprep.subr.mxu0 0.0
      %2218 = vmatpush1.msra.mxu0 %v2120
      %2219 = vmatprep.subr.mxu0 0.0
      %2220 = vmatpush1.msra.mxu0 %v2121
      %2221 = vmatprep.subr.mxu0 0.0
      %2222 = vmatpush1.msra.mxu0 %v2122
      %2223 = vmatprep.subr.mxu0 0.0
      %2224 = vmatpush1.msra.mxu0 %v2123
      %2225 = vmatprep.subr.mxu0 0.0
      %2226 = vmatpush1.msra.mxu0 %v2124
      %2227 = vmatprep.subr.mxu0 0.0
      %2228 = vmatpush1.msra.mxu0 %v2125
      %2229 = vmatprep.subr.mxu0 0.0
      %2230 = vmatpush1.msra.mxu0 %v2134
      %2231 = vmatprep.subr.mxu0 0.0
      %2232 = vmatpush1.msra.mxu0 0.0
      %2233 = vmatprep.subr.mxu0 0.0
      %2234 = vmatpush1.msra.mxu0 0.0
      %2235 = vmatprep.subr.mxu0 0.0
      %2236 = vmatpush1.msra.mxu0 0.0
      %2237 = vmatprep.subr.mxu0 0.0
      %2238 = vmatpush1.msra.mxu0 0.0
      %2239 = vmatprep.subr.mxu0 0.0
      %2240 = vmatpush1.msra.mxu0 0.0
      %2241 = vmatprep.subr.mxu0 0.0
      %2242 = vmatpush1.msra.mxu0 0.0
      %2243 = vmatprep.subr.mxu0 0.0
      %2244 = vmatpush1.msra.mxu0 0.0
      %2245 = vmatprep.subr.mxu0 0.0
      %2246 = vmatpush1.msra.mxu0 0.0
      %2247 = vmatprep.subr.mxu0 0.0
      %2248 = vmatpush1.msra.mxu0 0.0
      %2249 = vmatprep.subr.mxu0 0.0
      %2250 = vmatpush1.msra.mxu0 0.0
      %2251 = vmatprep.subr.mxu0 0.0
      %2252 = vmatpush1.msra.mxu0 0.0
      %2253 = vmatprep.subr.mxu0 0.0
      %2254 = vmatpush1.msra.mxu0 0.0
      %2255 = vmatprep.subr.mxu0 0.0
      %2256 = vmatpush1.msra.mxu0 0.0
      %2257 = vmatprep.subr.mxu0 0.0
      %2258 = vmatpush1.msra.mxu0 0.0
      %2259 = vmatprep.subr.mxu0 0.0
      %2260 = vmatpush1.msra.mxu0 0.0
      %2261 = vmatprep.subr.mxu0 0.0
      %2262 = vmatpush1.msra.mxu0 0.0
      %2263 = vmatprep.subr.mxu0 0.0
      %2264 = vmatpush1.msra.mxu0 0.0
      %2265 = vmatprep.subr.mxu0 0.0
      %2266 = vmatpush1.msra.mxu0 0.0
      %2267 = vmatprep.subr.mxu0 0.0
      %2268 = vmatpush1.msra.mxu0 0.0
      %2269 = vmatprep.subr.mxu0 0.0
      %2270 = vmatpush1.msra.mxu0 0.0
      %2271 = vmatprep.subr.mxu0 0.0
      %2272 = vmatpush1.msra.mxu0 0.0
      %2273 = vmatprep.subr.mxu0 0.0
      %2274 = vmatpush1.msra.mxu0 0.0
      %2275 = vmatprep.mubr.f32.mxu0 0.0
      %2276 = vmatmul.mubr.f32.gmra.mrb[0].mxu0 %v2128
      %v2277 = vpop.f32.mrb[0].mxu0
      %v2278 = vadd.f32 %v2203, %v2277
      %v2279 = vpop.f32.mrb[0].mxu0
      %2280 = vmatprep.mubr.f32.mxu0 0.0
      %2281 = vmatmul.mubr.f32.gmra.mrb[0].mxu0 %v2131
      %v2282 = vpop.f32.mrb[0].mxu0
      %v2283 = vadd.f32 %v2208, %v2282
      %v2284 = vpop.f32.mrb[0].mxu0
      %2285 = vdwg.mxu0
      %2286 = vmatprep.subr.mxu0 0.0
      %2287 = vmatpush1.msra.mxu0 %v2077
      %2288 = vmatprep.subr.mxu0 0.0
      %2289 = vmatpush1.msra.mxu0 %v2078
      %2290 = vmatprep.subr.mxu0 0.0
      %2291 = vmatpush1.msra.mxu0 %v2079
      %2292 = vmatprep.subr.mxu0 0.0
      %2293 = vmatpush1.msra.mxu0 %v2080
      %2294 = vmatprep.subr.mxu0 0.0
      %2295 = vmatpush1.msra.mxu0 %v2081
      %2296 = vmatprep.subr.mxu0 0.0
      %2297 = vmatpush1.msra.mxu0 %v2082
      %2298 = vmatprep.subr.mxu0 0.0
      %2299 = vmatpush1.msra.mxu0 %v2083
      %2300 = vmatprep.subr.mxu0 0.0
      %2301 = vmatpush1.msra.mxu0 %v2084
      %2302 = vmatprep.subr.mxu0 0.0
      %2303 = vmatpush1.msra.mxu0 0.0
      %2304 = vmatprep.subr.mxu0 0.0
      %2305 = vmatpush1.msra.mxu0 0.0
      %2306 = vmatprep.subr.mxu0 0.0
      %2307 = vmatpush1.msra.mxu0 0.0
      %2308 = vmatprep.subr.mxu0 0.0
      %2309 = vmatpush1.msra.mxu0 0.0
      %2310 = vmatprep.subr.mxu0 0.0
      %2311 = vmatpush1.msra.mxu0 0.0
      %2312 = vmatprep.subr.mxu0 0.0
      %2313 = vmatpush1.msra.mxu0 0.0
      %2314 = vmatprep.subr.mxu0 0.0
      %2315 = vmatpush1.msra.mxu0 0.0
      %2316 = vmatprep.subr.mxu0 0.0
      %2317 = vmatpush1.msra.mxu0 0.0
      %2318 = vmatprep.subr.mxu0 0.0
      %2319 = vmatpush1.msra.mxu0 0.0
      %2320 = vmatprep.subr.mxu0 0.0
      %2321 = vmatpush1.msra.mxu0 0.0
      %2322 = vmatprep.subr.mxu0 0.0
      %2323 = vmatpush1.msra.mxu0 0.0
      %2324 = vmatprep.subr.mxu0 0.0
      %2325 = vmatpush1.msra.mxu0 0.0
      %2326 = vmatprep.subr.mxu0 0.0
      %2327 = vmatpush1.msra.mxu0 0.0
      %2328 = vmatprep.subr.mxu0 0.0
      %2329 = vmatpush1.msra.mxu0 0.0
      %2330 = vmatprep.subr.mxu0 0.0
      %2331 = vmatpush1.msra.mxu0 0.0
      %2332 = vmatprep.subr.mxu0 0.0
      %2333 = vmatpush1.msra.mxu0 0.0
      %2334 = vmatprep.subr.mxu0 0.0
      %2335 = vmatpush1.msra.mxu0 0.0
      %2336 = vmatprep.subr.mxu0 0.0
      %2337 = vmatpush1.msra.mxu0 0.0
      %2338 = vmatprep.subr.mxu0 0.0
      %2339 = vmatpush1.msra.mxu0 0.0
      %2340 = vmatprep.subr.mxu0 0.0
      %2341 = vmatpush1.msra.mxu0 0.0
      %2342 = vmatprep.subr.mxu0 0.0
      %2343 = vmatpush1.msra.mxu0 0.0
      %2344 = vmatprep.subr.mxu0 0.0
      %2345 = vmatpush1.msra.mxu0 0.0
      %2346 = vmatprep.subr.mxu0 0.0
      %2347 = vmatpush1.msra.mxu0 0.0
      %2348 = vmatprep.subr.mxu0 0.0
      %2349 = vmatpush1.msra.mxu0 0.0
      %2350 = vmatprep.mubr.f32.mxu0 0.0
      %2351 = vmatmul.mubr.f32.gmra.mrb[0].mxu0 %v527
      %v2352 = vpop.f32.mrb[0].mxu0
      %v2353 = vadd.f32 %v2278, %v2352
      %v2354 = vpop.f32.mrb[0].mxu0
      %2355 = vmatprep.mubr.f32.mxu0 0.0
      %2356 = vmatmul.mubr.f32.gmra.mrb[0].mxu0 %v530
      %v2357 = vpop.f32.mrb[0].mxu0
      %v2358 = vadd.f32 %v2283, %v2357
      %v2359 = vpop.f32.mrb[0].mxu0
      %2360 = vdwg.mxu0
      %v2361 = vld [vmem:[%s8] sm:$0x1]
      %v2363 = vlaneseq
      %v2364 = vshrl.u32 %v2363, 7
      %v2365 = vsub.s32 0, %v2364
      %v2366 = vrot.slane %v2361, %v2365
      %v2368 = vadd.f32 %v2353, %v2366
      %v2369 = vadd.f32 %v2358, %v2366
      %v2370 = vmax.f32 %v2368, 0.0
      %v2371 = vmax.f32 %v2369, 0.0
      %v2372 = vadd.f32 %v502, %v2370
      %v2373 = vadd.f32 %v503, %v2371
      %2374 = vst.msk [vmem:[%s496] sm:$0xff] %vm525, %v2372
      %2375 = vst.msk [vmem:[%s496 + $0x8] sm:$0xff] %vm525, %v2373
      %v2376 = vld [vmem:[%s9] sm:$0xff]
      %v2377 = vld [vmem:[%s9 + $0x8] sm:$0xff]
      %v2378 = vld [vmem:[%s9 + $0x10] sm:$0xff]
      %v2379 = vld [vmem:[%s9 + $0x18] sm:$0xff]
      %v2380 = vld [vmem:[%s9 + $0x20] sm:$0xff]
      %v2381 = vld [vmem:[%s9 + $0x28] sm:$0xff]
      %v2382 = vld [vmem:[%s9 + $0x30] sm:$0xff]
      %v2383 = vld [vmem:[%s9 + $0x38] sm:$0xff]
      %v2384 = vld [vmem:[%s9 + $0x40] sm:$0xff]
      %v2385 = vld [vmem:[%s9 + $0x48] sm:$0xff]
      %v2386 = vld [vmem:[%s9 + $0x50] sm:$0xff]
      %v2387 = vld [vmem:[%s9 + $0x58] sm:$0xff]
      %v2388 = vld [vmem:[%s9 + $0x60] sm:$0xff]
      %v2389 = vld [vmem:[%s9 + $0x68] sm:$0xff]
      %v2390 = vld [vmem:[%s9 + $0x70] sm:$0xff]
      %v2391 = vld [vmem:[%s9 + $0x78] sm:$0xff]
      %v2392 = vld [vmem:[%s9 + $0x80] sm:$0xff]
      %v2393 = vld [vmem:[%s9 + $0x88] sm:$0xff]
      %v2394 = vld [vmem:[%s9 + $0x90] sm:$0xff]
      %v2395 = vld [vmem:[%s9 + $0x98] sm:$0xff]
      %v2396 = vld [vmem:[%s9 + $0xa0] sm:$0xff]
      %v2397 = vld [vmem:[%s9 + $0xa8] sm:$0xff]
      %v2398 = vld [vmem:[%s9 + $0xb0] sm:$0xff]
      %v2399 = vld [vmem:[%s9 + $0xb8] sm:$0xff]
      %v2400 = vld [vmem:[%s9 + $0xc0] sm:$0xff]
      %v2401 = vld [vmem:[%s9 + $0xc8] sm:$0xff]
      %v2402 = vld [vmem:[%s9 + $0xd0] sm:$0xff]
      %v2403 = vld [vmem:[%s9 + $0xd8] sm:$0xff]
      %v2404 = vld [vmem:[%s9 + $0xe0] sm:$0xff]
      %v2405 = vld [vmem:[%s9 + $0xe8] sm:$0xff]
      %v2406 = vld [vmem:[%s9 + $0xf0] sm:$0xff]
      %v2407 = vld [vmem:[%s9 + $0xf8] sm:$0xff]
      %v2408 = vld [vmem:[%s9 + $0x100] sm:$0xff]
      %v2409 = vld [vmem:[%s9 + $0x108] sm:$0xff]
      %v2410 = vld [vmem:[%s9 + $0x110] sm:$0xff]
      %v2411 = vld [vmem:[%s9 + $0x118] sm:$0xff]
      %v2412 = vld [vmem:[%s9 + $0x120] sm:$0xff]
      %v2413 = vld [vmem:[%s9 + $0x128] sm:$0xff]
      %v2414 = vld [vmem:[%s9 + $0x130] sm:$0xff]
      %v2415 = vld [vmem:[%s9 + $0x138] sm:$0xff]
      %v2416 = vld [vmem:[%s9 + $0x140] sm:$0xff]
      %v2417 = vld [vmem:[%s9 + $0x148] sm:$0xff]
      %v2418 = vld [vmem:[%s9 + $0x150] sm:$0xff]
      %v2419 = vld [vmem:[%s9 + $0x158] sm:$0xff]
      %v2420 = vld [vmem:[%s9 + $0x160] sm:$0xff]
      %v2421 = vld [vmem:[%s9 + $0x168] sm:$0xff]
      %v2422 = vld [vmem:[%s9 + $0x170] sm:$0xff]
      %v2423 = vld [vmem:[%s9 + $0x178] sm:$0xff]
      %v2424 = vld [vmem:[%s9 + $0x180] sm:$0xff]
      %v2425 = vld [vmem:[%s9 + $0x188] sm:$0xff]
      %v2426 = vld [vmem:[%s9 + $0x190] sm:$0xff]
      %v2427 = vld [vmem:[%s9 + $0x198] sm:$0xff]
      %v2428 = vld [vmem:[%s9 + $0x1a0] sm:$0xff]
      %v2429 = vld [vmem:[%s9 + $0x1a8] sm:$0xff]
      %v2430 = vld [vmem:[%s9 + $0x1b0] sm:$0xff]
      %v2431 = vld [vmem:[%s9 + $0x1b8] sm:$0xff]
      %v2432 = vld [vmem:[%s9 + $0x1c0] sm:$0xff]
      %v2433 = vld [vmem:[%s9 + $0x1c8] sm:$0xff]
      %v2434 = vld [vmem:[%s9 + $0x1d0] sm:$0xff]
      %v2435 = vld [vmem:[%s9 + $0x1d8] sm:$0xff]
      %v2436 = vld [vmem:[%s9 + $0x1e0] sm:$0xff]
      %v2437 = vld [vmem:[%s9 + $0x1e8] sm:$0xff]
      %v2438 = vld [vmem:[%s9 + $0x1f0] sm:$0xff]
      %v2439 = vld [vmem:[%s9 + $0x1f8] sm:$0xff]
      %v2440 = vld [vmem:[%s9 + $0x200] sm:$0xff]
      %v2441 = vld [vmem:[%s9 + $0x208] sm:$0xff]
      %v2442 = vld [vmem:[%s9 + $0x210] sm:$0xff]
      %v2443 = vld [vmem:[%s9 + $0x218] sm:$0xff]
      %v2444 = vld [vmem:[%s9 + $0x220] sm:$0xff]
      %v2445 = vld [vmem:[%s9 + $0x228] sm:$0xff]
      %v2446 = vld [vmem:[%s9 + $0x230] sm:$0xff]
      %v2447 = vld [vmem:[%s9 + $0x238] sm:$0xff]
      %v2448 = vld [vmem:[%s9 + $0x240] sm:$0xff]
      %v2449 = vld [vmem:[%s9 + $0x248] sm:$0xff]
      %v2450 = vld [vmem:[%s9 + $0x250] sm:$0xff]
      %v2451 = vld [vmem:[%s9 + $0x258] sm:$0xff]
      %v2452 = vld [vmem:[%s9 + $0x260] sm:$0xff]
      %v2453 = vld [vmem:[%s9 + $0x268] sm:$0xff]
      %v2454 = vld [vmem:[%s9 + $0x270] sm:$0xff]
      %v2455 = vld [vmem:[%s9 + $0x278] sm:$0xff]
      %v2456 = vld [vmem:[%s9 + $0x280] sm:$0xff]
      %v2457 = vld [vmem:[%s9 + $0x288] sm:$0xff]
      %v2458 = vld [vmem:[%s9 + $0x290] sm:$0xff]
      %v2459 = vld [vmem:[%s9 + $0x298] sm:$0xff]
      %v2460 = vld [vmem:[%s9 + $0x2a0] sm:$0xff]
      %v2461 = vld [vmem:[%s9 + $0x2a8] sm:$0xff]
      %v2462 = vld [vmem:[%s9 + $0x2b0] sm:$0xff]
      %v2463 = vld [vmem:[%s9 + $0x2b8] sm:$0xff]
      %v2464 = vld [vmem:[%s9 + $0x2c0] sm:$0xff]
      %v2465 = vld [vmem:[%s9 + $0x2c8] sm:$0xff]
      %v2466 = vld [vmem:[%s9 + $0x2d0] sm:$0xff]
      %v2467 = vld [vmem:[%s9 + $0x2d8] sm:$0xff]
      %v2468 = vld [vmem:[%s9 + $0x2e0] sm:$0xff]
      %v2469 = vld [vmem:[%s9 + $0x2e8] sm:$0xff]
      %v2470 = vld [vmem:[%s9 + $0x2f0] sm:$0xff]
      %v2471 = vld [vmem:[%s9 + $0x2f8] sm:$0xff]
      %v2472 = vld [vmem:[%s9 + $0x300] sm:$0xff]
      %v2473 = vld [vmem:[%s9 + $0x308] sm:$0xff]
      %v2474 = vld [vmem:[%s9 + $0x310] sm:$0xff]
      %v2475 = vld [vmem:[%s9 + $0x318] sm:$0xff]
      %v2476 = vld [vmem:[%s9 + $0x320] sm:$0xff]
      %v2477 = vld [vmem:[%s9 + $0x328] sm:$0xff]
      %v2478 = vld [vmem:[%s9 + $0x330] sm:$0xff]
      %v2479 = vld [vmem:[%s9 + $0x338] sm:$0xff]
      %v2480 = vld [vmem:[%s9 + $0x340] sm:$0xff]
      %v2481 = vld [vmem:[%s9 + $0x348] sm:$0xff]
      %v2482 = vld [vmem:[%s9 + $0x350] sm:$0xff]
      %v2483 = vld [vmem:[%s9 + $0x358] sm:$0xff]
      %v2484 = vld [vmem:[%s9 + $0x360] sm:$0xff]
      %v2485 = vld [vmem:[%s9 + $0x368] sm:$0xff]
      %v2486 = vld [vmem:[%s9 + $0x370] sm:$0xff]
      %v2487 = vld [vmem:[%s9 + $0x378] sm:$0xff]
      %v2488 = vld [vmem:[%s9 + $0x380] sm:$0xff]
      %v2489 = vld [vmem:[%s9 + $0x388] sm:$0xff]
      %v2490 = vld [vmem:[%s9 + $0x390] sm:$0xff]
      %v2491 = vld [vmem:[%s9 + $0x398] sm:$0xff]
      %v2492 = vld [vmem:[%s9 + $0x3a0] sm:$0xff]
      %v2493 = vld [vmem:[%s9 + $0x3a8] sm:$0xff]
      %v2494 = vld [vmem:[%s9 + $0x3b0] sm:$0xff]
      %v2495 = vld [vmem:[%s9 + $0x3b8] sm:$0xff]
      %v2496 = vld [vmem:[%s9 + $0x3c0] sm:$0xff]
      %v2497 = vld [vmem:[%s9 + $0x3c8] sm:$0xff]
      %v2498 = vld [vmem:[%s9 + $0x3d0] sm:$0xff]
      %v2499 = vld [vmem:[%s9 + $0x3d8] sm:$0xf]
      %v2500 = vld [vmem:[%s9 + $0x3e0] sm:$0xf]
      %v2501 = vld [vmem:[%s9 + $0x3e8] sm:$0xf]
      %v2502 = vld [vmem:[%s10] sm:$0xff]
      %v2503 = vld [vmem:[%s10 + $0x8] sm:$0xff]
      %v2504 = vld [vmem:[%s10 + $0x10] sm:$0xff]
      %v2505 = vld [vmem:[%s10 + $0x18] sm:$0xff]
      %v2506 = vld [vmem:[%s10 + $0x20] sm:$0xff]
      %v2507 = vld [vmem:[%s10 + $0x28] sm:$0xff]
      %v2508 = vld [vmem:[%s10 + $0x30] sm:$0xff]
      %v2509 = vld [vmem:[%s10 + $0x38] sm:$0xff]
      %v2510 = vld [vmem:[%s10 + $0x40] sm:$0xff]
      %v2511 = vld [vmem:[%s10 + $0x48] sm:$0xff]
      %v2512 = vld [vmem:[%s10 + $0x50] sm:$0xff]
      %v2513 = vld [vmem:[%s10 + $0x58] sm:$0xff]
      %v2514 = vld [vmem:[%s10 + $0x60] sm:$0xff]
      %v2515 = vld [vmem:[%s10 + $0x68] sm:$0xff]
      %v2516 = vld [vmem:[%s10 + $0x70] sm:$0xff]
      %v2517 = vld [vmem:[%s10 + $0x78] sm:$0xff]
      %v2518 = vld [vmem:[%s10 + $0x80] sm:$0xff]
      %v2519 = vld [vmem:[%s10 + $0x88] sm:$0xff]
      %v2520 = vld [vmem:[%s10 + $0x90] sm:$0xff]
      %v2521 = vld [vmem:[%s10 + $0x98] sm:$0xff]
      %v2522 = vld [vmem:[%s10 + $0xa0] sm:$0xff]
      %v2523 = vld [vmem:[%s10 + $0xa8] sm:$0xff]
      %v2524 = vld [vmem:[%s10 + $0xb0] sm:$0xff]
      %v2525 = vld [vmem:[%s10 + $0xb8] sm:$0xff]
      %v2527 = vsel %vm525, %v2076, 0
      %2529 = vmatprep.subr.mxu0 %v2503
      %2530 = vmatpush1.msra.mxu0 %v2502
      %2531 = vmatprep.subr.mxu0 %v2506
      %2532 = vmatpush1.msra.mxu0 %v2505
      %2533 = vmatprep.subr.mxu0 %v2509
      %2534 = vmatpush1.msra.mxu0 %v2508
      %2535 = vmatprep.subr.mxu0 %v2512
      %2536 = vmatpush1.msra.mxu0 %v2511
      %2537 = vmatprep.subr.mxu0 %v2515
      %2538 = vmatpush1.msra.mxu0 %v2514
      %2539 = vmatprep.subr.mxu0 %v2518
      %2540 = vmatpush1.msra.mxu0 %v2517
      %2541 = vmatprep.subr.mxu0 %v2521
      %2542 = vmatpush1.msra.mxu0 %v2520
      %2543 = vmatprep.subr.mxu0 %v2524
      %2544 = vmatpush1.msra.mxu0 %v2523
      %2545 = vmatprep.subr.mxu0 0.0
      %2546 = vmatpush1.msra.mxu0 0.0
      %2547 = vmatprep.subr.mxu0 0.0
      %2548 = vmatpush1.msra.mxu0 0.0
      %2549 = vmatprep.subr.mxu0 0.0
      %2550 = vmatpush1.msra.mxu0 0.0
      %2551 = vmatprep.subr.mxu0 0.0
      %2552 = vmatpush1.msra.mxu0 0.0
      %2553 = vmatprep.subr.mxu0 0.0
      %2554 = vmatpush1.msra.mxu0 0.0
      %2555 = vmatprep.subr.mxu0 0.0
      %2556 = vmatpush1.msra.mxu0 0.0
      %2557 = vmatprep.subr.mxu0 0.0
      %2558 = vmatpush1.msra.mxu0 0.0
      %2559 = vmatprep.subr.mxu0 0.0
      %2560 = vmatpush1.msra.mxu0 0.0
      %2561 = vmatprep.subr.mxu0 0.0
      %2562 = vmatpush1.msra.mxu0 0.0
      %2563 = vmatprep.subr.mxu0 0.0
      %2564 = vmatpush1.msra.mxu0 0.0
      %2565 = vmatprep.subr.mxu0 0.0
      %2566 = vmatpush1.msra.mxu0 0.0
      %2567 = vmatprep.subr.mxu0 0.0
      %2568 = vmatpush1.msra.mxu0 0.0
      %2569 = vmatprep.subr.mxu0 0.0
      %2570 = vmatpush1.msra.mxu0 0.0
      %2571 = vmatprep.subr.mxu0 0.0
      %2572 = vmatpush1.msra.mxu0 0.0
      %2573 = vmatprep.subr.mxu0 0.0
      %2574 = vmatpush1.msra.mxu0 0.0
      %2575 = vmatprep.subr.mxu0 0.0
      %2576 = vmatpush1.msra.mxu0 0.0
      %2577 = vmatprep.subr.mxu0 0.0
      %2578 = vmatpush1.msra.mxu0 0.0
      %2579 = vmatprep.subr.mxu0 0.0
      %2580 = vmatpush1.msra.mxu0 0.0
      %2581 = vmatprep.subr.mxu0 0.0
      %2582 = vmatpush1.msra.mxu0 0.0
      %2583 = vmatprep.subr.mxu0 0.0
      %2584 = vmatpush1.msra.mxu0 0.0
      %2585 = vmatprep.subr.mxu0 0.0
      %2586 = vmatpush1.msra.mxu0 0.0
      %2587 = vmatprep.subr.mxu0 0.0
      %2588 = vmatpush1.msra.mxu0 0.0
      %2589 = vmatprep.subr.mxu0 0.0
      %2590 = vmatpush1.msra.mxu0 0.0
      %2591 = vmatprep.subr.mxu0 0.0
      %2592 = vmatpush1.msra.mxu0 0.0
      %2593 = vmatprep.mubr.f32.mxu0 0.0
      %2594 = vmatmul.mubr.f32.gmra.mrb[0].mxu0 %v2527
      %v2595 = vpop.f32.mrb[0].mxu0
      %v2596 = vadd.f32 0.0, %v2595
      %v2597 = vpop.f32.mrb[0].mxu0
      %v2598 = vadd.f32 0.0, %v2597
      %2599 = vdwg.mxu0
      %2600 = vmatprep.subr.mxu0 0.0
      %2601 = vmatpush1.msra.mxu0 %v2504
      %2602 = vmatprep.subr.mxu0 0.0
      %2603 = vmatpush1.msra.mxu0 %v2507
      %2604 = vmatprep.subr.mxu0 0.0
      %2605 = vmatpush1.msra.mxu0 %v2510
      %2606 = vmatprep.subr.mxu0 0.0
      %2607 = vmatpush1.msra.mxu0 %v2513
      %2608 = vmatprep.subr.mxu0 0.0
      %2609 = vmatpush1.msra.mxu0 %v2516
      %2610 = vmatprep.subr.mxu0 0.0
      %2611 = vmatpush1.msra.mxu0 %v2519
      %2612 = vmatprep.subr.mxu0 0.0
      %2613 = vmatpush1.msra.mxu0 %v2522
      %2614 = vmatprep.subr.mxu0 0.0
      %2615 = vmatpush1.msra.mxu0 %v2525
      %2616 = vmatprep.subr.mxu0 0.0
      %2617 = vmatpush1.msra.mxu0 0.0
      %2618 = vmatprep.subr.mxu0 0.0
      %2619 = vmatpush1.msra.mxu0 0.0
      %2620 = vmatprep.subr.mxu0 0.0
      %2621 = vmatpush1.msra.mxu0 0.0
      %2622 = vmatprep.subr.mxu0 0.0
      %2623 = vmatpush1.msra.mxu0 0.0
      %2624 = vmatprep.subr.mxu0 0.0
      %2625 = vmatpush1.msra.mxu0 0.0
      %2626 = vmatprep.subr.mxu0 0.0
      %2627 = vmatpush1.msra.mxu0 0.0
      %2628 = vmatprep.subr.mxu0 0.0
      %2629 = vmatpush1.msra.mxu0 0.0
      %2630 = vmatprep.subr.mxu0 0.0
      %2631 = vmatpush1.msra.mxu0 0.0
      %2632 = vmatprep.subr.mxu0 0.0
      %2633 = vmatpush1.msra.mxu0 0.0
      %2634 = vmatprep.subr.mxu0 0.0
      %2635 = vmatpush1.msra.mxu0 0.0
      %2636 = vmatprep.subr.mxu0 0.0
      %2637 = vmatpush1.msra.mxu0 0.0
      %2638 = vmatprep.subr.mxu0 0.0
      %2639 = vmatpush1.msra.mxu0 0.0
      %2640 = vmatprep.subr.mxu0 0.0
      %2641 = vmatpush1.msra.mxu0 0.0
      %2642 = vmatprep.subr.mxu0 0.0
      %2643 = vmatpush1.msra.mxu0 0.0
      %2644 = vmatprep.subr.mxu0 0.0
      %2645 = vmatpush1.msra.mxu0 0.0
      %2646 = vmatprep.subr.mxu0 0.0
      %2647 = vmatpush1.msra.mxu0 0.0
      %2648 = vmatprep.subr.mxu0 0.0
      %2649 = vmatpush1.msra.mxu0 0.0
      %2650 = vmatprep.subr.mxu0 0.0
      %2651 = vmatpush1.msra.mxu0 0.0
      %2652 = vmatprep.subr.mxu0 0.0
      %2653 = vmatpush1.msra.mxu0 0.0
      %2654 = vmatprep.subr.mxu0 0.0
      %2655 = vmatpush1.msra.mxu0 0.0
      %2656 = vmatprep.subr.mxu0 0.0
      %2657 = vmatpush1.msra.mxu0 0.0
      %2658 = vmatprep.subr.mxu0 0.0
      %2659 = vmatpush1.msra.mxu0 0.0
      %2660 = vmatprep.subr.mxu0 0.0
      %2661 = vmatpush1.msra.mxu0 0.0
      %2662 = vmatprep.subr.mxu0 0.0
      %2663 = vmatpush1.msra.mxu0 0.0
      %2664 = vmatprep.mubr.f32.mxu0 0.0
      %2665 = vmatmul.mubr.f32.gmra.mrb[0].mxu0 %v2527
      %v2666 = vpop.f32.mrb[0].mxu0
      %v2667 = vadd.f32 0.0, %v2666
      %v2668 = vpop.f32.mrb[0].mxu0
      %2669 = vdwg.mxu0
      %v2671 = vsel %vm664, %v2499, 0
      %v2674 = vsel %vm664, %v2500, 0
      %v2677 = vsel %vm664, %v2501, 0
      %2679 = vmatprep.subr.mxu0 %v2377
      %2680 = vmatpush1.msra.mxu0 %v2376
      %2681 = vmatprep.subr.mxu0 %v2380
      %2682 = vmatpush1.msra.mxu0 %v2379
      %2683 = vmatprep.subr.mxu0 %v2383
      %2684 = vmatpush1.msra.mxu0 %v2382
      %2685 = vmatprep.subr.mxu0 %v2386
      %2686 = vmatpush1.msra.mxu0 %v2385
      %2687 = vmatprep.subr.mxu0 %v2389
      %2688 = vmatpush1.msra.mxu0 %v2388
      %2689 = vmatprep.subr.mxu0 %v2392
      %2690 = vmatpush1.msra.mxu0 %v2391
      %2691 = vmatprep.subr.mxu0 %v2395
      %2692 = vmatpush1.msra.mxu0 %v2394
      %2693 = vmatprep.subr.mxu0 %v2398
      %2694 = vmatpush1.msra.mxu0 %v2397
      %2695 = vmatprep.subr.mxu0 %v2401
      %2696 = vmatpush1.msra.mxu0 %v2400
      %2697 = vmatprep.subr.mxu0 %v2404
      %2698 = vmatpush1.msra.mxu0 %v2403
      %2699 = vmatprep.subr.mxu0 %v2407
      %2700 = vmatpush1.msra.mxu0 %v2406
      %2701 = vmatprep.subr.mxu0 %v2410
      %2702 = vmatpush1.msra.mxu0 %v2409
      %2703 = vmatprep.subr.mxu0 %v2413
      %2704 = vmatpush1.msra.mxu0 %v2412
      %2705 = vmatprep.subr.mxu0 %v2416
      %2706 = vmatpush1.msra.mxu0 %v2415
      %2707 = vmatprep.subr.mxu0 %v2419
      %2708 = vmatpush1.msra.mxu0 %v2418
      %2709 = vmatprep.subr.mxu0 %v2422
      %2710 = vmatpush1.msra.mxu0 %v2421
      %2711 = vmatprep.subr.mxu0 %v2425
      %2712 = vmatpush1.msra.mxu0 %v2424
      %2713 = vmatprep.subr.mxu0 %v2428
      %2714 = vmatpush1.msra.mxu0 %v2427
      %2715 = vmatprep.subr.mxu0 %v2431
      %2716 = vmatpush1.msra.mxu0 %v2430
      %2717 = vmatprep.subr.mxu0 %v2434
      %2718 = vmatpush1.msra.mxu0 %v2433
      %2719 = vmatprep.subr.mxu0 %v2437
      %2720 = vmatpush1.msra.mxu0 %v2436
      %2721 = vmatprep.subr.mxu0 %v2440
      %2722 = vmatpush1.msra.mxu0 %v2439
      %2723 = vmatprep.subr.mxu0 %v2443
      %2724 = vmatpush1.msra.mxu0 %v2442
      %2725 = vmatprep.subr.mxu0 %v2446
      %2726 = vmatpush1.msra.mxu0 %v2445
      %2727 = vmatprep.subr.mxu0 %v2449
      %2728 = vmatpush1.msra.mxu0 %v2448
      %2729 = vmatprep.subr.mxu0 %v2452
      %2730 = vmatpush1.msra.mxu0 %v2451
      %2731 = vmatprep.subr.mxu0 %v2455
      %2732 = vmatpush1.msra.mxu0 %v2454
      %2733 = vmatprep.subr.mxu0 %v2458
      %2734 = vmatpush1.msra.mxu0 %v2457
      %2735 = vmatprep.subr.mxu0 %v2461
      %2736 = vmatpush1.msra.mxu0 %v2460
      %2737 = vmatprep.subr.mxu0 %v2464
      %2738 = vmatpush1.msra.mxu0 %v2463
      %2739 = vmatprep.subr.mxu0 %v2467
      %2740 = vmatpush1.msra.mxu0 %v2466
      %2741 = vmatprep.subr.mxu0 %v2470
      %2742 = vmatpush1.msra.mxu0 %v2469
      %2743 = vmatprep.mubr.f32.mxu0 %v506
      %2744 = vmatmul.mubr.f32.gmra.mrb[0].mxu0 %v505
      %v2745 = vpop.f32.mrb[0].mxu0
      %v2746 = vadd.f32 %v2596, %v2745
      %v2747 = vpop.f32.mrb[0].mxu0
      %v2748 = vadd.f32 %v2598, %v2747
      %2749 = vdwg.mxu0
      %2750 = vmatprep.subr.mxu0 %v2473
      %2751 = vmatpush1.msra.mxu0 %v2472
      %2752 = vmatprep.subr.mxu0 %v2476
      %2753 = vmatpush1.msra.mxu0 %v2475
      %2754 = vmatprep.subr.mxu0 %v2479
      %2755 = vmatpush1.msra.mxu0 %v2478
      %2756 = vmatprep.subr.mxu0 %v2482
      %2757 = vmatpush1.msra.mxu0 %v2481
      %2758 = vmatprep.subr.mxu0 %v2485
      %2759 = vmatpush1.msra.mxu0 %v2484
      %2760 = vmatprep.subr.mxu0 %v2488
      %2761 = vmatpush1.msra.mxu0 %v2487
      %2762 = vmatprep.subr.mxu0 %v2491
      %2763 = vmatpush1.msra.mxu0 %v2490
      %2764 = vmatprep.subr.mxu0 %v2494
      %2765 = vmatpush1.msra.mxu0 %v2493
      %2766 = vmatprep.subr.mxu0 %v2497
      %2767 = vmatpush1.msra.mxu0 %v2496
      %2768 = vmatprep.subr.mxu0 %v2674
      %2769 = vmatpush1.msra.mxu0 %v2671
      %2770 = vmatprep.subr.mxu0 0.0
      %2771 = vmatpush1.msra.mxu0 0.0
      %2772 = vmatprep.subr.mxu0 0.0
      %2773 = vmatpush1.msra.mxu0 0.0
      %2774 = vmatprep.subr.mxu0 0.0
      %2775 = vmatpush1.msra.mxu0 0.0
      %2776 = vmatprep.subr.mxu0 0.0
      %2777 = vmatpush1.msra.mxu0 0.0
      %2778 = vmatprep.subr.mxu0 0.0
      %2779 = vmatpush1.msra.mxu0 0.0
      %2780 = vmatprep.subr.mxu0 0.0
      %2781 = vmatpush1.msra.mxu0 0.0
      %2782 = vmatprep.subr.mxu0 0.0
      %2783 = vmatpush1.msra.mxu0 0.0
      %2784 = vmatprep.subr.mxu0 0.0
      %2785 = vmatpush1.msra.mxu0 0.0
      %2786 = vmatprep.subr.mxu0 0.0
      %2787 = vmatpush1.msra.mxu0 0.0
      %2788 = vmatprep.subr.mxu0 0.0
      %2789 = vmatpush1.msra.mxu0 0.0
      %2790 = vmatprep.subr.mxu0 0.0
      %2791 = vmatpush1.msra.mxu0 0.0
      %2792 = vmatprep.subr.mxu0 0.0
      %2793 = vmatpush1.msra.mxu0 0.0
      %2794 = vmatprep.subr.mxu0 0.0
      %2795 = vmatpush1.msra.mxu0 0.0
      %2796 = vmatprep.subr.mxu0 0.0
      %2797 = vmatpush1.msra.mxu0 0.0
      %2798 = vmatprep.subr.mxu0 0.0
      %2799 = vmatpush1.msra.mxu0 0.0
      %2800 = vmatprep.subr.mxu0 0.0
      %2801 = vmatpush1.msra.mxu0 0.0
      %2802 = vmatprep.subr.mxu0 0.0
      %2803 = vmatpush1.msra.mxu0 0.0
      %2804 = vmatprep.subr.mxu0 0.0
      %2805 = vmatpush1.msra.mxu0 0.0
      %2806 = vmatprep.subr.mxu0 0.0
      %2807 = vmatpush1.msra.mxu0 0.0
      %2808 = vmatprep.subr.mxu0 0.0
      %2809 = vmatpush1.msra.mxu0 0.0
      %2810 = vmatprep.subr.mxu0 0.0
      %2811 = vmatpush1.msra.mxu0 0.0
      %2812 = vmatprep.subr.mxu0 0.0
      %2813 = vmatpush1.msra.mxu0 0.0
      %2814 = vmatprep.mubr.f32.mxu0 0.0
      %2815 = vmatmul.mubr.f32.gmra.mrb[0].mxu0 %v659
      %v2816 = vpop.f32.mrb[0].mxu0
      %v2817 = vadd.f32 %v2746, %v2816
      %v2818 = vpop.f32.mrb[0].mxu0
      %v2819 = vadd.f32 %v2748, %v2818
      %2820 = vdwg.mxu0
      %2821 = vmatprep.subr.mxu0 0.0
      %2822 = vmatpush1.msra.mxu0 %v2378
      %2823 = vmatprep.subr.mxu0 0.0
      %2824 = vmatpush1.msra.mxu0 %v2381
      %2825 = vmatprep.subr.mxu0 0.0
      %2826 = vmatpush1.msra.mxu0 %v2384
      %2827 = vmatprep.subr.mxu0 0.0
      %2828 = vmatpush1.msra.mxu0 %v2387
      %2829 = vmatprep.subr.mxu0 0.0
      %2830 = vmatpush1.msra.mxu0 %v2390
      %2831 = vmatprep.subr.mxu0 0.0
      %2832 = vmatpush1.msra.mxu0 %v2393
      %2833 = vmatprep.subr.mxu0 0.0
      %2834 = vmatpush1.msra.mxu0 %v2396
      %2835 = vmatprep.subr.mxu0 0.0
      %2836 = vmatpush1.msra.mxu0 %v2399
      %2837 = vmatprep.subr.mxu0 0.0
      %2838 = vmatpush1.msra.mxu0 %v2402
      %2839 = vmatprep.subr.mxu0 0.0
      %2840 = vmatpush1.msra.mxu0 %v2405
      %2841 = vmatprep.subr.mxu0 0.0
      %2842 = vmatpush1.msra.mxu0 %v2408
      %2843 = vmatprep.subr.mxu0 0.0
      %2844 = vmatpush1.msra.mxu0 %v2411
      %2845 = vmatprep.subr.mxu0 0.0
      %2846 = vmatpush1.msra.mxu0 %v2414
      %2847 = vmatprep.subr.mxu0 0.0
      %2848 = vmatpush1.msra.mxu0 %v2417
      %2849 = vmatprep.subr.mxu0 0.0
      %2850 = vmatpush1.msra.mxu0 %v2420
      %2851 = vmatprep.subr.mxu0 0.0
      %2852 = vmatpush1.msra.mxu0 %v2423
      %2853 = vmatprep.subr.mxu0 0.0
      %2854 = vmatpush1.msra.mxu0 %v2426
      %2855 = vmatprep.subr.mxu0 0.0
      %2856 = vmatpush1.msra.mxu0 %v2429
      %2857 = vmatprep.subr.mxu0 0.0
      %2858 = vmatpush1.msra.mxu0 %v2432
      %2859 = vmatprep.subr.mxu0 0.0
      %2860 = vmatpush1.msra.mxu0 %v2435
      %2861 = vmatprep.subr.mxu0 0.0
      %2862 = vmatpush1.msra.mxu0 %v2438
      %2863 = vmatprep.subr.mxu0 0.0
      %2864 = vmatpush1.msra.mxu0 %v2441
      %2865 = vmatprep.subr.mxu0 0.0
      %2866 = vmatpush1.msra.mxu0 %v2444
      %2867 = vmatprep.subr.mxu0 0.0
      %2868 = vmatpush1.msra.mxu0 %v2447
      %2869 = vmatprep.subr.mxu0 0.0
      %2870 = vmatpush1.msra.mxu0 %v2450
      %2871 = vmatprep.subr.mxu0 0.0
      %2872 = vmatpush1.msra.mxu0 %v2453
      %2873 = vmatprep.subr.mxu0 0.0
      %2874 = vmatpush1.msra.mxu0 %v2456
      %2875 = vmatprep.subr.mxu0 0.0
      %2876 = vmatpush1.msra.mxu0 %v2459
      %2877 = vmatprep.subr.mxu0 0.0
      %2878 = vmatpush1.msra.mxu0 %v2462
      %2879 = vmatprep.subr.mxu0 0.0
      %2880 = vmatpush1.msra.mxu0 %v2465
      %2881 = vmatprep.subr.mxu0 0.0
      %2882 = vmatpush1.msra.mxu0 %v2468
      %2883 = vmatprep.subr.mxu0 0.0
      %2884 = vmatpush1.msra.mxu0 %v2471
      %2885 = vmatprep.mubr.f32.mxu0 %v506
      %2886 = vmatmul.mubr.f32.gmra.mrb[0].mxu0 %v505
      %v2887 = vpop.f32.mrb[0].mxu0
      %v2888 = vadd.f32 %v2667, %v2887
      %v2889 = vpop.f32.mrb[0].mxu0
      %2890 = vdwg.mxu0
      %2891 = vmatprep.subr.mxu0 0.0
      %2892 = vmatpush1.msra.mxu0 %v2474
      %2893 = vmatprep.subr.mxu0 0.0
      %2894 = vmatpush1.msra.mxu0 %v2477
      %2895 = vmatprep.subr.mxu0 0.0
      %2896 = vmatpush1.msra.mxu0 %v2480
      %2897 = vmatprep.subr.mxu0 0.0
      %2898 = vmatpush1.msra.mxu0 %v2483
      %2899 = vmatprep.subr.mxu0 0.0
      %2900 = vmatpush1.msra.mxu0 %v2486
      %2901 = vmatprep.subr.mxu0 0.0
      %2902 = vmatpush1.msra.mxu0 %v2489
      %2903 = vmatprep.subr.mxu0 0.0
      %2904 = vmatpush1.msra.mxu0 %v2492
      %2905 = vmatprep.subr.mxu0 0.0
      %2906 = vmatpush1.msra.mxu0 %v2495
      %2907 = vmatprep.subr.mxu0 0.0
      %2908 = vmatpush1.msra.mxu0 %v2498
      %2909 = vmatprep.subr.mxu0 0.0
      %2910 = vmatpush1.msra.mxu0 %v2677
      %2911 = vmatprep.subr.mxu0 0.0
      %2912 = vmatpush1.msra.mxu0 0.0
      %2913 = vmatprep.subr.mxu0 0.0
      %2914 = vmatpush1.msra.mxu0 0.0
      %2915 = vmatprep.subr.mxu0 0.0
      %2916 = vmatpush1.msra.mxu0 0.0
      %2917 = vmatprep.subr.mxu0 0.0
      %2918 = vmatpush1.msra.mxu0 0.0
      %2919 = vmatprep.subr.mxu0 0.0
      %2920 = vmatpush1.msra.mxu0 0.0
      %2921 = vmatprep.subr.mxu0 0.0
      %2922 = vmatpush1.msra.mxu0 0.0
      %2923 = vmatprep.subr.mxu0 0.0
      %2924 = vmatpush1.msra.mxu0 0.0
      %2925 = vmatprep.subr.mxu0 0.0
      %2926 = vmatpush1.msra.mxu0 0.0
      %2927 = vmatprep.subr.mxu0 0.0
      %2928 = vmatpush1.msra.mxu0 0.0
      %2929 = vmatprep.subr.mxu0 0.0
      %2930 = vmatpush1.msra.mxu0 0.0
      %2931 = vmatprep.subr.mxu0 0.0
      %2932 = vmatpush1.msra.mxu0 0.0
      %2933 = vmatprep.subr.mxu0 0.0
      %2934 = vmatpush1.msra.mxu0 0.0
      %2935 = vmatprep.subr.mxu0 0.0
      %2936 = vmatpush1.msra.mxu0 0.0
      %2937 = vmatprep.subr.mxu0 0.0
      %2938 = vmatpush1.msra.mxu0 0.0
      %2939 = vmatprep.subr.mxu0 0.0
      %2940 = vmatpush1.msra.mxu0 0.0
      %2941 = vmatprep.subr.mxu0 0.0
      %2942 = vmatpush1.msra.mxu0 0.0
      %2943 = vmatprep.subr.mxu0 0.0
      %2944 = vmatpush1.msra.mxu0 0.0
      %2945 = vmatprep.subr.mxu0 0.0
      %2946 = vmatpush1.msra.mxu0 0.0
      %2947 = vmatprep.subr.mxu0 0.0
      %2948 = vmatpush1.msra.mxu0 0.0
      %2949 = vmatprep.subr.mxu0 0.0
      %2950 = vmatpush1.msra.mxu0 0.0
      %2951 = vmatprep.subr.mxu0 0.0
      %2952 = vmatpush1.msra.mxu0 0.0
      %2953 = vmatprep.subr.mxu0 0.0
      %2954 = vmatpush1.msra.mxu0 0.0
      %2955 = vmatprep.mubr.f32.mxu0 0.0
      %2956 = vmatmul.mubr.f32.gmra.mrb[0].mxu0 %v659
      %v2957 = vpop.f32.mrb[0].mxu0
      %v2958 = vadd.f32 %v2888, %v2957
      %v2959 = vpop.f32.mrb[0].mxu0
      %2960 = vdwg.mxu0
      %v2961 = vld [vmem:[%s11] sm:$0x7]
      %v2963 = vlaneseq
      %v2964 = vshrl.u32 %v2963, 7
      %v2965 = vsub.s32 0, %v2964
      %v2966 = vrot.slane %v2961, %v2965
      %v2967 = vlaneseq
      %v2968 = vshrl.u32 %v2967, 7
      %v2969 = vsub.s32 1, %v2968
      %v2970 = vrot.slane %v2961, %v2969
      %v2971 = vlaneseq
      %v2972 = vshrl.u32 %v2971, 7
      %v2973 = vsub.s32 2, %v2972
      %v2974 = vrot.slane %v2961, %v2973
      %v2978 = vadd.f32 %v2817, %v2966
      %v2979 = vadd.f32 %v2819, %v2970
      %v2980 = vadd.f32 %v2958, %v2974
      %v2981 = vmax.f32 %v2978, 0.0
      %v2982 = vmax.f32 %v2979, 0.0
      %v2983 = vmax.f32 %v2980, 0.0
      %v2984 = vadd.f32 %v505, %v2981
      %v2985 = vadd.f32 %v506, %v2982
      %v2986 = vadd.f32 %v507, %v2983
      %2987 = vst [vmem:[%s501] sm:$0xff] %v2984
      %2988 = vst [vmem:[%s501 + $0x8] sm:$0xff] %v2985
      %2989 = vst.msk [vmem:[%s501 + $0x10] sm:$0xff] %vm657, %v2986
      %p2990 = scmp.lt.s32.totalorder %s25, 1
      %s2991 = scalar_select %p2990, %s25, 1
      %s2992 = smul.addr %s2991, 2
      %s2993 = smul.addr %s2992, 8
      %s2994 = scalar_lea.vmem %s12, %s2993
      %p2995 = scmp.lt.s32.totalorder %s25, 1
      %s2996 = scalar_select %p2995, %s25, 1
      %s2997 = smul.addr %s2996, 3
      %s2998 = smul.addr %s2997, 8
      %s2999 = scalar_lea.vmem %s13, %s2998
      // Predicated region
      $region69: #{dcn_with_rcnn_forward.9} parent=67 // pred_check
        %p3000 = pneg %p315
      $region70: #{dcn_with_rcnn_forward.9} parent=67 // pred_check_branch
        %3002 = sbr.rel (%p3000) target = $region72
      $region71: #{dcn_with_rcnn_forward.9} parent=67 // pred_region
        _
      $region72: #{dcn_with_rcnn_forward.9} parent=67 // pred_fallthru
        _
      // Predicated region
      $region73: #{dcn_with_rcnn_forward.9} parent=67 // pred_check
        %p3003 = pneg %p341
      $region74: #{dcn_with_rcnn_forward.9} parent=67 // pred_check_branch
        %3005 = sbr.rel (%p3003) target = $region76
      $region75: #{dcn_with_rcnn_forward.9} parent=67 // pred_region
        _
      $region76: #{dcn_with_rcnn_forward.9} parent=67 // pred_fallthru
        _
    $region68: #{dcn_with_rcnn_forward.9} parent=5 // pred_fallthru
      _
    %p3006 = scmp.le.s32.totalorder 2, %s20
    // Predicated region
    $region77: #{dcn_with_rcnn_forward.9} parent=5 // pred_check
      %p3007 = pneg %p3006
    $region78: #{dcn_with_rcnn_forward.9} parent=5 // pred_check_branch
      %3009 = sbr.rel (%p3007) target = $region80
    $region79: #{dcn_with_rcnn_forward.9} parent=5 // pred_region
      %s3010 = ssub.s32 %s20, 2
      // Predicated region
      $region81: #{dcn_with_rcnn_forward.9} parent=79 // pred_check
        %p3011 = pneg %p321
      $region82: #{dcn_with_rcnn_forward.9} parent=79 // pred_check_branch
        %3013 = sbr.rel (%p3011) target = $region84
      $region83: #{dcn_with_rcnn_forward.9} parent=79 // pred_region
        %p3014 = scmp.lt.s32.totalorder %s26, 1
        %s3015 = scalar_select %p3014, %s26, 1
        %s3016 = smul.addr %s3015, 2
        %s3017 = smul.addr %s3016, 8
        %s3018 = scalar_lea.vmem %s12, %s3017
      $region84: #{dcn_with_rcnn_forward.9} parent=79 // pred_fallthru
        _
      // Predicated region
      $region85: #{dcn_with_rcnn_forward.9} parent=79 // pred_check
        %p3019 = pneg %p347
      $region86: #{dcn_with_rcnn_forward.9} parent=79 // pred_check_branch
        %3021 = sbr.rel (%p3019) target = $region88
      $region87: #{dcn_with_rcnn_forward.9} parent=79 // pred_region
        %p3022 = scmp.lt.s32.totalorder %s26, 1
        %s3023 = scalar_select %p3022, %s26, 1
        %s3024 = smul.addr %s3023, 3
        %s3025 = smul.addr %s3024, 8
        %s3026 = scalar_lea.vmem %s13, %s3025
      $region88: #{dcn_with_rcnn_forward.9} parent=79 // pred_fallthru
        _
    $region80: #{dcn_with_rcnn_forward.9} parent=5 // pred_fallthru
      _
  $region6: #{dcn_with_rcnn_forward.9} parent=0 // loop_footer
    %s24 = sadd.s32 1, %s20
  $region7: #{dcn_with_rcnn_forward.9} parent=0 // loop_footer_branch
    %19 = sbr.rel target = $region3
  $region8: #{dcn_with_rcnn_forward.9} parent=0 // loop_exit
    _

</llo_original>
